<compile_context>
chip_gen: v7x
topology: tpu7x:2x2x1
jax: 0.10.0
libtpu: 0.0.40
codegen_flags: <defaults>
</compile_context>

<pallas_src>
import functools

import jax
import jax.numpy as jnp
from jax import lax
from jax.experimental import pallas as pl
from jax.experimental.pallas import tpu as pltpu


def _round_up(x, m):
    return (x + m - 1) // m * m


# ----------------------------------------------------------------------------
# Kernel 1:  relu( (x @ w_folded) + shift )      (conv1x1x1 + bn1 + relu)
# ----------------------------------------------------------------------------
def _conv1_kernel(x_ref, w_ref, shift_ref, o_ref):
    acc = jnp.dot(x_ref[...], w_ref[...], preferred_element_type=jnp.float32)
    o_ref[...] = jnp.maximum(acc + shift_ref[...], 0.0).astype(o_ref.dtype)


def conv1_bn_relu(x2d_bf16, w_bf16, shift_f32, *, tm):
    """x2d: (Mp, K) bf16, w: (K, N) bf16 (BN scale folded), shift: (1, N) f32 -> (Mp, N) bf16."""
    Mp, K = x2d_bf16.shape
    N = w_bf16.shape[1]
    flops = 2 * Mp * K * N
    bytes_accessed = Mp * K * 2 + K * N * 2 + Mp * N * 2 + 4 * N
    return pl.pallas_call(
        _conv1_kernel,
        out_shape=jax.ShapeDtypeStruct((Mp, N), jnp.bfloat16),
        grid=(Mp // tm,),
        in_specs=[
            pl.BlockSpec((tm, K), lambda i: (i, 0)),
            pl.BlockSpec((K, N), lambda i: (0, 0)),
            pl.BlockSpec((1, N), lambda i: (0, 0)),
        ],
        out_specs=pl.BlockSpec((tm, N), lambda i: (i, 0)),
        compiler_params=pltpu.CompilerParams(dimension_semantics=("parallel",)),
        cost_estimate=pl.CostEstimate(flops=flops, transcendentals=0,
                                      bytes_accessed=bytes_accessed),
    )(x2d_bf16, w_bf16, shift_f32)


# ----------------------------------------------------------------------------
# Kernel 2:  conv3x3x3 + bn2 + relu + conv1x1x1 + bn3 + residual + relu (fused)
# ----------------------------------------------------------------------------
def _conv2_conv3_kernel(x0_ref, x1_ref, x2_ref, w2_ref, s2_ref,
                        w3_ref, s3_ref, res_ref, o_ref, *, H, W, Cp):
    # x{kd}_ref : (Hp, Wp, Cp) bf16 padded slabs for input depth d-1, d, d+1
    # w2_ref    : (27*Cp, Pp) bf16, BN2 scale folded, tap-major (kd, kh, kw)
    # s2_ref    : (1, Pp) f32      shift for bn2
    # w3_ref    : (Pp, Op) bf16, BN3 scale folded
    # s3_ref    : (1, Op) f32      shift for bn3
    # res_ref   : (H*W, Op) f32    residual rows
    # o_ref     : (H*W, Op) f32
    HW = H * W
    Pp = w2_ref.shape[1]
    slabs = (x0_ref, x1_ref, x2_ref)

    acc = jnp.zeros((HW, Pp), jnp.float32)
    for kd in range(3):
        for kh in range(3):
            for kw in range(3):
                t = (kd * 3 + kh) * 3 + kw
                win = slabs[kd][kh:kh + H, kw:kw + W, :]          # (H, W, Cp) bf16
                win = win.reshape(HW, Cp)
                acc = acc + jnp.dot(win, w2_ref[t * Cp:(t + 1) * Cp, :],
                                    preferred_element_type=jnp.float32)

    h = jnp.maximum(acc + s2_ref[...], 0.0)                        # bn2 + relu (f32)
    y = jnp.dot(h.astype(jnp.bfloat16), w3_ref[...],
                preferred_element_type=jnp.float32)                # conv3 on MXU
    y = y + s3_ref[...] + res_ref[...]                             # bn3 + residual
    o_ref[...] = jnp.maximum(y, 0.0)


def conv2_conv3_fused(xpad, w2f, s2, w3f, s3, res2d, *, n, d, h, w, Cp, Op):
    """xpad: (n, d+2, h+2, w+2, Cp) bf16; returns (n*d*h*w, Op) f32."""
    Hp, Wp = h + 2, w + 2
    HW = h * w
    M = n * d * HW
    Pp = w2f.shape[1]

    kernel = functools.partial(_conv2_conv3_kernel, H=h, W=w, Cp=Cp)

    slab_shape = (None, None, Hp, Wp, Cp)
    x_specs = [
        pl.BlockSpec(slab_shape, lambda ni, di: (ni, di, 0, 0, 0)),       # kd = 0
        pl.BlockSpec(slab_shape, lambda ni, di: (ni, di + 1, 0, 0, 0)),   # kd = 1
        pl.BlockSpec(slab_shape, lambda ni, di: (ni, di + 2, 0, 0, 0)),   # kd = 2
    ]

    flops = 2 * M * (27 * Cp) * Pp + 2 * M * Pp * Op
    bytes_accessed = (3 * n * d * Hp * Wp * Cp * 2          # three slabs per step
                      + 27 * Cp * Pp * 2 + Pp * Op * 2      # weights
                      + M * Op * 4 * 2                      # residual + output
                      + 4 * (Pp + Op))

    return pl.pallas_call(
        kernel,
        out_shape=jax.ShapeDtypeStruct((M, Op), jnp.float32),
        grid=(n, d),
        in_specs=x_specs + [
            pl.BlockSpec((27 * Cp, Pp), lambda ni, di: (0, 0)),
            pl.BlockSpec((1, Pp), lambda ni, di: (0, 0)),
            pl.BlockSpec((Pp, Op), lambda ni, di: (0, 0)),
            pl.BlockSpec((1, Op), lambda ni, di: (0, 0)),
            pl.BlockSpec((HW, Op), lambda ni, di: (ni * d + di, 0)),
        ],
        out_specs=pl.BlockSpec((HW, Op), lambda ni, di: (ni * d + di, 0)),
        compiler_params=pltpu.CompilerParams(
            dimension_semantics=("parallel", "parallel")),
        cost_estimate=pl.CostEstimate(flops=flops, transcendentals=0,
                                      bytes_accessed=bytes_accessed),
    )(xpad, xpad, xpad, w2f, s2, w3f, s3, res2d)


# ----------------------------------------------------------------------------
# BN folding (eval-mode running stats)
# ----------------------------------------------------------------------------
def fold_bn(gamma, beta, mean, var, eps=1e-5):
    scale = gamma / jnp.sqrt(var + eps)
    shift = beta - mean * scale
    return scale, shift


# ----------------------------------------------------------------------------
# Bottleneck forward (stride=1, downsample=None  ->  in_planes == planes*4)
# ----------------------------------------------------------------------------
def bottleneck_forward(x_ncdhw, params):
    n, c_in, d, h, w = x_ncdhw.shape
    planes = params["w1"].shape[1]
    c_out = 4 * planes
    assert c_in == c_out, "stride=1 / downsample=None requires in_planes == planes*4"

    cin_p = _round_up(c_in, 128)
    Pp = _round_up(planes, 128)
    Op = _round_up(c_out, 128)

    # channels-last, flat rows
    x = jnp.transpose(x_ncdhw, (0, 2, 3, 4, 1))                  # (N, D, H, W, Cin)
    M = n * d * h * w
    x2d = x.reshape(M, c_in)

    # Fold BN scale into weights; zero-pad channel dims to lane-dense multiples of 128.
    s1, b1 = fold_bn(*params["bn1"])
    s2, b2 = fold_bn(*params["bn2"])
    s3, b3 = fold_bn(*params["bn3"])

    w1f = params["w1"] * s1[None, :]                             # (Cin, P)
    w1f = jnp.pad(w1f, ((0, cin_p - c_in), (0, Pp - planes))).astype(jnp.bfloat16)
    b1p = jnp.pad(b1, (0, Pp - planes)).reshape(1, Pp).astype(jnp.float32)

    w2f = params["w2"] * s2                                      # (3,3,3,P,P) * (P,)
    w2f = jnp.pad(w2f, ((0, 0), (0, 0), (0, 0),
                        (0, Pp - planes), (0, Pp - planes)))
    w2f = w2f.reshape(27 * Pp, Pp).astype(jnp.bfloat16)
    b2p = jnp.pad(b2, (0, Pp - planes)).reshape(1, Pp).astype(jnp.float32)

    w3f = params["w3"] * s3[None, :]                             # (P, 4P)
    w3f = jnp.pad(w3f, ((0, Pp - planes), (0, Op - c_out))).astype(jnp.bfloat16)
    b3p = jnp.pad(b3, (0, Op - c_out)).reshape(1, Op).astype(jnp.float32)

    # residual kept in f32 (not a matmul input)
    res2d = jnp.pad(x2d, ((0, 0), (0, Op - c_out))).astype(jnp.float32)

    # ---- conv1 + bn1 + relu ----
    tm1 = min(512, _round_up(M, 8))
    Mp = _round_up(M, tm1)
    x1in = jnp.pad(x2d, ((0, Mp - M), (0, cin_p - c_in))).astype(jnp.bfloat16)
    a1 = conv1_bn_relu(x1in, w1f, b1p, tm=tm1)                   # (Mp, Pp) bf16
    a1 = a1[:M].reshape(n, d, h, w, Pp)
    a1p = jnp.pad(a1, ((0, 0), (1, 1), (1, 1), (1, 1), (0, 0)))  # spatial zero pad (SAME)

    # ---- conv2 + bn2 + relu + conv3 + bn3 + residual + relu (one fused kernel) ----
    out2d = conv2_conv3_fused(a1p, w2f, b2p, w3f, b3p, res2d,
                              n=n, d=d, h=h, w=w, Cp=Pp, Op=Op)  # (M, Op) f32

    out = out2d.reshape(n, d, h, w, Op)[..., :c_out]
    return jnp.transpose(out, (0, 4, 1, 2, 3))                   # NCDHW


# ----------------------------------------------------------------------------
# Pure-JAX f32 reference (for correctness check)
# ----------------------------------------------------------------------------
def bottleneck_reference(x_ncdhw, params):
    x = jnp.transpose(x_ncdhw, (0, 2, 3, 4, 1))  # NDHWC

    def bn(y, p):
        g, b, m, v = p
        return (y - m) / jnp.sqrt(v + 1e-5) * g + b

    out = jnp.einsum("ndhwc,co->ndhwo", x, params["w1"])
    out = jax.nn.relu(bn(out, params["bn1"]))

    w2 = params["w2"]                                            # (3,3,3,In,Out) = DHWIO
    dn = lax.conv_dimension_numbers(out.shape, w2.shape, ("NDHWC", "DHWIO", "NDHWC"))
    out = lax.conv_general_dilated(out, w2, (1, 1, 1), "SAME", dimension_numbers=dn)
    out = jax.nn.relu(bn(out, params["bn2"]))

    out = jnp.einsum("ndhwc,co->ndhwo", out, params["w3"])
    out = bn(out, params["bn3"]) + x
    out = jax.nn.relu(out)
    return jnp.transpose(out, (0, 4, 1, 2, 3))


# ----------------------------------------------------------------------------
def make_params(key, in_planes, planes):
    expansion = 4
    ks = jax.random.split(key, 12)
    w1 = 0.1 * jax.random.normal(ks[0], (in_planes, planes), jnp.float32)
    # conv2 weight stored as (kd, kh, kw, Cin, Cout)  (DHWIO)
    w2 = 0.05 * jax.random.normal(ks[1], (3, 3, 3, planes, planes), jnp.float32)
    w3 = 0.1 * jax.random.normal(ks[2], (planes, planes * expansion), jnp.float32)

    def bn_params(kg, kb, km, kv, c):
        gamma = 1.0 + 0.1 * jax.random.normal(kg, (c,), jnp.float32)
        beta = 0.1 * jax.random.normal(kb, (c,), jnp.float32)
        mean = 0.1 * jax.random.normal(km, (c,), jnp.float32)
        var = jnp.abs(1.0 + 0.1 * jax.random.normal(kv, (c,), jnp.float32))
        return (gamma, beta, mean, var)

    return {
        "w1": w1, "w2": w2, "w3": w3,
        "bn1": bn_params(ks[3], ks[4], ks[5], ks[6], planes),
        "bn2": bn_params(ks[7], ks[8], ks[9], ks[10], planes),
        "bn3": bn_params(*jax.random.split(ks[11], 4), planes * expansion),
    }


if __name__ == "__main__":
    key = jax.random.PRNGKey(0)
    k_x, k_p = jax.random.split(key)

    # small shapes: batch=2, in_planes=16, planes=4 (expansion 4 -> residual matches)
    N, C_IN, PLANES, D, H, W = 2, 16, 4, 8, 8, 8
    x = jax.random.normal(k_x, (N, C_IN, D, H, W), jnp.float32)
    params = make_params(k_p, C_IN, PLANES)

    out = jax.jit(bottleneck_forward)(x, params)
    out = jax.block_until_ready(out)

    ref = jax.block_until_ready(bottleneck_reference(x, params))
    assert out.shape == (N, PLANES * 4, D, H, W), out.shape
    # bf16 matmul inputs (f32 accumulate / epilogue) -> slightly loosened tolerance
    err = float(jnp.max(jnp.abs(out - ref)))
    assert jnp.allclose(out, ref, rtol=2e-2, atol=2e-2), err

    print("KERNEL_OK")
</pallas_src>

<mosaic_0001>
module attributes {stable_mosaic.version = 11 : i64} {
  func.func @_conv1_kernel(%arg0: i32, %arg1: memref<512x128xbf16, #tpu.memory_space<vmem>>, %arg2: memref<128x128xbf16, #tpu.memory_space<vmem>>, %arg3: memref<1x128xf32, #tpu.memory_space<vmem>>, %arg4: memref<512x128xbf16, #tpu.memory_space<vmem>>) attributes {dimension_semantics = [#tpu.dimension_semantics<parallel>], iteration_bounds = array<i64: 2>, scalar_prefetch = 0 : i64, scratch_operands = 0 : i64, tpu.core_type = #tpu.core_type<tc>, window_params = [{transform_indices = @transform_0, window_bounds = array<i64: 512, 128>}, {pipeline_mode = #tpu.pipeline_mode<synchronous>, transform_indices = @transform_1, window_bounds = array<i64: 128, 128>}, {pipeline_mode = #tpu.pipeline_mode<synchronous>, transform_indices = @transform_2, window_bounds = array<i64: 1, 128>}, {transform_indices = @transform_3, window_bounds = array<i64: 512, 128>}]} {
    %c0 = arith.constant 0 : index
    %c0_0 = arith.constant 0 : index
    %0 = vector.load %arg1[%c0, %c0_0] : memref<512x128xbf16, #tpu.memory_space<vmem>>, vector<512x128xbf16>
    %c0_1 = arith.constant 0 : index
    %c0_2 = arith.constant 0 : index
    %1 = vector.load %arg2[%c0_1, %c0_2] : memref<128x128xbf16, #tpu.memory_space<vmem>>, vector<128x128xbf16>
    %cst = arith.constant dense<0.000000e+00> : vector<512x128xf32>
    %2 = tpu.matmul %0, %1, %cst {dimension_numbers = #tpu.dot_dimension_numbers<[1], [0], [0], [1], [0, 0, 1, 1], [], []>} : vector<512x128xbf16>, vector<128x128xbf16>, vector<512x128xf32> -> vector<512x128xf32>
    %c0_3 = arith.constant 0 : index
    %c0_4 = arith.constant 0 : index
    %3 = vector.load %arg3[%c0_3, %c0_4] : memref<1x128xf32, #tpu.memory_space<vmem>>, vector<1x128xf32>
    %4 = vector.broadcast %3 : vector<1x128xf32> to vector<512x128xf32>
    %5 = arith.addf %2, %4 : vector<512x128xf32>
    %cst_5 = arith.constant 0.000000e+00 : f32
    %6 = vector.broadcast %cst_5 : f32 to vector<512x128xf32>
    %7 = arith.maximumf %5, %6 : vector<512x128xf32>
    %8 = arith.truncf %7 : vector<512x128xf32> to vector<512x128xbf16>
    %c0_6 = arith.constant 0 : index
    %c0_7 = arith.constant 0 : index
    %9 = vector.load %arg4[%c0_6, %c0_7] : memref<512x128xbf16, #tpu.memory_space<vmem>>, vector<512x128xbf16>
    tpu.vector_store %arg4[%c0_6, %c0_7], %8 {strides = array<i32>} : memref<512x128xbf16, #tpu.memory_space<vmem>>, vector<512x128xbf16>,
    return
  }
  func.func @transform_0(%arg0: i32) -> (i32, i32) {
    %c0_i32 = arith.constant 0 : i32
    %c0_i32_0 = arith.constant 0 : i32
    return %arg0, %c0_i32 : i32, i32
  }
  func.func @transform_1(%arg0: i32) -> (i32, i32) {
    %c0_i32 = arith.constant 0 : i32
    %c0_i32_0 = arith.constant 0 : i32
    %c0_i32_1 = arith.constant 0 : i32
    return %c0_i32, %c0_i32_0 : i32, i32
  }
  func.func @transform_2(%arg0: i32) -> (i32, i32) {
    %c0_i32 = arith.constant 0 : i32
    %c0_i32_0 = arith.constant 0 : i32
    %c0_i32_1 = arith.constant 0 : i32
    return %c0_i32, %c0_i32_0 : i32, i32
  }
  func.func @transform_3(%arg0: i32) -> (i32, i32) {
    %c0_i32 = arith.constant 0 : i32
    %c0_i32_0 = arith.constant 0 : i32
    return %arg0, %c0_i32 : i32, i32
  }
}

module attributes {stable_mosaic.version = 11 : i64} {
  func.func @_conv2_conv3_kernel(%arg0: i32, %arg1: i32, %arg2: memref<1x1x10x10x128xbf16, #tpu.memory_space<vmem>>, %arg3: memref<1x1x10x10x128xbf16, #tpu.memory_space<vmem>>, %arg4: memref<1x1x10x10x128xbf16, #tpu.memory_space<vmem>>, %arg5: memref<3456x128xbf16, #tpu.memory_space<vmem>>, %arg6: memref<1x128xf32, #tpu.memory_space<vmem>>, %arg7: memref<128x128xbf16, #tpu.memory_space<vmem>>, %arg8: memref<1x128xf32, #tpu.memory_space<vmem>>, %arg9: memref<64x128xf32, #tpu.memory_space<vmem>>, %arg10: memref<64x128xf32, #tpu.memory_space<vmem>>) attributes {dimension_semantics = [#tpu.dimension_semantics<parallel>, #tpu.dimension_semantics<parallel>], iteration_bounds = array<i64: 2, 8>, scalar_prefetch = 0 : i64, scratch_operands = 0 : i64, tpu.core_type = #tpu.core_type<tc>, window_params = [{transform_indices = @transform_0, window_bounds = array<i64: 1, 1, 10, 10, 128>}, {transform_indices = @transform_1, window_bounds = array<i64: 1, 1, 10, 10, 128>}, {transform_indices = @transform_2, window_bounds = array<i64: 1, 1, 10, 10, 128>}, {pipeline_mode = #tpu.pipeline_mode<synchronous>, transform_indices = @transform_3, window_bounds = array<i64: 3456, 128>}, {pipeline_mode = #tpu.pipeline_mode<synchronous>, transform_indices = @transform_4, window_bounds = array<i64: 1, 128>}, {pipeline_mode = #tpu.pipeline_mode<synchronous>, transform_indices = @transform_5, window_bounds = array<i64: 128, 128>}, {pipeline_mode = #tpu.pipeline_mode<synchronous>, transform_indices = @transform_6, window_bounds = array<i64: 1, 128>}, {transform_indices = @transform_7, window_bounds = array<i64: 64, 128>}, {transform_indices = @transform_8, window_bounds = array<i64: 64, 128>}]} {
    %cst = arith.constant 0.000000e+00 : f32
    %0 = vector.broadcast %cst : f32 to vector<64x128xf32>
    %c0 = arith.constant 0 : index
    %c0_0 = arith.constant 0 : index
    %c0_1 = arith.constant 0 : index
    %c0_2 = arith.constant 0 : index
    %c0_3 = arith.constant 0 : index
    %1 = vector.load %arg2[%c0, %c0_0, %c0_1, %c0_2, %c0_3] : memref<1x1x10x10x128xbf16, #tpu.memory_space<vmem>>, vector<1x1x8x8x128xbf16>
    %2 = vector.shape_cast %1 : vector<1x1x8x8x128xbf16> to vector<8x8x128xbf16>
    %3 = vector.shape_cast %2 : vector<8x8x128xbf16> to vector<64x128xbf16>
    %c0_4 = arith.constant 0 : index
    %c0_5 = arith.constant 0 : index
    %4 = vector.load %arg5[%c0_4, %c0_5] : memref<3456x128xbf16, #tpu.memory_space<vmem>>, vector<128x128xbf16>
    %cst_6 = arith.constant dense<0.000000e+00> : vector<64x128xf32>
    %5 = tpu.matmul %3, %4, %cst_6 {dimension_numbers = #tpu.dot_dimension_numbers<[1], [0], [0], [1], [0, 0, 1, 1], [], []>} : vector<64x128xbf16>, vector<128x128xbf16>, vector<64x128xf32> -> vector<64x128xf32>
    %6 = arith.addf %0, %5 : vector<64x128xf32>
    %c0_7 = arith.constant 0 : index
    %c0_8 = arith.constant 0 : index
    %c0_9 = arith.constant 0 : index
    %c1 = arith.constant 1 : index
    %c0_10 = arith.constant 0 : index
    %7 = vector.load %arg2[%c0_7, %c0_8, %c0_9, %c1, %c0_10] : memref<1x1x10x10x128xbf16, #tpu.memory_space<vmem>>, vector<1x1x8x8x128xbf16>
    %8 = vector.shape_cast %7 : vector<1x1x8x8x128xbf16> to vector<8x8x128xbf16>
    %9 = vector.shape_cast %8 : vector<8x8x128xbf16> to vector<64x128xbf16>
    %c128 = arith.constant 128 : index
    %c0_11 = arith.constant 0 : index
    %10 = vector.load %arg5[%c128, %c0_11] : memref<3456x128xbf16, #tpu.memory_space<vmem>>, vector<128x128xbf16>
    %cst_12 = arith.constant dense<0.000000e+00> : vector<64x128xf32>
    %11 = tpu.matmul %9, %10, %cst_12 {dimension_numbers = #tpu.dot_dimension_numbers<[1], [0], [0], [1], [0, 0, 1, 1], [], []>} : vector<64x128xbf16>, vector<128x128xbf16>, vector<64x128xf32> -> vector<64x128xf32>
    %12 = arith.addf %6, %11 : vector<64x128xf32>
    %c0_13 = arith.constant 0 : index
    %c0_14 = arith.constant 0 : index
    %c0_15 = arith.constant 0 : index
    %c2 = arith.constant 2 : index
    %c0_16 = arith.constant 0 : index
    %13 = vector.load %arg2[%c0_13, %c0_14, %c0_15, %c2, %c0_16] : memref<1x1x10x10x128xbf16, #tpu.memory_space<vmem>>, vector<1x1x8x8x128xbf16>
    %14 = vector.shape_cast %13 : vector<1x1x8x8x128xbf16> to vector<8x8x128xbf16>
    %15 = vector.shape_cast %14 : vector<8x8x128xbf16> to vector<64x128xbf16>
    %c256 = arith.constant 256 : index
    %c0_17 = arith.constant 0 : index
    %16 = vector.load %arg5[%c256, %c0_17] : memref<3456x128xbf16, #tpu.memory_space<vmem>>, vector<128x128xbf16>
    %cst_18 = arith.constant dense<0.000000e+00> : vector<64x128xf32>
    %17 = tpu.matmul %15, %16, %cst_18 {dimension_numbers = #tpu.dot_dimension_numbers<[1], [0], [0], [1], [0, 0, 1, 1], [], []>} : vector<64x128xbf16>, vector<128x128xbf16>, vector<64x128xf32> -> vector<64x128xf32>
    %18 = arith.addf %12, %17 : vector<64x128xf32>
    %c0_19 = arith.constant 0 : index
    %c0_20 = arith.constant 0 : index
    %c1_21 = arith.constant 1 : index
    %c0_22 = arith.constant 0 : index
    %c0_23 = arith.constant 0 : index
    %19 = vector.load %arg2[%c0_19, %c0_20, %c1_21, %c0_22, %c0_23] : memref<1x1x10x10x128xbf16, #tpu.memory_space<vmem>>, vector<1x1x8x8x128xbf16>
    %20 = vector.shape_cast %19 : vector<1x1x8x8x128xbf16> to vector<8x8x128xbf16>
    %21 = vector.shape_cast %20 : vector<8x8x128xbf16> to vector<64x128xbf16>
    %c384 = arith.constant 384 : index
    %c0_24 = arith.constant 0 : index
    %22 = vector.load %arg5[%c384, %c0_24] : memref<3456x128xbf16, #tpu.memory_space<vmem>>, vector<128x128xbf16>
    %cst_25 = arith.constant dense<0.000000e+00> : vector<64x128xf32>
    %23 = tpu.matmul %21, %22, %cst_25 {dimension_numbers = #tpu.dot_dimension_numbers<[1], [0], [0], [1], [0, 0, 1, 1], [], []>} : vector<64x128xbf16>, vector<128x128xbf16>, vector<64x128xf32> -> vector<64x128xf32>
    %24 = arith.addf %18, %23 : vector<64x128xf32>
    %c0_26 = arith.constant 0 : index
    %c0_27 = arith.constant 0 : index
    %c1_28 = arith.constant 1 : index
    %c1_29 = arith.constant 1 : index
    %c0_30 = arith.constant 0 : index
    %25 = vector.load %arg2[%c0_26, %c0_27, %c1_28, %c1_29, %c0_30] : memref<1x1x10x10x128xbf16, #tpu.memory_space<vmem>>, vector<1x1x8x8x128xbf16>
    %26 = vector.shape_cast %25 : vector<1x1x8x8x128xbf16> to vector<8x8x128xbf16>
    %27 = vector.shape_cast %26 : vector<8x8x128xbf16> to vector<64x128xbf16>
    %c512 = arith.constant 512 : index
    %c0_31 = arith.constant 0 : index
    %28 = vector.load %arg5[%c512, %c0_31] : memref<3456x128xbf16, #tpu.memory_space<vmem>>, vector<128x128xbf16>
    %cst_32 = arith.constant dense<0.000000e+00> : vector<64x128xf32>
    %29 = tpu.matmul %27, %28, %cst_32 {dimension_numbers = #tpu.dot_dimension_numbers<[1], [0], [0], [1], [0, 0, 1, 1], [], []>} : vector<64x128xbf16>, vector<128x128xbf16>, vector<64x128xf32> -> vector<64x128xf32>
    %30 = arith.addf %24, %29 : vector<64x128xf32>
    %c0_33 = arith.constant 0 : index
    %c0_34 = arith.constant 0 : index
    %c1_35 = arith.constant 1 : index
    %c2_36 = arith.constant 2 : index
    %c0_37 = arith.constant 0 : index
    %31 = vector.load %arg2[%c0_33, %c0_34, %c1_35, %c2_36, %c0_37] : memref<1x1x10x10x128xbf16, #tpu.memory_space<vmem>>, vector<1x1x8x8x128xbf16>
    %32 = vector.shape_cast %31 : vector<1x1x8x8x128xbf16> to vector<8x8x128xbf16>
    %33 = vector.shape_cast %32 : vector<8x8x128xbf16> to vector<64x128xbf16>
    %c640 = arith.constant 640 : index
    %c0_38 = arith.constant 0 : index
    %34 = vector.load %arg5[%c640, %c0_38] : memref<3456x128xbf16, #tpu.memory_space<vmem>>, vector<128x128xbf16>
    %cst_39 = arith.constant dense<0.000000e+00> : vector<64x128xf32>
    %35 = tpu.matmul %33, %34, %cst_39 {dimension_numbers = #tpu.dot_dimension_numbers<[1], [0], [0], [1], [0, 0, 1, 1], [], []>} : vector<64x128xbf16>, vector<128x128xbf16>, vector<64x128xf32> -> vector<64x128xf32>
    %36 = arith.addf %30, %35 : vector<64x128xf32>
    %c0_40 = arith.constant 0 : index
    %c0_41 = arith.constant 0 : index
    %c2_42 = arith.constant 2 : index
    %c0_43 = arith.constant 0 : index
    %c0_44 = arith.constant 0 : index
    %37 = vector.load %arg2[%c0_40, %c0_41, %c2_42, %c0_43, %c0_44] : memref<1x1x10x10x128xbf16, #tpu.memory_space<vmem>>, vector<1x1x8x8x128xbf16>
    %38 = vector.shape_cast %37 : vector<1x1x8x8x128xbf16> to vector<8x8x128xbf16>
    %39 = vector.shape_cast %38 : vector<8x8x128xbf16> to vector<64x128xbf16>
    %c768 = arith.constant 768 : index
    %c0_45 = arith.constant 0 : index
    %40 = vector.load %arg5[%c768, %c0_45] : memref<3456x128xbf16, #tpu.memory_space<vmem>>, vector<128x128xbf16>
    %cst_46 = arith.constant dense<0.000000e+00> : vector<64x128xf32>
    %41 = tpu.matmul %39, %40, %cst_46 {dimension_numbers = #tpu.dot_dimension_numbers<[1], [0], [0], [1], [0, 0, 1, 1], [], []>} : vector<64x128xbf16>, vector<128x128xbf16>, vector<64x128xf32> -> vector<64x128xf32>
    %42 = arith.addf %36, %41 : vector<64x128xf32>
    %c0_47 = arith.constant 0 : index
    %c0_48 = arith.constant 0 : index
    %c2_49 = arith.constant 2 : index
    %c1_50 = arith.constant 1 : index
    %c0_51 = arith.constant 0 : index
    %43 = vector.load %arg2[%c0_47, %c0_48, %c2_49, %c1_50, %c0_51] : memref<1x1x10x10x128xbf16, #tpu.memory_space<vmem>>, vector<1x1x8x8x128xbf16>
    %44 = vector.shape_cast %43 : vector<1x1x8x8x128xbf16> to vector<8x8x128xbf16>
    %45 = vector.shape_cast %44 : vector<8x8x128xbf16> to vector<64x128xbf16>
    %c896 = arith.constant 896 : index
    %c0_52 = arith.constant 0 : index
    %46 = vector.load %arg5[%c896, %c0_52] : memref<3456x128xbf16, #tpu.memory_space<vmem>>, vector<128x128xbf16>
    %cst_53 = arith.constant dense<0.000000e+00> : vector<64x128xf32>
    %47 = tpu.matmul %45, %46, %cst_53 {dimension_numbers = #tpu.dot_dimension_numbers<[1], [0], [0], [1], [0, 0, 1, 1], [], []>} : vector<64x128xbf16>, vector<128x128xbf16>, vector<64x128xf32> -> vector<64x128xf32>
    %48 = arith.addf %42, %47 : vector<64x128xf32>
    %c0_54 = arith.constant 0 : index
    %c0_55 = arith.constant 0 : index
    %c2_56 = arith.constant 2 : index
    %c2_57 = arith.constant 2 : index
    %c0_58 = arith.constant 0 : index
    %49 = vector.load %arg2[%c0_54, %c0_55, %c2_56, %c2_57, %c0_58] : memref<1x1x10x10x128xbf16, #tpu.memory_space<vmem>>, vector<1x1x8x8x128xbf16>
    %50 = vector.shape_cast %49 : vector<1x1x8x8x128xbf16> to vector<8x8x128xbf16>
    %51 = vector.shape_cast %50 : vector<8x8x128xbf16> to vector<64x128xbf16>
    %c1024 = arith.constant 1024 : index
    %c0_59 = arith.constant 0 : index
    %52 = vector.load %arg5[%c1024, %c0_59] : memref<3456x128xbf16, #tpu.memory_space<vmem>>, vector<128x128xbf16>
    %cst_60 = arith.constant dense<0.000000e+00> : vector<64x128xf32>
    %53 = tpu.matmul %51, %52, %cst_60 {dimension_numbers = #tpu.dot_dimension_numbers<[1], [0], [0], [1], [0, 0, 1, 1], [], []>} : vector<64x128xbf16>, vector<128x128xbf16>, vector<64x128xf32> -> vector<64x128xf32>
    %54 = arith.addf %48, %53 : vector<64x128xf32>
    %c0_61 = arith.constant 0 : index
    %c0_62 = arith.constant 0 : index
    %c0_63 = arith.constant 0 : index
    %c0_64 = arith.constant 0 : index
    %c0_65 = arith.constant 0 : index
    %55 = vector.load %arg3[%c0_61, %c0_62, %c0_63, %c0_64, %c0_65] : memref<1x1x10x10x128xbf16, #tpu.memory_space<vmem>>, vector<1x1x8x8x128xbf16>
    %56 = vector.shape_cast %55 : vector<1x1x8x8x128xbf16> to vector<8x8x128xbf16>
    %57 = vector.shape_cast %56 : vector<8x8x128xbf16> to vector<64x128xbf16>
    %c1152 = arith.constant 1152 : index
    %c0_66 = arith.constant 0 : index
    %58 = vector.load %arg5[%c1152, %c0_66] : memref<3456x128xbf16, #tpu.memory_space<vmem>>, vector<128x128xbf16>
    %cst_67 = arith.constant dense<0.000000e+00> : vector<64x128xf32>
    %59 = tpu.matmul %57, %58, %cst_67 {dimension_numbers = #tpu.dot_dimension_numbers<[1], [0], [0], [1], [0, 0, 1, 1], [], []>} : vector<64x128xbf16>, vector<128x128xbf16>, vector<64x128xf32> -> vector<64x128xf32>
    %60 = arith.addf %54, %59 : vector<64x128xf32>
    %c0_68 = arith.constant 0 : index
    %c0_69 = arith.constant 0 : index
    %c0_70 = arith.constant 0 : index
    %c1_71 = arith.constant 1 : index
    %c0_72 = arith.constant 0 : index
    %61 = vector.load %arg3[%c0_68, %c0_69, %c0_70, %c1_71, %c0_72] : memref<1x1x10x10x128xbf16, #tpu.memory_space<vmem>>, vector<1x1x8x8x128xbf16>
    %62 = vector.shape_cast %61 : vector<1x1x8x8x128xbf16> to vector<8x8x128xbf16>
    %63 = vector.shape_cast %62 : vector<8x8x128xbf16> to vector<64x128xbf16>
    %c1280 = arith.constant 1280 : index
    %c0_73 = arith.constant 0 : index
    %64 = vector.load %arg5[%c1280, %c0_73] : memref<3456x128xbf16, #tpu.memory_space<vmem>>, vector<128x128xbf16>
    %cst_74 = arith.constant dense<0.000000e+00> : vector<64x128xf32>
    %65 = tpu.matmul %63, %64, %cst_74 {dimension_numbers = #tpu.dot_dimension_numbers<[1], [0], [0], [1], [0, 0, 1, 1], [], []>} : vector<64x128xbf16>, vector<128x128xbf16>, vector<64x128xf32> -> vector<64x128xf32>
    %66 = arith.addf %60, %65 : vector<64x128xf32>
    %c0_75 = arith.constant 0 : index
    %c0_76 = arith.constant 0 : index
    %c0_77 = arith.constant 0 : index
    %c2_78 = arith.constant 2 : index
    %c0_79 = arith.constant 0 : index
    %67 = vector.load %arg3[%c0_75, %c0_76, %c0_77, %c2_78, %c0_79] : memref<1x1x10x10x128xbf16, #tpu.memory_space<vmem>>, vector<1x1x8x8x128xbf16>
    %68 = vector.shape_cast %67 : vector<1x1x8x8x128xbf16> to vector<8x8x128xbf16>
    %69 = vector.shape_cast %68 : vector<8x8x128xbf16> to vector<64x128xbf16>
    %c1408 = arith.constant 1408 : index
    %c0_80 = arith.constant 0 : index
    %70 = vector.load %arg5[%c1408, %c0_80] : memref<3456x128xbf16, #tpu.memory_space<vmem>>, vector<128x128xbf16>
    %cst_81 = arith.constant dense<0.000000e+00> : vector<64x128xf32>
    %71 = tpu.matmul %69, %70, %cst_81 {dimension_numbers = #tpu.dot_dimension_numbers<[1], [0], [0], [1], [0, 0, 1, 1], [], []>} : vector<64x128xbf16>, vector<128x128xbf16>, vector<64x128xf32> -> vector<64x128xf32>
    %72 = arith.addf %66, %71 : vector<64x128xf32>
    %c0_82 = arith.constant 0 : index
    %c0_83 = arith.constant 0 : index
    %c1_84 = arith.constant 1 : index
    %c0_85 = arith.constant 0 : index
    %c0_86 = arith.constant 0 : index
    %73 = vector.load %arg3[%c0_82, %c0_83, %c1_84, %c0_85, %c0_86] : memref<1x1x10x10x128xbf16, #tpu.memory_space<vmem>>, vector<1x1x8x8x128xbf16>
    %74 = vector.shape_cast %73 : vector<1x1x8x8x128xbf16> to vector<8x8x128xbf16>
    %75 = vector.shape_cast %74 : vector<8x8x128xbf16> to vector<64x128xbf16>
    %c1536 = arith.constant 1536 : index
    %c0_87 = arith.constant 0 : index
    %76 = vector.load %arg5[%c1536, %c0_87] : memref<3456x128xbf16, #tpu.memory_space<vmem>>, vector<128x128xbf16>
    %cst_88 = arith.constant dense<0.000000e+00> : vector<64x128xf32>
    %77 = tpu.matmul %75, %76, %cst_88 {dimension_numbers = #tpu.dot_dimension_numbers<[1], [0], [0], [1], [0, 0, 1, 1], [], []>} : vector<64x128xbf16>, vector<128x128xbf16>, vector<64x128xf32> -> vector<64x128xf32>
    %78 = arith.addf %72, %77 : vector<64x128xf32>
    %c0_89 = arith.constant 0 : index
    %c0_90 = arith.constant 0 : index
    %c1_91 = arith.constant 1 : index
    %c1_92 = arith.constant 1 : index
    %c0_93 = arith.constant 0 : index
    %79 = vector.load %arg3[%c0_89, %c0_90, %c1_91, %c1_92, %c0_93] : memref<1x1x10x10x128xbf16, #tpu.memory_space<vmem>>, vector<1x1x8x8x128xbf16>
    %80 = vector.shape_cast %79 : vector<1x1x8x8x128xbf16> to vector<8x8x128xbf16>
    %81 = vector.shape_cast %80 : vector<8x8x128xbf16> to vector<64x128xbf16>
    %c1664 = arith.constant 1664 : index
    %c0_94 = arith.constant 0 : index
    %82 = vector.load %arg5[%c1664, %c0_94] : memref<3456x128xbf16, #tpu.memory_space<vmem>>, vector<128x128xbf16>
    %cst_95 = arith.constant dense<0.000000e+00> : vector<64x128xf32>
    %83 = tpu.matmul %81, %82, %cst_95 {dimension_numbers = #tpu.dot_dimension_numbers<[1], [0], [0], [1], [0, 0, 1, 1], [], []>} : vector<64x128xbf16>, vector<128x128xbf16>, vector<64x128xf32> -> vector<64x128xf32>
    %84 = arith.addf %78, %83 : vector<64x128xf32>
    %c0_96 = arith.constant 0 : index
    %c0_97 = arith.constant 0 : index
    %c1_98 = arith.constant 1 : index
    %c2_99 = arith.constant 2 : index
    %c0_100 = arith.constant 0 : index
    %85 = vector.load %arg3[%c0_96, %c0_97, %c1_98, %c2_99, %c0_100] : memref<1x1x10x10x128xbf16, #tpu.memory_space<vmem>>, vector<1x1x8x8x128xbf16>
    %86 = vector.shape_cast %85 : vector<1x1x8x8x128xbf16> to vector<8x8x128xbf16>
    %87 = vector.shape_cast %86 : vector<8x8x128xbf16> to vector<64x128xbf16>
    %c1792 = arith.constant 1792 : index
    %c0_101 = arith.constant 0 : index
    %88 = vector.load %arg5[%c1792, %c0_101] : memref<3456x128xbf16, #tpu.memory_space<vmem>>, vector<128x128xbf16>
    %cst_102 = arith.constant dense<0.000000e+00> : vector<64x128xf32>
    %89 = tpu.matmul %87, %88, %cst_102 {dimension_numbers = #tpu.dot_dimension_numbers<[1], [0], [0], [1], [0, 0, 1, 1], [], []>} : vector<64x128xbf16>, vector<128x128xbf16>, vector<64x128xf32> -> vector<64x128xf32>
    %90 = arith.addf %84, %89 : vector<64x128xf32>
    %c0_103 = arith.constant 0 : index
    %c0_104 = arith.constant 0 : index
    %c2_105 = arith.constant 2 : index
    %c0_106 = arith.constant 0 : index
    %c0_107 = arith.constant 0 : index
    %91 = vector.load %arg3[%c0_103, %c0_104, %c2_105, %c0_106, %c0_107] : memref<1x1x10x10x128xbf16, #tpu.memory_space<vmem>>, vector<1x1x8x8x128xbf16>
    %92 = vector.shape_cast %91 : vector<1x1x8x8x128xbf16> to vector<8x8x128xbf16>
    %93 = vector.shape_cast %92 : vector<8x8x128xbf16> to vector<64x128xbf16>
    %c1920 = arith.constant 1920 : index
    %c0_108 = arith.constant 0 : index
    %94 = vector.load %arg5[%c1920, %c0_108] : memref<3456x128xbf16, #tpu.memory_space<vmem>>, vector<128x128xbf16>
    %cst_109 = arith.constant dense<0.000000e+00> : vector<64x128xf32>
    %95 = tpu.matmul %93, %94, %cst_109 {dimension_numbers = #tpu.dot_dimension_numbers<[1], [0], [0], [1], [0, 0, 1, 1], [], []>} : vector<64x128xbf16>, vector<128x128xbf16>, vector<64x128xf32> -> vector<64x128xf32>
    %96 = arith.addf %90, %95 : vector<64x128xf32>
    %c0_110 = arith.constant 0 : index
    %c0_111 = arith.constant 0 : index
    %c2_112 = arith.constant 2 : index
    %c1_113 = arith.constant 1 : index
    %c0_114 = arith.constant 0 : index
    %97 = vector.load %arg3[%c0_110, %c0_111, %c2_112, %c1_113, %c0_114] : memref<1x1x10x10x128xbf16, #tpu.memory_space<vmem>>, vector<1x1x8x8x128xbf16>
    %98 = vector.shape_cast %97 : vector<1x1x8x8x128xbf16> to vector<8x8x128xbf16>
    %99 = vector.shape_cast %98 : vector<8x8x128xbf16> to vector<64x128xbf16>
    %c2048 = arith.constant 2048 : index
    %c0_115 = arith.constant 0 : index
    %100 = vector.load %arg5[%c2048, %c0_115] : memref<3456x128xbf16, #tpu.memory_space<vmem>>, vector<128x128xbf16>
    %cst_116 = arith.constant dense<0.000000e+00> : vector<64x128xf32>
    %101 = tpu.matmul %99, %100, %cst_116 {dimension_numbers = #tpu.dot_dimension_numbers<[1], [0], [0], [1], [0, 0, 1, 1], [], []>} : vector<64x128xbf16>, vector<128x128xbf16>, vector<64x128xf32> -> vector<64x128xf32>
    %102 = arith.addf %96, %101 : vector<64x128xf32>
    %c0_117 = arith.constant 0 : index
    %c0_118 = arith.constant 0 : index
    %c2_119 = arith.constant 2 : index
    %c2_120 = arith.constant 2 : index
    %c0_121 = arith.constant 0 : index
    %103 = vector.load %arg3[%c0_117, %c0_118, %c2_119, %c2_120, %c0_121] : memref<1x1x10x10x128xbf16, #tpu.memory_space<vmem>>, vector<1x1x8x8x128xbf16>
    %104 = vector.shape_cast %103 : vector<1x1x8x8x128xbf16> to vector<8x8x128xbf16>
    %105 = vector.shape_cast %104 : vector<8x8x128xbf16> to vector<64x128xbf16>
    %c2176 = arith.constant 2176 : index
    %c0_122 = arith.constant 0 : index
    %106 = vector.load %arg5[%c2176, %c0_122] : memref<3456x128xbf16, #tpu.memory_space<vmem>>, vector<128x128xbf16>
    %cst_123 = arith.constant dense<0.000000e+00> : vector<64x128xf32>
    %107 = tpu.matmul %105, %106, %cst_123 {dimension_numbers = #tpu.dot_dimension_numbers<[1], [0], [0], [1], [0, 0, 1, 1], [], []>} : vector<64x128xbf16>, vector<128x128xbf16>, vector<64x128xf32> -> vector<64x128xf32>
    %108 = arith.addf %102, %107 : vector<64x128xf32>
    %c0_124 = arith.constant 0 : index
    %c0_125 = arith.constant 0 : index
    %c0_126 = arith.constant 0 : index
    %c0_127 = arith.constant 0 : index
    %c0_128 = arith.constant 0 : index
    %109 = vector.load %arg4[%c0_124, %c0_125, %c0_126, %c0_127, %c0_128] : memref<1x1x10x10x128xbf16, #tpu.memory_space<vmem>>, vector<1x1x8x8x128xbf16>
    %110 = vector.shape_cast %109 : vector<1x1x8x8x128xbf16> to vector<8x8x128xbf16>
    %111 = vector.shape_cast %110 : vector<8x8x128xbf16> to vector<64x128xbf16>
    %c2304 = arith.constant 2304 : index
    %c0_129 = arith.constant 0 : index
    %112 = vector.load %arg5[%c2304, %c0_129] : memref<3456x128xbf16, #tpu.memory_space<vmem>>, vector<128x128xbf16>
    %cst_130 = arith.constant dense<0.000000e+00> : vector<64x128xf32>
    %113 = tpu.matmul %111, %112, %cst_130 {dimension_numbers = #tpu.dot_dimension_numbers<[1], [0], [0], [1], [0, 0, 1, 1], [], []>} : vector<64x128xbf16>, vector<128x128xbf16>, vector<64x128xf32> -> vector<64x128xf32>
    %114 = arith.addf %108, %113 : vector<64x128xf32>
    %c0_131 = arith.constant 0 : index
    %c0_132 = arith.constant 0 : index
    %c0_133 = arith.constant 0 : index
    %c1_134 = arith.constant 1 : index
    %c0_135 = arith.constant 0 : index
    %115 = vector.load %arg4[%c0_131, %c0_132, %c0_133, %c1_134, %c0_135] : memref<1x1x10x10x128xbf16, #tpu.memory_space<vmem>>, vector<1x1x8x8x128xbf16>
    %116 = vector.shape_cast %115 : vector<1x1x8x8x128xbf16> to vector<8x8x128xbf16>
    %117 = vector.shape_cast %116 : vector<8x8x128xbf16> to vector<64x128xbf16>
    %c2432 = arith.constant 2432 : index
    %c0_136 = arith.constant 0 : index
    %118 = vector.load %arg5[%c2432, %c0_136] : memref<3456x128xbf16, #tpu.memory_space<vmem>>, vector<128x128xbf16>
    %cst_137 = arith.constant dense<0.000000e+00> : vector<64x128xf32>
    %119 = tpu.matmul %117, %118, %cst_137 {dimension_numbers = #tpu.dot_dimension_numbers<[1], [0], [0], [1], [0, 0, 1, 1], [], []>} : vector<64x128xbf16>, vector<128x128xbf16>, vector<64x128xf32> -> vector<64x128xf32>
    %120 = arith.addf %114, %119 : vector<64x128xf32>
    %c0_138 = arith.constant 0 : index
    %c0_139 = arith.constant 0 : index
    %c0_140 = arith.constant 0 : index
    %c2_141 = arith.constant 2 : index
    %c0_142 = arith.constant 0 : index
    %121 = vector.load %arg4[%c0_138, %c0_139, %c0_140, %c2_141, %c0_142] : memref<1x1x10x10x128xbf16, #tpu.memory_space<vmem>>, vector<1x1x8x8x128xbf16>
    %122 = vector.shape_cast %121 : vector<1x1x8x8x128xbf16> to vector<8x8x128xbf16>
    %123 = vector.shape_cast %122 : vector<8x8x128xbf16> to vector<64x128xbf16>
    %c2560 = arith.constant 2560 : index
    %c0_143 = arith.constant 0 : index
    %124 = vector.load %arg5[%c2560, %c0_143] : memref<3456x128xbf16, #tpu.memory_space<vmem>>, vector<128x128xbf16>
    %cst_144 = arith.constant dense<0.000000e+00> : vector<64x128xf32>
    %125 = tpu.matmul %123, %124, %cst_144 {dimension_numbers = #tpu.dot_dimension_numbers<[1], [0], [0], [1], [0, 0, 1, 1], [], []>} : vector<64x128xbf16>, vector<128x128xbf16>, vector<64x128xf32> -> vector<64x128xf32>
    %126 = arith.addf %120, %125 : vector<64x128xf32>
    %c0_145 = arith.constant 0 : index
    %c0_146 = arith.constant 0 : index
    %c1_147 = arith.constant 1 : index
    %c0_148 = arith.constant 0 : index
    %c0_149 = arith.constant 0 : index
    %127 = vector.load %arg4[%c0_145, %c0_146, %c1_147, %c0_148, %c0_149] : memref<1x1x10x10x128xbf16, #tpu.memory_space<vmem>>, vector<1x1x8x8x128xbf16>
    %128 = vector.shape_cast %127 : vector<1x1x8x8x128xbf16> to vector<8x8x128xbf16>
    %129 = vector.shape_cast %128 : vector<8x8x128xbf16> to vector<64x128xbf16>
    %c2688 = arith.constant 2688 : index
    %c0_150 = arith.constant 0 : index
    %130 = vector.load %arg5[%c2688, %c0_150] : memref<3456x128xbf16, #tpu.memory_space<vmem>>, vector<128x128xbf16>
    %cst_151 = arith.constant dense<0.000000e+00> : vector<64x128xf32>
    %131 = tpu.matmul %129, %130, %cst_151 {dimension_numbers = #tpu.dot_dimension_numbers<[1], [0], [0], [1], [0, 0, 1, 1], [], []>} : vector<64x128xbf16>, vector<128x128xbf16>, vector<64x128xf32> -> vector<64x128xf32>
    %132 = arith.addf %126, %131 : vector<64x128xf32>
    %c0_152 = arith.constant 0 : index
    %c0_153 = arith.constant 0 : index
    %c1_154 = arith.constant 1 : index
    %c1_155 = arith.constant 1 : index
    %c0_156 = arith.constant 0 : index
    %133 = vector.load %arg4[%c0_152, %c0_153, %c1_154, %c1_155, %c0_156] : memref<1x1x10x10x128xbf16, #tpu.memory_space<vmem>>, vector<1x1x8x8x128xbf16>
    %134 = vector.shape_cast %133 : vector<1x1x8x8x128xbf16> to vector<8x8x128xbf16>
    %135 = vector.shape_cast %134 : vector<8x8x128xbf16> to vector<64x128xbf16>
    %c2816 = arith.constant 2816 : index
    %c0_157 = arith.constant 0 : index
    %136 = vector.load %arg5[%c2816, %c0_157] : memref<3456x128xbf16, #tpu.memory_space<vmem>>, vector<128x128xbf16>
    %cst_158 = arith.constant dense<0.000000e+00> : vector<64x128xf32>
    %137 = tpu.matmul %135, %136, %cst_158 {dimension_numbers = #tpu.dot_dimension_numbers<[1], [0], [0], [1], [0, 0, 1, 1], [], []>} : vector<64x128xbf16>, vector<128x128xbf16>, vector<64x128xf32> -> vector<64x128xf32>
    %138 = arith.addf %132, %137 : vector<64x128xf32>
    %c0_159 = arith.constant 0 : index
    %c0_160 = arith.constant 0 : index
    %c1_161 = arith.constant 1 : index
    %c2_162 = arith.constant 2 : index
    %c0_163 = arith.constant 0 : index
    %139 = vector.load %arg4[%c0_159, %c0_160, %c1_161, %c2_162, %c0_163] : memref<1x1x10x10x128xbf16, #tpu.memory_space<vmem>>, vector<1x1x8x8x128xbf16>
    %140 = vector.shape_cast %139 : vector<1x1x8x8x128xbf16> to vector<8x8x128xbf16>
    %141 = vector.shape_cast %140 : vector<8x8x128xbf16> to vector<64x128xbf16>
    %c2944 = arith.constant 2944 : index
    %c0_164 = arith.constant 0 : index
    %142 = vector.load %arg5[%c2944, %c0_164] : memref<3456x128xbf16, #tpu.memory_space<vmem>>, vector<128x128xbf16>
    %cst_165 = arith.constant dense<0.000000e+00> : vector<64x128xf32>
    %143 = tpu.matmul %141, %142, %cst_165 {dimension_numbers = #tpu.dot_dimension_numbers<[1], [0], [0], [1], [0, 0, 1, 1], [], []>} : vector<64x128xbf16>, vector<128x128xbf16>, vector<64x128xf32> -> vector<64x128xf32>
    %144 = arith.addf %138, %143 : vector<64x128xf32>
    %c0_166 = arith.constant 0 : index
    %c0_167 = arith.constant 0 : index
    %c2_168 = arith.constant 2 : index
    %c0_169 = arith.constant 0 : index
    %c0_170 = arith.constant 0 : index
    %145 = vector.load %arg4[%c0_166, %c0_167, %c2_168, %c0_169, %c0_170] : memref<1x1x10x10x128xbf16, #tpu.memory_space<vmem>>, vector<1x1x8x8x128xbf16>
    %146 = vector.shape_cast %145 : vector<1x1x8x8x128xbf16> to vector<8x8x128xbf16>
    %147 = vector.shape_cast %146 : vector<8x8x128xbf16> to vector<64x128xbf16>
    %c3072 = arith.constant 3072 : index
    %c0_171 = arith.constant 0 : index
    %148 = vector.load %arg5[%c3072, %c0_171] : memref<3456x128xbf16, #tpu.memory_space<vmem>>, vector<128x128xbf16>
    %cst_172 = arith.constant dense<0.000000e+00> : vector<64x128xf32>
    %149 = tpu.matmul %147, %148, %cst_172 {dimension_numbers = #tpu.dot_dimension_numbers<[1], [0], [0], [1], [0, 0, 1, 1], [], []>} : vector<64x128xbf16>, vector<128x128xbf16>, vector<64x128xf32> -> vector<64x128xf32>
    %150 = arith.addf %144, %149 : vector<64x128xf32>
    %c0_173 = arith.constant 0 : index
    %c0_174 = arith.constant 0 : index
    %c2_175 = arith.constant 2 : index
    %c1_176 = arith.constant 1 : index
    %c0_177 = arith.constant 0 : index
    %151 = vector.load %arg4[%c0_173, %c0_174, %c2_175, %c1_176, %c0_177] : memref<1x1x10x10x128xbf16, #tpu.memory_space<vmem>>, vector<1x1x8x8x128xbf16>
    %152 = vector.shape_cast %151 : vector<1x1x8x8x128xbf16> to vector<8x8x128xbf16>
    %153 = vector.shape_cast %152 : vector<8x8x128xbf16> to vector<64x128xbf16>
    %c3200 = arith.constant 3200 : index
    %c0_178 = arith.constant 0 : index
    %154 = vector.load %arg5[%c3200, %c0_178] : memref<3456x128xbf16, #tpu.memory_space<vmem>>, vector<128x128xbf16>
    %cst_179 = arith.constant dense<0.000000e+00> : vector<64x128xf32>
    %155 = tpu.matmul %153, %154, %cst_179 {dimension_numbers = #tpu.dot_dimension_numbers<[1], [0], [0], [1], [0, 0, 1, 1], [], []>} : vector<64x128xbf16>, vector<128x128xbf16>, vector<64x128xf32> -> vector<64x128xf32>
    %156 = arith.addf %150, %155 : vector<64x128xf32>
    %c0_180 = arith.constant 0 : index
    %c0_181 = arith.constant 0 : index
    %c2_182 = arith.constant 2 : index
    %c2_183 = arith.constant 2 : index
    %c0_184 = arith.constant 0 : index
    %157 = vector.load %arg4[%c0_180, %c0_181, %c2_182, %c2_183, %c0_184] : memref<1x1x10x10x128xbf16, #tpu.memory_space<vmem>>, vector<1x1x8x8x128xbf16>
    %158 = vector.shape_cast %157 : vector<1x1x8x8x128xbf16> to vector<8x8x128xbf16>
    %159 = vector.shape_cast %158 : vector<8x8x128xbf16> to vector<64x128xbf16>
    %c3328 = arith.constant 3328 : index
    %c0_185 = arith.constant 0 : index
    %160 = vector.load %arg5[%c3328, %c0_185] : memref<3456x128xbf16, #tpu.memory_space<vmem>>, vector<128x128xbf16>
    %cst_186 = arith.constant dense<0.000000e+00> : vector<64x128xf32>
    %161 = tpu.matmul %159, %160, %cst_186 {dimension_numbers = #tpu.dot_dimension_numbers<[1], [0], [0], [1], [0, 0, 1, 1], [], []>} : vector<64x128xbf16>, vector<128x128xbf16>, vector<64x128xf32> -> vector<64x128xf32>
    %162 = arith.addf %156, %161 : vector<64x128xf32>
    %c0_187 = arith.constant 0 : index
    %c0_188 = arith.constant 0 : index
    %163 = vector.load %arg6[%c0_187, %c0_188] : memref<1x128xf32, #tpu.memory_space<vmem>>, vector<1x128xf32>
    %164 = vector.broadcast %163 : vector<1x128xf32> to vector<64x128xf32>
    %165 = arith.addf %162, %164 : vector<64x128xf32>
    %cst_189 = arith.constant 0.000000e+00 : f32
    %166 = vector.broadcast %cst_189 : f32 to vector<64x128xf32>
    %167 = arith.maximumf %165, %166 : vector<64x128xf32>
    %168 = arith.truncf %167 : vector<64x128xf32> to vector<64x128xbf16>
    %c0_190 = arith.constant 0 : index
    %c0_191 = arith.constant 0 : index
    %169 = vector.load %arg7[%c0_190, %c0_191] : memref<128x128xbf16, #tpu.memory_space<vmem>>, vector<128x128xbf16>
    %cst_192 = arith.constant dense<0.000000e+00> : vector<64x128xf32>
    %170 = tpu.matmul %168, %169, %cst_192 {dimension_numbers = #tpu.dot_dimension_numbers<[1], [0], [0], [1], [0, 0, 1, 1], [], []>} : vector<64x128xbf16>, vector<128x128xbf16>, vector<64x128xf32> -> vector<64x128xf32>
    %c0_193 = arith.constant 0 : index
    %c0_194 = arith.constant 0 : index
    %171 = vector.load %arg8[%c0_193, %c0_194] : memref<1x128xf32, #tpu.memory_space<vmem>>, vector<1x128xf32>
    %172 = vector.broadcast %171 : vector<1x128xf32> to vector<64x128xf32>
    %173 = arith.addf %170, %172 : vector<64x128xf32>
    %c0_195 = arith.constant 0 : index
    %c0_196 = arith.constant 0 : index
    %174 = vector.load %arg9[%c0_195, %c0_196] : memref<64x128xf32, #tpu.memory_space<vmem>>, vector<64x128xf32>
    %175 = arith.addf %173, %174 : vector<64x128xf32>
    %cst_197 = arith.constant 0.000000e+00 : f32
    %176 = vector.broadcast %cst_197 : f32 to vector<64x128xf32>
    %177 = arith.maximumf %175, %176 : vector<64x128xf32>
    %c0_198 = arith.constant 0 : index
    %c0_199 = arith.constant 0 : index
    %178 = vector.load %arg10[%c0_198, %c0_199] : memref<64x128xf32, #tpu.memory_space<vmem>>, vector<64x128xf32>
    tpu.vector_store %arg10[%c0_198, %c0_199], %177 {strides = array<i32>} : memref<64x128xf32, #tpu.memory_space<vmem>>, vector<64x128xf32>,
    return
  }
  func.func @transform_0(%arg0: i32, %arg1: i32) -> (i32, i32, i32, i32, i32) {
    %c0_i32 = arith.constant 0 : i32
    %c0_i32_0 = arith.constant 0 : i32
    %c0_i32_1 = arith.constant 0 : i32
    %c0_i32_2 = arith.constant 0 : i32
    return %arg0, %arg1, %c0_i32, %c0_i32_0, %c0_i32_1 : i32, i32, i32, i32, i32
  }
  func.func @transform_1(%arg0: i32, %arg1: i32) -> (i32, i32, i32, i32, i32) {
    %c1_i32 = arith.constant 1 : i32
    %0 = arith.addi %arg1, %c1_i32 : i32
    %c0_i32 = arith.constant 0 : i32
    %c0_i32_0 = arith.constant 0 : i32
    %c0_i32_1 = arith.constant 0 : i32
    %c0_i32_2 = arith.constant 0 : i32
    return %arg0, %0, %c0_i32, %c0_i32_0, %c0_i32_1 : i32, i32, i32, i32, i32
  }
  func.func @transform_2(%arg0: i32, %arg1: i32) -> (i32, i32, i32, i32, i32) {
    %c2_i32 = arith.constant 2 : i32
    %0 = arith.addi %arg1, %c2_i32 : i32
    %c0_i32 = arith.constant 0 : i32
    %c0_i32_0 = arith.constant 0 : i32
    %c0_i32_1 = arith.constant 0 : i32
    %c0_i32_2 = arith.constant 0 : i32
    return %arg0, %0, %c0_i32, %c0_i32_0, %c0_i32_1 : i32, i32, i32, i32, i32
  }
  func.func @transform_3(%arg0: i32, %arg1: i32) -> (i32, i32) {
    %c0_i32 = arith.constant 0 : i32
    %c0_i32_0 = arith.constant 0 : i32
    %c0_i32_1 = arith.constant 0 : i32
    return %c0_i32, %c0_i32_0 : i32, i32
  }
  func.func @transform_4(%arg0: i32, %arg1: i32) -> (i32, i32) {
    %c0_i32 = arith.constant 0 : i32
    %c0_i32_0 = arith.constant 0 : i32
    %c0_i32_1 = arith.constant 0 : i32
    return %c0_i32, %c0_i32_0 : i32, i32
  }
  func.func @transform_5(%arg0: i32, %arg1: i32) -> (i32, i32) {
    %c0_i32 = arith.constant 0 : i32
    %c0_i32_0 = arith.constant 0 : i32
    %c0_i32_1 = arith.constant 0 : i32
    return %c0_i32, %c0_i32_0 : i32, i32
  }
  func.func @transform_6(%arg0: i32, %arg1: i32) -> (i32, i32) {
    %c0_i32 = arith.constant 0 : i32
    %c0_i32_0 = arith.constant 0 : i32
    %c0_i32_1 = arith.constant 0 : i32
    return %c0_i32, %c0_i32_0 : i32, i32
  }
  func.func @transform_7(%arg0: i32, %arg1: i32) -> (i32, i32) {
    %c8_i32 = arith.constant 8 : i32
    %0 = arith.muli %arg0, %c8_i32 : i32
    %1 = arith.addi %0, %arg1 : i32
    %c0_i32 = arith.constant 0 : i32
    %c0_i32_0 = arith.constant 0 : i32
    return %1, %c0_i32 : i32, i32
  }
  func.func @transform_8(%arg0: i32, %arg1: i32) -> (i32, i32) {
    %c8_i32 = arith.constant 8 : i32
    %0 = arith.muli %arg0, %c8_i32 : i32
    %1 = arith.addi %0, %arg1 : i32
    %c0_i32 = arith.constant 0 : i32
    %c0_i32_0 = arith.constant 0 : i32
    return %1, %c0_i32 : i32, i32
  }
}

</mosaic_0001>

<llo_original>
// kernel: bottleneck_forward.2
$region0: #{bottleneck_forward.2}
  #allocation0 [shape = 'u32[]', space=smem, size = 0x4, offset = 0x4, fixed_abs, tag = 'smem constant byte address 0x4 - core index']
  #allocation1 [shape = 'u32[144,128]{1,0:T(1,128)}', space=vmem, size = 0x12000, scoped, tag = 'internal scratch']
  %s0 = inlined_call_operand.vmem [shape: bf16[1024,128], index: 0, kind: input, shape index: {}]
  %s1 = inlined_call_operand.vmem [shape: bf16[128,128], index: 1, kind: input, shape index: {}]
  %s2 = inlined_call_operand.vmem [shape: f32[1,128], index: 2, kind: input, shape index: {}]
  %s3 = inlined_call_operand.vmem [shape: bf16[1024,128], index: 3, kind: output, shape index: {}]
  %s4 = sld [smem:[#allocation0]]
  $region45: #{bottleneck_forward.2} parent=0
    _
  %s6 = ssub.s32 1, %s4
  %s7 = scalar_select 0, %s6, %s4
  loop: start=0, step=1, limit=4
  $region2: #{bottleneck_forward.2} parent=0 // loop_pre_header
    _
  $region3: #{bottleneck_forward.2} parent=0 // loop_header
    %s9 = sphi 0, %s13
    %p10 = scmp.ge.s32.totalorder %s9, 4
    %s19 = sphi 0, %s21
    %s22 = sphi 0, %s19
    %s23 = sphi 0, %s22
    %s39 = sphi 0, %s23
    %s43 = sphi 0, %s43
    %s45 = sphi 0, %s43
    %s46 = sphi 0, %s45
    %s60 = sphi 0, %s46
    %s64 = sphi 0, %s64
    %s66 = sphi 0, %s64
    %s67 = sphi 0, %s66
    %s81 = sphi 0, %s67
    %s87 = sphi 0, %s89
    %s90 = sphi 0, %s87
    %s91 = sphi 0, %s90
    %s107 = sphi 0, %s91
  $region4: #{bottleneck_forward.2} parent=0 // loop_header_branch
    %12 = sbr.rel (%p10) target = $region8
  $region5: #{bottleneck_forward.2} parent=0 // loop_body
    %s14 = ssub.s32 %s9, 1
    %s15 = ssub.s32 %s9, 2
    %s16 = sadd.s32 %s9, 1
    %s17 = ssub.s32 %s9, %s16
    %p18 = scmp.eq.s32.totalorder %s17, 0
    %s20 = sadd.s32 %s19, 1
    %s21 = scalar_select %p18, %s19, %s20
    %p24 = pneg %p18
    %p25 = scmp.eq.s32.totalorder %s9, 1
    %p26 = por %p24, %p25
    %p27 = scmp.ne.s32.totalorder %s19, %s22
    %p28 = scmp.eq.s32.totalorder %s9, 0
    %p29 = por %p27, %p28
    %p30 = scmp.ne.s32.totalorder %s19, %s22
    %p31 = scmp.eq.s32.totalorder %s14, 1
    %p32 = por %p30, %p31
    %p33 = scmp.ne.s32.totalorder %s22, %s23
    %p34 = scmp.eq.s32.totalorder %s14, 0
    %p35 = por %p33, %p34
    %p36 = scmp.ne.s32.totalorder %s22, %s23
    %p37 = scmp.eq.s32.totalorder %s15, 1
    %p38 = por %p36, %p37
    %p40 = scmp.ne.s32.totalorder %s23, %s39
    %p41 = scmp.eq.s32.totalorder %s15, 0
    %p42 = por %p40, %p41
    %s44 = sadd.s32 %s43, 1
    %p47 = scmp.eq.s32.totalorder %s9, 1
    %p48 = scmp.ne.s32.totalorder %s43, %s45
    %p49 = scmp.eq.s32.totalorder %s9, 0
    %p50 = por %p48, %p49
    %p51 = scmp.ne.s32.totalorder %s43, %s45
    %p52 = scmp.eq.s32.totalorder %s14, 1
    %p53 = por %p51, %p52
    %p54 = scmp.ne.s32.totalorder %s45, %s46
    %p55 = scmp.eq.s32.totalorder %s14, 0
    %p56 = por %p54, %p55
    %p57 = scmp.ne.s32.totalorder %s45, %s46
    %p58 = scmp.eq.s32.totalorder %s15, 1
    %p59 = por %p57, %p58
    %p61 = scmp.ne.s32.totalorder %s46, %s60
    %p62 = scmp.eq.s32.totalorder %s15, 0
    %p63 = por %p61, %p62
    %s65 = sadd.s32 %s64, 1
    %p68 = scmp.eq.s32.totalorder %s9, 1
    %p69 = scmp.ne.s32.totalorder %s64, %s66
    %p70 = scmp.eq.s32.totalorder %s9, 0
    %p71 = por %p69, %p70
    %p72 = scmp.ne.s32.totalorder %s64, %s66
    %p73 = scmp.eq.s32.totalorder %s14, 1
    %p74 = por %p72, %p73
    %p75 = scmp.ne.s32.totalorder %s66, %s67
    %p76 = scmp.eq.s32.totalorder %s14, 0
    %p77 = por %p75, %p76
    %p78 = scmp.ne.s32.totalorder %s66, %s67
    %p79 = scmp.eq.s32.totalorder %s15, 1
    %p80 = por %p78, %p79
    %p82 = scmp.ne.s32.totalorder %s67, %s81
    %p83 = scmp.eq.s32.totalorder %s15, 0
    %p84 = por %p82, %p83
    %s85 = ssub.s32 %s9, %s16
    %p86 = scmp.eq.s32.totalorder %s85, 0
    %s88 = sadd.s32 %s87, 1
    %s89 = scalar_select %p86, %s87, %s88
    %p92 = pneg %p86
    %p93 = scmp.eq.s32.totalorder %s9, 1
    %p94 = por %p92, %p93
    %p95 = scmp.ne.s32.totalorder %s87, %s90
    %p96 = scmp.eq.s32.totalorder %s9, 0
    %p97 = por %p95, %p96
    %p98 = scmp.ne.s32.totalorder %s87, %s90
    %p99 = scmp.eq.s32.totalorder %s14, 1
    %p100 = por %p98, %p99
    %p101 = scmp.ne.s32.totalorder %s90, %s91
    %p102 = scmp.eq.s32.totalorder %s14, 0
    %p103 = por %p101, %p102
    %p104 = scmp.ne.s32.totalorder %s90, %s91
    %p105 = scmp.eq.s32.totalorder %s15, 1
    %p106 = por %p104, %p105
    %p108 = scmp.ne.s32.totalorder %s91, %s107
    %p109 = scmp.eq.s32.totalorder %s15, 0
    %p110 = por %p108, %p109
    %p111 = scmp.le.s32.totalorder 1, %s9
    %p112 = scmp.lt.s32.totalorder %s9, 3
    %p113 = pnand %p111, %p112
    %p114 = pneg %p113
    // Predicated region
    $region9: #{bottleneck_forward.2} parent=5 // pred_check
      _
    $region10: #{bottleneck_forward.2} parent=5 // pred_check_branch
      %116 = sbr.rel (%p113) target = $region12
    $region11: #{bottleneck_forward.2} parent=5 // pred_region
      %s117 = ssub.s32 %s9, 1
      // Predicated region
      $region13: #{bottleneck_forward.2} parent=11 // pred_check
        %p118 = pneg %p56
      $region14: #{bottleneck_forward.2} parent=11 // pred_check_branch
        %120 = sbr.rel (%p118) target = $region16
      $region15: #{bottleneck_forward.2} parent=11 // pred_region
        _
      $region16: #{bottleneck_forward.2} parent=11 // pred_fallthru
        _
      // Predicated region
      $region17: #{bottleneck_forward.2} parent=11 // pred_check
        %p121 = pneg %p77
      $region18: #{bottleneck_forward.2} parent=11 // pred_check_branch
        %123 = sbr.rel (%p121) target = $region20
      $region19: #{bottleneck_forward.2} parent=11 // pred_region
        _
      $region20: #{bottleneck_forward.2} parent=11 // pred_fallthru
        _
    $region12: #{bottleneck_forward.2} parent=5 // pred_fallthru
      _
    %p124 = scmp.lt.s32.totalorder %s9, 2
    // Predicated region
    $region21: #{bottleneck_forward.2} parent=5 // pred_check
      %p125 = pneg %p124
    $region22: #{bottleneck_forward.2} parent=5 // pred_check_branch
      %127 = sbr.rel (%p125) target = $region24
    $region23: #{bottleneck_forward.2} parent=5 // pred_region
      // Predicated region
      $region25: #{bottleneck_forward.2} parent=23 // pred_check
        %p128 = pneg %p29
      $region26: #{bottleneck_forward.2} parent=23 // pred_check_branch
        %130 = sbr.rel (%p128) target = $region28
      $region27: #{bottleneck_forward.2} parent=23 // pred_region
        %s131 = smul.u32 64, %s9
        %p132 = scmp.lt.s32.totalorder %s131, 127
        %s133 = scalar_select %p132, %s131, 127
        %s134 = smul.addr %s133, 4
        %s135 = scalar_lea.vmem %s0, %s134
        %s136 = smul.u32 64, %s9
      $region28: #{bottleneck_forward.2} parent=23 // pred_fallthru
        _
    $region24: #{bottleneck_forward.2} parent=5 // pred_fallthru
      _
    %p137 = scmp.le.s32.totalorder 1, %s9
    %p138 = scmp.lt.s32.totalorder %s9, 3
    %p139 = pnand %p137, %p138
    %p140 = pneg %p139
    // Predicated region
    $region29: #{bottleneck_forward.2} parent=5 // pred_check
      _
    $region30: #{bottleneck_forward.2} parent=5 // pred_check_branch
      %142 = sbr.rel (%p139) target = $region32
    $region31: #{bottleneck_forward.2} parent=5 // pred_region
      %s143 = ssub.s32 %s9, 1
      %s144 = smul.u32 64, %s14
      %p145 = scmp.lt.s32.totalorder %s144, 127
      %s146 = scalar_select %p145, %s144, 127
      %s147 = smul.addr %s146, 4
      %s148 = scalar_lea.vmem %s0, %s147
      %p149 = pneg %p35
      %p150 = pneg %p32
      %p151 = pneg %p56
      %p152 = pneg %p53
      %p153 = pneg %p77
      %p154 = pneg %p74
      %p155 = pneg %p103
      %p156 = pneg %p100
      %s157 = smul.u32 64, %s14
      %p158 = scmp.lt.s32.totalorder %s157, 127
      %s159 = scalar_select %p158, %s157, 127
      %s160 = smul.addr %s159, 4
      %s161 = scalar_lea.vmem %s3, %s160
      %s162 = smul.u32 64, %s14
      %p163 = scmp.lt.s32.totalorder %s162, 127
      %s164 = scalar_select %p163, %s162, 127
      %s165 = smul.addr %s164, 4
      %s166 = scalar_lea.vmem %s0, %s165
      %s167 = smul.u32 64, %s14
      %s168 = smul.u32 64, %s14
      %p169 = scmp.lt.s32.totalorder %s168, 127
      %s170 = scalar_select %p169, %s168, 127
      %s171 = smul.addr %s170, 4
      %s172 = scalar_lea.vmem %s3, %s171
      %s173 = smul.u32 64, %s14
      %v175 = vld [vmem:[%s166] sm:$0xf]
      %v176 = vld [vmem:[%s166 + $0x4] sm:$0xf]
      %v177 = vld [vmem:[%s166 + $0x8] sm:$0xf]
      %v178 = vld [vmem:[%s166 + $0xc] sm:$0xf]
      %v179 = vld [vmem:[%s166 + $0x10] sm:$0xf]
      %v180 = vld [vmem:[%s166 + $0x14] sm:$0xf]
      %v181 = vld [vmem:[%s166 + $0x18] sm:$0xf]
      %v182 = vld [vmem:[%s166 + $0x1c] sm:$0xf]
      %v183 = vld [vmem:[%s166 + $0x20] sm:$0xf]
      %v184 = vld [vmem:[%s166 + $0x24] sm:$0xf]
      %v185 = vld [vmem:[%s166 + $0x28] sm:$0xf]
      %v186 = vld [vmem:[%s166 + $0x2c] sm:$0xf]
      %v187 = vld [vmem:[%s166 + $0x30] sm:$0xf]
      %v188 = vld [vmem:[%s166 + $0x34] sm:$0xf]
      %v189 = vld [vmem:[%s166 + $0x38] sm:$0xf]
      %v190 = vld [vmem:[%s166 + $0x3c] sm:$0xf]
      %v191 = vld [vmem:[%s166 + $0x40] sm:$0xf]
      %v192 = vld [vmem:[%s166 + $0x44] sm:$0xf]
      %v193 = vld [vmem:[%s166 + $0x48] sm:$0xf]
      %v194 = vld [vmem:[%s166 + $0x4c] sm:$0xf]
      %v195 = vld [vmem:[%s166 + $0x50] sm:$0xf]
      %v196 = vld [vmem:[%s166 + $0x54] sm:$0xf]
      %v197 = vld [vmem:[%s166 + $0x58] sm:$0xf]
      %v198 = vld [vmem:[%s166 + $0x5c] sm:$0xf]
      %v199 = vld [vmem:[%s166 + $0x60] sm:$0xf]
      %v200 = vld [vmem:[%s166 + $0x64] sm:$0xf]
      %v201 = vld [vmem:[%s166 + $0x68] sm:$0xf]
      %v202 = vld [vmem:[%s166 + $0x6c] sm:$0xf]
      %v203 = vld [vmem:[%s166 + $0x70] sm:$0xf]
      %v204 = vld [vmem:[%s166 + $0x74] sm:$0xf]
      %v205 = vld [vmem:[%s166 + $0x78] sm:$0xf]
      %v206 = vld [vmem:[%s166 + $0x7c] sm:$0xf]
      %v207 = vld [vmem:[%s166 + $0x80] sm:$0xf]
      %v208 = vld [vmem:[%s166 + $0x84] sm:$0xf]
      %v209 = vld [vmem:[%s166 + $0x88] sm:$0xf]
      %v210 = vld [vmem:[%s166 + $0x8c] sm:$0xf]
      %v211 = vld [vmem:[%s166 + $0x90] sm:$0xf]
      %v212 = vld [vmem:[%s166 + $0x94] sm:$0xf]
      %v213 = vld [vmem:[%s166 + $0x98] sm:$0xf]
      %v214 = vld [vmem:[%s166 + $0x9c] sm:$0xf]
      %v215 = vld [vmem:[%s166 + $0xa0] sm:$0xf]
      %v216 = vld [vmem:[%s166 + $0xa4] sm:$0xf]
      %v217 = vld [vmem:[%s166 + $0xa8] sm:$0xf]
      %v218 = vld [vmem:[%s166 + $0xac] sm:$0xf]
      %v219 = vld [vmem:[%s166 + $0xb0] sm:$0xf]
      %v220 = vld [vmem:[%s166 + $0xb4] sm:$0xf]
      %v221 = vld [vmem:[%s166 + $0xb8] sm:$0xf]
      %v222 = vld [vmem:[%s166 + $0xbc] sm:$0xf]
      %v223 = vld [vmem:[%s166 + $0xc0] sm:$0xf]
      %v224 = vld [vmem:[%s166 + $0xc4] sm:$0xf]
      %v225 = vld [vmem:[%s166 + $0xc8] sm:$0xf]
      %v226 = vld [vmem:[%s166 + $0xcc] sm:$0xf]
      %v227 = vld [vmem:[%s166 + $0xd0] sm:$0xf]
      %v228 = vld [vmem:[%s166 + $0xd4] sm:$0xf]
      %v229 = vld [vmem:[%s166 + $0xd8] sm:$0xf]
      %v230 = vld [vmem:[%s166 + $0xdc] sm:$0xf]
      %v231 = vld [vmem:[%s166 + $0xe0] sm:$0xf]
      %v232 = vld [vmem:[%s166 + $0xe4] sm:$0xf]
      %v233 = vld [vmem:[%s166 + $0xe8] sm:$0xf]
      %v234 = vld [vmem:[%s166 + $0xec] sm:$0xf]
      %v235 = vld [vmem:[%s166 + $0xf0] sm:$0xf]
      %v236 = vld [vmem:[%s166 + $0xf4] sm:$0xf]
      %v237 = vld [vmem:[%s166 + $0xf8] sm:$0xf]
      %v238 = vld [vmem:[%s166 + $0xfc] sm:$0xf]
      %v239 = vld [vmem:[%s1] sm:$0xf]
      %v240 = vld [vmem:[%s1 + $0x4] sm:$0xf]
      %v241 = vld [vmem:[%s1 + $0x8] sm:$0xf]
      %v242 = vld [vmem:[%s1 + $0xc] sm:$0xf]
      %v243 = vld [vmem:[%s1 + $0x10] sm:$0xf]
      %v244 = vld [vmem:[%s1 + $0x14] sm:$0xf]
      %v245 = vld [vmem:[%s1 + $0x18] sm:$0xf]
      %v246 = vld [vmem:[%s1 + $0x1c] sm:$0xf]
      %v247 = vld [vmem:[%s1 + $0x20] sm:$0xf]
      %v248 = vld [vmem:[%s1 + $0x24] sm:$0xf]
      %v249 = vld [vmem:[%s1 + $0x28] sm:$0xf]
      %v250 = vld [vmem:[%s1 + $0x2c] sm:$0xf]
      %v251 = vld [vmem:[%s1 + $0x30] sm:$0xf]
      %v252 = vld [vmem:[%s1 + $0x34] sm:$0xf]
      %v253 = vld [vmem:[%s1 + $0x38] sm:$0xf]
      %v254 = vld [vmem:[%s1 + $0x3c] sm:$0xf]
      %v255 = vld [vmem:[%s2] sm:$0x1]
      %v257 = vlaneseq
      %v258 = vshrl.u32 %v257, 7
      %v259 = vsub.s32 0, %v258
      %v260 = vrot.slane %v255, %v259
      %v326 = vunpack.c.l.b16 %v175
      %v327 = vunpack.c.l.b16 %v176
      %v328 = vunpack.c.l.b16 %v177
      %v329 = vunpack.c.l.b16 %v178
      %v330 = vunpack.c.l.b16 %v179
      %v331 = vunpack.c.l.b16 %v180
      %v332 = vunpack.c.l.b16 %v181
      %v333 = vunpack.c.l.b16 %v182
      %v334 = vunpack.c.l.b16 %v183
      %v335 = vunpack.c.l.b16 %v184
      %v336 = vunpack.c.l.b16 %v185
      %v337 = vunpack.c.l.b16 %v186
      %v338 = vunpack.c.l.b16 %v187
      %v339 = vunpack.c.l.b16 %v188
      %v340 = vunpack.c.l.b16 %v189
      %v341 = vunpack.c.l.b16 %v190
      %v342 = vunpack.c.l.b16 %v191
      %v343 = vunpack.c.l.b16 %v192
      %v344 = vunpack.c.l.b16 %v193
      %v345 = vunpack.c.l.b16 %v194
      %v346 = vunpack.c.l.b16 %v195
      %v347 = vunpack.c.l.b16 %v196
      %v348 = vunpack.c.l.b16 %v197
      %v349 = vunpack.c.l.b16 %v198
      %v350 = vunpack.c.l.b16 %v199
      %v351 = vunpack.c.l.b16 %v200
      %v352 = vunpack.c.l.b16 %v201
      %v353 = vunpack.c.l.b16 %v202
      %v354 = vunpack.c.l.b16 %v203
      %v355 = vunpack.c.l.b16 %v204
      %v356 = vunpack.c.l.b16 %v205
      %v357 = vunpack.c.l.b16 %v206
      %v358 = vunpack.c.l.b16 %v207
      %v359 = vunpack.c.l.b16 %v208
      %v360 = vunpack.c.l.b16 %v209
      %v361 = vunpack.c.l.b16 %v210
      %v362 = vunpack.c.l.b16 %v211
      %v363 = vunpack.c.l.b16 %v212
      %v364 = vunpack.c.l.b16 %v213
      %v365 = vunpack.c.l.b16 %v214
      %v366 = vunpack.c.l.b16 %v215
      %v367 = vunpack.c.l.b16 %v216
      %v368 = vunpack.c.l.b16 %v217
      %v369 = vunpack.c.l.b16 %v218
      %v370 = vunpack.c.l.b16 %v219
      %v371 = vunpack.c.l.b16 %v220
      %v372 = vunpack.c.l.b16 %v221
      %v373 = vunpack.c.l.b16 %v222
      %v374 = vunpack.c.l.b16 %v223
      %v375 = vunpack.c.l.b16 %v224
      %v376 = vunpack.c.l.b16 %v225
      %v377 = vunpack.c.l.b16 %v226
      %v378 = vunpack.c.l.b16 %v227
      %v379 = vunpack.c.l.b16 %v228
      %v380 = vunpack.c.l.b16 %v229
      %v381 = vunpack.c.l.b16 %v230
      %v382 = vunpack.c.l.b16 %v231
      %v383 = vunpack.c.l.b16 %v232
      %v384 = vunpack.c.l.b16 %v233
      %v385 = vunpack.c.l.b16 %v234
      %v386 = vunpack.c.l.b16 %v235
      %v387 = vunpack.c.l.b16 %v236
      %v388 = vunpack.c.l.b16 %v237
      %v389 = vunpack.c.l.b16 %v238
      %v390 = vpack.c.b16 %v327, %v326
      %v391 = vpack.c.b16 %v329, %v328
      %v392 = vpack.c.b16 %v331, %v330
      %v393 = vpack.c.b16 %v333, %v332
      %v394 = vpack.c.b16 %v335, %v334
      %v395 = vpack.c.b16 %v337, %v336
      %v396 = vpack.c.b16 %v339, %v338
      %v397 = vpack.c.b16 %v341, %v340
      %v398 = vpack.c.b16 %v343, %v342
      %v399 = vpack.c.b16 %v345, %v344
      %v400 = vpack.c.b16 %v347, %v346
      %v401 = vpack.c.b16 %v349, %v348
      %v402 = vpack.c.b16 %v351, %v350
      %v403 = vpack.c.b16 %v353, %v352
      %v404 = vpack.c.b16 %v355, %v354
      %v405 = vpack.c.b16 %v357, %v356
      %v406 = vpack.c.b16 %v359, %v358
      %v407 = vpack.c.b16 %v361, %v360
      %v408 = vpack.c.b16 %v363, %v362
      %v409 = vpack.c.b16 %v365, %v364
      %v410 = vpack.c.b16 %v367, %v366
      %v411 = vpack.c.b16 %v369, %v368
      %v412 = vpack.c.b16 %v371, %v370
      %v413 = vpack.c.b16 %v373, %v372
      %v414 = vpack.c.b16 %v375, %v374
      %v415 = vpack.c.b16 %v377, %v376
      %v416 = vpack.c.b16 %v379, %v378
      %v417 = vpack.c.b16 %v381, %v380
      %v418 = vpack.c.b16 %v383, %v382
      %v419 = vpack.c.b16 %v385, %v384
      %v420 = vpack.c.b16 %v387, %v386
      %v421 = vpack.c.b16 %v389, %v388
      %v470 = vunpack.c.l.b16 %v239
      %v471 = vunpack.c.l.b16 %v240
      %v472 = vunpack.c.l.b16 %v241
      %v473 = vunpack.c.l.b16 %v242
      %v474 = vunpack.c.l.b16 %v243
      %v475 = vunpack.c.l.b16 %v244
      %v476 = vunpack.c.l.b16 %v245
      %v477 = vunpack.c.l.b16 %v246
      %v478 = vunpack.c.l.b16 %v247
      %v479 = vunpack.c.l.b16 %v248
      %v480 = vunpack.c.l.b16 %v249
      %v481 = vunpack.c.l.b16 %v250
      %v482 = vunpack.c.l.b16 %v251
      %v483 = vunpack.c.l.b16 %v252
      %v484 = vunpack.c.l.b16 %v253
      %v485 = vunpack.c.l.b16 %v254
      %v486 = vpack.c.b16 %v471, %v470
      %v487 = vpack.c.b16 %v473, %v472
      %v488 = vpack.c.b16 %v475, %v474
      %v489 = vpack.c.b16 %v477, %v476
      %v490 = vpack.c.b16 %v479, %v478
      %v491 = vpack.c.b16 %v481, %v480
      %v492 = vpack.c.b16 %v483, %v482
      %v493 = vpack.c.b16 %v485, %v484
      %502 = vmatprep.subr.bf16.mxu0 0
      %503 = vmatpush1.bf16.msra.mxu0 %v486
      %504 = vmatprep.subr.bf16.mxu0 0
      %505 = vmatpush1.bf16.msra.mxu0 %v487
      %506 = vmatprep.subr.bf16.mxu0 0
      %507 = vmatpush1.bf16.msra.mxu0 %v488
      %508 = vmatprep.subr.bf16.mxu0 0
      %509 = vmatpush1.bf16.msra.mxu0 %v489
      %510 = vmatprep.subr.bf16.mxu0 0
      %511 = vmatpush1.bf16.msra.mxu0 %v490
      %512 = vmatprep.subr.bf16.mxu0 0
      %513 = vmatpush1.bf16.msra.mxu0 %v491
      %514 = vmatprep.subr.bf16.mxu0 0
      %515 = vmatpush1.bf16.msra.mxu0 %v492
      %516 = vmatprep.subr.bf16.mxu0 0
      %517 = vmatpush1.bf16.msra.mxu0 %v493
      %518 = vmatprep.subr.bf16.mxu0 0
      %519 = vmatpush1.bf16.msra.mxu0 0
      %520 = vmatprep.subr.bf16.mxu0 0
      %521 = vmatpush1.bf16.msra.mxu0 0
      %522 = vmatprep.subr.bf16.mxu0 0
      %523 = vmatpush1.bf16.msra.mxu0 0
      %524 = vmatprep.subr.bf16.mxu0 0
      %525 = vmatpush1.bf16.msra.mxu0 0
      %526 = vmatprep.subr.bf16.mxu0 0
      %527 = vmatpush1.bf16.msra.mxu0 0
      %528 = vmatprep.subr.bf16.mxu0 0
      %529 = vmatpush1.bf16.msra.mxu0 0
      %530 = vmatprep.subr.bf16.mxu0 0
      %531 = vmatpush1.bf16.msra.mxu0 0
      %532 = vmatprep.subr.bf16.mxu0 0
      %533 = vmatpush1.bf16.msra.mxu0 0
      %534 = vmatprep.mubr.bf16.mxu0 0
      %535 = vmatmul.mubr.bf16.gmra.mrb[0].mxu0 %v390
      %v536 = vpop.f32.mrb[0].mxu0
      %v537 = vadd.f32 %v260, %v536
      %v538 = vpop.f32.mrb[0].mxu0
      %v539 = vpop.f32.mrb[0].mxu0
      %v540 = vadd.f32 %v260, %v539
      %v541 = vpop.f32.mrb[0].mxu0
      %542 = vmatprep.mubr.bf16.mxu0 0
      %543 = vmatmul.mubr.bf16.gmra.mrb[0].mxu0 %v391
      %v544 = vpop.f32.mrb[0].mxu0
      %v545 = vadd.f32 %v260, %v544
      %v546 = vpop.f32.mrb[0].mxu0
      %v547 = vpop.f32.mrb[0].mxu0
      %v548 = vadd.f32 %v260, %v547
      %v549 = vpop.f32.mrb[0].mxu0
      %550 = vmatprep.mubr.bf16.mxu0 0
      %551 = vmatmul.mubr.bf16.gmra.mrb[0].mxu0 %v392
      %v552 = vpop.f32.mrb[0].mxu0
      %v553 = vadd.f32 %v260, %v552
      %v554 = vpop.f32.mrb[0].mxu0
      %v555 = vpop.f32.mrb[0].mxu0
      %v556 = vadd.f32 %v260, %v555
      %v557 = vpop.f32.mrb[0].mxu0
      %558 = vmatprep.mubr.bf16.mxu0 0
      %559 = vmatmul.mubr.bf16.gmra.mrb[0].mxu0 %v393
      %v560 = vpop.f32.mrb[0].mxu0
      %v561 = vadd.f32 %v260, %v560
      %v562 = vpop.f32.mrb[0].mxu0
      %v563 = vpop.f32.mrb[0].mxu0
      %v564 = vadd.f32 %v260, %v563
      %v565 = vpop.f32.mrb[0].mxu0
      %566 = vmatprep.mubr.bf16.mxu0 0
      %567 = vmatmul.mubr.bf16.gmra.mrb[0].mxu0 %v394
      %v568 = vpop.f32.mrb[0].mxu0
      %v569 = vadd.f32 %v260, %v568
      %v570 = vpop.f32.mrb[0].mxu0
      %v571 = vpop.f32.mrb[0].mxu0
      %v572 = vadd.f32 %v260, %v571
      %v573 = vpop.f32.mrb[0].mxu0
      %574 = vmatprep.mubr.bf16.mxu0 0
      %575 = vmatmul.mubr.bf16.gmra.mrb[0].mxu0 %v395
      %v576 = vpop.f32.mrb[0].mxu0
      %v577 = vadd.f32 %v260, %v576
      %v578 = vpop.f32.mrb[0].mxu0
      %v579 = vpop.f32.mrb[0].mxu0
      %v580 = vadd.f32 %v260, %v579
      %v581 = vpop.f32.mrb[0].mxu0
      %582 = vmatprep.mubr.bf16.mxu0 0
      %583 = vmatmul.mubr.bf16.gmra.mrb[0].mxu0 %v396
      %v584 = vpop.f32.mrb[0].mxu0
      %v585 = vadd.f32 %v260, %v584
      %v586 = vpop.f32.mrb[0].mxu0
      %v587 = vpop.f32.mrb[0].mxu0
      %v588 = vadd.f32 %v260, %v587
      %v589 = vpop.f32.mrb[0].mxu0
      %590 = vmatprep.mubr.bf16.mxu0 0
      %591 = vmatmul.mubr.bf16.gmra.mrb[0].mxu0 %v397
      %v592 = vpop.f32.mrb[0].mxu0
      %v593 = vadd.f32 %v260, %v592
      %v594 = vpop.f32.mrb[0].mxu0
      %v595 = vpop.f32.mrb[0].mxu0
      %v596 = vadd.f32 %v260, %v595
      %v597 = vpop.f32.mrb[0].mxu0
      %598 = vmatprep.mubr.bf16.mxu0 0
      %599 = vmatmul.mubr.bf16.gmra.mrb[0].mxu0 %v398
      %v600 = vpop.f32.mrb[0].mxu0
      %v601 = vadd.f32 %v260, %v600
      %v602 = vpop.f32.mrb[0].mxu0
      %v603 = vpop.f32.mrb[0].mxu0
      %v604 = vadd.f32 %v260, %v603
      %v605 = vpop.f32.mrb[0].mxu0
      %606 = vmatprep.mubr.bf16.mxu0 0
      %607 = vmatmul.mubr.bf16.gmra.mrb[0].mxu0 %v399
      %v608 = vpop.f32.mrb[0].mxu0
      %v609 = vadd.f32 %v260, %v608
      %v610 = vpop.f32.mrb[0].mxu0
      %v611 = vpop.f32.mrb[0].mxu0
      %v612 = vadd.f32 %v260, %v611
      %v613 = vpop.f32.mrb[0].mxu0
      %614 = vmatprep.mubr.bf16.mxu0 0
      %615 = vmatmul.mubr.bf16.gmra.mrb[0].mxu0 %v400
      %v616 = vpop.f32.mrb[0].mxu0
      %v617 = vadd.f32 %v260, %v616
      %v618 = vpop.f32.mrb[0].mxu0
      %v619 = vpop.f32.mrb[0].mxu0
      %v620 = vadd.f32 %v260, %v619
      %v621 = vpop.f32.mrb[0].mxu0
      %622 = vmatprep.mubr.bf16.mxu0 0
      %623 = vmatmul.mubr.bf16.gmra.mrb[0].mxu0 %v401
      %v624 = vpop.f32.mrb[0].mxu0
      %v625 = vadd.f32 %v260, %v624
      %v626 = vpop.f32.mrb[0].mxu0
      %v627 = vpop.f32.mrb[0].mxu0
      %v628 = vadd.f32 %v260, %v627
      %v629 = vpop.f32.mrb[0].mxu0
      %630 = vmatprep.mubr.bf16.mxu0 0
      %631 = vmatmul.mubr.bf16.gmra.mrb[0].mxu0 %v402
      %v632 = vpop.f32.mrb[0].mxu0
      %v633 = vadd.f32 %v260, %v632
      %v634 = vpop.f32.mrb[0].mxu0
      %v635 = vpop.f32.mrb[0].mxu0
      %v636 = vadd.f32 %v260, %v635
      %v637 = vpop.f32.mrb[0].mxu0
      %638 = vmatprep.mubr.bf16.mxu0 0
      %639 = vmatmul.mubr.bf16.gmra.mrb[0].mxu0 %v403
      %v640 = vpop.f32.mrb[0].mxu0
      %v641 = vadd.f32 %v260, %v640
      %v642 = vpop.f32.mrb[0].mxu0
      %v643 = vpop.f32.mrb[0].mxu0
      %v644 = vadd.f32 %v260, %v643
      %v645 = vpop.f32.mrb[0].mxu0
      %646 = vmatprep.mubr.bf16.mxu0 0
      %647 = vmatmul.mubr.bf16.gmra.mrb[0].mxu0 %v404
      %v648 = vpop.f32.mrb[0].mxu0
      %v649 = vadd.f32 %v260, %v648
      %v650 = vpop.f32.mrb[0].mxu0
      %v651 = vpop.f32.mrb[0].mxu0
      %v652 = vadd.f32 %v260, %v651
      %v653 = vpop.f32.mrb[0].mxu0
      %654 = vmatprep.mubr.bf16.mxu0 0
      %655 = vmatmul.mubr.bf16.gmra.mrb[0].mxu0 %v405
      %v656 = vpop.f32.mrb[0].mxu0
      %v657 = vadd.f32 %v260, %v656
      %v658 = vpop.f32.mrb[0].mxu0
      %v659 = vpop.f32.mrb[0].mxu0
      %v660 = vadd.f32 %v260, %v659
      %v661 = vpop.f32.mrb[0].mxu0
      %662 = vmatprep.mubr.bf16.mxu0 0
      %663 = vmatmul.mubr.bf16.gmra.mrb[0].mxu0 %v406
      %v664 = vpop.f32.mrb[0].mxu0
      %v665 = vadd.f32 %v260, %v664
      %v666 = vpop.f32.mrb[0].mxu0
      %v667 = vpop.f32.mrb[0].mxu0
      %v668 = vadd.f32 %v260, %v667
      %v669 = vpop.f32.mrb[0].mxu0
      %670 = vmatprep.mubr.bf16.mxu0 0
      %671 = vmatmul.mubr.bf16.gmra.mrb[0].mxu0 %v407
      %v672 = vpop.f32.mrb[0].mxu0
      %v673 = vadd.f32 %v260, %v672
      %v674 = vpop.f32.mrb[0].mxu0
      %v675 = vpop.f32.mrb[0].mxu0
      %v676 = vadd.f32 %v260, %v675
      %v677 = vpop.f32.mrb[0].mxu0
      %678 = vmatprep.mubr.bf16.mxu0 0
      %679 = vmatmul.mubr.bf16.gmra.mrb[0].mxu0 %v408
      %v680 = vpop.f32.mrb[0].mxu0
      %v681 = vadd.f32 %v260, %v680
      %v682 = vpop.f32.mrb[0].mxu0
      %v683 = vpop.f32.mrb[0].mxu0
      %v684 = vadd.f32 %v260, %v683
      %v685 = vpop.f32.mrb[0].mxu0
      %686 = vmatprep.mubr.bf16.mxu0 0
      %687 = vmatmul.mubr.bf16.gmra.mrb[0].mxu0 %v409
      %v688 = vpop.f32.mrb[0].mxu0
      %v689 = vadd.f32 %v260, %v688
      %v690 = vpop.f32.mrb[0].mxu0
      %v691 = vpop.f32.mrb[0].mxu0
      %v692 = vadd.f32 %v260, %v691
      %v693 = vpop.f32.mrb[0].mxu0
      %694 = vmatprep.mubr.bf16.mxu0 0
      %695 = vmatmul.mubr.bf16.gmra.mrb[0].mxu0 %v410
      %v696 = vpop.f32.mrb[0].mxu0
      %v697 = vadd.f32 %v260, %v696
      %v698 = vpop.f32.mrb[0].mxu0
      %v699 = vpop.f32.mrb[0].mxu0
      %v700 = vadd.f32 %v260, %v699
      %v701 = vpop.f32.mrb[0].mxu0
      %702 = vmatprep.mubr.bf16.mxu0 0
      %703 = vmatmul.mubr.bf16.gmra.mrb[0].mxu0 %v411
      %v704 = vpop.f32.mrb[0].mxu0
      %v705 = vadd.f32 %v260, %v704
      %v706 = vpop.f32.mrb[0].mxu0
      %v707 = vpop.f32.mrb[0].mxu0
      %v708 = vadd.f32 %v260, %v707
      %v709 = vpop.f32.mrb[0].mxu0
      %710 = vmatprep.mubr.bf16.mxu0 0
      %711 = vmatmul.mubr.bf16.gmra.mrb[0].mxu0 %v412
      %v712 = vpop.f32.mrb[0].mxu0
      %v713 = vadd.f32 %v260, %v712
      %v714 = vpop.f32.mrb[0].mxu0
      %v715 = vpop.f32.mrb[0].mxu0
      %v716 = vadd.f32 %v260, %v715
      %v717 = vpop.f32.mrb[0].mxu0
      %718 = vmatprep.mubr.bf16.mxu0 0
      %719 = vmatmul.mubr.bf16.gmra.mrb[0].mxu0 %v413
      %v720 = vpop.f32.mrb[0].mxu0
      %v721 = vadd.f32 %v260, %v720
      %v722 = vpop.f32.mrb[0].mxu0
      %v723 = vpop.f32.mrb[0].mxu0
      %v724 = vadd.f32 %v260, %v723
      %v725 = vpop.f32.mrb[0].mxu0
      %726 = vmatprep.mubr.bf16.mxu0 0
      %727 = vmatmul.mubr.bf16.gmra.mrb[0].mxu0 %v414
      %v728 = vpop.f32.mrb[0].mxu0
      %v729 = vadd.f32 %v260, %v728
      %v730 = vpop.f32.mrb[0].mxu0
      %v731 = vpop.f32.mrb[0].mxu0
      %v732 = vadd.f32 %v260, %v731
      %v733 = vpop.f32.mrb[0].mxu0
      %734 = vmatprep.mubr.bf16.mxu0 0
      %735 = vmatmul.mubr.bf16.gmra.mrb[0].mxu0 %v415
      %v736 = vpop.f32.mrb[0].mxu0
      %v737 = vadd.f32 %v260, %v736
      %v738 = vpop.f32.mrb[0].mxu0
      %v739 = vpop.f32.mrb[0].mxu0
      %v740 = vadd.f32 %v260, %v739
      %v741 = vpop.f32.mrb[0].mxu0
      %742 = vmatprep.mubr.bf16.mxu0 0
      %743 = vmatmul.mubr.bf16.gmra.mrb[0].mxu0 %v416
      %v744 = vpop.f32.mrb[0].mxu0
      %v745 = vadd.f32 %v260, %v744
      %v746 = vpop.f32.mrb[0].mxu0
      %v747 = vpop.f32.mrb[0].mxu0
      %v748 = vadd.f32 %v260, %v747
      %v749 = vpop.f32.mrb[0].mxu0
      %750 = vmatprep.mubr.bf16.mxu0 0
      %751 = vmatmul.mubr.bf16.gmra.mrb[0].mxu0 %v417
      %v752 = vpop.f32.mrb[0].mxu0
      %v753 = vadd.f32 %v260, %v752
      %v754 = vpop.f32.mrb[0].mxu0
      %v755 = vpop.f32.mrb[0].mxu0
      %v756 = vadd.f32 %v260, %v755
      %v757 = vpop.f32.mrb[0].mxu0
      %758 = vmatprep.mubr.bf16.mxu0 0
      %759 = vmatmul.mubr.bf16.gmra.mrb[0].mxu0 %v418
      %v760 = vpop.f32.mrb[0].mxu0
      %v761 = vadd.f32 %v260, %v760
      %v762 = vpop.f32.mrb[0].mxu0
      %v763 = vpop.f32.mrb[0].mxu0
      %v764 = vadd.f32 %v260, %v763
      %v765 = vpop.f32.mrb[0].mxu0
      %766 = vmatprep.mubr.bf16.mxu0 0
      %767 = vmatmul.mubr.bf16.gmra.mrb[0].mxu0 %v419
      %v768 = vpop.f32.mrb[0].mxu0
      %v769 = vadd.f32 %v260, %v768
      %v770 = vpop.f32.mrb[0].mxu0
      %v771 = vpop.f32.mrb[0].mxu0
      %v772 = vadd.f32 %v260, %v771
      %v773 = vpop.f32.mrb[0].mxu0
      %774 = vmatprep.mubr.bf16.mxu0 0
      %775 = vmatmul.mubr.bf16.gmra.mrb[0].mxu0 %v420
      %v776 = vpop.f32.mrb[0].mxu0
      %v777 = vadd.f32 %v260, %v776
      %v778 = vpop.f32.mrb[0].mxu0
      %v779 = vpop.f32.mrb[0].mxu0
      %v780 = vadd.f32 %v260, %v779
      %v781 = vpop.f32.mrb[0].mxu0
      %782 = vmatprep.mubr.bf16.mxu0 0
      %783 = vmatmul.mubr.bf16.gmra.mrb[0].mxu0 %v421
      %v784 = vpop.f32.mrb[0].mxu0
      %v785 = vadd.f32 %v260, %v784
      %v786 = vpop.f32.mrb[0].mxu0
      %v787 = vpop.f32.mrb[0].mxu0
      %v788 = vadd.f32 %v260, %v787
      %v789 = vpop.f32.mrb[0].mxu0
      %790 = vdwg.mxu0
      %v791 = vmax.f32 %v537, 0.0
      %v792 = vmax.f32 %v540, 0.0
      %v793 = vmax.f32 %v545, 0.0
      %v794 = vmax.f32 %v548, 0.0
      %v795 = vmax.f32 %v553, 0.0
      %v796 = vmax.f32 %v556, 0.0
      %v797 = vmax.f32 %v561, 0.0
      %v798 = vmax.f32 %v564, 0.0
      %v799 = vmax.f32 %v569, 0.0
      %v800 = vmax.f32 %v572, 0.0
      %v801 = vmax.f32 %v577, 0.0
      %v802 = vmax.f32 %v580, 0.0
      %v803 = vmax.f32 %v585, 0.0
      %v804 = vmax.f32 %v588, 0.0
      %v805 = vmax.f32 %v593, 0.0
      %v806 = vmax.f32 %v596, 0.0
      %v807 = vmax.f32 %v601, 0.0
      %v808 = vmax.f32 %v604, 0.0
      %v809 = vmax.f32 %v609, 0.0
      %v810 = vmax.f32 %v612, 0.0
      %v811 = vmax.f32 %v617, 0.0
      %v812 = vmax.f32 %v620, 0.0
      %v813 = vmax.f32 %v625, 0.0
      %v814 = vmax.f32 %v628, 0.0
      %v815 = vmax.f32 %v633, 0.0
      %v816 = vmax.f32 %v636, 0.0
      %v817 = vmax.f32 %v641, 0.0
      %v818 = vmax.f32 %v644, 0.0
      %v819 = vmax.f32 %v649, 0.0
      %v820 = vmax.f32 %v652, 0.0
      %v821 = vmax.f32 %v657, 0.0
      %v822 = vmax.f32 %v660, 0.0
      %v823 = vmax.f32 %v665, 0.0
      %v824 = vmax.f32 %v668, 0.0
      %v825 = vmax.f32 %v673, 0.0
      %v826 = vmax.f32 %v676, 0.0
      %v827 = vmax.f32 %v681, 0.0
      %v828 = vmax.f32 %v684, 0.0
      %v829 = vmax.f32 %v689, 0.0
      %v830 = vmax.f32 %v692, 0.0
      %v831 = vmax.f32 %v697, 0.0
      %v832 = vmax.f32 %v700, 0.0
      %v833 = vmax.f32 %v705, 0.0
      %v834 = vmax.f32 %v708, 0.0
      %v835 = vmax.f32 %v713, 0.0
      %v836 = vmax.f32 %v716, 0.0
      %v837 = vmax.f32 %v721, 0.0
      %v838 = vmax.f32 %v724, 0.0
      %v839 = vmax.f32 %v729, 0.0
      %v840 = vmax.f32 %v732, 0.0
      %v841 = vmax.f32 %v737, 0.0
      %v842 = vmax.f32 %v740, 0.0
      %v843 = vmax.f32 %v745, 0.0
      %v844 = vmax.f32 %v748, 0.0
      %v845 = vmax.f32 %v753, 0.0
      %v846 = vmax.f32 %v756, 0.0
      %v847 = vmax.f32 %v761, 0.0
      %v848 = vmax.f32 %v764, 0.0
      %v849 = vmax.f32 %v769, 0.0
      %v850 = vmax.f32 %v772, 0.0
      %v851 = vmax.f32 %v777, 0.0
      %v852 = vmax.f32 %v780, 0.0
      %v853 = vmax.f32 %v785, 0.0
      %v854 = vmax.f32 %v788, 0.0
      %v855 = vpack.c.bf16 %v792, %v791
      %v856 = vpack.c.bf16 %v794, %v793
      %v857 = vpack.c.bf16 %v796, %v795
      %v858 = vpack.c.bf16 %v798, %v797
      %v859 = vpack.c.bf16 %v800, %v799
      %v860 = vpack.c.bf16 %v802, %v801
      %v861 = vpack.c.bf16 %v804, %v803
      %v862 = vpack.c.bf16 %v806, %v805
      %v863 = vpack.c.bf16 %v808, %v807
      %v864 = vpack.c.bf16 %v810, %v809
      %v865 = vpack.c.bf16 %v812, %v811
      %v866 = vpack.c.bf16 %v814, %v813
      %v867 = vpack.c.bf16 %v816, %v815
      %v868 = vpack.c.bf16 %v818, %v817
      %v869 = vpack.c.bf16 %v820, %v819
      %v870 = vpack.c.bf16 %v822, %v821
      %v871 = vpack.c.bf16 %v824, %v823
      %v872 = vpack.c.bf16 %v826, %v825
      %v873 = vpack.c.bf16 %v828, %v827
      %v874 = vpack.c.bf16 %v830, %v829
      %v875 = vpack.c.bf16 %v832, %v831
      %v876 = vpack.c.bf16 %v834, %v833
      %v877 = vpack.c.bf16 %v836, %v835
      %v878 = vpack.c.bf16 %v838, %v837
      %v879 = vpack.c.bf16 %v840, %v839
      %v880 = vpack.c.bf16 %v842, %v841
      %v881 = vpack.c.bf16 %v844, %v843
      %v882 = vpack.c.bf16 %v846, %v845
      %v883 = vpack.c.bf16 %v848, %v847
      %v884 = vpack.c.bf16 %v850, %v849
      %v885 = vpack.c.bf16 %v852, %v851
      %v886 = vpack.c.bf16 %v854, %v853
      %v919 = vunpack.c.l.b16 %v855
      %v920 = vunpack.c.h.b16 %v855
      %v921 = vunpack.c.l.b16 %v856
      %v922 = vunpack.c.h.b16 %v856
      %v923 = vunpack.c.l.b16 %v857
      %v924 = vunpack.c.h.b16 %v857
      %v925 = vunpack.c.l.b16 %v858
      %v926 = vunpack.c.h.b16 %v858
      %v927 = vunpack.c.l.b16 %v859
      %v928 = vunpack.c.h.b16 %v859
      %v929 = vunpack.c.l.b16 %v860
      %v930 = vunpack.c.h.b16 %v860
      %v931 = vunpack.c.l.b16 %v861
      %v932 = vunpack.c.h.b16 %v861
      %v933 = vunpack.c.l.b16 %v862
      %v934 = vunpack.c.h.b16 %v862
      %v935 = vunpack.c.l.b16 %v863
      %v936 = vunpack.c.h.b16 %v863
      %v937 = vunpack.c.l.b16 %v864
      %v938 = vunpack.c.h.b16 %v864
      %v939 = vunpack.c.l.b16 %v865
      %v940 = vunpack.c.h.b16 %v865
      %v941 = vunpack.c.l.b16 %v866
      %v942 = vunpack.c.h.b16 %v866
      %v943 = vunpack.c.l.b16 %v867
      %v944 = vunpack.c.h.b16 %v867
      %v945 = vunpack.c.l.b16 %v868
      %v946 = vunpack.c.h.b16 %v868
      %v947 = vunpack.c.l.b16 %v869
      %v948 = vunpack.c.h.b16 %v869
      %v949 = vunpack.c.l.b16 %v870
      %v950 = vunpack.c.h.b16 %v870
      %v951 = vunpack.c.l.b16 %v871
      %v952 = vunpack.c.h.b16 %v871
      %v953 = vunpack.c.l.b16 %v872
      %v954 = vunpack.c.h.b16 %v872
      %v955 = vunpack.c.l.b16 %v873
      %v956 = vunpack.c.h.b16 %v873
      %v957 = vunpack.c.l.b16 %v874
      %v958 = vunpack.c.h.b16 %v874
      %v959 = vunpack.c.l.b16 %v875
      %v960 = vunpack.c.h.b16 %v875
      %v961 = vunpack.c.l.b16 %v876
      %v962 = vunpack.c.h.b16 %v876
      %v963 = vunpack.c.l.b16 %v877
      %v964 = vunpack.c.h.b16 %v877
      %v965 = vunpack.c.l.b16 %v878
      %v966 = vunpack.c.h.b16 %v878
      %v967 = vunpack.c.l.b16 %v879
      %v968 = vunpack.c.h.b16 %v879
      %v969 = vunpack.c.l.b16 %v880
      %v970 = vunpack.c.h.b16 %v880
      %v971 = vunpack.c.l.b16 %v881
      %v972 = vunpack.c.h.b16 %v881
      %v973 = vunpack.c.l.b16 %v882
      %v974 = vunpack.c.h.b16 %v882
      %v975 = vunpack.c.l.b16 %v883
      %v976 = vunpack.c.h.b16 %v883
      %v977 = vunpack.c.l.b16 %v884
      %v978 = vunpack.c.h.b16 %v884
      %v979 = vunpack.c.l.b16 %v885
      %v980 = vunpack.c.h.b16 %v885
      %v981 = vunpack.c.l.b16 %v886
      %v982 = vunpack.c.h.b16 %v886
      %v983 = vpack.c.b16 %v919, %v919
      %v984 = vpack.c.b16 %v920, %v920
      %v985 = vpack.c.b16 %v921, %v921
      %v986 = vpack.c.b16 %v922, %v922
      %v987 = vpack.c.b16 %v923, %v923
      %v988 = vpack.c.b16 %v924, %v924
      %v989 = vpack.c.b16 %v925, %v925
      %v990 = vpack.c.b16 %v926, %v926
      %v991 = vpack.c.b16 %v927, %v927
      %v992 = vpack.c.b16 %v928, %v928
      %v993 = vpack.c.b16 %v929, %v929
      %v994 = vpack.c.b16 %v930, %v930
      %v995 = vpack.c.b16 %v931, %v931
      %v996 = vpack.c.b16 %v932, %v932
      %v997 = vpack.c.b16 %v933, %v933
      %v998 = vpack.c.b16 %v934, %v934
      %v999 = vpack.c.b16 %v935, %v935
      %v1000 = vpack.c.b16 %v936, %v936
      %v1001 = vpack.c.b16 %v937, %v937
      %v1002 = vpack.c.b16 %v938, %v938
      %v1003 = vpack.c.b16 %v939, %v939
      %v1004 = vpack.c.b16 %v940, %v940
      %v1005 = vpack.c.b16 %v941, %v941
      %v1006 = vpack.c.b16 %v942, %v942
      %v1007 = vpack.c.b16 %v943, %v943
      %v1008 = vpack.c.b16 %v944, %v944
      %v1009 = vpack.c.b16 %v945, %v945
      %v1010 = vpack.c.b16 %v946, %v946
      %v1011 = vpack.c.b16 %v947, %v947
      %v1012 = vpack.c.b16 %v948, %v948
      %v1013 = vpack.c.b16 %v949, %v949
      %v1014 = vpack.c.b16 %v950, %v950
      %v1015 = vpack.c.b16 %v951, %v951
      %v1016 = vpack.c.b16 %v952, %v952
      %v1017 = vpack.c.b16 %v953, %v953
      %v1018 = vpack.c.b16 %v954, %v954
      %v1019 = vpack.c.b16 %v955, %v955
      %v1020 = vpack.c.b16 %v956, %v956
      %v1021 = vpack.c.b16 %v957, %v957
      %v1022 = vpack.c.b16 %v958, %v958
      %v1023 = vpack.c.b16 %v959, %v959
      %v1024 = vpack.c.b16 %v960, %v960
      %v1025 = vpack.c.b16 %v961, %v961
      %v1026 = vpack.c.b16 %v962, %v962
      %v1027 = vpack.c.b16 %v963, %v963
      %v1028 = vpack.c.b16 %v964, %v964
      %v1029 = vpack.c.b16 %v965, %v965
      %v1030 = vpack.c.b16 %v966, %v966
      %v1031 = vpack.c.b16 %v967, %v967
      %v1032 = vpack.c.b16 %v968, %v968
      %v1033 = vpack.c.b16 %v969, %v969
      %v1034 = vpack.c.b16 %v970, %v970
      %v1035 = vpack.c.b16 %v971, %v971
      %v1036 = vpack.c.b16 %v972, %v972
      %v1037 = vpack.c.b16 %v973, %v973
      %v1038 = vpack.c.b16 %v974, %v974
      %v1039 = vpack.c.b16 %v975, %v975
      %v1040 = vpack.c.b16 %v976, %v976
      %v1041 = vpack.c.b16 %v977, %v977
      %v1042 = vpack.c.b16 %v978, %v978
      %v1043 = vpack.c.b16 %v979, %v979
      %v1044 = vpack.c.b16 %v980, %v980
      %v1045 = vpack.c.b16 %v981, %v981
      %v1046 = vpack.c.b16 %v982, %v982
      %1111 = vst [vmem:[%s172] sm:$0xf] %v983
      %1112 = vst [vmem:[%s172 + $0x4] sm:$0xf] %v984
      %1113 = vst [vmem:[%s172 + $0x8] sm:$0xf] %v985
      %1114 = vst [vmem:[%s172 + $0xc] sm:$0xf] %v986
      %1115 = vst [vmem:[%s172 + $0x10] sm:$0xf] %v987
      %1116 = vst [vmem:[%s172 + $0x14] sm:$0xf] %v988
      %1117 = vst [vmem:[%s172 + $0x18] sm:$0xf] %v989
      %1118 = vst [vmem:[%s172 + $0x1c] sm:$0xf] %v990
      %1119 = vst [vmem:[%s172 + $0x20] sm:$0xf] %v991
      %1120 = vst [vmem:[%s172 + $0x24] sm:$0xf] %v992
      %1121 = vst [vmem:[%s172 + $0x28] sm:$0xf] %v993
      %1122 = vst [vmem:[%s172 + $0x2c] sm:$0xf] %v994
      %1123 = vst [vmem:[%s172 + $0x30] sm:$0xf] %v995
      %1124 = vst [vmem:[%s172 + $0x34] sm:$0xf] %v996
      %1125 = vst [vmem:[%s172 + $0x38] sm:$0xf] %v997
      %1126 = vst [vmem:[%s172 + $0x3c] sm:$0xf] %v998
      %1127 = vst [vmem:[%s172 + $0x40] sm:$0xf] %v999
      %1128 = vst [vmem:[%s172 + $0x44] sm:$0xf] %v1000
      %1129 = vst [vmem:[%s172 + $0x48] sm:$0xf] %v1001
      %1130 = vst [vmem:[%s172 + $0x4c] sm:$0xf] %v1002
      %1131 = vst [vmem:[%s172 + $0x50] sm:$0xf] %v1003
      %1132 = vst [vmem:[%s172 + $0x54] sm:$0xf] %v1004
      %1133 = vst [vmem:[%s172 + $0x58] sm:$0xf] %v1005
      %1134 = vst [vmem:[%s172 + $0x5c] sm:$0xf] %v1006
      %1135 = vst [vmem:[%s172 + $0x60] sm:$0xf] %v1007
      %1136 = vst [vmem:[%s172 + $0x64] sm:$0xf] %v1008
      %1137 = vst [vmem:[%s172 + $0x68] sm:$0xf] %v1009
      %1138 = vst [vmem:[%s172 + $0x6c] sm:$0xf] %v1010
      %1139 = vst [vmem:[%s172 + $0x70] sm:$0xf] %v1011
      %1140 = vst [vmem:[%s172 + $0x74] sm:$0xf] %v1012
      %1141 = vst [vmem:[%s172 + $0x78] sm:$0xf] %v1013
      %1142 = vst [vmem:[%s172 + $0x7c] sm:$0xf] %v1014
      %1143 = vst [vmem:[%s172 + $0x80] sm:$0xf] %v1015
      %1144 = vst [vmem:[%s172 + $0x84] sm:$0xf] %v1016
      %1145 = vst [vmem:[%s172 + $0x88] sm:$0xf] %v1017
      %1146 = vst [vmem:[%s172 + $0x8c] sm:$0xf] %v1018
      %1147 = vst [vmem:[%s172 + $0x90] sm:$0xf] %v1019
      %1148 = vst [vmem:[%s172 + $0x94] sm:$0xf] %v1020
      %1149 = vst [vmem:[%s172 + $0x98] sm:$0xf] %v1021
      %1150 = vst [vmem:[%s172 + $0x9c] sm:$0xf] %v1022
      %1151 = vst [vmem:[%s172 + $0xa0] sm:$0xf] %v1023
      %1152 = vst [vmem:[%s172 + $0xa4] sm:$0xf] %v1024
      %1153 = vst [vmem:[%s172 + $0xa8] sm:$0xf] %v1025
      %1154 = vst [vmem:[%s172 + $0xac] sm:$0xf] %v1026
      %1155 = vst [vmem:[%s172 + $0xb0] sm:$0xf] %v1027
      %1156 = vst [vmem:[%s172 + $0xb4] sm:$0xf] %v1028
      %1157 = vst [vmem:[%s172 + $0xb8] sm:$0xf] %v1029
      %1158 = vst [vmem:[%s172 + $0xbc] sm:$0xf] %v1030
      %1159 = vst [vmem:[%s172 + $0xc0] sm:$0xf] %v1031
      %1160 = vst [vmem:[%s172 + $0xc4] sm:$0xf] %v1032
      %1161 = vst [vmem:[%s172 + $0xc8] sm:$0xf] %v1033
      %1162 = vst [vmem:[%s172 + $0xcc] sm:$0xf] %v1034
      %1163 = vst [vmem:[%s172 + $0xd0] sm:$0xf] %v1035
      %1164 = vst [vmem:[%s172 + $0xd4] sm:$0xf] %v1036
      %1165 = vst [vmem:[%s172 + $0xd8] sm:$0xf] %v1037
      %1166 = vst [vmem:[%s172 + $0xdc] sm:$0xf] %v1038
      %1167 = vst [vmem:[%s172 + $0xe0] sm:$0xf] %v1039
      %1168 = vst [vmem:[%s172 + $0xe4] sm:$0xf] %v1040
      %1169 = vst [vmem:[%s172 + $0xe8] sm:$0xf] %v1041
      %1170 = vst [vmem:[%s172 + $0xec] sm:$0xf] %v1042
      %1171 = vst [vmem:[%s172 + $0xf0] sm:$0xf] %v1043
      %1172 = vst [vmem:[%s172 + $0xf4] sm:$0xf] %v1044
      %1173 = vst [vmem:[%s172 + $0xf8] sm:$0xf] %v1045
      %1174 = vst [vmem:[%s172 + $0xfc] sm:$0xf] %v1046
      %s1175 = smul.u32 64, %s14
      %p1176 = scmp.lt.s32.totalorder %s1175, 127
      %s1177 = scalar_select %p1176, %s1175, 127
      %s1178 = smul.addr %s1177, 4
      %s1179 = scalar_lea.vmem %s3, %s1178
      // Predicated region
      $region33: #{bottleneck_forward.2} parent=31 // pred_check
        %p1180 = pneg %p100
      $region34: #{bottleneck_forward.2} parent=31 // pred_check_branch
        %1182 = sbr.rel (%p1180) target = $region36
      $region35: #{bottleneck_forward.2} parent=31 // pred_region
        %s1183 = smul.u32 64, %s14
      $region36: #{bottleneck_forward.2} parent=31 // pred_fallthru
        _
    $region32: #{bottleneck_forward.2} parent=5 // pred_fallthru
      _
    %p1184 = scmp.le.s32.totalorder 2, %s9
    // Predicated region
    $region37: #{bottleneck_forward.2} parent=5 // pred_check
      %p1185 = pneg %p1184
    $region38: #{bottleneck_forward.2} parent=5 // pred_check_branch
      %1187 = sbr.rel (%p1185) target = $region40
    $region39: #{bottleneck_forward.2} parent=5 // pred_region
      %s1188 = ssub.s32 %s9, 2
      // Predicated region
      $region41: #{bottleneck_forward.2} parent=39 // pred_check
        %p1189 = pneg %p106
      $region42: #{bottleneck_forward.2} parent=39 // pred_check_branch
        %1191 = sbr.rel (%p1189) target = $region44
      $region43: #{bottleneck_forward.2} parent=39 // pred_region
        %s1192 = smul.u32 64, %s15
        %p1193 = scmp.lt.s32.totalorder %s1192, 127
        %s1194 = scalar_select %p1193, %s1192, 127
        %s1195 = smul.addr %s1194, 4
        %s1196 = scalar_lea.vmem %s3, %s1195
      $region44: #{bottleneck_forward.2} parent=39 // pred_fallthru
        _
    $region40: #{bottleneck_forward.2} parent=5 // pred_fallthru
      _
  $region6: #{bottleneck_forward.2} parent=0 // loop_footer
    %s13 = sadd.s32 1, %s9
  $region7: #{bottleneck_forward.2} parent=0 // loop_footer_branch
    %8 = sbr.rel target = $region3
  $region8: #{bottleneck_forward.2} parent=0 // loop_exit
    _

// kernel: bottleneck_forward.3
$region0: #{bottleneck_forward.3}
  #allocation0 [shape = 'u32[]', space=smem, size = 0x4, offset = 0x4, fixed_abs, tag = 'smem constant byte address 0x4 - core index']
  #allocation1 [shape = 'u32[144,128]{1,0:T(1,128)}', space=vmem, size = 0x12000, scoped, tag = 'internal scratch']
  %s0 = inlined_call_operand.vmem [shape: bf16[2,10,10,10,128], index: 0, kind: input, shape index: {}, may-alias: {0,1,2}]
  %s1 = inlined_call_operand.vmem [shape: bf16[2,10,10,10,128], index: 1, kind: input, shape index: {}, may-alias: {0,1,2}]
  %s2 = inlined_call_operand.vmem [shape: bf16[2,10,10,10,128], index: 2, kind: input, shape index: {}, may-alias: {0,1,2}]
  %s3 = inlined_call_operand.vmem [shape: bf16[3456,128], index: 3, kind: input, shape index: {}]
  %s4 = inlined_call_operand.vmem [shape: f32[1,128], index: 4, kind: input, shape index: {}]
  %s5 = inlined_call_operand.vmem [shape: bf16[128,128], index: 5, kind: input, shape index: {}]
  %s6 = inlined_call_operand.vmem [shape: f32[1,128], index: 6, kind: input, shape index: {}]
  %s7 = inlined_call_operand.vmem [shape: f32[1024,128], index: 7, kind: input, shape index: {}]
  %s8 = inlined_call_operand.vmem [shape: f32[1024,128], index: 8, kind: output, shape index: {}]
  %s9 = sld [smem:[#allocation0]]
  $region65: #{bottleneck_forward.3} parent=0
    _
  %s11 = ssub.s32 1, %s9
  %s12 = scalar_select 0, %s11, %s9
  loop: start=0, step=1, limit=18
  $region2: #{bottleneck_forward.3} parent=0 // loop_pre_header
    _
  $region3: #{bottleneck_forward.3} parent=0 // loop_header
    %s14 = sphi 0, %s18
    %p15 = scmp.ge.s32.totalorder %s14, 18
    %s21 = sphi 0, %s33
    %s22 = sphi 0, %s29
    %s23 = sphi 0, %s21
    %s24 = sphi 0, %s22
    %s25 = sphi 0, %s23
    %s26 = sphi 0, %s24
    %s38 = sphi 0, %s40
    %s41 = sphi 0, %s38
    %s42 = sphi 0, %s41
    %s58 = sphi 0, %s42
    %s68 = sphi 0, %s70
    %s71 = sphi 0, %s68
    %s72 = sphi 0, %s71
    %s88 = sphi 0, %s72
    %s98 = sphi 0, %s100
    %s101 = sphi 0, %s98
    %s102 = sphi 0, %s101
    %s118 = sphi 0, %s102
    %s122 = sphi 0, %s122
    %s124 = sphi 0, %s122
    %s125 = sphi 0, %s124
    %s139 = sphi 0, %s125
    %s143 = sphi 0, %s143
    %s145 = sphi 0, %s143
    %s146 = sphi 0, %s145
    %s160 = sphi 0, %s146
    %s164 = sphi 0, %s164
    %s166 = sphi 0, %s164
    %s167 = sphi 0, %s166
    %s181 = sphi 0, %s167
    %s185 = sphi 0, %s185
    %s187 = sphi 0, %s185
    %s188 = sphi 0, %s187
    %s202 = sphi 0, %s188
    %s212 = sphi 0, %s214
    %s215 = sphi 0, %s212
    %s216 = sphi 0, %s215
    %s232 = sphi 0, %s216
    %s242 = sphi 0, %s244
    %s245 = sphi 0, %s242
    %s246 = sphi 0, %s245
    %s262 = sphi 0, %s246
  $region4: #{bottleneck_forward.3} parent=0 // loop_header_branch
    %17 = sbr.rel (%p15) target = $region8
  $region5: #{bottleneck_forward.3} parent=0 // loop_body
    %s19 = ssub.s32 %s14, 1
    %s20 = ssub.s32 %s14, 2
    %s27 = sadd.s32 1, %s22
    %p28 = scmp.ge.s32.totalorder %s27, 8
    %s29 = scalar_select %p28, 0, %s27
    %s30 = sadd.s32 1, %s21
    %s31 = scalar_select %p28, %s30, %s21
    %p32 = scmp.ge.s32.totalorder %s31, 2
    %s33 = scalar_select %p32, 0, %s31
    %s34 = ssub.s32 %s21, %s33
    %s35 = ssub.s32 %s22, %s29
    %s36 = sor.u32 %s34, %s35
    %p37 = scmp.eq.s32.totalorder %s36, 0
    %s39 = sadd.s32 %s38, 1
    %s40 = scalar_select %p37, %s38, %s39
    %p43 = pneg %p37
    %p44 = scmp.eq.s32.totalorder %s14, 15
    %p45 = por %p43, %p44
    %p46 = scmp.ne.s32.totalorder %s38, %s41
    %p47 = scmp.eq.s32.totalorder %s14, 0
    %p48 = por %p46, %p47
    %p49 = scmp.ne.s32.totalorder %s38, %s41
    %p50 = scmp.eq.s32.totalorder %s19, 15
    %p51 = por %p49, %p50
    %p52 = scmp.ne.s32.totalorder %s41, %s42
    %p53 = scmp.eq.s32.totalorder %s19, 0
    %p54 = por %p52, %p53
    %p55 = scmp.ne.s32.totalorder %s41, %s42
    %p56 = scmp.eq.s32.totalorder %s20, 15
    %p57 = por %p55, %p56
    %p59 = scmp.ne.s32.totalorder %s42, %s58
    %p60 = scmp.eq.s32.totalorder %s20, 0
    %p61 = por %p59, %p60
    %s62 = sadd.s32 %s22, 1
    %s63 = sadd.s32 %s29, 1
    %s64 = ssub.s32 %s21, %s33
    %s65 = ssub.s32 %s62, %s63
    %s66 = sor.u32 %s64, %s65
    %p67 = scmp.eq.s32.totalorder %s66, 0
    %s69 = sadd.s32 %s68, 1
    %s70 = scalar_select %p67, %s68, %s69
    %p73 = pneg %p67
    %p74 = scmp.eq.s32.totalorder %s14, 15
    %p75 = por %p73, %p74
    %p76 = scmp.ne.s32.totalorder %s68, %s71
    %p77 = scmp.eq.s32.totalorder %s14, 0
    %p78 = por %p76, %p77
    %p79 = scmp.ne.s32.totalorder %s68, %s71
    %p80 = scmp.eq.s32.totalorder %s19, 15
    %p81 = por %p79, %p80
    %p82 = scmp.ne.s32.totalorder %s71, %s72
    %p83 = scmp.eq.s32.totalorder %s19, 0
    %p84 = por %p82, %p83
    %p85 = scmp.ne.s32.totalorder %s71, %s72
    %p86 = scmp.eq.s32.totalorder %s20, 15
    %p87 = por %p85, %p86
    %p89 = scmp.ne.s32.totalorder %s72, %s88
    %p90 = scmp.eq.s32.totalorder %s20, 0
    %p91 = por %p89, %p90
    %s92 = sadd.s32 %s22, 2
    %s93 = sadd.s32 %s29, 2
    %s94 = ssub.s32 %s21, %s33
    %s95 = ssub.s32 %s92, %s93
    %s96 = sor.u32 %s94, %s95
    %p97 = scmp.eq.s32.totalorder %s96, 0
    %s99 = sadd.s32 %s98, 1
    %s100 = scalar_select %p97, %s98, %s99
    %p103 = pneg %p97
    %p104 = scmp.eq.s32.totalorder %s14, 15
    %p105 = por %p103, %p104
    %p106 = scmp.ne.s32.totalorder %s98, %s101
    %p107 = scmp.eq.s32.totalorder %s14, 0
    %p108 = por %p106, %p107
    %p109 = scmp.ne.s32.totalorder %s98, %s101
    %p110 = scmp.eq.s32.totalorder %s19, 15
    %p111 = por %p109, %p110
    %p112 = scmp.ne.s32.totalorder %s101, %s102
    %p113 = scmp.eq.s32.totalorder %s19, 0
    %p114 = por %p112, %p113
    %p115 = scmp.ne.s32.totalorder %s101, %s102
    %p116 = scmp.eq.s32.totalorder %s20, 15
    %p117 = por %p115, %p116
    %p119 = scmp.ne.s32.totalorder %s102, %s118
    %p120 = scmp.eq.s32.totalorder %s20, 0
    %p121 = por %p119, %p120
    %s123 = sadd.s32 %s122, 1
    %p126 = scmp.eq.s32.totalorder %s14, 15
    %p127 = scmp.ne.s32.totalorder %s122, %s124
    %p128 = scmp.eq.s32.totalorder %s14, 0
    %p129 = por %p127, %p128
    %p130 = scmp.ne.s32.totalorder %s122, %s124
    %p131 = scmp.eq.s32.totalorder %s19, 15
    %p132 = por %p130, %p131
    %p133 = scmp.ne.s32.totalorder %s124, %s125
    %p134 = scmp.eq.s32.totalorder %s19, 0
    %p135 = por %p133, %p134
    %p136 = scmp.ne.s32.totalorder %s124, %s125
    %p137 = scmp.eq.s32.totalorder %s20, 15
    %p138 = por %p136, %p137
    %p140 = scmp.ne.s32.totalorder %s125, %s139
    %p141 = scmp.eq.s32.totalorder %s20, 0
    %p142 = por %p140, %p141
    %s144 = sadd.s32 %s143, 1
    %p147 = scmp.eq.s32.totalorder %s14, 15
    %p148 = scmp.ne.s32.totalorder %s143, %s145
    %p149 = scmp.eq.s32.totalorder %s14, 0
    %p150 = por %p148, %p149
    %p151 = scmp.ne.s32.totalorder %s143, %s145
    %p152 = scmp.eq.s32.totalorder %s19, 15
    %p153 = por %p151, %p152
    %p154 = scmp.ne.s32.totalorder %s145, %s146
    %p155 = scmp.eq.s32.totalorder %s19, 0
    %p156 = por %p154, %p155
    %p157 = scmp.ne.s32.totalorder %s145, %s146
    %p158 = scmp.eq.s32.totalorder %s20, 15
    %p159 = por %p157, %p158
    %p161 = scmp.ne.s32.totalorder %s146, %s160
    %p162 = scmp.eq.s32.totalorder %s20, 0
    %p163 = por %p161, %p162
    %s165 = sadd.s32 %s164, 1
    %p168 = scmp.eq.s32.totalorder %s14, 15
    %p169 = scmp.ne.s32.totalorder %s164, %s166
    %p170 = scmp.eq.s32.totalorder %s14, 0
    %p171 = por %p169, %p170
    %p172 = scmp.ne.s32.totalorder %s164, %s166
    %p173 = scmp.eq.s32.totalorder %s19, 15
    %p174 = por %p172, %p173
    %p175 = scmp.ne.s32.totalorder %s166, %s167
    %p176 = scmp.eq.s32.totalorder %s19, 0
    %p177 = por %p175, %p176
    %p178 = scmp.ne.s32.totalorder %s166, %s167
    %p179 = scmp.eq.s32.totalorder %s20, 15
    %p180 = por %p178, %p179
    %p182 = scmp.ne.s32.totalorder %s167, %s181
    %p183 = scmp.eq.s32.totalorder %s20, 0
    %p184 = por %p182, %p183
    %s186 = sadd.s32 %s185, 1
    %p189 = scmp.eq.s32.totalorder %s14, 15
    %p190 = scmp.ne.s32.totalorder %s185, %s187
    %p191 = scmp.eq.s32.totalorder %s14, 0
    %p192 = por %p190, %p191
    %p193 = scmp.ne.s32.totalorder %s185, %s187
    %p194 = scmp.eq.s32.totalorder %s19, 15
    %p195 = por %p193, %p194
    %p196 = scmp.ne.s32.totalorder %s187, %s188
    %p197 = scmp.eq.s32.totalorder %s19, 0
    %p198 = por %p196, %p197
    %p199 = scmp.ne.s32.totalorder %s187, %s188
    %p200 = scmp.eq.s32.totalorder %s20, 15
    %p201 = por %p199, %p200
    %p203 = scmp.ne.s32.totalorder %s188, %s202
    %p204 = scmp.eq.s32.totalorder %s20, 0
    %p205 = por %p203, %p204
    %s206 = smul.u32 %s21, 8
    %s207 = sadd.s32 %s206, %s22
    %s208 = smul.u32 %s33, 8
    %s209 = sadd.s32 %s208, %s29
    %s210 = ssub.s32 %s207, %s209
    %p211 = scmp.eq.s32.totalorder %s210, 0
    %s213 = sadd.s32 %s212, 1
    %s214 = scalar_select %p211, %s212, %s213
    %p217 = pneg %p211
    %p218 = scmp.eq.s32.totalorder %s14, 15
    %p219 = por %p217, %p218
    %p220 = scmp.ne.s32.totalorder %s212, %s215
    %p221 = scmp.eq.s32.totalorder %s14, 0
    %p222 = por %p220, %p221
    %p223 = scmp.ne.s32.totalorder %s212, %s215
    %p224 = scmp.eq.s32.totalorder %s19, 15
    %p225 = por %p223, %p224
    %p226 = scmp.ne.s32.totalorder %s215, %s216
    %p227 = scmp.eq.s32.totalorder %s19, 0
    %p228 = por %p226, %p227
    %p229 = scmp.ne.s32.totalorder %s215, %s216
    %p230 = scmp.eq.s32.totalorder %s20, 15
    %p231 = por %p229, %p230
    %p233 = scmp.ne.s32.totalorder %s216, %s232
    %p234 = scmp.eq.s32.totalorder %s20, 0
    %p235 = por %p233, %p234
    %s236 = smul.u32 %s21, 8
    %s237 = sadd.s32 %s236, %s22
    %s238 = smul.u32 %s33, 8
    %s239 = sadd.s32 %s238, %s29
    %s240 = ssub.s32 %s237, %s239
    %p241 = scmp.eq.s32.totalorder %s240, 0
    %s243 = sadd.s32 %s242, 1
    %s244 = scalar_select %p241, %s242, %s243
    %p247 = pneg %p241
    %p248 = scmp.eq.s32.totalorder %s14, 15
    %p249 = por %p247, %p248
    %p250 = scmp.ne.s32.totalorder %s242, %s245
    %p251 = scmp.eq.s32.totalorder %s14, 0
    %p252 = por %p250, %p251
    %p253 = scmp.ne.s32.totalorder %s242, %s245
    %p254 = scmp.eq.s32.totalorder %s19, 15
    %p255 = por %p253, %p254
    %p256 = scmp.ne.s32.totalorder %s245, %s246
    %p257 = scmp.eq.s32.totalorder %s19, 0
    %p258 = por %p256, %p257
    %p259 = scmp.ne.s32.totalorder %s245, %s246
    %p260 = scmp.eq.s32.totalorder %s20, 15
    %p261 = por %p259, %p260
    %p263 = scmp.ne.s32.totalorder %s246, %s262
    %p264 = scmp.eq.s32.totalorder %s20, 0
    %p265 = por %p263, %p264
    %p266 = scmp.le.s32.totalorder 1, %s14
    %p267 = scmp.lt.s32.totalorder %s14, 17
    %p268 = pnand %p266, %p267
    %p269 = pneg %p268
    // Predicated region
    $region9: #{bottleneck_forward.3} parent=5 // pred_check
      _
    $region10: #{bottleneck_forward.3} parent=5 // pred_check_branch
      %271 = sbr.rel (%p268) target = $region12
    $region11: #{bottleneck_forward.3} parent=5 // pred_region
      %s272 = ssub.s32 %s14, 1
      // Predicated region
      $region13: #{bottleneck_forward.3} parent=11 // pred_check
        %p273 = pneg %p135
      $region14: #{bottleneck_forward.3} parent=11 // pred_check_branch
        %275 = sbr.rel (%p273) target = $region16
      $region15: #{bottleneck_forward.3} parent=11 // pred_region
        _
      $region16: #{bottleneck_forward.3} parent=11 // pred_fallthru
        _
      // Predicated region
      $region17: #{bottleneck_forward.3} parent=11 // pred_check
        %p276 = pneg %p156
      $region18: #{bottleneck_forward.3} parent=11 // pred_check_branch
        %278 = sbr.rel (%p276) target = $region20
      $region19: #{bottleneck_forward.3} parent=11 // pred_region
        _
      $region20: #{bottleneck_forward.3} parent=11 // pred_fallthru
        _
      // Predicated region
      $region21: #{bottleneck_forward.3} parent=11 // pred_check
        %p279 = pneg %p177
      $region22: #{bottleneck_forward.3} parent=11 // pred_check_branch
        %281 = sbr.rel (%p279) target = $region24
      $region23: #{bottleneck_forward.3} parent=11 // pred_region
        _
      $region24: #{bottleneck_forward.3} parent=11 // pred_fallthru
        _
      // Predicated region
      $region25: #{bottleneck_forward.3} parent=11 // pred_check
        %p282 = pneg %p198
      $region26: #{bottleneck_forward.3} parent=11 // pred_check_branch
        %284 = sbr.rel (%p282) target = $region28
      $region27: #{bottleneck_forward.3} parent=11 // pred_region
        _
      $region28: #{bottleneck_forward.3} parent=11 // pred_fallthru
        _
    $region12: #{bottleneck_forward.3} parent=5 // pred_fallthru
      _
    %p285 = scmp.lt.s32.totalorder %s14, 16
    // Predicated region
    $region29: #{bottleneck_forward.3} parent=5 // pred_check
      %p286 = pneg %p285
    $region30: #{bottleneck_forward.3} parent=5 // pred_check_branch
      %288 = sbr.rel (%p286) target = $region32
    $region31: #{bottleneck_forward.3} parent=5 // pred_region
      // Predicated region
      $region33: #{bottleneck_forward.3} parent=31 // pred_check
        %p289 = pneg %p48
      $region34: #{bottleneck_forward.3} parent=31 // pred_check_branch
        %291 = sbr.rel (%p289) target = $region36
      $region35: #{bottleneck_forward.3} parent=31 // pred_region
        %p292 = scmp.lt.s32.totalorder %s21, 1
        %s293 = scalar_select %p292, %s21, 1
        %p294 = scmp.lt.s32.totalorder %s22, 9
        %s295 = scalar_select %p294, %s22, 9
        %s296 = smul.addr %s295, 20
        %s297 = smul.addr %s293, 200
        %s298 = sadd.s32 %s296, %s297
        %s299 = smul.addr %s298, 4
        %s300 = scalar_lea.vmem %s0, %s299
      $region36: #{bottleneck_forward.3} parent=31 // pred_fallthru
        _
      // Predicated region
      $region37: #{bottleneck_forward.3} parent=31 // pred_check
        %p301 = pneg %p78
      $region38: #{bottleneck_forward.3} parent=31 // pred_check_branch
        %303 = sbr.rel (%p301) target = $region40
      $region39: #{bottleneck_forward.3} parent=31 // pred_region
        %s304 = sadd.s32 %s22, 1
        %p305 = scmp.lt.s32.totalorder %s21, 1
        %s306 = scalar_select %p305, %s21, 1
        %p307 = scmp.lt.s32.totalorder %s304, 9
        %s308 = scalar_select %p307, %s304, 9
        %s309 = smul.addr %s308, 20
        %s310 = smul.addr %s306, 200
        %s311 = sadd.s32 %s309, %s310
        %s312 = smul.addr %s311, 4
        %s313 = scalar_lea.vmem %s1, %s312
        %s314 = sadd.s32 %s22, 1
      $region40: #{bottleneck_forward.3} parent=31 // pred_fallthru
        _
      // Predicated region
      $region41: #{bottleneck_forward.3} parent=31 // pred_check
        %p315 = pneg %p108
      $region42: #{bottleneck_forward.3} parent=31 // pred_check_branch
        %317 = sbr.rel (%p315) target = $region44
      $region43: #{bottleneck_forward.3} parent=31 // pred_region
        %s318 = sadd.s32 %s22, 2
        %p319 = scmp.lt.s32.totalorder %s21, 1
        %s320 = scalar_select %p319, %s21, 1
        %p321 = scmp.lt.s32.totalorder %s318, 9
        %s322 = scalar_select %p321, %s318, 9
        %s323 = smul.addr %s322, 20
        %s324 = smul.addr %s320, 200
        %s325 = sadd.s32 %s323, %s324
        %s326 = smul.addr %s325, 4
        %s327 = scalar_lea.vmem %s2, %s326
        %s328 = sadd.s32 %s22, 2
      $region44: #{bottleneck_forward.3} parent=31 // pred_fallthru
        _
      // Predicated region
      $region45: #{bottleneck_forward.3} parent=31 // pred_check
        %p329 = pneg %p222
      $region46: #{bottleneck_forward.3} parent=31 // pred_check_branch
        %331 = sbr.rel (%p329) target = $region48
      $region47: #{bottleneck_forward.3} parent=31 // pred_region
        %s332 = smul.u32 %s21, 8
        %s333 = sadd.s32 %s332, %s22
        %s334 = smul.u32 8, %s333
        %p335 = scmp.lt.s32.totalorder %s334, 127
        %s336 = scalar_select %p335, %s334, 127
        %s337 = smul.addr %s336, 8
        %s338 = scalar_lea.vmem %s7, %s337
        %s339 = smul.u32 %s21, 8
        %s340 = sadd.s32 %s339, %s22
        %s341 = smul.u32 8, %s340
      $region48: #{bottleneck_forward.3} parent=31 // pred_fallthru
        _
    $region32: #{bottleneck_forward.3} parent=5 // pred_fallthru
      _
    %p342 = scmp.le.s32.totalorder 1, %s14
    %p343 = scmp.lt.s32.totalorder %s14, 17
    %p344 = pnand %p342, %p343
    %p345 = pneg %p344
    // Predicated region
    $region49: #{bottleneck_forward.3} parent=5 // pred_check
      _
    $region50: #{bottleneck_forward.3} parent=5 // pred_check_branch
      %347 = sbr.rel (%p344) target = $region52
    $region51: #{bottleneck_forward.3} parent=5 // pred_region
      %s348 = ssub.s32 %s14, 1
      %p349 = scmp.lt.s32.totalorder %s23, 1
      %s350 = scalar_select %p349, %s23, 1
      %p351 = scmp.lt.s32.totalorder %s24, 9
      %s352 = scalar_select %p351, %s24, 9
      %s353 = smul.addr %s352, 20
      %s354 = smul.addr %s350, 200
      %s355 = sadd.s32 %s353, %s354
      %s356 = smul.addr %s355, 4
      %s357 = scalar_lea.vmem %s0, %s356
      %p358 = pneg %p54
      %p359 = pneg %p51
      %s360 = sadd.s32 %s24, 1
      %p361 = scmp.lt.s32.totalorder %s23, 1
      %s362 = scalar_select %p361, %s23, 1
      %p363 = scmp.lt.s32.totalorder %s360, 9
      %s364 = scalar_select %p363, %s360, 9
      %s365 = smul.addr %s364, 20
      %s366 = smul.addr %s362, 200
      %s367 = sadd.s32 %s365, %s366
      %s368 = smul.addr %s367, 4
      %s369 = scalar_lea.vmem %s1, %s368
      %p370 = pneg %p84
      %p371 = pneg %p81
      %s372 = sadd.s32 %s24, 2
      %p373 = scmp.lt.s32.totalorder %s23, 1
      %s374 = scalar_select %p373, %s23, 1
      %p375 = scmp.lt.s32.totalorder %s372, 9
      %s376 = scalar_select %p375, %s372, 9
      %s377 = smul.addr %s376, 20
      %s378 = smul.addr %s374, 200
      %s379 = sadd.s32 %s377, %s378
      %s380 = smul.addr %s379, 4
      %s381 = scalar_lea.vmem %s2, %s380
      %p382 = pneg %p114
      %p383 = pneg %p111
      %p384 = pneg %p135
      %p385 = pneg %p132
      %p386 = pneg %p156
      %p387 = pneg %p153
      %p388 = pneg %p177
      %p389 = pneg %p174
      %p390 = pneg %p198
      %p391 = pneg %p195
      %s392 = smul.u32 %s23, 8
      %s393 = sadd.s32 %s392, %s24
      %s394 = smul.u32 8, %s393
      %p395 = scmp.lt.s32.totalorder %s394, 127
      %s396 = scalar_select %p395, %s394, 127
      %s397 = smul.addr %s396, 8
      %s398 = scalar_lea.vmem %s7, %s397
      %p399 = pneg %p228
      %p400 = pneg %p225
      %p401 = pneg %p258
      %p402 = pneg %p255
      %s403 = smul.u32 %s23, 8
      %s404 = sadd.s32 %s403, %s24
      %s405 = smul.u32 8, %s404
      %p406 = scmp.lt.s32.totalorder %s405, 127
      %s407 = scalar_select %p406, %s405, 127
      %s408 = smul.addr %s407, 8
      %s409 = scalar_lea.vmem %s8, %s408
      %p410 = scmp.lt.s32.totalorder %s23, 1
      %s411 = scalar_select %p410, %s23, 1
      %p412 = scmp.lt.s32.totalorder %s24, 9
      %s413 = scalar_select %p412, %s24, 9
      %s414 = smul.addr %s413, 20
      %s415 = smul.addr %s411, 200
      %s416 = sadd.s32 %s414, %s415
      %s417 = smul.addr %s416, 4
      %s418 = scalar_lea.vmem %s0, %s417
      %s419 = sadd.s32 %s24, 1
      %p420 = scmp.lt.s32.totalorder %s23, 1
      %s421 = scalar_select %p420, %s23, 1
      %p422 = scmp.lt.s32.totalorder %s419, 9
      %s423 = scalar_select %p422, %s419, 9
      %s424 = smul.addr %s423, 20
      %s425 = smul.addr %s421, 200
      %s426 = sadd.s32 %s424, %s425
      %s427 = smul.addr %s426, 4
      %s428 = scalar_lea.vmem %s1, %s427
      %s429 = sadd.s32 %s24, 1
      %s430 = sadd.s32 %s24, 2
      %p431 = scmp.lt.s32.totalorder %s23, 1
      %s432 = scalar_select %p431, %s23, 1
      %p433 = scmp.lt.s32.totalorder %s430, 9
      %s434 = scalar_select %p433, %s430, 9
      %s435 = smul.addr %s434, 20
      %s436 = smul.addr %s432, 200
      %s437 = sadd.s32 %s435, %s436
      %s438 = smul.addr %s437, 4
      %s439 = scalar_lea.vmem %s2, %s438
      %s440 = sadd.s32 %s24, 2
      %s441 = smul.u32 %s23, 8
      %s442 = sadd.s32 %s441, %s24
      %s443 = smul.u32 8, %s442
      %p444 = scmp.lt.s32.totalorder %s443, 127
      %s445 = scalar_select %p444, %s443, 127
      %s446 = smul.addr %s445, 8
      %s447 = scalar_lea.vmem %s7, %s446
      %s448 = smul.u32 %s23, 8
      %s449 = sadd.s32 %s448, %s24
      %s450 = smul.u32 8, %s449
      %s451 = smul.u32 %s23, 8
      %s452 = sadd.s32 %s451, %s24
      %s453 = smul.u32 8, %s452
      %p454 = scmp.lt.s32.totalorder %s453, 127
      %s455 = scalar_select %p454, %s453, 127
      %s456 = smul.addr %s455, 8
      %s457 = scalar_lea.vmem %s8, %s456
      %s458 = smul.u32 %s23, 8
      %s459 = sadd.s32 %s458, %s24
      %s460 = smul.u32 8, %s459
      %v462 = vld [vmem:[%s418] sm:$0xf]
      %v463 = vld [vmem:[%s418 + $0x8] sm:$0xf]
      %v464 = vld [vmem:[%s418 + $0x10] sm:$0xf]
      %v465 = vld [vmem:[%s418 + $0x18] sm:$0xf]
      %v466 = vld [vmem:[%s418 + $0x20] sm:$0xf]
      %v467 = vld [vmem:[%s418 + $0x28] sm:$0xf]
      %v468 = vld [vmem:[%s418 + $0x30] sm:$0xf]
      %v469 = vld [vmem:[%s418 + $0x38] sm:$0xf]
      %v470 = vld [vmem:[%s3] sm:$0xf]
      %v471 = vld [vmem:[%s3 + $0x4] sm:$0xf]
      %v472 = vld [vmem:[%s3 + $0x8] sm:$0xf]
      %v473 = vld [vmem:[%s3 + $0xc] sm:$0xf]
      %v474 = vld [vmem:[%s3 + $0x10] sm:$0xf]
      %v475 = vld [vmem:[%s3 + $0x14] sm:$0xf]
      %v476 = vld [vmem:[%s3 + $0x18] sm:$0xf]
      %v477 = vld [vmem:[%s3 + $0x1c] sm:$0xf]
      %v478 = vld [vmem:[%s3 + $0x20] sm:$0xf]
      %v479 = vld [vmem:[%s3 + $0x24] sm:$0xf]
      %v480 = vld [vmem:[%s3 + $0x28] sm:$0xf]
      %v481 = vld [vmem:[%s3 + $0x2c] sm:$0xf]
      %v482 = vld [vmem:[%s3 + $0x30] sm:$0xf]
      %v483 = vld [vmem:[%s3 + $0x34] sm:$0xf]
      %v484 = vld [vmem:[%s3 + $0x38] sm:$0xf]
      %v485 = vld [vmem:[%s3 + $0x3c] sm:$0xf]
      %v486 = vld [vmem:[%s418 + $0x4] sm:$0x1]
      %v487 = vld [vmem:[%s418 + $0xc] sm:$0x1]
      %v488 = vld [vmem:[%s418 + $0x14] sm:$0x1]
      %v489 = vld [vmem:[%s418 + $0x1c] sm:$0x1]
      %v490 = vld [vmem:[%s418 + $0x24] sm:$0x1]
      %v491 = vld [vmem:[%s418 + $0x2c] sm:$0x1]
      %v492 = vld [vmem:[%s418 + $0x34] sm:$0x1]
      %v493 = vld [vmem:[%s418 + $0x3c] sm:$0x1]
      %vm494 = vsmask.f32 3328
      %vm495 = vsmask.f32 7440
      %vm496 = vmor %vm494, %vm495
      %v498 = vshrl.u32 %v462, 16
      %v500 = vrot.slane %v498, 4
      %v501 = vshll.u32 %v462, 16
      %v503 = vrot.slane %v501, 5
      %v504 = vor.u32 %v500, %v503
      %v505 = vrot.slane %v504, 4
      %v507 = vshll.u32 %v486, 16
      %v509 = vrot.slane %v507, 5
      %v510 = vsel %vm496, %v505, %v509
      %v512 = vshrl.u32 %v463, 16
      %v514 = vrot.slane %v512, 4
      %v515 = vshll.u32 %v463, 16
      %v517 = vrot.slane %v515, 5
      %v518 = vor.u32 %v514, %v517
      %v519 = vrot.slane %v518, 4
      %v521 = vshll.u32 %v487, 16
      %v523 = vrot.slane %v521, 5
      %v524 = vsel %vm496, %v519, %v523
      %v526 = vshrl.u32 %v464, 16
      %v528 = vrot.slane %v526, 4
      %v529 = vshll.u32 %v464, 16
      %v531 = vrot.slane %v529, 5
      %v532 = vor.u32 %v528, %v531
      %v533 = vrot.slane %v532, 4
      %v535 = vshll.u32 %v488, 16
      %v537 = vrot.slane %v535, 5
      %v538 = vsel %vm496, %v533, %v537
      %v540 = vshrl.u32 %v465, 16
      %v542 = vrot.slane %v540, 4
      %v543 = vshll.u32 %v465, 16
      %v545 = vrot.slane %v543, 5
      %v546 = vor.u32 %v542, %v545
      %v547 = vrot.slane %v546, 4
      %v549 = vshll.u32 %v489, 16
      %v551 = vrot.slane %v549, 5
      %v552 = vsel %vm496, %v547, %v551
      %v554 = vshrl.u32 %v466, 16
      %v556 = vrot.slane %v554, 4
      %v557 = vshll.u32 %v466, 16
      %v559 = vrot.slane %v557, 5
      %v560 = vor.u32 %v556, %v559
      %v561 = vrot.slane %v560, 4
      %v563 = vshll.u32 %v490, 16
      %v565 = vrot.slane %v563, 5
      %v566 = vsel %vm496, %v561, %v565
      %v568 = vshrl.u32 %v467, 16
      %v570 = vrot.slane %v568, 4
      %v571 = vshll.u32 %v467, 16
      %v573 = vrot.slane %v571, 5
      %v574 = vor.u32 %v570, %v573
      %v575 = vrot.slane %v574, 4
      %v577 = vshll.u32 %v491, 16
      %v579 = vrot.slane %v577, 5
      %v580 = vsel %vm496, %v575, %v579
      %v582 = vshrl.u32 %v468, 16
      %v584 = vrot.slane %v582, 4
      %v585 = vshll.u32 %v468, 16
      %v587 = vrot.slane %v585, 5
      %v588 = vor.u32 %v584, %v587
      %v589 = vrot.slane %v588, 4
      %v591 = vshll.u32 %v492, 16
      %v593 = vrot.slane %v591, 5
      %v594 = vsel %vm496, %v589, %v593
      %v596 = vshrl.u32 %v469, 16
      %v598 = vrot.slane %v596, 4
      %v599 = vshll.u32 %v469, 16
      %v601 = vrot.slane %v599, 5
      %v602 = vor.u32 %v598, %v601
      %v603 = vrot.slane %v602, 4
      %v605 = vshll.u32 %v493, 16
      %v607 = vrot.slane %v605, 5
      %v608 = vsel %vm496, %v603, %v607
      %v609 = vld [vmem:[%s3 + $0x40] sm:$0xf]
      %v610 = vld [vmem:[%s3 + $0x44] sm:$0xf]
      %v611 = vld [vmem:[%s3 + $0x48] sm:$0xf]
      %v612 = vld [vmem:[%s3 + $0x4c] sm:$0xf]
      %v613 = vld [vmem:[%s3 + $0x50] sm:$0xf]
      %v614 = vld [vmem:[%s3 + $0x54] sm:$0xf]
      %v615 = vld [vmem:[%s3 + $0x58] sm:$0xf]
      %v616 = vld [vmem:[%s3 + $0x5c] sm:$0xf]
      %v617 = vld [vmem:[%s3 + $0x60] sm:$0xf]
      %v618 = vld [vmem:[%s3 + $0x64] sm:$0xf]
      %v619 = vld [vmem:[%s3 + $0x68] sm:$0xf]
      %v620 = vld [vmem:[%s3 + $0x6c] sm:$0xf]
      %v621 = vld [vmem:[%s3 + $0x70] sm:$0xf]
      %v622 = vld [vmem:[%s3 + $0x74] sm:$0xf]
      %v623 = vld [vmem:[%s3 + $0x78] sm:$0xf]
      %v624 = vld [vmem:[%s3 + $0x7c] sm:$0xf]
      %v625 = vunpack.c.l.b16 %v510
      %v626 = vunpack.c.l.b16 %v524
      %v627 = vunpack.c.l.b16 %v538
      %v628 = vunpack.c.l.b16 %v552
      %v629 = vunpack.c.l.b16 %v566
      %v630 = vunpack.c.l.b16 %v580
      %v631 = vunpack.c.l.b16 %v594
      %v632 = vunpack.c.l.b16 %v608
      %v633 = vpack.c.b16 %v626, %v625
      %v634 = vpack.c.b16 %v628, %v627
      %v635 = vpack.c.b16 %v630, %v629
      %v636 = vpack.c.b16 %v632, %v631
      %v657 = vunpack.c.l.b16 %v609
      %v658 = vunpack.c.l.b16 %v610
      %v659 = vunpack.c.l.b16 %v611
      %v660 = vunpack.c.l.b16 %v612
      %v661 = vunpack.c.l.b16 %v613
      %v662 = vunpack.c.l.b16 %v614
      %v663 = vunpack.c.l.b16 %v615
      %v664 = vunpack.c.l.b16 %v616
      %v665 = vunpack.c.l.b16 %v617
      %v666 = vunpack.c.l.b16 %v618
      %v667 = vunpack.c.l.b16 %v619
      %v668 = vunpack.c.l.b16 %v620
      %v669 = vunpack.c.l.b16 %v621
      %v670 = vunpack.c.l.b16 %v622
      %v671 = vunpack.c.l.b16 %v623
      %v672 = vunpack.c.l.b16 %v624
      %v673 = vpack.c.b16 %v658, %v657
      %v674 = vpack.c.b16 %v660, %v659
      %v675 = vpack.c.b16 %v662, %v661
      %v676 = vpack.c.b16 %v664, %v663
      %v677 = vpack.c.b16 %v666, %v665
      %v678 = vpack.c.b16 %v668, %v667
      %v679 = vpack.c.b16 %v670, %v669
      %v680 = vpack.c.b16 %v672, %v671
      %689 = vmatprep.subr.bf16.mxu0 0
      %690 = vmatpush1.bf16.msra.mxu0 %v673
      %691 = vmatprep.subr.bf16.mxu0 0
      %692 = vmatpush1.bf16.msra.mxu0 %v674
      %693 = vmatprep.subr.bf16.mxu0 0
      %694 = vmatpush1.bf16.msra.mxu0 %v675
      %695 = vmatprep.subr.bf16.mxu0 0
      %696 = vmatpush1.bf16.msra.mxu0 %v676
      %697 = vmatprep.subr.bf16.mxu0 0
      %698 = vmatpush1.bf16.msra.mxu0 %v677
      %699 = vmatprep.subr.bf16.mxu0 0
      %700 = vmatpush1.bf16.msra.mxu0 %v678
      %701 = vmatprep.subr.bf16.mxu0 0
      %702 = vmatpush1.bf16.msra.mxu0 %v679
      %703 = vmatprep.subr.bf16.mxu0 0
      %704 = vmatpush1.bf16.msra.mxu0 %v680
      %705 = vmatprep.subr.bf16.mxu0 0
      %706 = vmatpush1.bf16.msra.mxu0 0
      %707 = vmatprep.subr.bf16.mxu0 0
      %708 = vmatpush1.bf16.msra.mxu0 0
      %709 = vmatprep.subr.bf16.mxu0 0
      %710 = vmatpush1.bf16.msra.mxu0 0
      %711 = vmatprep.subr.bf16.mxu0 0
      %712 = vmatpush1.bf16.msra.mxu0 0
      %713 = vmatprep.subr.bf16.mxu0 0
      %714 = vmatpush1.bf16.msra.mxu0 0
      %715 = vmatprep.subr.bf16.mxu0 0
      %716 = vmatpush1.bf16.msra.mxu0 0
      %717 = vmatprep.subr.bf16.mxu0 0
      %718 = vmatpush1.bf16.msra.mxu0 0
      %719 = vmatprep.subr.bf16.mxu0 0
      %720 = vmatpush1.bf16.msra.mxu0 0
      %721 = vmatprep.mubr.bf16.mxu0 0
      %722 = vmatmul.mubr.bf16.gmra.mrb[0].mxu0 %v633
      %v723 = vpop.f32.mrb[0].mxu0
      %v724 = vadd.f32 0.0, %v723
      %v725 = vpop.f32.mrb[0].mxu0
      %v726 = vpop.f32.mrb[0].mxu0
      %v727 = vadd.f32 0.0, %v726
      %v728 = vpop.f32.mrb[0].mxu0
      %729 = vmatprep.mubr.bf16.mxu0 0
      %730 = vmatmul.mubr.bf16.gmra.mrb[0].mxu0 %v634
      %v731 = vpop.f32.mrb[0].mxu0
      %v732 = vadd.f32 0.0, %v731
      %v733 = vpop.f32.mrb[0].mxu0
      %v734 = vpop.f32.mrb[0].mxu0
      %v735 = vadd.f32 0.0, %v734
      %v736 = vpop.f32.mrb[0].mxu0
      %737 = vmatprep.mubr.bf16.mxu0 0
      %738 = vmatmul.mubr.bf16.gmra.mrb[0].mxu0 %v635
      %v739 = vpop.f32.mrb[0].mxu0
      %v740 = vadd.f32 0.0, %v739
      %v741 = vpop.f32.mrb[0].mxu0
      %v742 = vpop.f32.mrb[0].mxu0
      %v743 = vadd.f32 0.0, %v742
      %v744 = vpop.f32.mrb[0].mxu0
      %745 = vmatprep.mubr.bf16.mxu0 0
      %746 = vmatmul.mubr.bf16.gmra.mrb[0].mxu0 %v636
      %v747 = vpop.f32.mrb[0].mxu0
      %v748 = vadd.f32 0.0, %v747
      %v749 = vpop.f32.mrb[0].mxu0
      %v750 = vpop.f32.mrb[0].mxu0
      %v751 = vadd.f32 0.0, %v750
      %v752 = vpop.f32.mrb[0].mxu0
      %753 = vdwg.mxu0
      %v762 = vunpack.c.l.b16 %v462
      %v763 = vunpack.c.l.b16 %v463
      %v764 = vunpack.c.l.b16 %v464
      %v765 = vunpack.c.l.b16 %v465
      %v766 = vunpack.c.l.b16 %v466
      %v767 = vunpack.c.l.b16 %v467
      %v768 = vunpack.c.l.b16 %v468
      %v769 = vunpack.c.l.b16 %v469
      %v770 = vpack.c.b16 %v763, %v762
      %v771 = vpack.c.b16 %v765, %v764
      %v772 = vpack.c.b16 %v767, %v766
      %v773 = vpack.c.b16 %v769, %v768
      %v794 = vunpack.c.l.b16 %v470
      %v795 = vunpack.c.l.b16 %v471
      %v796 = vunpack.c.l.b16 %v472
      %v797 = vunpack.c.l.b16 %v473
      %v798 = vunpack.c.l.b16 %v474
      %v799 = vunpack.c.l.b16 %v475
      %v800 = vunpack.c.l.b16 %v476
      %v801 = vunpack.c.l.b16 %v477
      %v802 = vunpack.c.l.b16 %v478
      %v803 = vunpack.c.l.b16 %v479
      %v804 = vunpack.c.l.b16 %v480
      %v805 = vunpack.c.l.b16 %v481
      %v806 = vunpack.c.l.b16 %v482
      %v807 = vunpack.c.l.b16 %v483
      %v808 = vunpack.c.l.b16 %v484
      %v809 = vunpack.c.l.b16 %v485
      %v810 = vpack.c.b16 %v795, %v794
      %v811 = vpack.c.b16 %v797, %v796
      %v812 = vpack.c.b16 %v799, %v798
      %v813 = vpack.c.b16 %v801, %v800
      %v814 = vpack.c.b16 %v803, %v802
      %v815 = vpack.c.b16 %v805, %v804
      %v816 = vpack.c.b16 %v807, %v806
      %v817 = vpack.c.b16 %v809, %v808
      %826 = vmatprep.subr.bf16.mxu0 0
      %827 = vmatpush1.bf16.msra.mxu0 %v810
      %828 = vmatprep.subr.bf16.mxu0 0
      %829 = vmatpush1.bf16.msra.mxu0 %v811
      %830 = vmatprep.subr.bf16.mxu0 0
      %831 = vmatpush1.bf16.msra.mxu0 %v812
      %832 = vmatprep.subr.bf16.mxu0 0
      %833 = vmatpush1.bf16.msra.mxu0 %v813
      %834 = vmatprep.subr.bf16.mxu0 0
      %835 = vmatpush1.bf16.msra.mxu0 %v814
      %836 = vmatprep.subr.bf16.mxu0 0
      %837 = vmatpush1.bf16.msra.mxu0 %v815
      %838 = vmatprep.subr.bf16.mxu0 0
      %839 = vmatpush1.bf16.msra.mxu0 %v816
      %840 = vmatprep.subr.bf16.mxu0 0
      %841 = vmatpush1.bf16.msra.mxu0 %v817
      %842 = vmatprep.subr.bf16.mxu0 0
      %843 = vmatpush1.bf16.msra.mxu0 0
      %844 = vmatprep.subr.bf16.mxu0 0
      %845 = vmatpush1.bf16.msra.mxu0 0
      %846 = vmatprep.subr.bf16.mxu0 0
      %847 = vmatpush1.bf16.msra.mxu0 0
      %848 = vmatprep.subr.bf16.mxu0 0
      %849 = vmatpush1.bf16.msra.mxu0 0
      %850 = vmatprep.subr.bf16.mxu0 0
      %851 = vmatpush1.bf16.msra.mxu0 0
      %852 = vmatprep.subr.bf16.mxu0 0
      %853 = vmatpush1.bf16.msra.mxu0 0
      %854 = vmatprep.subr.bf16.mxu0 0
      %855 = vmatpush1.bf16.msra.mxu0 0
      %856 = vmatprep.subr.bf16.mxu0 0
      %857 = vmatpush1.bf16.msra.mxu0 0
      %858 = vmatprep.mubr.bf16.mxu0 0
      %859 = vmatmul.mubr.bf16.gmra.mrb[0].mxu0 %v770
      %v860 = vpop.f32.mrb[0].mxu0
      %v861 = vadd.f32 %v724, %v860
      %v862 = vpop.f32.mrb[0].mxu0
      %v863 = vpop.f32.mrb[0].mxu0
      %v864 = vadd.f32 %v727, %v863
      %v865 = vpop.f32.mrb[0].mxu0
      %866 = vmatprep.mubr.bf16.mxu0 0
      %867 = vmatmul.mubr.bf16.gmra.mrb[0].mxu0 %v771
      %v868 = vpop.f32.mrb[0].mxu0
      %v869 = vadd.f32 %v732, %v868
      %v870 = vpop.f32.mrb[0].mxu0
      %v871 = vpop.f32.mrb[0].mxu0
      %v872 = vadd.f32 %v735, %v871
      %v873 = vpop.f32.mrb[0].mxu0
      %874 = vmatprep.mubr.bf16.mxu0 0
      %875 = vmatmul.mubr.bf16.gmra.mrb[0].mxu0 %v772
      %v876 = vpop.f32.mrb[0].mxu0
      %v877 = vadd.f32 %v740, %v876
      %v878 = vpop.f32.mrb[0].mxu0
      %v879 = vpop.f32.mrb[0].mxu0
      %v880 = vadd.f32 %v743, %v879
      %v881 = vpop.f32.mrb[0].mxu0
      %882 = vmatprep.mubr.bf16.mxu0 0
      %883 = vmatmul.mubr.bf16.gmra.mrb[0].mxu0 %v773
      %v884 = vpop.f32.mrb[0].mxu0
      %v885 = vadd.f32 %v748, %v884
      %v886 = vpop.f32.mrb[0].mxu0
      %v887 = vpop.f32.mrb[0].mxu0
      %v888 = vadd.f32 %v751, %v887
      %v889 = vpop.f32.mrb[0].mxu0
      %890 = vdwg.mxu0
      %v891 = vld [vmem:[%s418] sm:$0xe]
      %v892 = vld [vmem:[%s418 + $0x8] sm:$0xe]
      %v893 = vld [vmem:[%s418 + $0x10] sm:$0xe]
      %v894 = vld [vmem:[%s418 + $0x18] sm:$0xe]
      %v895 = vld [vmem:[%s418 + $0x20] sm:$0xe]
      %v896 = vld [vmem:[%s418 + $0x28] sm:$0xe]
      %v897 = vld [vmem:[%s418 + $0x30] sm:$0xe]
      %v898 = vld [vmem:[%s418 + $0x38] sm:$0xe]
      %vm915 = vcmask 1042432
      %vm916 = vcmask 1046532
      %vm917 = vmor %vm915, %vm916
      %v918 = vrot.slane %v891, 5
      %v919 = vrot.slane %v918, 4
      %v920 = vrot.slane %v486, 5
      %v921 = vsel %vm917, %v919, %v920
      %v922 = vrot.slane %v892, 5
      %v923 = vrot.slane %v922, 4
      %v924 = vrot.slane %v487, 5
      %v925 = vsel %vm917, %v923, %v924
      %v926 = vrot.slane %v893, 5
      %v927 = vrot.slane %v926, 4
      %v928 = vrot.slane %v488, 5
      %v929 = vsel %vm917, %v927, %v928
      %v930 = vrot.slane %v894, 5
      %v931 = vrot.slane %v930, 4
      %v932 = vrot.slane %v489, 5
      %v933 = vsel %vm917, %v931, %v932
      %v934 = vrot.slane %v895, 5
      %v935 = vrot.slane %v934, 4
      %v936 = vrot.slane %v490, 5
      %v937 = vsel %vm917, %v935, %v936
      %v938 = vrot.slane %v896, 5
      %v939 = vrot.slane %v938, 4
      %v940 = vrot.slane %v491, 5
      %v941 = vsel %vm917, %v939, %v940
      %v942 = vrot.slane %v897, 5
      %v943 = vrot.slane %v942, 4
      %v944 = vrot.slane %v492, 5
      %v945 = vsel %vm917, %v943, %v944
      %v946 = vrot.slane %v898, 5
      %v947 = vrot.slane %v946, 4
      %v948 = vrot.slane %v493, 5
      %v949 = vsel %vm917, %v947, %v948
      %v950 = vld [vmem:[%s3 + $0x80] sm:$0xf]
      %v951 = vld [vmem:[%s3 + $0x84] sm:$0xf]
      %v952 = vld [vmem:[%s3 + $0x88] sm:$0xf]
      %v953 = vld [vmem:[%s3 + $0x8c] sm:$0xf]
      %v954 = vld [vmem:[%s3 + $0x90] sm:$0xf]
      %v955 = vld [vmem:[%s3 + $0x94] sm:$0xf]
      %v956 = vld [vmem:[%s3 + $0x98] sm:$0xf]
      %v957 = vld [vmem:[%s3 + $0x9c] sm:$0xf]
      %v958 = vld [vmem:[%s3 + $0xa0] sm:$0xf]
      %v959 = vld [vmem:[%s3 + $0xa4] sm:$0xf]
      %v960 = vld [vmem:[%s3 + $0xa8] sm:$0xf]
      %v961 = vld [vmem:[%s3 + $0xac] sm:$0xf]
      %v962 = vld [vmem:[%s3 + $0xb0] sm:$0xf]
      %v963 = vld [vmem:[%s3 + $0xb4] sm:$0xf]
      %v964 = vld [vmem:[%s3 + $0xb8] sm:$0xf]
      %v965 = vld [vmem:[%s3 + $0xbc] sm:$0xf]
      %v966 = vunpack.c.l.b16 %v921
      %v967 = vunpack.c.l.b16 %v925
      %v968 = vunpack.c.l.b16 %v929
      %v969 = vunpack.c.l.b16 %v933
      %v970 = vunpack.c.l.b16 %v937
      %v971 = vunpack.c.l.b16 %v941
      %v972 = vunpack.c.l.b16 %v945
      %v973 = vunpack.c.l.b16 %v949
      %v974 = vpack.c.b16 %v967, %v966
      %v975 = vpack.c.b16 %v969, %v968
      %v976 = vpack.c.b16 %v971, %v970
      %v977 = vpack.c.b16 %v973, %v972
      %v998 = vunpack.c.l.b16 %v950
      %v999 = vunpack.c.l.b16 %v951
      %v1000 = vunpack.c.l.b16 %v952
      %v1001 = vunpack.c.l.b16 %v953
      %v1002 = vunpack.c.l.b16 %v954
      %v1003 = vunpack.c.l.b16 %v955
      %v1004 = vunpack.c.l.b16 %v956
      %v1005 = vunpack.c.l.b16 %v957
      %v1006 = vunpack.c.l.b16 %v958
      %v1007 = vunpack.c.l.b16 %v959
      %v1008 = vunpack.c.l.b16 %v960
      %v1009 = vunpack.c.l.b16 %v961
      %v1010 = vunpack.c.l.b16 %v962
      %v1011 = vunpack.c.l.b16 %v963
      %v1012 = vunpack.c.l.b16 %v964
      %v1013 = vunpack.c.l.b16 %v965
      %v1014 = vpack.c.b16 %v999, %v998
      %v1015 = vpack.c.b16 %v1001, %v1000
      %v1016 = vpack.c.b16 %v1003, %v1002
      %v1017 = vpack.c.b16 %v1005, %v1004
      %v1018 = vpack.c.b16 %v1007, %v1006
      %v1019 = vpack.c.b16 %v1009, %v1008
      %v1020 = vpack.c.b16 %v1011, %v1010
      %v1021 = vpack.c.b16 %v1013, %v1012
      %1030 = vmatprep.subr.bf16.mxu0 0
      %1031 = vmatpush1.bf16.msra.mxu0 %v1014
      %1032 = vmatprep.subr.bf16.mxu0 0
      %1033 = vmatpush1.bf16.msra.mxu0 %v1015
      %1034 = vmatprep.subr.bf16.mxu0 0
      %1035 = vmatpush1.bf16.msra.mxu0 %v1016
      %1036 = vmatprep.subr.bf16.mxu0 0
      %1037 = vmatpush1.bf16.msra.mxu0 %v1017
      %1038 = vmatprep.subr.bf16.mxu0 0
      %1039 = vmatpush1.bf16.msra.mxu0 %v1018
      %1040 = vmatprep.subr.bf16.mxu0 0
      %1041 = vmatpush1.bf16.msra.mxu0 %v1019
      %1042 = vmatprep.subr.bf16.mxu0 0
      %1043 = vmatpush1.bf16.msra.mxu0 %v1020
      %1044 = vmatprep.subr.bf16.mxu0 0
      %1045 = vmatpush1.bf16.msra.mxu0 %v1021
      %1046 = vmatprep.subr.bf16.mxu0 0
      %1047 = vmatpush1.bf16.msra.mxu0 0
      %1048 = vmatprep.subr.bf16.mxu0 0
      %1049 = vmatpush1.bf16.msra.mxu0 0
      %1050 = vmatprep.subr.bf16.mxu0 0
      %1051 = vmatpush1.bf16.msra.mxu0 0
      %1052 = vmatprep.subr.bf16.mxu0 0
      %1053 = vmatpush1.bf16.msra.mxu0 0
      %1054 = vmatprep.subr.bf16.mxu0 0
      %1055 = vmatpush1.bf16.msra.mxu0 0
      %1056 = vmatprep.subr.bf16.mxu0 0
      %1057 = vmatpush1.bf16.msra.mxu0 0
      %1058 = vmatprep.subr.bf16.mxu0 0
      %1059 = vmatpush1.bf16.msra.mxu0 0
      %1060 = vmatprep.subr.bf16.mxu0 0
      %1061 = vmatpush1.bf16.msra.mxu0 0
      %1062 = vmatprep.mubr.bf16.mxu0 0
      %1063 = vmatmul.mubr.bf16.gmra.mrb[0].mxu0 %v974
      %v1064 = vpop.f32.mrb[0].mxu0
      %v1065 = vadd.f32 0.0, %v1064
      %v1066 = vpop.f32.mrb[0].mxu0
      %v1067 = vpop.f32.mrb[0].mxu0
      %v1068 = vadd.f32 0.0, %v1067
      %v1069 = vpop.f32.mrb[0].mxu0
      %1070 = vmatprep.mubr.bf16.mxu0 0
      %1071 = vmatmul.mubr.bf16.gmra.mrb[0].mxu0 %v975
      %v1072 = vpop.f32.mrb[0].mxu0
      %v1073 = vadd.f32 0.0, %v1072
      %v1074 = vpop.f32.mrb[0].mxu0
      %v1075 = vpop.f32.mrb[0].mxu0
      %v1076 = vadd.f32 0.0, %v1075
      %v1077 = vpop.f32.mrb[0].mxu0
      %1078 = vmatprep.mubr.bf16.mxu0 0
      %1079 = vmatmul.mubr.bf16.gmra.mrb[0].mxu0 %v976
      %v1080 = vpop.f32.mrb[0].mxu0
      %v1081 = vadd.f32 0.0, %v1080
      %v1082 = vpop.f32.mrb[0].mxu0
      %v1083 = vpop.f32.mrb[0].mxu0
      %v1084 = vadd.f32 0.0, %v1083
      %v1085 = vpop.f32.mrb[0].mxu0
      %1086 = vmatprep.mubr.bf16.mxu0 0
      %1087 = vmatmul.mubr.bf16.gmra.mrb[0].mxu0 %v977
      %v1088 = vpop.f32.mrb[0].mxu0
      %v1089 = vadd.f32 0.0, %v1088
      %v1090 = vpop.f32.mrb[0].mxu0
      %v1091 = vpop.f32.mrb[0].mxu0
      %v1092 = vadd.f32 0.0, %v1091
      %v1093 = vpop.f32.mrb[0].mxu0
      %1094 = vdwg.mxu0
      %v1095 = vadd.f32 %v861, %v1065
      %v1096 = vadd.f32 %v864, %v1068
      %v1097 = vadd.f32 %v869, %v1073
      %v1098 = vadd.f32 %v872, %v1076
      %v1099 = vadd.f32 %v877, %v1081
      %v1100 = vadd.f32 %v880, %v1084
      %v1101 = vadd.f32 %v885, %v1089
      %v1102 = vadd.f32 %v888, %v1092
      %s1103 = scalar_lea.vmem %s418, 8
      %v1104 = vld [vmem:[%s1103] sm:$0xf]
      %v1105 = vld [vmem:[%s1103 + $0x8] sm:$0xf]
      %v1106 = vld [vmem:[%s1103 + $0x10] sm:$0xf]
      %v1107 = vld [vmem:[%s1103 + $0x18] sm:$0xf]
      %v1108 = vld [vmem:[%s1103 + $0x20] sm:$0xf]
      %v1109 = vld [vmem:[%s1103 + $0x28] sm:$0xf]
      %v1110 = vld [vmem:[%s1103 + $0x30] sm:$0xf]
      %v1111 = vld [vmem:[%s1103 + $0x38] sm:$0xf]
      %v1112 = vld [vmem:[%s3 + $0xc0] sm:$0xf]
      %v1113 = vld [vmem:[%s3 + $0xc4] sm:$0xf]
      %v1114 = vld [vmem:[%s3 + $0xc8] sm:$0xf]
      %v1115 = vld [vmem:[%s3 + $0xcc] sm:$0xf]
      %v1116 = vld [vmem:[%s3 + $0xd0] sm:$0xf]
      %v1117 = vld [vmem:[%s3 + $0xd4] sm:$0xf]
      %v1118 = vld [vmem:[%s3 + $0xd8] sm:$0xf]
      %v1119 = vld [vmem:[%s3 + $0xdc] sm:$0xf]
      %v1120 = vld [vmem:[%s3 + $0xe0] sm:$0xf]
      %v1121 = vld [vmem:[%s3 + $0xe4] sm:$0xf]
      %v1122 = vld [vmem:[%s3 + $0xe8] sm:$0xf]
      %v1123 = vld [vmem:[%s3 + $0xec] sm:$0xf]
      %v1124 = vld [vmem:[%s3 + $0xf0] sm:$0xf]
      %v1125 = vld [vmem:[%s3 + $0xf4] sm:$0xf]
      %v1126 = vld [vmem:[%s3 + $0xf8] sm:$0xf]
      %v1127 = vld [vmem:[%s3 + $0xfc] sm:$0xf]
      %v1136 = vunpack.c.l.b16 %v1104
      %v1137 = vunpack.c.l.b16 %v1105
      %v1138 = vunpack.c.l.b16 %v1106
      %v1139 = vunpack.c.l.b16 %v1107
      %v1140 = vunpack.c.l.b16 %v1108
      %v1141 = vunpack.c.l.b16 %v1109
      %v1142 = vunpack.c.l.b16 %v1110
      %v1143 = vunpack.c.l.b16 %v1111
      %v1144 = vpack.c.b16 %v1137, %v1136
      %v1145 = vpack.c.b16 %v1139, %v1138
      %v1146 = vpack.c.b16 %v1141, %v1140
      %v1147 = vpack.c.b16 %v1143, %v1142
      %v1168 = vunpack.c.l.b16 %v1112
      %v1169 = vunpack.c.l.b16 %v1113
      %v1170 = vunpack.c.l.b16 %v1114
      %v1171 = vunpack.c.l.b16 %v1115
      %v1172 = vunpack.c.l.b16 %v1116
      %v1173 = vunpack.c.l.b16 %v1117
      %v1174 = vunpack.c.l.b16 %v1118
      %v1175 = vunpack.c.l.b16 %v1119
      %v1176 = vunpack.c.l.b16 %v1120
      %v1177 = vunpack.c.l.b16 %v1121
      %v1178 = vunpack.c.l.b16 %v1122
      %v1179 = vunpack.c.l.b16 %v1123
      %v1180 = vunpack.c.l.b16 %v1124
      %v1181 = vunpack.c.l.b16 %v1125
      %v1182 = vunpack.c.l.b16 %v1126
      %v1183 = vunpack.c.l.b16 %v1127
      %v1184 = vpack.c.b16 %v1169, %v1168
      %v1185 = vpack.c.b16 %v1171, %v1170
      %v1186 = vpack.c.b16 %v1173, %v1172
      %v1187 = vpack.c.b16 %v1175, %v1174
      %v1188 = vpack.c.b16 %v1177, %v1176
      %v1189 = vpack.c.b16 %v1179, %v1178
      %v1190 = vpack.c.b16 %v1181, %v1180
      %v1191 = vpack.c.b16 %v1183, %v1182
      %1200 = vmatprep.subr.bf16.mxu0 0
      %1201 = vmatpush1.bf16.msra.mxu0 %v1184
      %1202 = vmatprep.subr.bf16.mxu0 0
      %1203 = vmatpush1.bf16.msra.mxu0 %v1185
      %1204 = vmatprep.subr.bf16.mxu0 0
      %1205 = vmatpush1.bf16.msra.mxu0 %v1186
      %1206 = vmatprep.subr.bf16.mxu0 0
      %1207 = vmatpush1.bf16.msra.mxu0 %v1187
      %1208 = vmatprep.subr.bf16.mxu0 0
      %1209 = vmatpush1.bf16.msra.mxu0 %v1188
      %1210 = vmatprep.subr.bf16.mxu0 0
      %1211 = vmatpush1.bf16.msra.mxu0 %v1189
      %1212 = vmatprep.subr.bf16.mxu0 0
      %1213 = vmatpush1.bf16.msra.mxu0 %v1190
      %1214 = vmatprep.subr.bf16.mxu0 0
      %1215 = vmatpush1.bf16.msra.mxu0 %v1191
      %1216 = vmatprep.subr.bf16.mxu0 0
      %1217 = vmatpush1.bf16.msra.mxu0 0
      %1218 = vmatprep.subr.bf16.mxu0 0
      %1219 = vmatpush1.bf16.msra.mxu0 0
      %1220 = vmatprep.subr.bf16.mxu0 0
      %1221 = vmatpush1.bf16.msra.mxu0 0
      %1222 = vmatprep.subr.bf16.mxu0 0
      %1223 = vmatpush1.bf16.msra.mxu0 0
      %1224 = vmatprep.subr.bf16.mxu0 0
      %1225 = vmatpush1.bf16.msra.mxu0 0
      %1226 = vmatprep.subr.bf16.mxu0 0
      %1227 = vmatpush1.bf16.msra.mxu0 0
      %1228 = vmatprep.subr.bf16.mxu0 0
      %1229 = vmatpush1.bf16.msra.mxu0 0
      %1230 = vmatprep.subr.bf16.mxu0 0
      %1231 = vmatpush1.bf16.msra.mxu0 0
      %1232 = vmatprep.mubr.bf16.mxu0 0
      %1233 = vmatmul.mubr.bf16.gmra.mrb[0].mxu0 %v1144
      %v1234 = vpop.f32.mrb[0].mxu0
      %v1235 = vadd.f32 0.0, %v1234
      %v1236 = vpop.f32.mrb[0].mxu0
      %v1237 = vpop.f32.mrb[0].mxu0
      %v1238 = vadd.f32 0.0, %v1237
      %v1239 = vpop.f32.mrb[0].mxu0
      %1240 = vmatprep.mubr.bf16.mxu0 0
      %1241 = vmatmul.mubr.bf16.gmra.mrb[0].mxu0 %v1145
      %v1242 = vpop.f32.mrb[0].mxu0
      %v1243 = vadd.f32 0.0, %v1242
      %v1244 = vpop.f32.mrb[0].mxu0
      %v1245 = vpop.f32.mrb[0].mxu0
      %v1246 = vadd.f32 0.0, %v1245
      %v1247 = vpop.f32.mrb[0].mxu0
      %1248 = vmatprep.mubr.bf16.mxu0 0
      %1249 = vmatmul.mubr.bf16.gmra.mrb[0].mxu0 %v1146
      %v1250 = vpop.f32.mrb[0].mxu0
      %v1251 = vadd.f32 0.0, %v1250
      %v1252 = vpop.f32.mrb[0].mxu0
      %v1253 = vpop.f32.mrb[0].mxu0
      %v1254 = vadd.f32 0.0, %v1253
      %v1255 = vpop.f32.mrb[0].mxu0
      %1256 = vmatprep.mubr.bf16.mxu0 0
      %1257 = vmatmul.mubr.bf16.gmra.mrb[0].mxu0 %v1147
      %v1258 = vpop.f32.mrb[0].mxu0
      %v1259 = vadd.f32 0.0, %v1258
      %v1260 = vpop.f32.mrb[0].mxu0
      %v1261 = vpop.f32.mrb[0].mxu0
      %v1262 = vadd.f32 0.0, %v1261
      %v1263 = vpop.f32.mrb[0].mxu0
      %1264 = vdwg.mxu0
      %v1265 = vadd.f32 %v1095, %v1235
      %v1266 = vadd.f32 %v1096, %v1238
      %v1267 = vadd.f32 %v1097, %v1243
      %v1268 = vadd.f32 %v1098, %v1246
      %v1269 = vadd.f32 %v1099, %v1251
      %v1270 = vadd.f32 %v1100, %v1254
      %v1271 = vadd.f32 %v1101, %v1259
      %v1272 = vadd.f32 %v1102, %v1262
      %v1273 = vld [vmem:[%s1103] sm:$0xf]
      %v1274 = vld [vmem:[%s1103 + $0x4] sm:$0x1]
      %v1275 = vld [vmem:[%s1103 + $0x8] sm:$0xf]
      %v1276 = vld [vmem:[%s1103 + $0xc] sm:$0x1]
      %v1277 = vld [vmem:[%s1103 + $0x10] sm:$0xf]
      %v1278 = vld [vmem:[%s1103 + $0x14] sm:$0x1]
      %v1279 = vld [vmem:[%s1103 + $0x18] sm:$0xf]
      %v1280 = vld [vmem:[%s1103 + $0x1c] sm:$0x1]
      %v1281 = vld [vmem:[%s1103 + $0x20] sm:$0xf]
      %v1282 = vld [vmem:[%s1103 + $0x24] sm:$0x1]
      %v1283 = vld [vmem:[%s1103 + $0x28] sm:$0xf]
      %v1284 = vld [vmem:[%s1103 + $0x2c] sm:$0x1]
      %v1285 = vld [vmem:[%s1103 + $0x30] sm:$0xf]
      %v1286 = vld [vmem:[%s1103 + $0x34] sm:$0x1]
      %v1287 = vld [vmem:[%s1103 + $0x38] sm:$0xf]
      %v1288 = vld [vmem:[%s1103 + $0x3c] sm:$0x1]
      %v1290 = vshrl.u32 %v1273, 16
      %v1292 = vrot.slane %v1290, 4
      %v1293 = vshll.u32 %v1273, 16
      %v1295 = vrot.slane %v1293, 5
      %v1296 = vor.u32 %v1292, %v1295
      %v1297 = vrot.slane %v1296, 4
      %v1299 = vshll.u32 %v1274, 16
      %v1301 = vrot.slane %v1299, 5
      %v1302 = vsel %vm496, %v1297, %v1301
      %v1304 = vshrl.u32 %v1275, 16
      %v1306 = vrot.slane %v1304, 4
      %v1307 = vshll.u32 %v1275, 16
      %v1309 = vrot.slane %v1307, 5
      %v1310 = vor.u32 %v1306, %v1309
      %v1311 = vrot.slane %v1310, 4
      %v1313 = vshll.u32 %v1276, 16
      %v1315 = vrot.slane %v1313, 5
      %v1316 = vsel %vm496, %v1311, %v1315
      %v1318 = vshrl.u32 %v1277, 16
      %v1320 = vrot.slane %v1318, 4
      %v1321 = vshll.u32 %v1277, 16
      %v1323 = vrot.slane %v1321, 5
      %v1324 = vor.u32 %v1320, %v1323
      %v1325 = vrot.slane %v1324, 4
      %v1327 = vshll.u32 %v1278, 16
      %v1329 = vrot.slane %v1327, 5
      %v1330 = vsel %vm496, %v1325, %v1329
      %v1332 = vshrl.u32 %v1279, 16
      %v1334 = vrot.slane %v1332, 4
      %v1335 = vshll.u32 %v1279, 16
      %v1337 = vrot.slane %v1335, 5
      %v1338 = vor.u32 %v1334, %v1337
      %v1339 = vrot.slane %v1338, 4
      %v1341 = vshll.u32 %v1280, 16
      %v1343 = vrot.slane %v1341, 5
      %v1344 = vsel %vm496, %v1339, %v1343
      %v1346 = vshrl.u32 %v1281, 16
      %v1348 = vrot.slane %v1346, 4
      %v1349 = vshll.u32 %v1281, 16
      %v1351 = vrot.slane %v1349, 5
      %v1352 = vor.u32 %v1348, %v1351
      %v1353 = vrot.slane %v1352, 4
      %v1355 = vshll.u32 %v1282, 16
      %v1357 = vrot.slane %v1355, 5
      %v1358 = vsel %vm496, %v1353, %v1357
      %v1360 = vshrl.u32 %v1283, 16
      %v1362 = vrot.slane %v1360, 4
      %v1363 = vshll.u32 %v1283, 16
      %v1365 = vrot.slane %v1363, 5
      %v1366 = vor.u32 %v1362, %v1365
      %v1367 = vrot.slane %v1366, 4
      %v1369 = vshll.u32 %v1284, 16
      %v1371 = vrot.slane %v1369, 5
      %v1372 = vsel %vm496, %v1367, %v1371
      %v1374 = vshrl.u32 %v1285, 16
      %v1376 = vrot.slane %v1374, 4
      %v1377 = vshll.u32 %v1285, 16
      %v1379 = vrot.slane %v1377, 5
      %v1380 = vor.u32 %v1376, %v1379
      %v1381 = vrot.slane %v1380, 4
      %v1383 = vshll.u32 %v1286, 16
      %v1385 = vrot.slane %v1383, 5
      %v1386 = vsel %vm496, %v1381, %v1385
      %v1388 = vshrl.u32 %v1287, 16
      %v1390 = vrot.slane %v1388, 4
      %v1391 = vshll.u32 %v1287, 16
      %v1393 = vrot.slane %v1391, 5
      %v1394 = vor.u32 %v1390, %v1393
      %v1395 = vrot.slane %v1394, 4
      %v1397 = vshll.u32 %v1288, 16
      %v1399 = vrot.slane %v1397, 5
      %v1400 = vsel %vm496, %v1395, %v1399
      %v1401 = vld [vmem:[%s3 + $0x100] sm:$0xf]
      %v1402 = vld [vmem:[%s3 + $0x104] sm:$0xf]
      %v1403 = vld [vmem:[%s3 + $0x108] sm:$0xf]
      %v1404 = vld [vmem:[%s3 + $0x10c] sm:$0xf]
      %v1405 = vld [vmem:[%s3 + $0x110] sm:$0xf]
      %v1406 = vld [vmem:[%s3 + $0x114] sm:$0xf]
      %v1407 = vld [vmem:[%s3 + $0x118] sm:$0xf]
      %v1408 = vld [vmem:[%s3 + $0x11c] sm:$0xf]
      %v1409 = vld [vmem:[%s3 + $0x120] sm:$0xf]
      %v1410 = vld [vmem:[%s3 + $0x124] sm:$0xf]
      %v1411 = vld [vmem:[%s3 + $0x128] sm:$0xf]
      %v1412 = vld [vmem:[%s3 + $0x12c] sm:$0xf]
      %v1413 = vld [vmem:[%s3 + $0x130] sm:$0xf]
      %v1414 = vld [vmem:[%s3 + $0x134] sm:$0xf]
      %v1415 = vld [vmem:[%s3 + $0x138] sm:$0xf]
      %v1416 = vld [vmem:[%s3 + $0x13c] sm:$0xf]
      %v1417 = vunpack.c.l.b16 %v1302
      %v1418 = vunpack.c.l.b16 %v1316
      %v1419 = vunpack.c.l.b16 %v1330
      %v1420 = vunpack.c.l.b16 %v1344
      %v1421 = vunpack.c.l.b16 %v1358
      %v1422 = vunpack.c.l.b16 %v1372
      %v1423 = vunpack.c.l.b16 %v1386
      %v1424 = vunpack.c.l.b16 %v1400
      %v1425 = vpack.c.b16 %v1418, %v1417
      %v1426 = vpack.c.b16 %v1420, %v1419
      %v1427 = vpack.c.b16 %v1422, %v1421
      %v1428 = vpack.c.b16 %v1424, %v1423
      %v1449 = vunpack.c.l.b16 %v1401
      %v1450 = vunpack.c.l.b16 %v1402
      %v1451 = vunpack.c.l.b16 %v1403
      %v1452 = vunpack.c.l.b16 %v1404
      %v1453 = vunpack.c.l.b16 %v1405
      %v1454 = vunpack.c.l.b16 %v1406
      %v1455 = vunpack.c.l.b16 %v1407
      %v1456 = vunpack.c.l.b16 %v1408
      %v1457 = vunpack.c.l.b16 %v1409
      %v1458 = vunpack.c.l.b16 %v1410
      %v1459 = vunpack.c.l.b16 %v1411
      %v1460 = vunpack.c.l.b16 %v1412
      %v1461 = vunpack.c.l.b16 %v1413
      %v1462 = vunpack.c.l.b16 %v1414
      %v1463 = vunpack.c.l.b16 %v1415
      %v1464 = vunpack.c.l.b16 %v1416
      %v1465 = vpack.c.b16 %v1450, %v1449
      %v1466 = vpack.c.b16 %v1452, %v1451
      %v1467 = vpack.c.b16 %v1454, %v1453
      %v1468 = vpack.c.b16 %v1456, %v1455
      %v1469 = vpack.c.b16 %v1458, %v1457
      %v1470 = vpack.c.b16 %v1460, %v1459
      %v1471 = vpack.c.b16 %v1462, %v1461
      %v1472 = vpack.c.b16 %v1464, %v1463
      %1481 = vmatprep.subr.bf16.mxu0 0
      %1482 = vmatpush1.bf16.msra.mxu0 %v1465
      %1483 = vmatprep.subr.bf16.mxu0 0
      %1484 = vmatpush1.bf16.msra.mxu0 %v1466
      %1485 = vmatprep.subr.bf16.mxu0 0
      %1486 = vmatpush1.bf16.msra.mxu0 %v1467
      %1487 = vmatprep.subr.bf16.mxu0 0
      %1488 = vmatpush1.bf16.msra.mxu0 %v1468
      %1489 = vmatprep.subr.bf16.mxu0 0
      %1490 = vmatpush1.bf16.msra.mxu0 %v1469
      %1491 = vmatprep.subr.bf16.mxu0 0
      %1492 = vmatpush1.bf16.msra.mxu0 %v1470
      %1493 = vmatprep.subr.bf16.mxu0 0
      %1494 = vmatpush1.bf16.msra.mxu0 %v1471
      %1495 = vmatprep.subr.bf16.mxu0 0
      %1496 = vmatpush1.bf16.msra.mxu0 %v1472
      %1497 = vmatprep.subr.bf16.mxu0 0
      %1498 = vmatpush1.bf16.msra.mxu0 0
      %1499 = vmatprep.subr.bf16.mxu0 0
      %1500 = vmatpush1.bf16.msra.mxu0 0
      %1501 = vmatprep.subr.bf16.mxu0 0
      %1502 = vmatpush1.bf16.msra.mxu0 0
      %1503 = vmatprep.subr.bf16.mxu0 0
      %1504 = vmatpush1.bf16.msra.mxu0 0
      %1505 = vmatprep.subr.bf16.mxu0 0
      %1506 = vmatpush1.bf16.msra.mxu0 0
      %1507 = vmatprep.subr.bf16.mxu0 0
      %1508 = vmatpush1.bf16.msra.mxu0 0
      %1509 = vmatprep.subr.bf16.mxu0 0
      %1510 = vmatpush1.bf16.msra.mxu0 0
      %1511 = vmatprep.subr.bf16.mxu0 0
      %1512 = vmatpush1.bf16.msra.mxu0 0
      %1513 = vmatprep.mubr.bf16.mxu0 0
      %1514 = vmatmul.mubr.bf16.gmra.mrb[0].mxu0 %v1425
      %v1515 = vpop.f32.mrb[0].mxu0
      %v1516 = vadd.f32 0.0, %v1515
      %v1517 = vpop.f32.mrb[0].mxu0
      %v1518 = vpop.f32.mrb[0].mxu0
      %v1519 = vadd.f32 0.0, %v1518
      %v1520 = vpop.f32.mrb[0].mxu0
      %1521 = vmatprep.mubr.bf16.mxu0 0
      %1522 = vmatmul.mubr.bf16.gmra.mrb[0].mxu0 %v1426
      %v1523 = vpop.f32.mrb[0].mxu0
      %v1524 = vadd.f32 0.0, %v1523
      %v1525 = vpop.f32.mrb[0].mxu0
      %v1526 = vpop.f32.mrb[0].mxu0
      %v1527 = vadd.f32 0.0, %v1526
      %v1528 = vpop.f32.mrb[0].mxu0
      %1529 = vmatprep.mubr.bf16.mxu0 0
      %1530 = vmatmul.mubr.bf16.gmra.mrb[0].mxu0 %v1427
      %v1531 = vpop.f32.mrb[0].mxu0
      %v1532 = vadd.f32 0.0, %v1531
      %v1533 = vpop.f32.mrb[0].mxu0
      %v1534 = vpop.f32.mrb[0].mxu0
      %v1535 = vadd.f32 0.0, %v1534
      %v1536 = vpop.f32.mrb[0].mxu0
      %1537 = vmatprep.mubr.bf16.mxu0 0
      %1538 = vmatmul.mubr.bf16.gmra.mrb[0].mxu0 %v1428
      %v1539 = vpop.f32.mrb[0].mxu0
      %v1540 = vadd.f32 0.0, %v1539
      %v1541 = vpop.f32.mrb[0].mxu0
      %v1542 = vpop.f32.mrb[0].mxu0
      %v1543 = vadd.f32 0.0, %v1542
      %v1544 = vpop.f32.mrb[0].mxu0
      %1545 = vdwg.mxu0
      %v1546 = vadd.f32 %v1265, %v1516
      %v1547 = vadd.f32 %v1266, %v1519
      %v1548 = vadd.f32 %v1267, %v1524
      %v1549 = vadd.f32 %v1268, %v1527
      %v1550 = vadd.f32 %v1269, %v1532
      %v1551 = vadd.f32 %v1270, %v1535
      %v1552 = vadd.f32 %v1271, %v1540
      %v1553 = vadd.f32 %v1272, %v1543
      %v1554 = vld [vmem:[%s1103] sm:$0xe]
      %v1555 = vld [vmem:[%s1103 + $0x8] sm:$0xe]
      %v1556 = vld [vmem:[%s1103 + $0x10] sm:$0xe]
      %v1557 = vld [vmem:[%s1103 + $0x18] sm:$0xe]
      %v1558 = vld [vmem:[%s1103 + $0x20] sm:$0xe]
      %v1559 = vld [vmem:[%s1103 + $0x28] sm:$0xe]
      %v1560 = vld [vmem:[%s1103 + $0x30] sm:$0xe]
      %v1561 = vld [vmem:[%s1103 + $0x38] sm:$0xe]
      %v1578 = vrot.slane %v1554, 5
      %v1579 = vrot.slane %v1578, 4
      %v1580 = vrot.slane %v1274, 5
      %v1581 = vsel %vm917, %v1579, %v1580
      %v1582 = vrot.slane %v1555, 5
      %v1583 = vrot.slane %v1582, 4
      %v1584 = vrot.slane %v1276, 5
      %v1585 = vsel %vm917, %v1583, %v1584
      %v1586 = vrot.slane %v1556, 5
      %v1587 = vrot.slane %v1586, 4
      %v1588 = vrot.slane %v1278, 5
      %v1589 = vsel %vm917, %v1587, %v1588
      %v1590 = vrot.slane %v1557, 5
      %v1591 = vrot.slane %v1590, 4
      %v1592 = vrot.slane %v1280, 5
      %v1593 = vsel %vm917, %v1591, %v1592
      %v1594 = vrot.slane %v1558, 5
      %v1595 = vrot.slane %v1594, 4
      %v1596 = vrot.slane %v1282, 5
      %v1597 = vsel %vm917, %v1595, %v1596
      %v1598 = vrot.slane %v1559, 5
      %v1599 = vrot.slane %v1598, 4
      %v1600 = vrot.slane %v1284, 5
      %v1601 = vsel %vm917, %v1599, %v1600
      %v1602 = vrot.slane %v1560, 5
      %v1603 = vrot.slane %v1602, 4
      %v1604 = vrot.slane %v1286, 5
      %v1605 = vsel %vm917, %v1603, %v1604
      %v1606 = vrot.slane %v1561, 5
      %v1607 = vrot.slane %v1606, 4
      %v1608 = vrot.slane %v1288, 5
      %v1609 = vsel %vm917, %v1607, %v1608
      %v1610 = vld [vmem:[%s3 + $0x140] sm:$0xf]
      %v1611 = vld [vmem:[%s3 + $0x144] sm:$0xf]
      %v1612 = vld [vmem:[%s3 + $0x148] sm:$0xf]
      %v1613 = vld [vmem:[%s3 + $0x14c] sm:$0xf]
      %v1614 = vld [vmem:[%s3 + $0x150] sm:$0xf]
      %v1615 = vld [vmem:[%s3 + $0x154] sm:$0xf]
      %v1616 = vld [vmem:[%s3 + $0x158] sm:$0xf]
      %v1617 = vld [vmem:[%s3 + $0x15c] sm:$0xf]
      %v1618 = vld [vmem:[%s3 + $0x160] sm:$0xf]
      %v1619 = vld [vmem:[%s3 + $0x164] sm:$0xf]
      %v1620 = vld [vmem:[%s3 + $0x168] sm:$0xf]
      %v1621 = vld [vmem:[%s3 + $0x16c] sm:$0xf]
      %v1622 = vld [vmem:[%s3 + $0x170] sm:$0xf]
      %v1623 = vld [vmem:[%s3 + $0x174] sm:$0xf]
      %v1624 = vld [vmem:[%s3 + $0x178] sm:$0xf]
      %v1625 = vld [vmem:[%s3 + $0x17c] sm:$0xf]
      %v1626 = vunpack.c.l.b16 %v1581
      %v1627 = vunpack.c.l.b16 %v1585
      %v1628 = vunpack.c.l.b16 %v1589
      %v1629 = vunpack.c.l.b16 %v1593
      %v1630 = vunpack.c.l.b16 %v1597
      %v1631 = vunpack.c.l.b16 %v1601
      %v1632 = vunpack.c.l.b16 %v1605
      %v1633 = vunpack.c.l.b16 %v1609
      %v1634 = vpack.c.b16 %v1627, %v1626
      %v1635 = vpack.c.b16 %v1629, %v1628
      %v1636 = vpack.c.b16 %v1631, %v1630
      %v1637 = vpack.c.b16 %v1633, %v1632
      %v1658 = vunpack.c.l.b16 %v1610
      %v1659 = vunpack.c.l.b16 %v1611
      %v1660 = vunpack.c.l.b16 %v1612
      %v1661 = vunpack.c.l.b16 %v1613
      %v1662 = vunpack.c.l.b16 %v1614
      %v1663 = vunpack.c.l.b16 %v1615
      %v1664 = vunpack.c.l.b16 %v1616
      %v1665 = vunpack.c.l.b16 %v1617
      %v1666 = vunpack.c.l.b16 %v1618
      %v1667 = vunpack.c.l.b16 %v1619
      %v1668 = vunpack.c.l.b16 %v1620
      %v1669 = vunpack.c.l.b16 %v1621
      %v1670 = vunpack.c.l.b16 %v1622
      %v1671 = vunpack.c.l.b16 %v1623
      %v1672 = vunpack.c.l.b16 %v1624
      %v1673 = vunpack.c.l.b16 %v1625
      %v1674 = vpack.c.b16 %v1659, %v1658
      %v1675 = vpack.c.b16 %v1661, %v1660
      %v1676 = vpack.c.b16 %v1663, %v1662
      %v1677 = vpack.c.b16 %v1665, %v1664
      %v1678 = vpack.c.b16 %v1667, %v1666
      %v1679 = vpack.c.b16 %v1669, %v1668
      %v1680 = vpack.c.b16 %v1671, %v1670
      %v1681 = vpack.c.b16 %v1673, %v1672
      %1690 = vmatprep.subr.bf16.mxu0 0
      %1691 = vmatpush1.bf16.msra.mxu0 %v1674
      %1692 = vmatprep.subr.bf16.mxu0 0
      %1693 = vmatpush1.bf16.msra.mxu0 %v1675
      %1694 = vmatprep.subr.bf16.mxu0 0
      %1695 = vmatpush1.bf16.msra.mxu0 %v1676
      %1696 = vmatprep.subr.bf16.mxu0 0
      %1697 = vmatpush1.bf16.msra.mxu0 %v1677
      %1698 = vmatprep.subr.bf16.mxu0 0
      %1699 = vmatpush1.bf16.msra.mxu0 %v1678
      %1700 = vmatprep.subr.bf16.mxu0 0
      %1701 = vmatpush1.bf16.msra.mxu0 %v1679
      %1702 = vmatprep.subr.bf16.mxu0 0
      %1703 = vmatpush1.bf16.msra.mxu0 %v1680
      %1704 = vmatprep.subr.bf16.mxu0 0
      %1705 = vmatpush1.bf16.msra.mxu0 %v1681
      %1706 = vmatprep.subr.bf16.mxu0 0
      %1707 = vmatpush1.bf16.msra.mxu0 0
      %1708 = vmatprep.subr.bf16.mxu0 0
      %1709 = vmatpush1.bf16.msra.mxu0 0
      %1710 = vmatprep.subr.bf16.mxu0 0
      %1711 = vmatpush1.bf16.msra.mxu0 0
      %1712 = vmatprep.subr.bf16.mxu0 0
      %1713 = vmatpush1.bf16.msra.mxu0 0
      %1714 = vmatprep.subr.bf16.mxu0 0
      %1715 = vmatpush1.bf16.msra.mxu0 0
      %1716 = vmatprep.subr.bf16.mxu0 0
      %1717 = vmatpush1.bf16.msra.mxu0 0
      %1718 = vmatprep.subr.bf16.mxu0 0
      %1719 = vmatpush1.bf16.msra.mxu0 0
      %1720 = vmatprep.subr.bf16.mxu0 0
      %1721 = vmatpush1.bf16.msra.mxu0 0
      %1722 = vmatprep.mubr.bf16.mxu0 0
      %1723 = vmatmul.mubr.bf16.gmra.mrb[0].mxu0 %v1634
      %v1724 = vpop.f32.mrb[0].mxu0
      %v1725 = vadd.f32 0.0, %v1724
      %v1726 = vpop.f32.mrb[0].mxu0
      %v1727 = vpop.f32.mrb[0].mxu0
      %v1728 = vadd.f32 0.0, %v1727
      %v1729 = vpop.f32.mrb[0].mxu0
      %1730 = vmatprep.mubr.bf16.mxu0 0
      %1731 = vmatmul.mubr.bf16.gmra.mrb[0].mxu0 %v1635
      %v1732 = vpop.f32.mrb[0].mxu0
      %v1733 = vadd.f32 0.0, %v1732
      %v1734 = vpop.f32.mrb[0].mxu0
      %v1735 = vpop.f32.mrb[0].mxu0
      %v1736 = vadd.f32 0.0, %v1735
      %v1737 = vpop.f32.mrb[0].mxu0
      %1738 = vmatprep.mubr.bf16.mxu0 0
      %1739 = vmatmul.mubr.bf16.gmra.mrb[0].mxu0 %v1636
      %v1740 = vpop.f32.mrb[0].mxu0
      %v1741 = vadd.f32 0.0, %v1740
      %v1742 = vpop.f32.mrb[0].mxu0
      %v1743 = vpop.f32.mrb[0].mxu0
      %v1744 = vadd.f32 0.0, %v1743
      %v1745 = vpop.f32.mrb[0].mxu0
      %1746 = vmatprep.mubr.bf16.mxu0 0
      %1747 = vmatmul.mubr.bf16.gmra.mrb[0].mxu0 %v1637
      %v1748 = vpop.f32.mrb[0].mxu0
      %v1749 = vadd.f32 0.0, %v1748
      %v1750 = vpop.f32.mrb[0].mxu0
      %v1751 = vpop.f32.mrb[0].mxu0
      %v1752 = vadd.f32 0.0, %v1751
      %v1753 = vpop.f32.mrb[0].mxu0
      %1754 = vdwg.mxu0
      %v1755 = vadd.f32 %v1546, %v1725
      %v1756 = vadd.f32 %v1547, %v1728
      %v1757 = vadd.f32 %v1548, %v1733
      %v1758 = vadd.f32 %v1549, %v1736
      %v1759 = vadd.f32 %v1550, %v1741
      %v1760 = vadd.f32 %v1551, %v1744
      %v1761 = vadd.f32 %v1552, %v1749
      %v1762 = vadd.f32 %v1553, %v1752
      %s1763 = scalar_lea.vmem %s418, 16
      %v1764 = vld [vmem:[%s1763] sm:$0xf]
      %v1765 = vld [vmem:[%s1763 + $0x8] sm:$0xf]
      %v1766 = vld [vmem:[%s1763 + $0x10] sm:$0xf]
      %v1767 = vld [vmem:[%s1763 + $0x18] sm:$0xf]
      %v1768 = vld [vmem:[%s1763 + $0x20] sm:$0xf]
      %v1769 = vld [vmem:[%s1763 + $0x28] sm:$0xf]
      %v1770 = vld [vmem:[%s1763 + $0x30] sm:$0xf]
      %v1771 = vld [vmem:[%s1763 + $0x38] sm:$0xf]
      %v1772 = vld [vmem:[%s3 + $0x180] sm:$0xf]
      %v1773 = vld [vmem:[%s3 + $0x184] sm:$0xf]
      %v1774 = vld [vmem:[%s3 + $0x188] sm:$0xf]
      %v1775 = vld [vmem:[%s3 + $0x18c] sm:$0xf]
      %v1776 = vld [vmem:[%s3 + $0x190] sm:$0xf]
      %v1777 = vld [vmem:[%s3 + $0x194] sm:$0xf]
      %v1778 = vld [vmem:[%s3 + $0x198] sm:$0xf]
      %v1779 = vld [vmem:[%s3 + $0x19c] sm:$0xf]
      %v1780 = vld [vmem:[%s3 + $0x1a0] sm:$0xf]
      %v1781 = vld [vmem:[%s3 + $0x1a4] sm:$0xf]
      %v1782 = vld [vmem:[%s3 + $0x1a8] sm:$0xf]
      %v1783 = vld [vmem:[%s3 + $0x1ac] sm:$0xf]
      %v1784 = vld [vmem:[%s3 + $0x1b0] sm:$0xf]
      %v1785 = vld [vmem:[%s3 + $0x1b4] sm:$0xf]
      %v1786 = vld [vmem:[%s3 + $0x1b8] sm:$0xf]
      %v1787 = vld [vmem:[%s3 + $0x1bc] sm:$0xf]
      %v1796 = vunpack.c.l.b16 %v1764
      %v1797 = vunpack.c.l.b16 %v1765
      %v1798 = vunpack.c.l.b16 %v1766
      %v1799 = vunpack.c.l.b16 %v1767
      %v1800 = vunpack.c.l.b16 %v1768
      %v1801 = vunpack.c.l.b16 %v1769
      %v1802 = vunpack.c.l.b16 %v1770
      %v1803 = vunpack.c.l.b16 %v1771
      %v1804 = vpack.c.b16 %v1797, %v1796
      %v1805 = vpack.c.b16 %v1799, %v1798
      %v1806 = vpack.c.b16 %v1801, %v1800
      %v1807 = vpack.c.b16 %v1803, %v1802
      %v1828 = vunpack.c.l.b16 %v1772
      %v1829 = vunpack.c.l.b16 %v1773
      %v1830 = vunpack.c.l.b16 %v1774
      %v1831 = vunpack.c.l.b16 %v1775
      %v1832 = vunpack.c.l.b16 %v1776
      %v1833 = vunpack.c.l.b16 %v1777
      %v1834 = vunpack.c.l.b16 %v1778
      %v1835 = vunpack.c.l.b16 %v1779
      %v1836 = vunpack.c.l.b16 %v1780
      %v1837 = vunpack.c.l.b16 %v1781
      %v1838 = vunpack.c.l.b16 %v1782
      %v1839 = vunpack.c.l.b16 %v1783
      %v1840 = vunpack.c.l.b16 %v1784
      %v1841 = vunpack.c.l.b16 %v1785
      %v1842 = vunpack.c.l.b16 %v1786
      %v1843 = vunpack.c.l.b16 %v1787
      %v1844 = vpack.c.b16 %v1829, %v1828
      %v1845 = vpack.c.b16 %v1831, %v1830
      %v1846 = vpack.c.b16 %v1833, %v1832
      %v1847 = vpack.c.b16 %v1835, %v1834
      %v1848 = vpack.c.b16 %v1837, %v1836
      %v1849 = vpack.c.b16 %v1839, %v1838
      %v1850 = vpack.c.b16 %v1841, %v1840
      %v1851 = vpack.c.b16 %v1843, %v1842
      %1860 = vmatprep.subr.bf16.mxu0 0
      %1861 = vmatpush1.bf16.msra.mxu0 %v1844
      %1862 = vmatprep.subr.bf16.mxu0 0
      %1863 = vmatpush1.bf16.msra.mxu0 %v1845
      %1864 = vmatprep.subr.bf16.mxu0 0
      %1865 = vmatpush1.bf16.msra.mxu0 %v1846
      %1866 = vmatprep.subr.bf16.mxu0 0
      %1867 = vmatpush1.bf16.msra.mxu0 %v1847
      %1868 = vmatprep.subr.bf16.mxu0 0
      %1869 = vmatpush1.bf16.msra.mxu0 %v1848
      %1870 = vmatprep.subr.bf16.mxu0 0
      %1871 = vmatpush1.bf16.msra.mxu0 %v1849
      %1872 = vmatprep.subr.bf16.mxu0 0
      %1873 = vmatpush1.bf16.msra.mxu0 %v1850
      %1874 = vmatprep.subr.bf16.mxu0 0
      %1875 = vmatpush1.bf16.msra.mxu0 %v1851
      %1876 = vmatprep.subr.bf16.mxu0 0
      %1877 = vmatpush1.bf16.msra.mxu0 0
      %1878 = vmatprep.subr.bf16.mxu0 0
      %1879 = vmatpush1.bf16.msra.mxu0 0
      %1880 = vmatprep.subr.bf16.mxu0 0
      %1881 = vmatpush1.bf16.msra.mxu0 0
      %1882 = vmatprep.subr.bf16.mxu0 0
      %1883 = vmatpush1.bf16.msra.mxu0 0
      %1884 = vmatprep.subr.bf16.mxu0 0
      %1885 = vmatpush1.bf16.msra.mxu0 0
      %1886 = vmatprep.subr.bf16.mxu0 0
      %1887 = vmatpush1.bf16.msra.mxu0 0
      %1888 = vmatprep.subr.bf16.mxu0 0
      %1889 = vmatpush1.bf16.msra.mxu0 0
      %1890 = vmatprep.subr.bf16.mxu0 0
      %1891 = vmatpush1.bf16.msra.mxu0 0
      %1892 = vmatprep.mubr.bf16.mxu0 0
      %1893 = vmatmul.mubr.bf16.gmra.mrb[0].mxu0 %v1804
      %v1894 = vpop.f32.mrb[0].mxu0
      %v1895 = vadd.f32 0.0, %v1894
      %v1896 = vpop.f32.mrb[0].mxu0
      %v1897 = vpop.f32.mrb[0].mxu0
      %v1898 = vadd.f32 0.0, %v1897
      %v1899 = vpop.f32.mrb[0].mxu0
      %1900 = vmatprep.mubr.bf16.mxu0 0
      %1901 = vmatmul.mubr.bf16.gmra.mrb[0].mxu0 %v1805
      %v1902 = vpop.f32.mrb[0].mxu0
      %v1903 = vadd.f32 0.0, %v1902
      %v1904 = vpop.f32.mrb[0].mxu0
      %v1905 = vpop.f32.mrb[0].mxu0
      %v1906 = vadd.f32 0.0, %v1905
      %v1907 = vpop.f32.mrb[0].mxu0
      %1908 = vmatprep.mubr.bf16.mxu0 0
      %1909 = vmatmul.mubr.bf16.gmra.mrb[0].mxu0 %v1806
      %v1910 = vpop.f32.mrb[0].mxu0
      %v1911 = vadd.f32 0.0, %v1910
      %v1912 = vpop.f32.mrb[0].mxu0
      %v1913 = vpop.f32.mrb[0].mxu0
      %v1914 = vadd.f32 0.0, %v1913
      %v1915 = vpop.f32.mrb[0].mxu0
      %1916 = vmatprep.mubr.bf16.mxu0 0
      %1917 = vmatmul.mubr.bf16.gmra.mrb[0].mxu0 %v1807
      %v1918 = vpop.f32.mrb[0].mxu0
      %v1919 = vadd.f32 0.0, %v1918
      %v1920 = vpop.f32.mrb[0].mxu0
      %v1921 = vpop.f32.mrb[0].mxu0
      %v1922 = vadd.f32 0.0, %v1921
      %v1923 = vpop.f32.mrb[0].mxu0
      %1924 = vdwg.mxu0
      %v1925 = vadd.f32 %v1755, %v1895
      %v1926 = vadd.f32 %v1756, %v1898
      %v1927 = vadd.f32 %v1757, %v1903
      %v1928 = vadd.f32 %v1758, %v1906
      %v1929 = vadd.f32 %v1759, %v1911
      %v1930 = vadd.f32 %v1760, %v1914
      %v1931 = vadd.f32 %v1761, %v1919
      %v1932 = vadd.f32 %v1762, %v1922
      %v1933 = vld [vmem:[%s1763] sm:$0xf]
      %v1934 = vld [vmem:[%s1763 + $0x4] sm:$0x1]
      %v1935 = vld [vmem:[%s1763 + $0x8] sm:$0xf]
      %v1936 = vld [vmem:[%s1763 + $0xc] sm:$0x1]
      %v1937 = vld [vmem:[%s1763 + $0x10] sm:$0xf]
      %v1938 = vld [vmem:[%s1763 + $0x14] sm:$0x1]
      %v1939 = vld [vmem:[%s1763 + $0x18] sm:$0xf]
      %v1940 = vld [vmem:[%s1763 + $0x1c] sm:$0x1]
      %v1941 = vld [vmem:[%s1763 + $0x20] sm:$0xf]
      %v1942 = vld [vmem:[%s1763 + $0x24] sm:$0x1]
      %v1943 = vld [vmem:[%s1763 + $0x28] sm:$0xf]
      %v1944 = vld [vmem:[%s1763 + $0x2c] sm:$0x1]
      %v1945 = vld [vmem:[%s1763 + $0x30] sm:$0xf]
      %v1946 = vld [vmem:[%s1763 + $0x34] sm:$0x1]
      %v1947 = vld [vmem:[%s1763 + $0x38] sm:$0xf]
      %v1948 = vld [vmem:[%s1763 + $0x3c] sm:$0x1]
      %v1950 = vshrl.u32 %v1933, 16
      %v1952 = vrot.slane %v1950, 4
      %v1953 = vshll.u32 %v1933, 16
      %v1955 = vrot.slane %v1953, 5
      %v1956 = vor.u32 %v1952, %v1955
      %v1957 = vrot.slane %v1956, 4
      %v1959 = vshll.u32 %v1934, 16
      %v1961 = vrot.slane %v1959, 5
      %v1962 = vsel %vm496, %v1957, %v1961
      %v1964 = vshrl.u32 %v1935, 16
      %v1966 = vrot.slane %v1964, 4
      %v1967 = vshll.u32 %v1935, 16
      %v1969 = vrot.slane %v1967, 5
      %v1970 = vor.u32 %v1966, %v1969
      %v1971 = vrot.slane %v1970, 4
      %v1973 = vshll.u32 %v1936, 16
      %v1975 = vrot.slane %v1973, 5
      %v1976 = vsel %vm496, %v1971, %v1975
      %v1978 = vshrl.u32 %v1937, 16
      %v1980 = vrot.slane %v1978, 4
      %v1981 = vshll.u32 %v1937, 16
      %v1983 = vrot.slane %v1981, 5
      %v1984 = vor.u32 %v1980, %v1983
      %v1985 = vrot.slane %v1984, 4
      %v1987 = vshll.u32 %v1938, 16
      %v1989 = vrot.slane %v1987, 5
      %v1990 = vsel %vm496, %v1985, %v1989
      %v1992 = vshrl.u32 %v1939, 16
      %v1994 = vrot.slane %v1992, 4
      %v1995 = vshll.u32 %v1939, 16
      %v1997 = vrot.slane %v1995, 5
      %v1998 = vor.u32 %v1994, %v1997
      %v1999 = vrot.slane %v1998, 4
      %v2001 = vshll.u32 %v1940, 16
      %v2003 = vrot.slane %v2001, 5
      %v2004 = vsel %vm496, %v1999, %v2003
      %v2006 = vshrl.u32 %v1941, 16
      %v2008 = vrot.slane %v2006, 4
      %v2009 = vshll.u32 %v1941, 16
      %v2011 = vrot.slane %v2009, 5
      %v2012 = vor.u32 %v2008, %v2011
      %v2013 = vrot.slane %v2012, 4
      %v2015 = vshll.u32 %v1942, 16
      %v2017 = vrot.slane %v2015, 5
      %v2018 = vsel %vm496, %v2013, %v2017
      %v2020 = vshrl.u32 %v1943, 16
      %v2022 = vrot.slane %v2020, 4
      %v2023 = vshll.u32 %v1943, 16
      %v2025 = vrot.slane %v2023, 5
      %v2026 = vor.u32 %v2022, %v2025
      %v2027 = vrot.slane %v2026, 4
      %v2029 = vshll.u32 %v1944, 16
      %v2031 = vrot.slane %v2029, 5
      %v2032 = vsel %vm496, %v2027, %v2031
      %v2034 = vshrl.u32 %v1945, 16
      %v2036 = vrot.slane %v2034, 4
      %v2037 = vshll.u32 %v1945, 16
      %v2039 = vrot.slane %v2037, 5
      %v2040 = vor.u32 %v2036, %v2039
      %v2041 = vrot.slane %v2040, 4
      %v2043 = vshll.u32 %v1946, 16
      %v2045 = vrot.slane %v2043, 5
      %v2046 = vsel %vm496, %v2041, %v2045
      %v2048 = vshrl.u32 %v1947, 16
      %v2050 = vrot.slane %v2048, 4
      %v2051 = vshll.u32 %v1947, 16
      %v2053 = vrot.slane %v2051, 5
      %v2054 = vor.u32 %v2050, %v2053
      %v2055 = vrot.slane %v2054, 4
      %v2057 = vshll.u32 %v1948, 16
      %v2059 = vrot.slane %v2057, 5
      %v2060 = vsel %vm496, %v2055, %v2059
      %v2061 = vld [vmem:[%s3 + $0x1c0] sm:$0xf]
      %v2062 = vld [vmem:[%s3 + $0x1c4] sm:$0xf]
      %v2063 = vld [vmem:[%s3 + $0x1c8] sm:$0xf]
      %v2064 = vld [vmem:[%s3 + $0x1cc] sm:$0xf]
      %v2065 = vld [vmem:[%s3 + $0x1d0] sm:$0xf]
      %v2066 = vld [vmem:[%s3 + $0x1d4] sm:$0xf]
      %v2067 = vld [vmem:[%s3 + $0x1d8] sm:$0xf]
      %v2068 = vld [vmem:[%s3 + $0x1dc] sm:$0xf]
      %v2069 = vld [vmem:[%s3 + $0x1e0] sm:$0xf]
      %v2070 = vld [vmem:[%s3 + $0x1e4] sm:$0xf]
      %v2071 = vld [vmem:[%s3 + $0x1e8] sm:$0xf]
      %v2072 = vld [vmem:[%s3 + $0x1ec] sm:$0xf]
      %v2073 = vld [vmem:[%s3 + $0x1f0] sm:$0xf]
      %v2074 = vld [vmem:[%s3 + $0x1f4] sm:$0xf]
      %v2075 = vld [vmem:[%s3 + $0x1f8] sm:$0xf]
      %v2076 = vld [vmem:[%s3 + $0x1fc] sm:$0xf]
      %v2077 = vunpack.c.l.b16 %v1962
      %v2078 = vunpack.c.l.b16 %v1976
      %v2079 = vunpack.c.l.b16 %v1990
      %v2080 = vunpack.c.l.b16 %v2004
      %v2081 = vunpack.c.l.b16 %v2018
      %v2082 = vunpack.c.l.b16 %v2032
      %v2083 = vunpack.c.l.b16 %v2046
      %v2084 = vunpack.c.l.b16 %v2060
      %v2085 = vpack.c.b16 %v2078, %v2077
      %v2086 = vpack.c.b16 %v2080, %v2079
      %v2087 = vpack.c.b16 %v2082, %v2081
      %v2088 = vpack.c.b16 %v2084, %v2083
      %v2109 = vunpack.c.l.b16 %v2061
      %v2110 = vunpack.c.l.b16 %v2062
      %v2111 = vunpack.c.l.b16 %v2063
      %v2112 = vunpack.c.l.b16 %v2064
      %v2113 = vunpack.c.l.b16 %v2065
      %v2114 = vunpack.c.l.b16 %v2066
      %v2115 = vunpack.c.l.b16 %v2067
      %v2116 = vunpack.c.l.b16 %v2068
      %v2117 = vunpack.c.l.b16 %v2069
      %v2118 = vunpack.c.l.b16 %v2070
      %v2119 = vunpack.c.l.b16 %v2071
      %v2120 = vunpack.c.l.b16 %v2072
      %v2121 = vunpack.c.l.b16 %v2073
      %v2122 = vunpack.c.l.b16 %v2074
      %v2123 = vunpack.c.l.b16 %v2075
      %v2124 = vunpack.c.l.b16 %v2076
      %v2125 = vpack.c.b16 %v2110, %v2109
      %v2126 = vpack.c.b16 %v2112, %v2111
      %v2127 = vpack.c.b16 %v2114, %v2113
      %v2128 = vpack.c.b16 %v2116, %v2115
      %v2129 = vpack.c.b16 %v2118, %v2117
      %v2130 = vpack.c.b16 %v2120, %v2119
      %v2131 = vpack.c.b16 %v2122, %v2121
      %v2132 = vpack.c.b16 %v2124, %v2123
      %2141 = vmatprep.subr.bf16.mxu0 0
      %2142 = vmatpush1.bf16.msra.mxu0 %v2125
      %2143 = vmatprep.subr.bf16.mxu0 0
      %2144 = vmatpush1.bf16.msra.mxu0 %v2126
      %2145 = vmatprep.subr.bf16.mxu0 0
      %2146 = vmatpush1.bf16.msra.mxu0 %v2127
      %2147 = vmatprep.subr.bf16.mxu0 0
      %2148 = vmatpush1.bf16.msra.mxu0 %v2128
      %2149 = vmatprep.subr.bf16.mxu0 0
      %2150 = vmatpush1.bf16.msra.mxu0 %v2129
      %2151 = vmatprep.subr.bf16.mxu0 0
      %2152 = vmatpush1.bf16.msra.mxu0 %v2130
      %2153 = vmatprep.subr.bf16.mxu0 0
      %2154 = vmatpush1.bf16.msra.mxu0 %v2131
      %2155 = vmatprep.subr.bf16.mxu0 0
      %2156 = vmatpush1.bf16.msra.mxu0 %v2132
      %2157 = vmatprep.subr.bf16.mxu0 0
      %2158 = vmatpush1.bf16.msra.mxu0 0
      %2159 = vmatprep.subr.bf16.mxu0 0
      %2160 = vmatpush1.bf16.msra.mxu0 0
      %2161 = vmatprep.subr.bf16.mxu0 0
      %2162 = vmatpush1.bf16.msra.mxu0 0
      %2163 = vmatprep.subr.bf16.mxu0 0
      %2164 = vmatpush1.bf16.msra.mxu0 0
      %2165 = vmatprep.subr.bf16.mxu0 0
      %2166 = vmatpush1.bf16.msra.mxu0 0
      %2167 = vmatprep.subr.bf16.mxu0 0
      %2168 = vmatpush1.bf16.msra.mxu0 0
      %2169 = vmatprep.subr.bf16.mxu0 0
      %2170 = vmatpush1.bf16.msra.mxu0 0
      %2171 = vmatprep.subr.bf16.mxu0 0
      %2172 = vmatpush1.bf16.msra.mxu0 0
      %2173 = vmatprep.mubr.bf16.mxu0 0
      %2174 = vmatmul.mubr.bf16.gmra.mrb[0].mxu0 %v2085
      %v2175 = vpop.f32.mrb[0].mxu0
      %v2176 = vadd.f32 0.0, %v2175
      %v2177 = vpop.f32.mrb[0].mxu0
      %v2178 = vpop.f32.mrb[0].mxu0
      %v2179 = vadd.f32 0.0, %v2178
      %v2180 = vpop.f32.mrb[0].mxu0
      %2181 = vmatprep.mubr.bf16.mxu0 0
      %2182 = vmatmul.mubr.bf16.gmra.mrb[0].mxu0 %v2086
      %v2183 = vpop.f32.mrb[0].mxu0
      %v2184 = vadd.f32 0.0, %v2183
      %v2185 = vpop.f32.mrb[0].mxu0
      %v2186 = vpop.f32.mrb[0].mxu0
      %v2187 = vadd.f32 0.0, %v2186
      %v2188 = vpop.f32.mrb[0].mxu0
      %2189 = vmatprep.mubr.bf16.mxu0 0
      %2190 = vmatmul.mubr.bf16.gmra.mrb[0].mxu0 %v2087
      %v2191 = vpop.f32.mrb[0].mxu0
      %v2192 = vadd.f32 0.0, %v2191
      %v2193 = vpop.f32.mrb[0].mxu0
      %v2194 = vpop.f32.mrb[0].mxu0
      %v2195 = vadd.f32 0.0, %v2194
      %v2196 = vpop.f32.mrb[0].mxu0
      %2197 = vmatprep.mubr.bf16.mxu0 0
      %2198 = vmatmul.mubr.bf16.gmra.mrb[0].mxu0 %v2088
      %v2199 = vpop.f32.mrb[0].mxu0
      %v2200 = vadd.f32 0.0, %v2199
      %v2201 = vpop.f32.mrb[0].mxu0
      %v2202 = vpop.f32.mrb[0].mxu0
      %v2203 = vadd.f32 0.0, %v2202
      %v2204 = vpop.f32.mrb[0].mxu0
      %2205 = vdwg.mxu0
      %v2206 = vadd.f32 %v1925, %v2176
      %v2207 = vadd.f32 %v1926, %v2179
      %v2208 = vadd.f32 %v1927, %v2184
      %v2209 = vadd.f32 %v1928, %v2187
      %v2210 = vadd.f32 %v1929, %v2192
      %v2211 = vadd.f32 %v1930, %v2195
      %v2212 = vadd.f32 %v1931, %v2200
      %v2213 = vadd.f32 %v1932, %v2203
      %v2214 = vld [vmem:[%s1763] sm:$0xe]
      %v2215 = vld [vmem:[%s1763 + $0x8] sm:$0xe]
      %v2216 = vld [vmem:[%s1763 + $0x10] sm:$0xe]
      %v2217 = vld [vmem:[%s1763 + $0x18] sm:$0xe]
      %v2218 = vld [vmem:[%s1763 + $0x20] sm:$0xe]
      %v2219 = vld [vmem:[%s1763 + $0x28] sm:$0xe]
      %v2220 = vld [vmem:[%s1763 + $0x30] sm:$0xe]
      %v2221 = vld [vmem:[%s1763 + $0x38] sm:$0xe]
      %v2238 = vrot.slane %v2214, 5
      %v2239 = vrot.slane %v2238, 4
      %v2240 = vrot.slane %v1934, 5
      %v2241 = vsel %vm917, %v2239, %v2240
      %v2242 = vrot.slane %v2215, 5
      %v2243 = vrot.slane %v2242, 4
      %v2244 = vrot.slane %v1936, 5
      %v2245 = vsel %vm917, %v2243, %v2244
      %v2246 = vrot.slane %v2216, 5
      %v2247 = vrot.slane %v2246, 4
      %v2248 = vrot.slane %v1938, 5
      %v2249 = vsel %vm917, %v2247, %v2248
      %v2250 = vrot.slane %v2217, 5
      %v2251 = vrot.slane %v2250, 4
      %v2252 = vrot.slane %v1940, 5
      %v2253 = vsel %vm917, %v2251, %v2252
      %v2254 = vrot.slane %v2218, 5
      %v2255 = vrot.slane %v2254, 4
      %v2256 = vrot.slane %v1942, 5
      %v2257 = vsel %vm917, %v2255, %v2256
      %v2258 = vrot.slane %v2219, 5
      %v2259 = vrot.slane %v2258, 4
      %v2260 = vrot.slane %v1944, 5
      %v2261 = vsel %vm917, %v2259, %v2260
      %v2262 = vrot.slane %v2220, 5
      %v2263 = vrot.slane %v2262, 4
      %v2264 = vrot.slane %v1946, 5
      %v2265 = vsel %vm917, %v2263, %v2264
      %v2266 = vrot.slane %v2221, 5
      %v2267 = vrot.slane %v2266, 4
      %v2268 = vrot.slane %v1948, 5
      %v2269 = vsel %vm917, %v2267, %v2268
      %v2270 = vld [vmem:[%s3 + $0x200] sm:$0xf]
      %v2271 = vld [vmem:[%s3 + $0x204] sm:$0xf]
      %v2272 = vld [vmem:[%s3 + $0x208] sm:$0xf]
      %v2273 = vld [vmem:[%s3 + $0x20c] sm:$0xf]
      %v2274 = vld [vmem:[%s3 + $0x210] sm:$0xf]
      %v2275 = vld [vmem:[%s3 + $0x214] sm:$0xf]
      %v2276 = vld [vmem:[%s3 + $0x218] sm:$0xf]
      %v2277 = vld [vmem:[%s3 + $0x21c] sm:$0xf]
      %v2278 = vld [vmem:[%s3 + $0x220] sm:$0xf]
      %v2279 = vld [vmem:[%s3 + $0x224] sm:$0xf]
      %v2280 = vld [vmem:[%s3 + $0x228] sm:$0xf]
      %v2281 = vld [vmem:[%s3 + $0x22c] sm:$0xf]
      %v2282 = vld [vmem:[%s3 + $0x230] sm:$0xf]
      %v2283 = vld [vmem:[%s3 + $0x234] sm:$0xf]
      %v2284 = vld [vmem:[%s3 + $0x238] sm:$0xf]
      %v2285 = vld [vmem:[%s3 + $0x23c] sm:$0xf]
      %v2286 = vunpack.c.l.b16 %v2241
      %v2287 = vunpack.c.l.b16 %v2245
      %v2288 = vunpack.c.l.b16 %v2249
      %v2289 = vunpack.c.l.b16 %v2253
      %v2290 = vunpack.c.l.b16 %v2257
      %v2291 = vunpack.c.l.b16 %v2261
      %v2292 = vunpack.c.l.b16 %v2265
      %v2293 = vunpack.c.l.b16 %v2269
      %v2294 = vpack.c.b16 %v2287, %v2286
      %v2295 = vpack.c.b16 %v2289, %v2288
      %v2296 = vpack.c.b16 %v2291, %v2290
      %v2297 = vpack.c.b16 %v2293, %v2292
      %v2318 = vunpack.c.l.b16 %v2270
      %v2319 = vunpack.c.l.b16 %v2271
      %v2320 = vunpack.c.l.b16 %v2272
      %v2321 = vunpack.c.l.b16 %v2273
      %v2322 = vunpack.c.l.b16 %v2274
      %v2323 = vunpack.c.l.b16 %v2275
      %v2324 = vunpack.c.l.b16 %v2276
      %v2325 = vunpack.c.l.b16 %v2277
      %v2326 = vunpack.c.l.b16 %v2278
      %v2327 = vunpack.c.l.b16 %v2279
      %v2328 = vunpack.c.l.b16 %v2280
      %v2329 = vunpack.c.l.b16 %v2281
      %v2330 = vunpack.c.l.b16 %v2282
      %v2331 = vunpack.c.l.b16 %v2283
      %v2332 = vunpack.c.l.b16 %v2284
      %v2333 = vunpack.c.l.b16 %v2285
      %v2334 = vpack.c.b16 %v2319, %v2318
      %v2335 = vpack.c.b16 %v2321, %v2320
      %v2336 = vpack.c.b16 %v2323, %v2322
      %v2337 = vpack.c.b16 %v2325, %v2324
      %v2338 = vpack.c.b16 %v2327, %v2326
      %v2339 = vpack.c.b16 %v2329, %v2328
      %v2340 = vpack.c.b16 %v2331, %v2330
      %v2341 = vpack.c.b16 %v2333, %v2332
      %2350 = vmatprep.subr.bf16.mxu0 0
      %2351 = vmatpush1.bf16.msra.mxu0 %v2334
      %2352 = vmatprep.subr.bf16.mxu0 0
      %2353 = vmatpush1.bf16.msra.mxu0 %v2335
      %2354 = vmatprep.subr.bf16.mxu0 0
      %2355 = vmatpush1.bf16.msra.mxu0 %v2336
      %2356 = vmatprep.subr.bf16.mxu0 0
      %2357 = vmatpush1.bf16.msra.mxu0 %v2337
      %2358 = vmatprep.subr.bf16.mxu0 0
      %2359 = vmatpush1.bf16.msra.mxu0 %v2338
      %2360 = vmatprep.subr.bf16.mxu0 0
      %2361 = vmatpush1.bf16.msra.mxu0 %v2339
      %2362 = vmatprep.subr.bf16.mxu0 0
      %2363 = vmatpush1.bf16.msra.mxu0 %v2340
      %2364 = vmatprep.subr.bf16.mxu0 0
      %2365 = vmatpush1.bf16.msra.mxu0 %v2341
      %2366 = vmatprep.subr.bf16.mxu0 0
      %2367 = vmatpush1.bf16.msra.mxu0 0
      %2368 = vmatprep.subr.bf16.mxu0 0
      %2369 = vmatpush1.bf16.msra.mxu0 0
      %2370 = vmatprep.subr.bf16.mxu0 0
      %2371 = vmatpush1.bf16.msra.mxu0 0
      %2372 = vmatprep.subr.bf16.mxu0 0
      %2373 = vmatpush1.bf16.msra.mxu0 0
      %2374 = vmatprep.subr.bf16.mxu0 0
      %2375 = vmatpush1.bf16.msra.mxu0 0
      %2376 = vmatprep.subr.bf16.mxu0 0
      %2377 = vmatpush1.bf16.msra.mxu0 0
      %2378 = vmatprep.subr.bf16.mxu0 0
      %2379 = vmatpush1.bf16.msra.mxu0 0
      %2380 = vmatprep.subr.bf16.mxu0 0
      %2381 = vmatpush1.bf16.msra.mxu0 0
      %2382 = vmatprep.mubr.bf16.mxu0 0
      %2383 = vmatmul.mubr.bf16.gmra.mrb[0].mxu0 %v2294
      %v2384 = vpop.f32.mrb[0].mxu0
      %v2385 = vadd.f32 0.0, %v2384
      %v2386 = vpop.f32.mrb[0].mxu0
      %v2387 = vpop.f32.mrb[0].mxu0
      %v2388 = vadd.f32 0.0, %v2387
      %v2389 = vpop.f32.mrb[0].mxu0
      %2390 = vmatprep.mubr.bf16.mxu0 0
      %2391 = vmatmul.mubr.bf16.gmra.mrb[0].mxu0 %v2295
      %v2392 = vpop.f32.mrb[0].mxu0
      %v2393 = vadd.f32 0.0, %v2392
      %v2394 = vpop.f32.mrb[0].mxu0
      %v2395 = vpop.f32.mrb[0].mxu0
      %v2396 = vadd.f32 0.0, %v2395
      %v2397 = vpop.f32.mrb[0].mxu0
      %2398 = vmatprep.mubr.bf16.mxu0 0
      %2399 = vmatmul.mubr.bf16.gmra.mrb[0].mxu0 %v2296
      %v2400 = vpop.f32.mrb[0].mxu0
      %v2401 = vadd.f32 0.0, %v2400
      %v2402 = vpop.f32.mrb[0].mxu0
      %v2403 = vpop.f32.mrb[0].mxu0
      %v2404 = vadd.f32 0.0, %v2403
      %v2405 = vpop.f32.mrb[0].mxu0
      %2406 = vmatprep.mubr.bf16.mxu0 0
      %2407 = vmatmul.mubr.bf16.gmra.mrb[0].mxu0 %v2297
      %v2408 = vpop.f32.mrb[0].mxu0
      %v2409 = vadd.f32 0.0, %v2408
      %v2410 = vpop.f32.mrb[0].mxu0
      %v2411 = vpop.f32.mrb[0].mxu0
      %v2412 = vadd.f32 0.0, %v2411
      %v2413 = vpop.f32.mrb[0].mxu0
      %2414 = vdwg.mxu0
      %v2415 = vadd.f32 %v2206, %v2385
      %v2416 = vadd.f32 %v2207, %v2388
      %v2417 = vadd.f32 %v2208, %v2393
      %v2418 = vadd.f32 %v2209, %v2396
      %v2419 = vadd.f32 %v2210, %v2401
      %v2420 = vadd.f32 %v2211, %v2404
      %v2421 = vadd.f32 %v2212, %v2409
      %v2422 = vadd.f32 %v2213, %v2412
      %v2423 = vld [vmem:[%s428] sm:$0xf]
      %v2424 = vld [vmem:[%s428 + $0x8] sm:$0xf]
      %v2425 = vld [vmem:[%s428 + $0x10] sm:$0xf]
      %v2426 = vld [vmem:[%s428 + $0x18] sm:$0xf]
      %v2427 = vld [vmem:[%s428 + $0x20] sm:$0xf]
      %v2428 = vld [vmem:[%s428 + $0x28] sm:$0xf]
      %v2429 = vld [vmem:[%s428 + $0x30] sm:$0xf]
      %v2430 = vld [vmem:[%s428 + $0x38] sm:$0xf]
      %v2431 = vld [vmem:[%s3 + $0x240] sm:$0xf]
      %v2432 = vld [vmem:[%s3 + $0x244] sm:$0xf]
      %v2433 = vld [vmem:[%s3 + $0x248] sm:$0xf]
      %v2434 = vld [vmem:[%s3 + $0x24c] sm:$0xf]
      %v2435 = vld [vmem:[%s3 + $0x250] sm:$0xf]
      %v2436 = vld [vmem:[%s3 + $0x254] sm:$0xf]
      %v2437 = vld [vmem:[%s3 + $0x258] sm:$0xf]
      %v2438 = vld [vmem:[%s3 + $0x25c] sm:$0xf]
      %v2439 = vld [vmem:[%s3 + $0x260] sm:$0xf]
      %v2440 = vld [vmem:[%s3 + $0x264] sm:$0xf]
      %v2441 = vld [vmem:[%s3 + $0x268] sm:$0xf]
      %v2442 = vld [vmem:[%s3 + $0x26c] sm:$0xf]
      %v2443 = vld [vmem:[%s3 + $0x270] sm:$0xf]
      %v2444 = vld [vmem:[%s3 + $0x274] sm:$0xf]
      %v2445 = vld [vmem:[%s3 + $0x278] sm:$0xf]
      %v2446 = vld [vmem:[%s3 + $0x27c] sm:$0xf]
      %v2455 = vunpack.c.l.b16 %v2423
      %v2456 = vunpack.c.l.b16 %v2424
      %v2457 = vunpack.c.l.b16 %v2425
      %v2458 = vunpack.c.l.b16 %v2426
      %v2459 = vunpack.c.l.b16 %v2427
      %v2460 = vunpack.c.l.b16 %v2428
      %v2461 = vunpack.c.l.b16 %v2429
      %v2462 = vunpack.c.l.b16 %v2430
      %v2463 = vpack.c.b16 %v2456, %v2455
      %v2464 = vpack.c.b16 %v2458, %v2457
      %v2465 = vpack.c.b16 %v2460, %v2459
      %v2466 = vpack.c.b16 %v2462, %v2461
      %v2487 = vunpack.c.l.b16 %v2431
      %v2488 = vunpack.c.l.b16 %v2432
      %v2489 = vunpack.c.l.b16 %v2433
      %v2490 = vunpack.c.l.b16 %v2434
      %v2491 = vunpack.c.l.b16 %v2435
      %v2492 = vunpack.c.l.b16 %v2436
      %v2493 = vunpack.c.l.b16 %v2437
      %v2494 = vunpack.c.l.b16 %v2438
      %v2495 = vunpack.c.l.b16 %v2439
      %v2496 = vunpack.c.l.b16 %v2440
      %v2497 = vunpack.c.l.b16 %v2441
      %v2498 = vunpack.c.l.b16 %v2442
      %v2499 = vunpack.c.l.b16 %v2443
      %v2500 = vunpack.c.l.b16 %v2444
      %v2501 = vunpack.c.l.b16 %v2445
      %v2502 = vunpack.c.l.b16 %v2446
      %v2503 = vpack.c.b16 %v2488, %v2487
      %v2504 = vpack.c.b16 %v2490, %v2489
      %v2505 = vpack.c.b16 %v2492, %v2491
      %v2506 = vpack.c.b16 %v2494, %v2493
      %v2507 = vpack.c.b16 %v2496, %v2495
      %v2508 = vpack.c.b16 %v2498, %v2497
      %v2509 = vpack.c.b16 %v2500, %v2499
      %v2510 = vpack.c.b16 %v2502, %v2501
      %2519 = vmatprep.subr.bf16.mxu0 0
      %2520 = vmatpush1.bf16.msra.mxu0 %v2503
      %2521 = vmatprep.subr.bf16.mxu0 0
      %2522 = vmatpush1.bf16.msra.mxu0 %v2504
      %2523 = vmatprep.subr.bf16.mxu0 0
      %2524 = vmatpush1.bf16.msra.mxu0 %v2505
      %2525 = vmatprep.subr.bf16.mxu0 0
      %2526 = vmatpush1.bf16.msra.mxu0 %v2506
      %2527 = vmatprep.subr.bf16.mxu0 0
      %2528 = vmatpush1.bf16.msra.mxu0 %v2507
      %2529 = vmatprep.subr.bf16.mxu0 0
      %2530 = vmatpush1.bf16.msra.mxu0 %v2508
      %2531 = vmatprep.subr.bf16.mxu0 0
      %2532 = vmatpush1.bf16.msra.mxu0 %v2509
      %2533 = vmatprep.subr.bf16.mxu0 0
      %2534 = vmatpush1.bf16.msra.mxu0 %v2510
      %2535 = vmatprep.subr.bf16.mxu0 0
      %2536 = vmatpush1.bf16.msra.mxu0 0
      %2537 = vmatprep.subr.bf16.mxu0 0
      %2538 = vmatpush1.bf16.msra.mxu0 0
      %2539 = vmatprep.subr.bf16.mxu0 0
      %2540 = vmatpush1.bf16.msra.mxu0 0
      %2541 = vmatprep.subr.bf16.mxu0 0
      %2542 = vmatpush1.bf16.msra.mxu0 0
      %2543 = vmatprep.subr.bf16.mxu0 0
      %2544 = vmatpush1.bf16.msra.mxu0 0
      %2545 = vmatprep.subr.bf16.mxu0 0
      %2546 = vmatpush1.bf16.msra.mxu0 0
      %2547 = vmatprep.subr.bf16.mxu0 0
      %2548 = vmatpush1.bf16.msra.mxu0 0
      %2549 = vmatprep.subr.bf16.mxu0 0
      %2550 = vmatpush1.bf16.msra.mxu0 0
      %2551 = vmatprep.mubr.bf16.mxu0 0
      %2552 = vmatmul.mubr.bf16.gmra.mrb[0].mxu0 %v2463
      %v2553 = vpop.f32.mrb[0].mxu0
      %v2554 = vadd.f32 0.0, %v2553
      %v2555 = vpop.f32.mrb[0].mxu0
      %v2556 = vpop.f32.mrb[0].mxu0
      %v2557 = vadd.f32 0.0, %v2556
      %v2558 = vpop.f32.mrb[0].mxu0
      %2559 = vmatprep.mubr.bf16.mxu0 0
      %2560 = vmatmul.mubr.bf16.gmra.mrb[0].mxu0 %v2464
      %v2561 = vpop.f32.mrb[0].mxu0
      %v2562 = vadd.f32 0.0, %v2561
      %v2563 = vpop.f32.mrb[0].mxu0
      %v2564 = vpop.f32.mrb[0].mxu0
      %v2565 = vadd.f32 0.0, %v2564
      %v2566 = vpop.f32.mrb[0].mxu0
      %2567 = vmatprep.mubr.bf16.mxu0 0
      %2568 = vmatmul.mubr.bf16.gmra.mrb[0].mxu0 %v2465
      %v2569 = vpop.f32.mrb[0].mxu0
      %v2570 = vadd.f32 0.0, %v2569
      %v2571 = vpop.f32.mrb[0].mxu0
      %v2572 = vpop.f32.mrb[0].mxu0
      %v2573 = vadd.f32 0.0, %v2572
      %v2574 = vpop.f32.mrb[0].mxu0
      %2575 = vmatprep.mubr.bf16.mxu0 0
      %2576 = vmatmul.mubr.bf16.gmra.mrb[0].mxu0 %v2466
      %v2577 = vpop.f32.mrb[0].mxu0
      %v2578 = vadd.f32 0.0, %v2577
      %v2579 = vpop.f32.mrb[0].mxu0
      %v2580 = vpop.f32.mrb[0].mxu0
      %v2581 = vadd.f32 0.0, %v2580
      %v2582 = vpop.f32.mrb[0].mxu0
      %2583 = vdwg.mxu0
      %v2584 = vadd.f32 %v2415, %v2554
      %v2585 = vadd.f32 %v2416, %v2557
      %v2586 = vadd.f32 %v2417, %v2562
      %v2587 = vadd.f32 %v2418, %v2565
      %v2588 = vadd.f32 %v2419, %v2570
      %v2589 = vadd.f32 %v2420, %v2573
      %v2590 = vadd.f32 %v2421, %v2578
      %v2591 = vadd.f32 %v2422, %v2581
      %v2592 = vld [vmem:[%s428] sm:$0xf]
      %v2593 = vld [vmem:[%s428 + $0x4] sm:$0x1]
      %v2594 = vld [vmem:[%s428 + $0x8] sm:$0xf]
      %v2595 = vld [vmem:[%s428 + $0xc] sm:$0x1]
      %v2596 = vld [vmem:[%s428 + $0x10] sm:$0xf]
      %v2597 = vld [vmem:[%s428 + $0x14] sm:$0x1]
      %v2598 = vld [vmem:[%s428 + $0x18] sm:$0xf]
      %v2599 = vld [vmem:[%s428 + $0x1c] sm:$0x1]
      %v2600 = vld [vmem:[%s428 + $0x20] sm:$0xf]
      %v2601 = vld [vmem:[%s428 + $0x24] sm:$0x1]
      %v2602 = vld [vmem:[%s428 + $0x28] sm:$0xf]
      %v2603 = vld [vmem:[%s428 + $0x2c] sm:$0x1]
      %v2604 = vld [vmem:[%s428 + $0x30] sm:$0xf]
      %v2605 = vld [vmem:[%s428 + $0x34] sm:$0x1]
      %v2606 = vld [vmem:[%s428 + $0x38] sm:$0xf]
      %v2607 = vld [vmem:[%s428 + $0x3c] sm:$0x1]
      %v2609 = vshrl.u32 %v2592, 16
      %v2611 = vrot.slane %v2609, 4
      %v2612 = vshll.u32 %v2592, 16
      %v2614 = vrot.slane %v2612, 5
      %v2615 = vor.u32 %v2611, %v2614
      %v2616 = vrot.slane %v2615, 4
      %v2618 = vshll.u32 %v2593, 16
      %v2620 = vrot.slane %v2618, 5
      %v2621 = vsel %vm496, %v2616, %v2620
      %v2623 = vshrl.u32 %v2594, 16
      %v2625 = vrot.slane %v2623, 4
      %v2626 = vshll.u32 %v2594, 16
      %v2628 = vrot.slane %v2626, 5
      %v2629 = vor.u32 %v2625, %v2628
      %v2630 = vrot.slane %v2629, 4
      %v2632 = vshll.u32 %v2595, 16
      %v2634 = vrot.slane %v2632, 5
      %v2635 = vsel %vm496, %v2630, %v2634
      %v2637 = vshrl.u32 %v2596, 16
      %v2639 = vrot.slane %v2637, 4
      %v2640 = vshll.u32 %v2596, 16
      %v2642 = vrot.slane %v2640, 5
      %v2643 = vor.u32 %v2639, %v2642
      %v2644 = vrot.slane %v2643, 4
      %v2646 = vshll.u32 %v2597, 16
      %v2648 = vrot.slane %v2646, 5
      %v2649 = vsel %vm496, %v2644, %v2648
      %v2651 = vshrl.u32 %v2598, 16
      %v2653 = vrot.slane %v2651, 4
      %v2654 = vshll.u32 %v2598, 16
      %v2656 = vrot.slane %v2654, 5
      %v2657 = vor.u32 %v2653, %v2656
      %v2658 = vrot.slane %v2657, 4
      %v2660 = vshll.u32 %v2599, 16
      %v2662 = vrot.slane %v2660, 5
      %v2663 = vsel %vm496, %v2658, %v2662
      %v2665 = vshrl.u32 %v2600, 16
      %v2667 = vrot.slane %v2665, 4
      %v2668 = vshll.u32 %v2600, 16
      %v2670 = vrot.slane %v2668, 5
      %v2671 = vor.u32 %v2667, %v2670
      %v2672 = vrot.slane %v2671, 4
      %v2674 = vshll.u32 %v2601, 16
      %v2676 = vrot.slane %v2674, 5
      %v2677 = vsel %vm496, %v2672, %v2676
      %v2679 = vshrl.u32 %v2602, 16
      %v2681 = vrot.slane %v2679, 4
      %v2682 = vshll.u32 %v2602, 16
      %v2684 = vrot.slane %v2682, 5
      %v2685 = vor.u32 %v2681, %v2684
      %v2686 = vrot.slane %v2685, 4
      %v2688 = vshll.u32 %v2603, 16
      %v2690 = vrot.slane %v2688, 5
      %v2691 = vsel %vm496, %v2686, %v2690
      %v2693 = vshrl.u32 %v2604, 16
      %v2695 = vrot.slane %v2693, 4
      %v2696 = vshll.u32 %v2604, 16
      %v2698 = vrot.slane %v2696, 5
      %v2699 = vor.u32 %v2695, %v2698
      %v2700 = vrot.slane %v2699, 4
      %v2702 = vshll.u32 %v2605, 16
      %v2704 = vrot.slane %v2702, 5
      %v2705 = vsel %vm496, %v2700, %v2704
      %v2707 = vshrl.u32 %v2606, 16
      %v2709 = vrot.slane %v2707, 4
      %v2710 = vshll.u32 %v2606, 16
      %v2712 = vrot.slane %v2710, 5
      %v2713 = vor.u32 %v2709, %v2712
      %v2714 = vrot.slane %v2713, 4
      %v2716 = vshll.u32 %v2607, 16
      %v2718 = vrot.slane %v2716, 5
      %v2719 = vsel %vm496, %v2714, %v2718
      %v2720 = vld [vmem:[%s3 + $0x280] sm:$0xf]
      %v2721 = vld [vmem:[%s3 + $0x284] sm:$0xf]
      %v2722 = vld [vmem:[%s3 + $0x288] sm:$0xf]
      %v2723 = vld [vmem:[%s3 + $0x28c] sm:$0xf]
      %v2724 = vld [vmem:[%s3 + $0x290] sm:$0xf]
      %v2725 = vld [vmem:[%s3 + $0x294] sm:$0xf]
      %v2726 = vld [vmem:[%s3 + $0x298] sm:$0xf]
      %v2727 = vld [vmem:[%s3 + $0x29c] sm:$0xf]
      %v2728 = vld [vmem:[%s3 + $0x2a0] sm:$0xf]
      %v2729 = vld [vmem:[%s3 + $0x2a4] sm:$0xf]
      %v2730 = vld [vmem:[%s3 + $0x2a8] sm:$0xf]
      %v2731 = vld [vmem:[%s3 + $0x2ac] sm:$0xf]
      %v2732 = vld [vmem:[%s3 + $0x2b0] sm:$0xf]
      %v2733 = vld [vmem:[%s3 + $0x2b4] sm:$0xf]
      %v2734 = vld [vmem:[%s3 + $0x2b8] sm:$0xf]
      %v2735 = vld [vmem:[%s3 + $0x2bc] sm:$0xf]
      %v2736 = vunpack.c.l.b16 %v2621
      %v2737 = vunpack.c.l.b16 %v2635
      %v2738 = vunpack.c.l.b16 %v2649
      %v2739 = vunpack.c.l.b16 %v2663
      %v2740 = vunpack.c.l.b16 %v2677
      %v2741 = vunpack.c.l.b16 %v2691
      %v2742 = vunpack.c.l.b16 %v2705
      %v2743 = vunpack.c.l.b16 %v2719
      %v2744 = vpack.c.b16 %v2737, %v2736
      %v2745 = vpack.c.b16 %v2739, %v2738
      %v2746 = vpack.c.b16 %v2741, %v2740
      %v2747 = vpack.c.b16 %v2743, %v2742
      %v2768 = vunpack.c.l.b16 %v2720
      %v2769 = vunpack.c.l.b16 %v2721
      %v2770 = vunpack.c.l.b16 %v2722
      %v2771 = vunpack.c.l.b16 %v2723
      %v2772 = vunpack.c.l.b16 %v2724
      %v2773 = vunpack.c.l.b16 %v2725
      %v2774 = vunpack.c.l.b16 %v2726
      %v2775 = vunpack.c.l.b16 %v2727
      %v2776 = vunpack.c.l.b16 %v2728
      %v2777 = vunpack.c.l.b16 %v2729
      %v2778 = vunpack.c.l.b16 %v2730
      %v2779 = vunpack.c.l.b16 %v2731
      %v2780 = vunpack.c.l.b16 %v2732
      %v2781 = vunpack.c.l.b16 %v2733
      %v2782 = vunpack.c.l.b16 %v2734
      %v2783 = vunpack.c.l.b16 %v2735
      %v2784 = vpack.c.b16 %v2769, %v2768
      %v2785 = vpack.c.b16 %v2771, %v2770
      %v2786 = vpack.c.b16 %v2773, %v2772
      %v2787 = vpack.c.b16 %v2775, %v2774
      %v2788 = vpack.c.b16 %v2777, %v2776
      %v2789 = vpack.c.b16 %v2779, %v2778
      %v2790 = vpack.c.b16 %v2781, %v2780
      %v2791 = vpack.c.b16 %v2783, %v2782
      %2800 = vmatprep.subr.bf16.mxu0 0
      %2801 = vmatpush1.bf16.msra.mxu0 %v2784
      %2802 = vmatprep.subr.bf16.mxu0 0
      %2803 = vmatpush1.bf16.msra.mxu0 %v2785
      %2804 = vmatprep.subr.bf16.mxu0 0
      %2805 = vmatpush1.bf16.msra.mxu0 %v2786
      %2806 = vmatprep.subr.bf16.mxu0 0
      %2807 = vmatpush1.bf16.msra.mxu0 %v2787
      %2808 = vmatprep.subr.bf16.mxu0 0
      %2809 = vmatpush1.bf16.msra.mxu0 %v2788
      %2810 = vmatprep.subr.bf16.mxu0 0
      %2811 = vmatpush1.bf16.msra.mxu0 %v2789
      %2812 = vmatprep.subr.bf16.mxu0 0
      %2813 = vmatpush1.bf16.msra.mxu0 %v2790
      %2814 = vmatprep.subr.bf16.mxu0 0
      %2815 = vmatpush1.bf16.msra.mxu0 %v2791
      %2816 = vmatprep.subr.bf16.mxu0 0
      %2817 = vmatpush1.bf16.msra.mxu0 0
      %2818 = vmatprep.subr.bf16.mxu0 0
      %2819 = vmatpush1.bf16.msra.mxu0 0
      %2820 = vmatprep.subr.bf16.mxu0 0
      %2821 = vmatpush1.bf16.msra.mxu0 0
      %2822 = vmatprep.subr.bf16.mxu0 0
      %2823 = vmatpush1.bf16.msra.mxu0 0
      %2824 = vmatprep.subr.bf16.mxu0 0
      %2825 = vmatpush1.bf16.msra.mxu0 0
      %2826 = vmatprep.subr.bf16.mxu0 0
      %2827 = vmatpush1.bf16.msra.mxu0 0
      %2828 = vmatprep.subr.bf16.mxu0 0
      %2829 = vmatpush1.bf16.msra.mxu0 0
      %2830 = vmatprep.subr.bf16.mxu0 0
      %2831 = vmatpush1.bf16.msra.mxu0 0
      %2832 = vmatprep.mubr.bf16.mxu0 0
      %2833 = vmatmul.mubr.bf16.gmra.mrb[0].mxu0 %v2744
      %v2834 = vpop.f32.mrb[0].mxu0
      %v2835 = vadd.f32 0.0, %v2834
      %v2836 = vpop.f32.mrb[0].mxu0
      %v2837 = vpop.f32.mrb[0].mxu0
      %v2838 = vadd.f32 0.0, %v2837
      %v2839 = vpop.f32.mrb[0].mxu0
      %2840 = vmatprep.mubr.bf16.mxu0 0
      %2841 = vmatmul.mubr.bf16.gmra.mrb[0].mxu0 %v2745
      %v2842 = vpop.f32.mrb[0].mxu0
      %v2843 = vadd.f32 0.0, %v2842
      %v2844 = vpop.f32.mrb[0].mxu0
      %v2845 = vpop.f32.mrb[0].mxu0
      %v2846 = vadd.f32 0.0, %v2845
      %v2847 = vpop.f32.mrb[0].mxu0
      %2848 = vmatprep.mubr.bf16.mxu0 0
      %2849 = vmatmul.mubr.bf16.gmra.mrb[0].mxu0 %v2746
      %v2850 = vpop.f32.mrb[0].mxu0
      %v2851 = vadd.f32 0.0, %v2850
      %v2852 = vpop.f32.mrb[0].mxu0
      %v2853 = vpop.f32.mrb[0].mxu0
      %v2854 = vadd.f32 0.0, %v2853
      %v2855 = vpop.f32.mrb[0].mxu0
      %2856 = vmatprep.mubr.bf16.mxu0 0
      %2857 = vmatmul.mubr.bf16.gmra.mrb[0].mxu0 %v2747
      %v2858 = vpop.f32.mrb[0].mxu0
      %v2859 = vadd.f32 0.0, %v2858
      %v2860 = vpop.f32.mrb[0].mxu0
      %v2861 = vpop.f32.mrb[0].mxu0
      %v2862 = vadd.f32 0.0, %v2861
      %v2863 = vpop.f32.mrb[0].mxu0
      %2864 = vdwg.mxu0
      %v2865 = vadd.f32 %v2584, %v2835
      %v2866 = vadd.f32 %v2585, %v2838
      %v2867 = vadd.f32 %v2586, %v2843
      %v2868 = vadd.f32 %v2587, %v2846
      %v2869 = vadd.f32 %v2588, %v2851
      %v2870 = vadd.f32 %v2589, %v2854
      %v2871 = vadd.f32 %v2590, %v2859
      %v2872 = vadd.f32 %v2591, %v2862
      %v2873 = vld [vmem:[%s428] sm:$0xe]
      %v2874 = vld [vmem:[%s428 + $0x8] sm:$0xe]
      %v2875 = vld [vmem:[%s428 + $0x10] sm:$0xe]
      %v2876 = vld [vmem:[%s428 + $0x18] sm:$0xe]
      %v2877 = vld [vmem:[%s428 + $0x20] sm:$0xe]
      %v2878 = vld [vmem:[%s428 + $0x28] sm:$0xe]
      %v2879 = vld [vmem:[%s428 + $0x30] sm:$0xe]
      %v2880 = vld [vmem:[%s428 + $0x38] sm:$0xe]
      %v2897 = vrot.slane %v2873, 5
      %v2898 = vrot.slane %v2897, 4
      %v2899 = vrot.slane %v2593, 5
      %v2900 = vsel %vm917, %v2898, %v2899
      %v2901 = vrot.slane %v2874, 5
      %v2902 = vrot.slane %v2901, 4
      %v2903 = vrot.slane %v2595, 5
      %v2904 = vsel %vm917, %v2902, %v2903
      %v2905 = vrot.slane %v2875, 5
      %v2906 = vrot.slane %v2905, 4
      %v2907 = vrot.slane %v2597, 5
      %v2908 = vsel %vm917, %v2906, %v2907
      %v2909 = vrot.slane %v2876, 5
      %v2910 = vrot.slane %v2909, 4
      %v2911 = vrot.slane %v2599, 5
      %v2912 = vsel %vm917, %v2910, %v2911
      %v2913 = vrot.slane %v2877, 5
      %v2914 = vrot.slane %v2913, 4
      %v2915 = vrot.slane %v2601, 5
      %v2916 = vsel %vm917, %v2914, %v2915
      %v2917 = vrot.slane %v2878, 5
      %v2918 = vrot.slane %v2917, 4
      %v2919 = vrot.slane %v2603, 5
      %v2920 = vsel %vm917, %v2918, %v2919
      %v2921 = vrot.slane %v2879, 5
      %v2922 = vrot.slane %v2921, 4
      %v2923 = vrot.slane %v2605, 5
      %v2924 = vsel %vm917, %v2922, %v2923
      %v2925 = vrot.slane %v2880, 5
      %v2926 = vrot.slane %v2925, 4
      %v2927 = vrot.slane %v2607, 5
      %v2928 = vsel %vm917, %v2926, %v2927
      %v2929 = vld [vmem:[%s3 + $0x2c0] sm:$0xf]
      %v2930 = vld [vmem:[%s3 + $0x2c4] sm:$0xf]
      %v2931 = vld [vmem:[%s3 + $0x2c8] sm:$0xf]
      %v2932 = vld [vmem:[%s3 + $0x2cc] sm:$0xf]
      %v2933 = vld [vmem:[%s3 + $0x2d0] sm:$0xf]
      %v2934 = vld [vmem:[%s3 + $0x2d4] sm:$0xf]
      %v2935 = vld [vmem:[%s3 + $0x2d8] sm:$0xf]
      %v2936 = vld [vmem:[%s3 + $0x2dc] sm:$0xf]
      %v2937 = vld [vmem:[%s3 + $0x2e0] sm:$0xf]
      %v2938 = vld [vmem:[%s3 + $0x2e4] sm:$0xf]
      %v2939 = vld [vmem:[%s3 + $0x2e8] sm:$0xf]
      %v2940 = vld [vmem:[%s3 + $0x2ec] sm:$0xf]
      %v2941 = vld [vmem:[%s3 + $0x2f0] sm:$0xf]
      %v2942 = vld [vmem:[%s3 + $0x2f4] sm:$0xf]
      %v2943 = vld [vmem:[%s3 + $0x2f8] sm:$0xf]
      %v2944 = vld [vmem:[%s3 + $0x2fc] sm:$0xf]
      %v2945 = vunpack.c.l.b16 %v2900
      %v2946 = vunpack.c.l.b16 %v2904
      %v2947 = vunpack.c.l.b16 %v2908
      %v2948 = vunpack.c.l.b16 %v2912
      %v2949 = vunpack.c.l.b16 %v2916
      %v2950 = vunpack.c.l.b16 %v2920
      %v2951 = vunpack.c.l.b16 %v2924
      %v2952 = vunpack.c.l.b16 %v2928
      %v2953 = vpack.c.b16 %v2946, %v2945
      %v2954 = vpack.c.b16 %v2948, %v2947
      %v2955 = vpack.c.b16 %v2950, %v2949
      %v2956 = vpack.c.b16 %v2952, %v2951
      %v2977 = vunpack.c.l.b16 %v2929
      %v2978 = vunpack.c.l.b16 %v2930
      %v2979 = vunpack.c.l.b16 %v2931
      %v2980 = vunpack.c.l.b16 %v2932
      %v2981 = vunpack.c.l.b16 %v2933
      %v2982 = vunpack.c.l.b16 %v2934
      %v2983 = vunpack.c.l.b16 %v2935
      %v2984 = vunpack.c.l.b16 %v2936
      %v2985 = vunpack.c.l.b16 %v2937
      %v2986 = vunpack.c.l.b16 %v2938
      %v2987 = vunpack.c.l.b16 %v2939
      %v2988 = vunpack.c.l.b16 %v2940
      %v2989 = vunpack.c.l.b16 %v2941
      %v2990 = vunpack.c.l.b16 %v2942
      %v2991 = vunpack.c.l.b16 %v2943
      %v2992 = vunpack.c.l.b16 %v2944
      %v2993 = vpack.c.b16 %v2978, %v2977
      %v2994 = vpack.c.b16 %v2980, %v2979
      %v2995 = vpack.c.b16 %v2982, %v2981
      %v2996 = vpack.c.b16 %v2984, %v2983
      %v2997 = vpack.c.b16 %v2986, %v2985
      %v2998 = vpack.c.b16 %v2988, %v2987
      %v2999 = vpack.c.b16 %v2990, %v2989
      %v3000 = vpack.c.b16 %v2992, %v2991
      %3009 = vmatprep.subr.bf16.mxu0 0
      %3010 = vmatpush1.bf16.msra.mxu0 %v2993
      %3011 = vmatprep.subr.bf16.mxu0 0
      %3012 = vmatpush1.bf16.msra.mxu0 %v2994
      %3013 = vmatprep.subr.bf16.mxu0 0
      %3014 = vmatpush1.bf16.msra.mxu0 %v2995
      %3015 = vmatprep.subr.bf16.mxu0 0
      %3016 = vmatpush1.bf16.msra.mxu0 %v2996
      %3017 = vmatprep.subr.bf16.mxu0 0
      %3018 = vmatpush1.bf16.msra.mxu0 %v2997
      %3019 = vmatprep.subr.bf16.mxu0 0
      %3020 = vmatpush1.bf16.msra.mxu0 %v2998
      %3021 = vmatprep.subr.bf16.mxu0 0
      %3022 = vmatpush1.bf16.msra.mxu0 %v2999
      %3023 = vmatprep.subr.bf16.mxu0 0
      %3024 = vmatpush1.bf16.msra.mxu0 %v3000
      %3025 = vmatprep.subr.bf16.mxu0 0
      %3026 = vmatpush1.bf16.msra.mxu0 0
      %3027 = vmatprep.subr.bf16.mxu0 0
      %3028 = vmatpush1.bf16.msra.mxu0 0
      %3029 = vmatprep.subr.bf16.mxu0 0
      %3030 = vmatpush1.bf16.msra.mxu0 0
      %3031 = vmatprep.subr.bf16.mxu0 0
      %3032 = vmatpush1.bf16.msra.mxu0 0
      %3033 = vmatprep.subr.bf16.mxu0 0
      %3034 = vmatpush1.bf16.msra.mxu0 0
      %3035 = vmatprep.subr.bf16.mxu0 0
      %3036 = vmatpush1.bf16.msra.mxu0 0
      %3037 = vmatprep.subr.bf16.mxu0 0
      %3038 = vmatpush1.bf16.msra.mxu0 0
      %3039 = vmatprep.subr.bf16.mxu0 0
      %3040 = vmatpush1.bf16.msra.mxu0 0
      %3041 = vmatprep.mubr.bf16.mxu0 0
      %3042 = vmatmul.mubr.bf16.gmra.mrb[0].mxu0 %v2953
      %v3043 = vpop.f32.mrb[0].mxu0
      %v3044 = vadd.f32 0.0, %v3043
      %v3045 = vpop.f32.mrb[0].mxu0
      %v3046 = vpop.f32.mrb[0].mxu0
      %v3047 = vadd.f32 0.0, %v3046
      %v3048 = vpop.f32.mrb[0].mxu0
      %3049 = vmatprep.mubr.bf16.mxu0 0
      %3050 = vmatmul.mubr.bf16.gmra.mrb[0].mxu0 %v2954
      %v3051 = vpop.f32.mrb[0].mxu0
      %v3052 = vadd.f32 0.0, %v3051
      %v3053 = vpop.f32.mrb[0].mxu0
      %v3054 = vpop.f32.mrb[0].mxu0
      %v3055 = vadd.f32 0.0, %v3054
      %v3056 = vpop.f32.mrb[0].mxu0
      %3057 = vmatprep.mubr.bf16.mxu0 0
      %3058 = vmatmul.mubr.bf16.gmra.mrb[0].mxu0 %v2955
      %v3059 = vpop.f32.mrb[0].mxu0
      %v3060 = vadd.f32 0.0, %v3059
      %v3061 = vpop.f32.mrb[0].mxu0
      %v3062 = vpop.f32.mrb[0].mxu0
      %v3063 = vadd.f32 0.0, %v3062
      %v3064 = vpop.f32.mrb[0].mxu0
      %3065 = vmatprep.mubr.bf16.mxu0 0
      %3066 = vmatmul.mubr.bf16.gmra.mrb[0].mxu0 %v2956
      %v3067 = vpop.f32.mrb[0].mxu0
      %v3068 = vadd.f32 0.0, %v3067
      %v3069 = vpop.f32.mrb[0].mxu0
      %v3070 = vpop.f32.mrb[0].mxu0
      %v3071 = vadd.f32 0.0, %v3070
      %v3072 = vpop.f32.mrb[0].mxu0
      %3073 = vdwg.mxu0
      %v3074 = vadd.f32 %v2865, %v3044
      %v3075 = vadd.f32 %v2866, %v3047
      %v3076 = vadd.f32 %v2867, %v3052
      %v3077 = vadd.f32 %v2868, %v3055
      %v3078 = vadd.f32 %v2869, %v3060
      %v3079 = vadd.f32 %v2870, %v3063
      %v3080 = vadd.f32 %v2871, %v3068
      %v3081 = vadd.f32 %v2872, %v3071
      %s3082 = scalar_lea.vmem %s428, 8
      %v3083 = vld [vmem:[%s3082] sm:$0xf]
      %v3084 = vld [vmem:[%s3082 + $0x8] sm:$0xf]
      %v3085 = vld [vmem:[%s3082 + $0x10] sm:$0xf]
      %v3086 = vld [vmem:[%s3082 + $0x18] sm:$0xf]
      %v3087 = vld [vmem:[%s3082 + $0x20] sm:$0xf]
      %v3088 = vld [vmem:[%s3082 + $0x28] sm:$0xf]
      %v3089 = vld [vmem:[%s3082 + $0x30] sm:$0xf]
      %v3090 = vld [vmem:[%s3082 + $0x38] sm:$0xf]
      %v3091 = vld [vmem:[%s3 + $0x300] sm:$0xf]
      %v3092 = vld [vmem:[%s3 + $0x304] sm:$0xf]
      %v3093 = vld [vmem:[%s3 + $0x308] sm:$0xf]
      %v3094 = vld [vmem:[%s3 + $0x30c] sm:$0xf]
      %v3095 = vld [vmem:[%s3 + $0x310] sm:$0xf]
      %v3096 = vld [vmem:[%s3 + $0x314] sm:$0xf]
      %v3097 = vld [vmem:[%s3 + $0x318] sm:$0xf]
      %v3098 = vld [vmem:[%s3 + $0x31c] sm:$0xf]
      %v3099 = vld [vmem:[%s3 + $0x320] sm:$0xf]
      %v3100 = vld [vmem:[%s3 + $0x324] sm:$0xf]
      %v3101 = vld [vmem:[%s3 + $0x328] sm:$0xf]
      %v3102 = vld [vmem:[%s3 + $0x32c] sm:$0xf]
      %v3103 = vld [vmem:[%s3 + $0x330] sm:$0xf]
      %v3104 = vld [vmem:[%s3 + $0x334] sm:$0xf]
      %v3105 = vld [vmem:[%s3 + $0x338] sm:$0xf]
      %v3106 = vld [vmem:[%s3 + $0x33c] sm:$0xf]
      %v3115 = vunpack.c.l.b16 %v3083
      %v3116 = vunpack.c.l.b16 %v3084
      %v3117 = vunpack.c.l.b16 %v3085
      %v3118 = vunpack.c.l.b16 %v3086
      %v3119 = vunpack.c.l.b16 %v3087
      %v3120 = vunpack.c.l.b16 %v3088
      %v3121 = vunpack.c.l.b16 %v3089
      %v3122 = vunpack.c.l.b16 %v3090
      %v3123 = vpack.c.b16 %v3116, %v3115
      %v3124 = vpack.c.b16 %v3118, %v3117
      %v3125 = vpack.c.b16 %v3120, %v3119
      %v3126 = vpack.c.b16 %v3122, %v3121
      %v3147 = vunpack.c.l.b16 %v3091
      %v3148 = vunpack.c.l.b16 %v3092
      %v3149 = vunpack.c.l.b16 %v3093
      %v3150 = vunpack.c.l.b16 %v3094
      %v3151 = vunpack.c.l.b16 %v3095
      %v3152 = vunpack.c.l.b16 %v3096
      %v3153 = vunpack.c.l.b16 %v3097
      %v3154 = vunpack.c.l.b16 %v3098
      %v3155 = vunpack.c.l.b16 %v3099
      %v3156 = vunpack.c.l.b16 %v3100
      %v3157 = vunpack.c.l.b16 %v3101
      %v3158 = vunpack.c.l.b16 %v3102
      %v3159 = vunpack.c.l.b16 %v3103
      %v3160 = vunpack.c.l.b16 %v3104
      %v3161 = vunpack.c.l.b16 %v3105
      %v3162 = vunpack.c.l.b16 %v3106
      %v3163 = vpack.c.b16 %v3148, %v3147
      %v3164 = vpack.c.b16 %v3150, %v3149
      %v3165 = vpack.c.b16 %v3152, %v3151
      %v3166 = vpack.c.b16 %v3154, %v3153
      %v3167 = vpack.c.b16 %v3156, %v3155
      %v3168 = vpack.c.b16 %v3158, %v3157
      %v3169 = vpack.c.b16 %v3160, %v3159
      %v3170 = vpack.c.b16 %v3162, %v3161
      %3179 = vmatprep.subr.bf16.mxu0 0
      %3180 = vmatpush1.bf16.msra.mxu0 %v3163
      %3181 = vmatprep.subr.bf16.mxu0 0
      %3182 = vmatpush1.bf16.msra.mxu0 %v3164
      %3183 = vmatprep.subr.bf16.mxu0 0
      %3184 = vmatpush1.bf16.msra.mxu0 %v3165
      %3185 = vmatprep.subr.bf16.mxu0 0
      %3186 = vmatpush1.bf16.msra.mxu0 %v3166
      %3187 = vmatprep.subr.bf16.mxu0 0
      %3188 = vmatpush1.bf16.msra.mxu0 %v3167
      %3189 = vmatprep.subr.bf16.mxu0 0
      %3190 = vmatpush1.bf16.msra.mxu0 %v3168
      %3191 = vmatprep.subr.bf16.mxu0 0
      %3192 = vmatpush1.bf16.msra.mxu0 %v3169
      %3193 = vmatprep.subr.bf16.mxu0 0
      %3194 = vmatpush1.bf16.msra.mxu0 %v3170
      %3195 = vmatprep.subr.bf16.mxu0 0
      %3196 = vmatpush1.bf16.msra.mxu0 0
      %3197 = vmatprep.subr.bf16.mxu0 0
      %3198 = vmatpush1.bf16.msra.mxu0 0
      %3199 = vmatprep.subr.bf16.mxu0 0
      %3200 = vmatpush1.bf16.msra.mxu0 0
      %3201 = vmatprep.subr.bf16.mxu0 0
      %3202 = vmatpush1.bf16.msra.mxu0 0
      %3203 = vmatprep.subr.bf16.mxu0 0
      %3204 = vmatpush1.bf16.msra.mxu0 0
      %3205 = vmatprep.subr.bf16.mxu0 0
      %3206 = vmatpush1.bf16.msra.mxu0 0
      %3207 = vmatprep.subr.bf16.mxu0 0
      %3208 = vmatpush1.bf16.msra.mxu0 0
      %3209 = vmatprep.subr.bf16.mxu0 0
      %3210 = vmatpush1.bf16.msra.mxu0 0
      %3211 = vmatprep.mubr.bf16.mxu0 0
      %3212 = vmatmul.mubr.bf16.gmra.mrb[0].mxu0 %v3123
      %v3213 = vpop.f32.mrb[0].mxu0
      %v3214 = vadd.f32 0.0, %v3213
      %v3215 = vpop.f32.mrb[0].mxu0
      %v3216 = vpop.f32.mrb[0].mxu0
      %v3217 = vadd.f32 0.0, %v3216
      %v3218 = vpop.f32.mrb[0].mxu0
      %3219 = vmatprep.mubr.bf16.mxu0 0
      %3220 = vmatmul.mubr.bf16.gmra.mrb[0].mxu0 %v3124
      %v3221 = vpop.f32.mrb[0].mxu0
      %v3222 = vadd.f32 0.0, %v3221
      %v3223 = vpop.f32.mrb[0].mxu0
      %v3224 = vpop.f32.mrb[0].mxu0
      %v3225 = vadd.f32 0.0, %v3224
      %v3226 = vpop.f32.mrb[0].mxu0
      %3227 = vmatprep.mubr.bf16.mxu0 0
      %3228 = vmatmul.mubr.bf16.gmra.mrb[0].mxu0 %v3125
      %v3229 = vpop.f32.mrb[0].mxu0
      %v3230 = vadd.f32 0.0, %v3229
      %v3231 = vpop.f32.mrb[0].mxu0
      %v3232 = vpop.f32.mrb[0].mxu0
      %v3233 = vadd.f32 0.0, %v3232
      %v3234 = vpop.f32.mrb[0].mxu0
      %3235 = vmatprep.mubr.bf16.mxu0 0
      %3236 = vmatmul.mubr.bf16.gmra.mrb[0].mxu0 %v3126
      %v3237 = vpop.f32.mrb[0].mxu0
      %v3238 = vadd.f32 0.0, %v3237
      %v3239 = vpop.f32.mrb[0].mxu0
      %v3240 = vpop.f32.mrb[0].mxu0
      %v3241 = vadd.f32 0.0, %v3240
      %v3242 = vpop.f32.mrb[0].mxu0
      %3243 = vdwg.mxu0
      %v3244 = vadd.f32 %v3074, %v3214
      %v3245 = vadd.f32 %v3075, %v3217
      %v3246 = vadd.f32 %v3076, %v3222
      %v3247 = vadd.f32 %v3077, %v3225
      %v3248 = vadd.f32 %v3078, %v3230
      %v3249 = vadd.f32 %v3079, %v3233
      %v3250 = vadd.f32 %v3080, %v3238
      %v3251 = vadd.f32 %v3081, %v3241
      %v3252 = vld [vmem:[%s3082] sm:$0xf]
      %v3253 = vld [vmem:[%s3082 + $0x4] sm:$0x1]
      %v3254 = vld [vmem:[%s3082 + $0x8] sm:$0xf]
      %v3255 = vld [vmem:[%s3082 + $0xc] sm:$0x1]
      %v3256 = vld [vmem:[%s3082 + $0x10] sm:$0xf]
      %v3257 = vld [vmem:[%s3082 + $0x14] sm:$0x1]
      %v3258 = vld [vmem:[%s3082 + $0x18] sm:$0xf]
      %v3259 = vld [vmem:[%s3082 + $0x1c] sm:$0x1]
      %v3260 = vld [vmem:[%s3082 + $0x20] sm:$0xf]
      %v3261 = vld [vmem:[%s3082 + $0x24] sm:$0x1]
      %v3262 = vld [vmem:[%s3082 + $0x28] sm:$0xf]
      %v3263 = vld [vmem:[%s3082 + $0x2c] sm:$0x1]
      %v3264 = vld [vmem:[%s3082 + $0x30] sm:$0xf]
      %v3265 = vld [vmem:[%s3082 + $0x34] sm:$0x1]
      %v3266 = vld [vmem:[%s3082 + $0x38] sm:$0xf]
      %v3267 = vld [vmem:[%s3082 + $0x3c] sm:$0x1]
      %v3269 = vshrl.u32 %v3252, 16
      %v3271 = vrot.slane %v3269, 4
      %v3272 = vshll.u32 %v3252, 16
      %v3274 = vrot.slane %v3272, 5
      %v3275 = vor.u32 %v3271, %v3274
      %v3276 = vrot.slane %v3275, 4
      %v3278 = vshll.u32 %v3253, 16
      %v3280 = vrot.slane %v3278, 5
      %v3281 = vsel %vm496, %v3276, %v3280
      %v3283 = vshrl.u32 %v3254, 16
      %v3285 = vrot.slane %v3283, 4
      %v3286 = vshll.u32 %v3254, 16
      %v3288 = vrot.slane %v3286, 5
      %v3289 = vor.u32 %v3285, %v3288
      %v3290 = vrot.slane %v3289, 4
      %v3292 = vshll.u32 %v3255, 16
      %v3294 = vrot.slane %v3292, 5
      %v3295 = vsel %vm496, %v3290, %v3294
      %v3297 = vshrl.u32 %v3256, 16
      %v3299 = vrot.slane %v3297, 4
      %v3300 = vshll.u32 %v3256, 16
      %v3302 = vrot.slane %v3300, 5
      %v3303 = vor.u32 %v3299, %v3302
      %v3304 = vrot.slane %v3303, 4
      %v3306 = vshll.u32 %v3257, 16
      %v3308 = vrot.slane %v3306, 5
      %v3309 = vsel %vm496, %v3304, %v3308
      %v3311 = vshrl.u32 %v3258, 16
      %v3313 = vrot.slane %v3311, 4
      %v3314 = vshll.u32 %v3258, 16
      %v3316 = vrot.slane %v3314, 5
      %v3317 = vor.u32 %v3313, %v3316
      %v3318 = vrot.slane %v3317, 4
      %v3320 = vshll.u32 %v3259, 16
      %v3322 = vrot.slane %v3320, 5
      %v3323 = vsel %vm496, %v3318, %v3322
      %v3325 = vshrl.u32 %v3260, 16
      %v3327 = vrot.slane %v3325, 4
      %v3328 = vshll.u32 %v3260, 16
      %v3330 = vrot.slane %v3328, 5
      %v3331 = vor.u32 %v3327, %v3330
      %v3332 = vrot.slane %v3331, 4
      %v3334 = vshll.u32 %v3261, 16
      %v3336 = vrot.slane %v3334, 5
      %v3337 = vsel %vm496, %v3332, %v3336
      %v3339 = vshrl.u32 %v3262, 16
      %v3341 = vrot.slane %v3339, 4
      %v3342 = vshll.u32 %v3262, 16
      %v3344 = vrot.slane %v3342, 5
      %v3345 = vor.u32 %v3341, %v3344
      %v3346 = vrot.slane %v3345, 4
      %v3348 = vshll.u32 %v3263, 16
      %v3350 = vrot.slane %v3348, 5
      %v3351 = vsel %vm496, %v3346, %v3350
      %v3353 = vshrl.u32 %v3264, 16
      %v3355 = vrot.slane %v3353, 4
      %v3356 = vshll.u32 %v3264, 16
      %v3358 = vrot.slane %v3356, 5
      %v3359 = vor.u32 %v3355, %v3358
      %v3360 = vrot.slane %v3359, 4
      %v3362 = vshll.u32 %v3265, 16
      %v3364 = vrot.slane %v3362, 5
      %v3365 = vsel %vm496, %v3360, %v3364
      %v3367 = vshrl.u32 %v3266, 16
      %v3369 = vrot.slane %v3367, 4
      %v3370 = vshll.u32 %v3266, 16
      %v3372 = vrot.slane %v3370, 5
      %v3373 = vor.u32 %v3369, %v3372
      %v3374 = vrot.slane %v3373, 4
      %v3376 = vshll.u32 %v3267, 16
      %v3378 = vrot.slane %v3376, 5
      %v3379 = vsel %vm496, %v3374, %v3378
      %v3380 = vld [vmem:[%s3 + $0x340] sm:$0xf]
      %v3381 = vld [vmem:[%s3 + $0x344] sm:$0xf]
      %v3382 = vld [vmem:[%s3 + $0x348] sm:$0xf]
      %v3383 = vld [vmem:[%s3 + $0x34c] sm:$0xf]
      %v3384 = vld [vmem:[%s3 + $0x350] sm:$0xf]
      %v3385 = vld [vmem:[%s3 + $0x354] sm:$0xf]
      %v3386 = vld [vmem:[%s3 + $0x358] sm:$0xf]
      %v3387 = vld [vmem:[%s3 + $0x35c] sm:$0xf]
      %v3388 = vld [vmem:[%s3 + $0x360] sm:$0xf]
      %v3389 = vld [vmem:[%s3 + $0x364] sm:$0xf]
      %v3390 = vld [vmem:[%s3 + $0x368] sm:$0xf]
      %v3391 = vld [vmem:[%s3 + $0x36c] sm:$0xf]
      %v3392 = vld [vmem:[%s3 + $0x370] sm:$0xf]
      %v3393 = vld [vmem:[%s3 + $0x374] sm:$0xf]
      %v3394 = vld [vmem:[%s3 + $0x378] sm:$0xf]
      %v3395 = vld [vmem:[%s3 + $0x37c] sm:$0xf]
      %v3396 = vunpack.c.l.b16 %v3281
      %v3397 = vunpack.c.l.b16 %v3295
      %v3398 = vunpack.c.l.b16 %v3309
      %v3399 = vunpack.c.l.b16 %v3323
      %v3400 = vunpack.c.l.b16 %v3337
      %v3401 = vunpack.c.l.b16 %v3351
      %v3402 = vunpack.c.l.b16 %v3365
      %v3403 = vunpack.c.l.b16 %v3379
      %v3404 = vpack.c.b16 %v3397, %v3396
      %v3405 = vpack.c.b16 %v3399, %v3398
      %v3406 = vpack.c.b16 %v3401, %v3400
      %v3407 = vpack.c.b16 %v3403, %v3402
      %v3428 = vunpack.c.l.b16 %v3380
      %v3429 = vunpack.c.l.b16 %v3381
      %v3430 = vunpack.c.l.b16 %v3382
      %v3431 = vunpack.c.l.b16 %v3383
      %v3432 = vunpack.c.l.b16 %v3384
      %v3433 = vunpack.c.l.b16 %v3385
      %v3434 = vunpack.c.l.b16 %v3386
      %v3435 = vunpack.c.l.b16 %v3387
      %v3436 = vunpack.c.l.b16 %v3388
      %v3437 = vunpack.c.l.b16 %v3389
      %v3438 = vunpack.c.l.b16 %v3390
      %v3439 = vunpack.c.l.b16 %v3391
      %v3440 = vunpack.c.l.b16 %v3392
      %v3441 = vunpack.c.l.b16 %v3393
      %v3442 = vunpack.c.l.b16 %v3394
      %v3443 = vunpack.c.l.b16 %v3395
      %v3444 = vpack.c.b16 %v3429, %v3428
      %v3445 = vpack.c.b16 %v3431, %v3430
      %v3446 = vpack.c.b16 %v3433, %v3432
      %v3447 = vpack.c.b16 %v3435, %v3434
      %v3448 = vpack.c.b16 %v3437, %v3436
      %v3449 = vpack.c.b16 %v3439, %v3438
      %v3450 = vpack.c.b16 %v3441, %v3440
      %v3451 = vpack.c.b16 %v3443, %v3442
      %3460 = vmatprep.subr.bf16.mxu0 0
      %3461 = vmatpush1.bf16.msra.mxu0 %v3444
      %3462 = vmatprep.subr.bf16.mxu0 0
      %3463 = vmatpush1.bf16.msra.mxu0 %v3445
      %3464 = vmatprep.subr.bf16.mxu0 0
      %3465 = vmatpush1.bf16.msra.mxu0 %v3446
      %3466 = vmatprep.subr.bf16.mxu0 0
      %3467 = vmatpush1.bf16.msra.mxu0 %v3447
      %3468 = vmatprep.subr.bf16.mxu0 0
      %3469 = vmatpush1.bf16.msra.mxu0 %v3448
      %3470 = vmatprep.subr.bf16.mxu0 0
      %3471 = vmatpush1.bf16.msra.mxu0 %v3449
      %3472 = vmatprep.subr.bf16.mxu0 0
      %3473 = vmatpush1.bf16.msra.mxu0 %v3450
      %3474 = vmatprep.subr.bf16.mxu0 0
      %3475 = vmatpush1.bf16.msra.mxu0 %v3451
      %3476 = vmatprep.subr.bf16.mxu0 0
      %3477 = vmatpush1.bf16.msra.mxu0 0
      %3478 = vmatprep.subr.bf16.mxu0 0
      %3479 = vmatpush1.bf16.msra.mxu0 0
      %3480 = vmatprep.subr.bf16.mxu0 0
      %3481 = vmatpush1.bf16.msra.mxu0 0
      %3482 = vmatprep.subr.bf16.mxu0 0
      %3483 = vmatpush1.bf16.msra.mxu0 0
      %3484 = vmatprep.subr.bf16.mxu0 0
      %3485 = vmatpush1.bf16.msra.mxu0 0
      %3486 = vmatprep.subr.bf16.mxu0 0
      %3487 = vmatpush1.bf16.msra.mxu0 0
      %3488 = vmatprep.subr.bf16.mxu0 0
      %3489 = vmatpush1.bf16.msra.mxu0 0
      %3490 = vmatprep.subr.bf16.mxu0 0
      %3491 = vmatpush1.bf16.msra.mxu0 0
      %3492 = vmatprep.mubr.bf16.mxu0 0
      %3493 = vmatmul.mubr.bf16.gmra.mrb[0].mxu0 %v3404
      %v3494 = vpop.f32.mrb[0].mxu0
      %v3495 = vadd.f32 0.0, %v3494
      %v3496 = vpop.f32.mrb[0].mxu0
      %v3497 = vpop.f32.mrb[0].mxu0
      %v3498 = vadd.f32 0.0, %v3497
      %v3499 = vpop.f32.mrb[0].mxu0
      %3500 = vmatprep.mubr.bf16.mxu0 0
      %3501 = vmatmul.mubr.bf16.gmra.mrb[0].mxu0 %v3405
      %v3502 = vpop.f32.mrb[0].mxu0
      %v3503 = vadd.f32 0.0, %v3502
      %v3504 = vpop.f32.mrb[0].mxu0
      %v3505 = vpop.f32.mrb[0].mxu0
      %v3506 = vadd.f32 0.0, %v3505
      %v3507 = vpop.f32.mrb[0].mxu0
      %3508 = vmatprep.mubr.bf16.mxu0 0
      %3509 = vmatmul.mubr.bf16.gmra.mrb[0].mxu0 %v3406
      %v3510 = vpop.f32.mrb[0].mxu0
      %v3511 = vadd.f32 0.0, %v3510
      %v3512 = vpop.f32.mrb[0].mxu0
      %v3513 = vpop.f32.mrb[0].mxu0
      %v3514 = vadd.f32 0.0, %v3513
      %v3515 = vpop.f32.mrb[0].mxu0
      %3516 = vmatprep.mubr.bf16.mxu0 0
      %3517 = vmatmul.mubr.bf16.gmra.mrb[0].mxu0 %v3407
      %v3518 = vpop.f32.mrb[0].mxu0
      %v3519 = vadd.f32 0.0, %v3518
      %v3520 = vpop.f32.mrb[0].mxu0
      %v3521 = vpop.f32.mrb[0].mxu0
      %v3522 = vadd.f32 0.0, %v3521
      %v3523 = vpop.f32.mrb[0].mxu0
      %3524 = vdwg.mxu0
      %v3525 = vadd.f32 %v3244, %v3495
      %v3526 = vadd.f32 %v3245, %v3498
      %v3527 = vadd.f32 %v3246, %v3503
      %v3528 = vadd.f32 %v3247, %v3506
      %v3529 = vadd.f32 %v3248, %v3511
      %v3530 = vadd.f32 %v3249, %v3514
      %v3531 = vadd.f32 %v3250, %v3519
      %v3532 = vadd.f32 %v3251, %v3522
      %v3533 = vld [vmem:[%s3082] sm:$0xe]
      %v3534 = vld [vmem:[%s3082 + $0x8] sm:$0xe]
      %v3535 = vld [vmem:[%s3082 + $0x10] sm:$0xe]
      %v3536 = vld [vmem:[%s3082 + $0x18] sm:$0xe]
      %v3537 = vld [vmem:[%s3082 + $0x20] sm:$0xe]
      %v3538 = vld [vmem:[%s3082 + $0x28] sm:$0xe]
      %v3539 = vld [vmem:[%s3082 + $0x30] sm:$0xe]
      %v3540 = vld [vmem:[%s3082 + $0x38] sm:$0xe]
      %v3557 = vrot.slane %v3533, 5
      %v3558 = vrot.slane %v3557, 4
      %v3559 = vrot.slane %v3253, 5
      %v3560 = vsel %vm917, %v3558, %v3559
      %v3561 = vrot.slane %v3534, 5
      %v3562 = vrot.slane %v3561, 4
      %v3563 = vrot.slane %v3255, 5
      %v3564 = vsel %vm917, %v3562, %v3563
      %v3565 = vrot.slane %v3535, 5
      %v3566 = vrot.slane %v3565, 4
      %v3567 = vrot.slane %v3257, 5
      %v3568 = vsel %vm917, %v3566, %v3567
      %v3569 = vrot.slane %v3536, 5
      %v3570 = vrot.slane %v3569, 4
      %v3571 = vrot.slane %v3259, 5
      %v3572 = vsel %vm917, %v3570, %v3571
      %v3573 = vrot.slane %v3537, 5
      %v3574 = vrot.slane %v3573, 4
      %v3575 = vrot.slane %v3261, 5
      %v3576 = vsel %vm917, %v3574, %v3575
      %v3577 = vrot.slane %v3538, 5
      %v3578 = vrot.slane %v3577, 4
      %v3579 = vrot.slane %v3263, 5
      %v3580 = vsel %vm917, %v3578, %v3579
      %v3581 = vrot.slane %v3539, 5
      %v3582 = vrot.slane %v3581, 4
      %v3583 = vrot.slane %v3265, 5
      %v3584 = vsel %vm917, %v3582, %v3583
      %v3585 = vrot.slane %v3540, 5
      %v3586 = vrot.slane %v3585, 4
      %v3587 = vrot.slane %v3267, 5
      %v3588 = vsel %vm917, %v3586, %v3587
      %v3589 = vld [vmem:[%s3 + $0x380] sm:$0xf]
      %v3590 = vld [vmem:[%s3 + $0x384] sm:$0xf]
      %v3591 = vld [vmem:[%s3 + $0x388] sm:$0xf]
      %v3592 = vld [vmem:[%s3 + $0x38c] sm:$0xf]
      %v3593 = vld [vmem:[%s3 + $0x390] sm:$0xf]
      %v3594 = vld [vmem:[%s3 + $0x394] sm:$0xf]
      %v3595 = vld [vmem:[%s3 + $0x398] sm:$0xf]
      %v3596 = vld [vmem:[%s3 + $0x39c] sm:$0xf]
      %v3597 = vld [vmem:[%s3 + $0x3a0] sm:$0xf]
      %v3598 = vld [vmem:[%s3 + $0x3a4] sm:$0xf]
      %v3599 = vld [vmem:[%s3 + $0x3a8] sm:$0xf]
      %v3600 = vld [vmem:[%s3 + $0x3ac] sm:$0xf]
      %v3601 = vld [vmem:[%s3 + $0x3b0] sm:$0xf]
      %v3602 = vld [vmem:[%s3 + $0x3b4] sm:$0xf]
      %v3603 = vld [vmem:[%s3 + $0x3b8] sm:$0xf]
      %v3604 = vld [vmem:[%s3 + $0x3bc] sm:$0xf]
      %v3605 = vunpack.c.l.b16 %v3560
      %v3606 = vunpack.c.l.b16 %v3564
      %v3607 = vunpack.c.l.b16 %v3568
      %v3608 = vunpack.c.l.b16 %v3572
      %v3609 = vunpack.c.l.b16 %v3576
      %v3610 = vunpack.c.l.b16 %v3580
      %v3611 = vunpack.c.l.b16 %v3584
      %v3612 = vunpack.c.l.b16 %v3588
      %v3613 = vpack.c.b16 %v3606, %v3605
      %v3614 = vpack.c.b16 %v3608, %v3607
      %v3615 = vpack.c.b16 %v3610, %v3609
      %v3616 = vpack.c.b16 %v3612, %v3611
      %v3637 = vunpack.c.l.b16 %v3589
      %v3638 = vunpack.c.l.b16 %v3590
      %v3639 = vunpack.c.l.b16 %v3591
      %v3640 = vunpack.c.l.b16 %v3592
      %v3641 = vunpack.c.l.b16 %v3593
      %v3642 = vunpack.c.l.b16 %v3594
      %v3643 = vunpack.c.l.b16 %v3595
      %v3644 = vunpack.c.l.b16 %v3596
      %v3645 = vunpack.c.l.b16 %v3597
      %v3646 = vunpack.c.l.b16 %v3598
      %v3647 = vunpack.c.l.b16 %v3599
      %v3648 = vunpack.c.l.b16 %v3600
      %v3649 = vunpack.c.l.b16 %v3601
      %v3650 = vunpack.c.l.b16 %v3602
      %v3651 = vunpack.c.l.b16 %v3603
      %v3652 = vunpack.c.l.b16 %v3604
      %v3653 = vpack.c.b16 %v3638, %v3637
      %v3654 = vpack.c.b16 %v3640, %v3639
      %v3655 = vpack.c.b16 %v3642, %v3641
      %v3656 = vpack.c.b16 %v3644, %v3643
      %v3657 = vpack.c.b16 %v3646, %v3645
      %v3658 = vpack.c.b16 %v3648, %v3647
      %v3659 = vpack.c.b16 %v3650, %v3649
      %v3660 = vpack.c.b16 %v3652, %v3651
      %3669 = vmatprep.subr.bf16.mxu0 0
      %3670 = vmatpush1.bf16.msra.mxu0 %v3653
      %3671 = vmatprep.subr.bf16.mxu0 0
      %3672 = vmatpush1.bf16.msra.mxu0 %v3654
      %3673 = vmatprep.subr.bf16.mxu0 0
      %3674 = vmatpush1.bf16.msra.mxu0 %v3655
      %3675 = vmatprep.subr.bf16.mxu0 0
      %3676 = vmatpush1.bf16.msra.mxu0 %v3656
      %3677 = vmatprep.subr.bf16.mxu0 0
      %3678 = vmatpush1.bf16.msra.mxu0 %v3657
      %3679 = vmatprep.subr.bf16.mxu0 0
      %3680 = vmatpush1.bf16.msra.mxu0 %v3658
      %3681 = vmatprep.subr.bf16.mxu0 0
      %3682 = vmatpush1.bf16.msra.mxu0 %v3659
      %3683 = vmatprep.subr.bf16.mxu0 0
      %3684 = vmatpush1.bf16.msra.mxu0 %v3660
      %3685 = vmatprep.subr.bf16.mxu0 0
      %3686 = vmatpush1.bf16.msra.mxu0 0
      %3687 = vmatprep.subr.bf16.mxu0 0
      %3688 = vmatpush1.bf16.msra.mxu0 0
      %3689 = vmatprep.subr.bf16.mxu0 0
      %3690 = vmatpush1.bf16.msra.mxu0 0
      %3691 = vmatprep.subr.bf16.mxu0 0
      %3692 = vmatpush1.bf16.msra.mxu0 0
      %3693 = vmatprep.subr.bf16.mxu0 0
      %3694 = vmatpush1.bf16.msra.mxu0 0
      %3695 = vmatprep.subr.bf16.mxu0 0
      %3696 = vmatpush1.bf16.msra.mxu0 0
      %3697 = vmatprep.subr.bf16.mxu0 0
      %3698 = vmatpush1.bf16.msra.mxu0 0
      %3699 = vmatprep.subr.bf16.mxu0 0
      %3700 = vmatpush1.bf16.msra.mxu0 0
      %3701 = vmatprep.mubr.bf16.mxu0 0
      %3702 = vmatmul.mubr.bf16.gmra.mrb[0].mxu0 %v3613
      %v3703 = vpop.f32.mrb[0].mxu0
      %v3704 = vadd.f32 0.0, %v3703
      %v3705 = vpop.f32.mrb[0].mxu0
      %v3706 = vpop.f32.mrb[0].mxu0
      %v3707 = vadd.f32 0.0, %v3706
      %v3708 = vpop.f32.mrb[0].mxu0
      %3709 = vmatprep.mubr.bf16.mxu0 0
      %3710 = vmatmul.mubr.bf16.gmra.mrb[0].mxu0 %v3614
      %v3711 = vpop.f32.mrb[0].mxu0
      %v3712 = vadd.f32 0.0, %v3711
      %v3713 = vpop.f32.mrb[0].mxu0
      %v3714 = vpop.f32.mrb[0].mxu0
      %v3715 = vadd.f32 0.0, %v3714
      %v3716 = vpop.f32.mrb[0].mxu0
      %3717 = vmatprep.mubr.bf16.mxu0 0
      %3718 = vmatmul.mubr.bf16.gmra.mrb[0].mxu0 %v3615
      %v3719 = vpop.f32.mrb[0].mxu0
      %v3720 = vadd.f32 0.0, %v3719
      %v3721 = vpop.f32.mrb[0].mxu0
      %v3722 = vpop.f32.mrb[0].mxu0
      %v3723 = vadd.f32 0.0, %v3722
      %v3724 = vpop.f32.mrb[0].mxu0
      %3725 = vmatprep.mubr.bf16.mxu0 0
      %3726 = vmatmul.mubr.bf16.gmra.mrb[0].mxu0 %v3616
      %v3727 = vpop.f32.mrb[0].mxu0
      %v3728 = vadd.f32 0.0, %v3727
      %v3729 = vpop.f32.mrb[0].mxu0
      %v3730 = vpop.f32.mrb[0].mxu0
      %v3731 = vadd.f32 0.0, %v3730
      %v3732 = vpop.f32.mrb[0].mxu0
      %3733 = vdwg.mxu0
      %v3734 = vadd.f32 %v3525, %v3704
      %v3735 = vadd.f32 %v3526, %v3707
      %v3736 = vadd.f32 %v3527, %v3712
      %v3737 = vadd.f32 %v3528, %v3715
      %v3738 = vadd.f32 %v3529, %v3720
      %v3739 = vadd.f32 %v3530, %v3723
      %v3740 = vadd.f32 %v3531, %v3728
      %v3741 = vadd.f32 %v3532, %v3731
      %s3742 = scalar_lea.vmem %s428, 16
      %v3743 = vld [vmem:[%s3742] sm:$0xf]
      %v3744 = vld [vmem:[%s3742 + $0x8] sm:$0xf]
      %v3745 = vld [vmem:[%s3742 + $0x10] sm:$0xf]
      %v3746 = vld [vmem:[%s3742 + $0x18] sm:$0xf]
      %v3747 = vld [vmem:[%s3742 + $0x20] sm:$0xf]
      %v3748 = vld [vmem:[%s3742 + $0x28] sm:$0xf]
      %v3749 = vld [vmem:[%s3742 + $0x30] sm:$0xf]
      %v3750 = vld [vmem:[%s3742 + $0x38] sm:$0xf]
      %v3751 = vld [vmem:[%s3 + $0x3c0] sm:$0xf]
      %v3752 = vld [vmem:[%s3 + $0x3c4] sm:$0xf]
      %v3753 = vld [vmem:[%s3 + $0x3c8] sm:$0xf]
      %v3754 = vld [vmem:[%s3 + $0x3cc] sm:$0xf]
      %v3755 = vld [vmem:[%s3 + $0x3d0] sm:$0xf]
      %v3756 = vld [vmem:[%s3 + $0x3d4] sm:$0xf]
      %v3757 = vld [vmem:[%s3 + $0x3d8] sm:$0xf]
      %v3758 = vld [vmem:[%s3 + $0x3dc] sm:$0xf]
      %v3759 = vld [vmem:[%s3 + $0x3e0] sm:$0xf]
      %v3760 = vld [vmem:[%s3 + $0x3e4] sm:$0xf]
      %v3761 = vld [vmem:[%s3 + $0x3e8] sm:$0xf]
      %v3762 = vld [vmem:[%s3 + $0x3ec] sm:$0xf]
      %v3763 = vld [vmem:[%s3 + $0x3f0] sm:$0xf]
      %v3764 = vld [vmem:[%s3 + $0x3f4] sm:$0xf]
      %v3765 = vld [vmem:[%s3 + $0x3f8] sm:$0xf]
      %v3766 = vld [vmem:[%s3 + $0x3fc] sm:$0xf]
      %v3775 = vunpack.c.l.b16 %v3743
      %v3776 = vunpack.c.l.b16 %v3744
      %v3777 = vunpack.c.l.b16 %v3745
      %v3778 = vunpack.c.l.b16 %v3746
      %v3779 = vunpack.c.l.b16 %v3747
      %v3780 = vunpack.c.l.b16 %v3748
      %v3781 = vunpack.c.l.b16 %v3749
      %v3782 = vunpack.c.l.b16 %v3750
      %v3783 = vpack.c.b16 %v3776, %v3775
      %v3784 = vpack.c.b16 %v3778, %v3777
      %v3785 = vpack.c.b16 %v3780, %v3779
      %v3786 = vpack.c.b16 %v3782, %v3781
      %v3807 = vunpack.c.l.b16 %v3751
      %v3808 = vunpack.c.l.b16 %v3752
      %v3809 = vunpack.c.l.b16 %v3753
      %v3810 = vunpack.c.l.b16 %v3754
      %v3811 = vunpack.c.l.b16 %v3755
      %v3812 = vunpack.c.l.b16 %v3756
      %v3813 = vunpack.c.l.b16 %v3757
      %v3814 = vunpack.c.l.b16 %v3758
      %v3815 = vunpack.c.l.b16 %v3759
      %v3816 = vunpack.c.l.b16 %v3760
      %v3817 = vunpack.c.l.b16 %v3761
      %v3818 = vunpack.c.l.b16 %v3762
      %v3819 = vunpack.c.l.b16 %v3763
      %v3820 = vunpack.c.l.b16 %v3764
      %v3821 = vunpack.c.l.b16 %v3765
      %v3822 = vunpack.c.l.b16 %v3766
      %v3823 = vpack.c.b16 %v3808, %v3807
      %v3824 = vpack.c.b16 %v3810, %v3809
      %v3825 = vpack.c.b16 %v3812, %v3811
      %v3826 = vpack.c.b16 %v3814, %v3813
      %v3827 = vpack.c.b16 %v3816, %v3815
      %v3828 = vpack.c.b16 %v3818, %v3817
      %v3829 = vpack.c.b16 %v3820, %v3819
      %v3830 = vpack.c.b16 %v3822, %v3821
      %3839 = vmatprep.subr.bf16.mxu0 0
      %3840 = vmatpush1.bf16.msra.mxu0 %v3823
      %3841 = vmatprep.subr.bf16.mxu0 0
      %3842 = vmatpush1.bf16.msra.mxu0 %v3824
      %3843 = vmatprep.subr.bf16.mxu0 0
      %3844 = vmatpush1.bf16.msra.mxu0 %v3825
      %3845 = vmatprep.subr.bf16.mxu0 0
      %3846 = vmatpush1.bf16.msra.mxu0 %v3826
      %3847 = vmatprep.subr.bf16.mxu0 0
      %3848 = vmatpush1.bf16.msra.mxu0 %v3827
      %3849 = vmatprep.subr.bf16.mxu0 0
      %3850 = vmatpush1.bf16.msra.mxu0 %v3828
      %3851 = vmatprep.subr.bf16.mxu0 0
      %3852 = vmatpush1.bf16.msra.mxu0 %v3829
      %3853 = vmatprep.subr.bf16.mxu0 0
      %3854 = vmatpush1.bf16.msra.mxu0 %v3830
      %3855 = vmatprep.subr.bf16.mxu0 0
      %3856 = vmatpush1.bf16.msra.mxu0 0
      %3857 = vmatprep.subr.bf16.mxu0 0
      %3858 = vmatpush1.bf16.msra.mxu0 0
      %3859 = vmatprep.subr.bf16.mxu0 0
      %3860 = vmatpush1.bf16.msra.mxu0 0
      %3861 = vmatprep.subr.bf16.mxu0 0
      %3862 = vmatpush1.bf16.msra.mxu0 0
      %3863 = vmatprep.subr.bf16.mxu0 0
      %3864 = vmatpush1.bf16.msra.mxu0 0
      %3865 = vmatprep.subr.bf16.mxu0 0
      %3866 = vmatpush1.bf16.msra.mxu0 0
      %3867 = vmatprep.subr.bf16.mxu0 0
      %3868 = vmatpush1.bf16.msra.mxu0 0
      %3869 = vmatprep.subr.bf16.mxu0 0
      %3870 = vmatpush1.bf16.msra.mxu0 0
      %3871 = vmatprep.mubr.bf16.mxu0 0
      %3872 = vmatmul.mubr.bf16.gmra.mrb[0].mxu0 %v3783
      %v3873 = vpop.f32.mrb[0].mxu0
      %v3874 = vadd.f32 0.0, %v3873
      %v3875 = vpop.f32.mrb[0].mxu0
      %v3876 = vpop.f32.mrb[0].mxu0
      %v3877 = vadd.f32 0.0, %v3876
      %v3878 = vpop.f32.mrb[0].mxu0
      %3879 = vmatprep.mubr.bf16.mxu0 0
      %3880 = vmatmul.mubr.bf16.gmra.mrb[0].mxu0 %v3784
      %v3881 = vpop.f32.mrb[0].mxu0
      %v3882 = vadd.f32 0.0, %v3881
      %v3883 = vpop.f32.mrb[0].mxu0
      %v3884 = vpop.f32.mrb[0].mxu0
      %v3885 = vadd.f32 0.0, %v3884
      %v3886 = vpop.f32.mrb[0].mxu0
      %3887 = vmatprep.mubr.bf16.mxu0 0
      %3888 = vmatmul.mubr.bf16.gmra.mrb[0].mxu0 %v3785
      %v3889 = vpop.f32.mrb[0].mxu0
      %v3890 = vadd.f32 0.0, %v3889
      %v3891 = vpop.f32.mrb[0].mxu0
      %v3892 = vpop.f32.mrb[0].mxu0
      %v3893 = vadd.f32 0.0, %v3892
      %v3894 = vpop.f32.mrb[0].mxu0
      %3895 = vmatprep.mubr.bf16.mxu0 0
      %3896 = vmatmul.mubr.bf16.gmra.mrb[0].mxu0 %v3786
      %v3897 = vpop.f32.mrb[0].mxu0
      %v3898 = vadd.f32 0.0, %v3897
      %v3899 = vpop.f32.mrb[0].mxu0
      %v3900 = vpop.f32.mrb[0].mxu0
      %v3901 = vadd.f32 0.0, %v3900
      %v3902 = vpop.f32.mrb[0].mxu0
      %3903 = vdwg.mxu0
      %v3904 = vadd.f32 %v3734, %v3874
      %v3905 = vadd.f32 %v3735, %v3877
      %v3906 = vadd.f32 %v3736, %v3882
      %v3907 = vadd.f32 %v3737, %v3885
      %v3908 = vadd.f32 %v3738, %v3890
      %v3909 = vadd.f32 %v3739, %v3893
      %v3910 = vadd.f32 %v3740, %v3898
      %v3911 = vadd.f32 %v3741, %v3901
      %v3912 = vld [vmem:[%s3742] sm:$0xf]
      %v3913 = vld [vmem:[%s3742 + $0x4] sm:$0x1]
      %v3914 = vld [vmem:[%s3742 + $0x8] sm:$0xf]
      %v3915 = vld [vmem:[%s3742 + $0xc] sm:$0x1]
      %v3916 = vld [vmem:[%s3742 + $0x10] sm:$0xf]
      %v3917 = vld [vmem:[%s3742 + $0x14] sm:$0x1]
      %v3918 = vld [vmem:[%s3742 + $0x18] sm:$0xf]
      %v3919 = vld [vmem:[%s3742 + $0x1c] sm:$0x1]
      %v3920 = vld [vmem:[%s3742 + $0x20] sm:$0xf]
      %v3921 = vld [vmem:[%s3742 + $0x24] sm:$0x1]
      %v3922 = vld [vmem:[%s3742 + $0x28] sm:$0xf]
      %v3923 = vld [vmem:[%s3742 + $0x2c] sm:$0x1]
      %v3924 = vld [vmem:[%s3742 + $0x30] sm:$0xf]
      %v3925 = vld [vmem:[%s3742 + $0x34] sm:$0x1]
      %v3926 = vld [vmem:[%s3742 + $0x38] sm:$0xf]
      %v3927 = vld [vmem:[%s3742 + $0x3c] sm:$0x1]
      %v3929 = vshrl.u32 %v3912, 16
      %v3931 = vrot.slane %v3929, 4
      %v3932 = vshll.u32 %v3912, 16
      %v3934 = vrot.slane %v3932, 5
      %v3935 = vor.u32 %v3931, %v3934
      %v3936 = vrot.slane %v3935, 4
      %v3938 = vshll.u32 %v3913, 16
      %v3940 = vrot.slane %v3938, 5
      %v3941 = vsel %vm496, %v3936, %v3940
      %v3943 = vshrl.u32 %v3914, 16
      %v3945 = vrot.slane %v3943, 4
      %v3946 = vshll.u32 %v3914, 16
      %v3948 = vrot.slane %v3946, 5
      %v3949 = vor.u32 %v3945, %v3948
      %v3950 = vrot.slane %v3949, 4
      %v3952 = vshll.u32 %v3915, 16
      %v3954 = vrot.slane %v3952, 5
      %v3955 = vsel %vm496, %v3950, %v3954
      %v3957 = vshrl.u32 %v3916, 16
      %v3959 = vrot.slane %v3957, 4
      %v3960 = vshll.u32 %v3916, 16
      %v3962 = vrot.slane %v3960, 5
      %v3963 = vor.u32 %v3959, %v3962
      %v3964 = vrot.slane %v3963, 4
      %v3966 = vshll.u32 %v3917, 16
      %v3968 = vrot.slane %v3966, 5
      %v3969 = vsel %vm496, %v3964, %v3968
      %v3971 = vshrl.u32 %v3918, 16
      %v3973 = vrot.slane %v3971, 4
      %v3974 = vshll.u32 %v3918, 16
      %v3976 = vrot.slane %v3974, 5
      %v3977 = vor.u32 %v3973, %v3976
      %v3978 = vrot.slane %v3977, 4
      %v3980 = vshll.u32 %v3919, 16
      %v3982 = vrot.slane %v3980, 5
      %v3983 = vsel %vm496, %v3978, %v3982
      %v3985 = vshrl.u32 %v3920, 16
      %v3987 = vrot.slane %v3985, 4
      %v3988 = vshll.u32 %v3920, 16
      %v3990 = vrot.slane %v3988, 5
      %v3991 = vor.u32 %v3987, %v3990
      %v3992 = vrot.slane %v3991, 4
      %v3994 = vshll.u32 %v3921, 16
      %v3996 = vrot.slane %v3994, 5
      %v3997 = vsel %vm496, %v3992, %v3996
      %v3999 = vshrl.u32 %v3922, 16
      %v4001 = vrot.slane %v3999, 4
      %v4002 = vshll.u32 %v3922, 16
      %v4004 = vrot.slane %v4002, 5
      %v4005 = vor.u32 %v4001, %v4004
      %v4006 = vrot.slane %v4005, 4
      %v4008 = vshll.u32 %v3923, 16
      %v4010 = vrot.slane %v4008, 5
      %v4011 = vsel %vm496, %v4006, %v4010
      %v4013 = vshrl.u32 %v3924, 16
      %v4015 = vrot.slane %v4013, 4
      %v4016 = vshll.u32 %v3924, 16
      %v4018 = vrot.slane %v4016, 5
      %v4019 = vor.u32 %v4015, %v4018
      %v4020 = vrot.slane %v4019, 4
      %v4022 = vshll.u32 %v3925, 16
      %v4024 = vrot.slane %v4022, 5
      %v4025 = vsel %vm496, %v4020, %v4024
      %v4027 = vshrl.u32 %v3926, 16
      %v4029 = vrot.slane %v4027, 4
      %v4030 = vshll.u32 %v3926, 16
      %v4032 = vrot.slane %v4030, 5
      %v4033 = vor.u32 %v4029, %v4032
      %v4034 = vrot.slane %v4033, 4
      %v4036 = vshll.u32 %v3927, 16
      %v4038 = vrot.slane %v4036, 5
      %v4039 = vsel %vm496, %v4034, %v4038
      %v4040 = vld [vmem:[%s3 + $0x400] sm:$0xf]
      %v4041 = vld [vmem:[%s3 + $0x404] sm:$0xf]
      %v4042 = vld [vmem:[%s3 + $0x408] sm:$0xf]
      %v4043 = vld [vmem:[%s3 + $0x40c] sm:$0xf]
      %v4044 = vld [vmem:[%s3 + $0x410] sm:$0xf]
      %v4045 = vld [vmem:[%s3 + $0x414] sm:$0xf]
      %v4046 = vld [vmem:[%s3 + $0x418] sm:$0xf]
      %v4047 = vld [vmem:[%s3 + $0x41c] sm:$0xf]
      %v4048 = vld [vmem:[%s3 + $0x420] sm:$0xf]
      %v4049 = vld [vmem:[%s3 + $0x424] sm:$0xf]
      %v4050 = vld [vmem:[%s3 + $0x428] sm:$0xf]
      %v4051 = vld [vmem:[%s3 + $0x42c] sm:$0xf]
      %v4052 = vld [vmem:[%s3 + $0x430] sm:$0xf]
      %v4053 = vld [vmem:[%s3 + $0x434] sm:$0xf]
      %v4054 = vld [vmem:[%s3 + $0x438] sm:$0xf]
      %v4055 = vld [vmem:[%s3 + $0x43c] sm:$0xf]
      %v4056 = vunpack.c.l.b16 %v3941
      %v4057 = vunpack.c.l.b16 %v3955
      %v4058 = vunpack.c.l.b16 %v3969
      %v4059 = vunpack.c.l.b16 %v3983
      %v4060 = vunpack.c.l.b16 %v3997
      %v4061 = vunpack.c.l.b16 %v4011
      %v4062 = vunpack.c.l.b16 %v4025
      %v4063 = vunpack.c.l.b16 %v4039
      %v4064 = vpack.c.b16 %v4057, %v4056
      %v4065 = vpack.c.b16 %v4059, %v4058
      %v4066 = vpack.c.b16 %v4061, %v4060
      %v4067 = vpack.c.b16 %v4063, %v4062
      %v4088 = vunpack.c.l.b16 %v4040
      %v4089 = vunpack.c.l.b16 %v4041
      %v4090 = vunpack.c.l.b16 %v4042
      %v4091 = vunpack.c.l.b16 %v4043
      %v4092 = vunpack.c.l.b16 %v4044
      %v4093 = vunpack.c.l.b16 %v4045
      %v4094 = vunpack.c.l.b16 %v4046
      %v4095 = vunpack.c.l.b16 %v4047
      %v4096 = vunpack.c.l.b16 %v4048
      %v4097 = vunpack.c.l.b16 %v4049
      %v4098 = vunpack.c.l.b16 %v4050
      %v4099 = vunpack.c.l.b16 %v4051
      %v4100 = vunpack.c.l.b16 %v4052
      %v4101 = vunpack.c.l.b16 %v4053
      %v4102 = vunpack.c.l.b16 %v4054
      %v4103 = vunpack.c.l.b16 %v4055
      %v4104 = vpack.c.b16 %v4089, %v4088
      %v4105 = vpack.c.b16 %v4091, %v4090
      %v4106 = vpack.c.b16 %v4093, %v4092
      %v4107 = vpack.c.b16 %v4095, %v4094
      %v4108 = vpack.c.b16 %v4097, %v4096
      %v4109 = vpack.c.b16 %v4099, %v4098
      %v4110 = vpack.c.b16 %v4101, %v4100
      %v4111 = vpack.c.b16 %v4103, %v4102
      %4120 = vmatprep.subr.bf16.mxu0 0
      %4121 = vmatpush1.bf16.msra.mxu0 %v4104
      %4122 = vmatprep.subr.bf16.mxu0 0
      %4123 = vmatpush1.bf16.msra.mxu0 %v4105
      %4124 = vmatprep.subr.bf16.mxu0 0
      %4125 = vmatpush1.bf16.msra.mxu0 %v4106
      %4126 = vmatprep.subr.bf16.mxu0 0
      %4127 = vmatpush1.bf16.msra.mxu0 %v4107
      %4128 = vmatprep.subr.bf16.mxu0 0
      %4129 = vmatpush1.bf16.msra.mxu0 %v4108
      %4130 = vmatprep.subr.bf16.mxu0 0
      %4131 = vmatpush1.bf16.msra.mxu0 %v4109
      %4132 = vmatprep.subr.bf16.mxu0 0
      %4133 = vmatpush1.bf16.msra.mxu0 %v4110
      %4134 = vmatprep.subr.bf16.mxu0 0
      %4135 = vmatpush1.bf16.msra.mxu0 %v4111
      %4136 = vmatprep.subr.bf16.mxu0 0
      %4137 = vmatpush1.bf16.msra.mxu0 0
      %4138 = vmatprep.subr.bf16.mxu0 0
      %4139 = vmatpush1.bf16.msra.mxu0 0
      %4140 = vmatprep.subr.bf16.mxu0 0
      %4141 = vmatpush1.bf16.msra.mxu0 0
      %4142 = vmatprep.subr.bf16.mxu0 0
      %4143 = vmatpush1.bf16.msra.mxu0 0
      %4144 = vmatprep.subr.bf16.mxu0 0
      %4145 = vmatpush1.bf16.msra.mxu0 0
      %4146 = vmatprep.subr.bf16.mxu0 0
      %4147 = vmatpush1.bf16.msra.mxu0 0
      %4148 = vmatprep.subr.bf16.mxu0 0
      %4149 = vmatpush1.bf16.msra.mxu0 0
      %4150 = vmatprep.subr.bf16.mxu0 0
      %4151 = vmatpush1.bf16.msra.mxu0 0
      %4152 = vmatprep.mubr.bf16.mxu0 0
      %4153 = vmatmul.mubr.bf16.gmra.mrb[0].mxu0 %v4064
      %v4154 = vpop.f32.mrb[0].mxu0
      %v4155 = vadd.f32 0.0, %v4154
      %v4156 = vpop.f32.mrb[0].mxu0
      %v4157 = vpop.f32.mrb[0].mxu0
      %v4158 = vadd.f32 0.0, %v4157
      %v4159 = vpop.f32.mrb[0].mxu0
      %4160 = vmatprep.mubr.bf16.mxu0 0
      %4161 = vmatmul.mubr.bf16.gmra.mrb[0].mxu0 %v4065
      %v4162 = vpop.f32.mrb[0].mxu0
      %v4163 = vadd.f32 0.0, %v4162
      %v4164 = vpop.f32.mrb[0].mxu0
      %v4165 = vpop.f32.mrb[0].mxu0
      %v4166 = vadd.f32 0.0, %v4165
      %v4167 = vpop.f32.mrb[0].mxu0
      %4168 = vmatprep.mubr.bf16.mxu0 0
      %4169 = vmatmul.mubr.bf16.gmra.mrb[0].mxu0 %v4066
      %v4170 = vpop.f32.mrb[0].mxu0
      %v4171 = vadd.f32 0.0, %v4170
      %v4172 = vpop.f32.mrb[0].mxu0
      %v4173 = vpop.f32.mrb[0].mxu0
      %v4174 = vadd.f32 0.0, %v4173
      %v4175 = vpop.f32.mrb[0].mxu0
      %4176 = vmatprep.mubr.bf16.mxu0 0
      %4177 = vmatmul.mubr.bf16.gmra.mrb[0].mxu0 %v4067
      %v4178 = vpop.f32.mrb[0].mxu0
      %v4179 = vadd.f32 0.0, %v4178
      %v4180 = vpop.f32.mrb[0].mxu0
      %v4181 = vpop.f32.mrb[0].mxu0
      %v4182 = vadd.f32 0.0, %v4181
      %v4183 = vpop.f32.mrb[0].mxu0
      %4184 = vdwg.mxu0
      %v4185 = vadd.f32 %v3904, %v4155
      %v4186 = vadd.f32 %v3905, %v4158
      %v4187 = vadd.f32 %v3906, %v4163
      %v4188 = vadd.f32 %v3907, %v4166
      %v4189 = vadd.f32 %v3908, %v4171
      %v4190 = vadd.f32 %v3909, %v4174
      %v4191 = vadd.f32 %v3910, %v4179
      %v4192 = vadd.f32 %v3911, %v4182
      %v4193 = vld [vmem:[%s3742] sm:$0xe]
      %v4194 = vld [vmem:[%s3742 + $0x8] sm:$0xe]
      %v4195 = vld [vmem:[%s3742 + $0x10] sm:$0xe]
      %v4196 = vld [vmem:[%s3742 + $0x18] sm:$0xe]
      %v4197 = vld [vmem:[%s3742 + $0x20] sm:$0xe]
      %v4198 = vld [vmem:[%s3742 + $0x28] sm:$0xe]
      %v4199 = vld [vmem:[%s3742 + $0x30] sm:$0xe]
      %v4200 = vld [vmem:[%s3742 + $0x38] sm:$0xe]
      %v4217 = vrot.slane %v4193, 5
      %v4218 = vrot.slane %v4217, 4
      %v4219 = vrot.slane %v3913, 5
      %v4220 = vsel %vm917, %v4218, %v4219
      %v4221 = vrot.slane %v4194, 5
      %v4222 = vrot.slane %v4221, 4
      %v4223 = vrot.slane %v3915, 5
      %v4224 = vsel %vm917, %v4222, %v4223
      %v4225 = vrot.slane %v4195, 5
      %v4226 = vrot.slane %v4225, 4
      %v4227 = vrot.slane %v3917, 5
      %v4228 = vsel %vm917, %v4226, %v4227
      %v4229 = vrot.slane %v4196, 5
      %v4230 = vrot.slane %v4229, 4
      %v4231 = vrot.slane %v3919, 5
      %v4232 = vsel %vm917, %v4230, %v4231
      %v4233 = vrot.slane %v4197, 5
      %v4234 = vrot.slane %v4233, 4
      %v4235 = vrot.slane %v3921, 5
      %v4236 = vsel %vm917, %v4234, %v4235
      %v4237 = vrot.slane %v4198, 5
      %v4238 = vrot.slane %v4237, 4
      %v4239 = vrot.slane %v3923, 5
      %v4240 = vsel %vm917, %v4238, %v4239
      %v4241 = vrot.slane %v4199, 5
      %v4242 = vrot.slane %v4241, 4
      %v4243 = vrot.slane %v3925, 5
      %v4244 = vsel %vm917, %v4242, %v4243
      %v4245 = vrot.slane %v4200, 5
      %v4246 = vrot.slane %v4245, 4
      %v4247 = vrot.slane %v3927, 5
      %v4248 = vsel %vm917, %v4246, %v4247
      %v4249 = vld [vmem:[%s3 + $0x440] sm:$0xf]
      %v4250 = vld [vmem:[%s3 + $0x444] sm:$0xf]
      %v4251 = vld [vmem:[%s3 + $0x448] sm:$0xf]
      %v4252 = vld [vmem:[%s3 + $0x44c] sm:$0xf]
      %v4253 = vld [vmem:[%s3 + $0x450] sm:$0xf]
      %v4254 = vld [vmem:[%s3 + $0x454] sm:$0xf]
      %v4255 = vld [vmem:[%s3 + $0x458] sm:$0xf]
      %v4256 = vld [vmem:[%s3 + $0x45c] sm:$0xf]
      %v4257 = vld [vmem:[%s3 + $0x460] sm:$0xf]
      %v4258 = vld [vmem:[%s3 + $0x464] sm:$0xf]
      %v4259 = vld [vmem:[%s3 + $0x468] sm:$0xf]
      %v4260 = vld [vmem:[%s3 + $0x46c] sm:$0xf]
      %v4261 = vld [vmem:[%s3 + $0x470] sm:$0xf]
      %v4262 = vld [vmem:[%s3 + $0x474] sm:$0xf]
      %v4263 = vld [vmem:[%s3 + $0x478] sm:$0xf]
      %v4264 = vld [vmem:[%s3 + $0x47c] sm:$0xf]
      %v4265 = vunpack.c.l.b16 %v4220
      %v4266 = vunpack.c.l.b16 %v4224
      %v4267 = vunpack.c.l.b16 %v4228
      %v4268 = vunpack.c.l.b16 %v4232
      %v4269 = vunpack.c.l.b16 %v4236
      %v4270 = vunpack.c.l.b16 %v4240
      %v4271 = vunpack.c.l.b16 %v4244
      %v4272 = vunpack.c.l.b16 %v4248
      %v4273 = vpack.c.b16 %v4266, %v4265
      %v4274 = vpack.c.b16 %v4268, %v4267
      %v4275 = vpack.c.b16 %v4270, %v4269
      %v4276 = vpack.c.b16 %v4272, %v4271
      %v4297 = vunpack.c.l.b16 %v4249
      %v4298 = vunpack.c.l.b16 %v4250
      %v4299 = vunpack.c.l.b16 %v4251
      %v4300 = vunpack.c.l.b16 %v4252
      %v4301 = vunpack.c.l.b16 %v4253
      %v4302 = vunpack.c.l.b16 %v4254
      %v4303 = vunpack.c.l.b16 %v4255
      %v4304 = vunpack.c.l.b16 %v4256
      %v4305 = vunpack.c.l.b16 %v4257
      %v4306 = vunpack.c.l.b16 %v4258
      %v4307 = vunpack.c.l.b16 %v4259
      %v4308 = vunpack.c.l.b16 %v4260
      %v4309 = vunpack.c.l.b16 %v4261
      %v4310 = vunpack.c.l.b16 %v4262
      %v4311 = vunpack.c.l.b16 %v4263
      %v4312 = vunpack.c.l.b16 %v4264
      %v4313 = vpack.c.b16 %v4298, %v4297
      %v4314 = vpack.c.b16 %v4300, %v4299
      %v4315 = vpack.c.b16 %v4302, %v4301
      %v4316 = vpack.c.b16 %v4304, %v4303
      %v4317 = vpack.c.b16 %v4306, %v4305
      %v4318 = vpack.c.b16 %v4308, %v4307
      %v4319 = vpack.c.b16 %v4310, %v4309
      %v4320 = vpack.c.b16 %v4312, %v4311
      %4329 = vmatprep.subr.bf16.mxu0 0
      %4330 = vmatpush1.bf16.msra.mxu0 %v4313
      %4331 = vmatprep.subr.bf16.mxu0 0
      %4332 = vmatpush1.bf16.msra.mxu0 %v4314
      %4333 = vmatprep.subr.bf16.mxu0 0
      %4334 = vmatpush1.bf16.msra.mxu0 %v4315
      %4335 = vmatprep.subr.bf16.mxu0 0
      %4336 = vmatpush1.bf16.msra.mxu0 %v4316
      %4337 = vmatprep.subr.bf16.mxu0 0
      %4338 = vmatpush1.bf16.msra.mxu0 %v4317
      %4339 = vmatprep.subr.bf16.mxu0 0
      %4340 = vmatpush1.bf16.msra.mxu0 %v4318
      %4341 = vmatprep.subr.bf16.mxu0 0
      %4342 = vmatpush1.bf16.msra.mxu0 %v4319
      %4343 = vmatprep.subr.bf16.mxu0 0
      %4344 = vmatpush1.bf16.msra.mxu0 %v4320
      %4345 = vmatprep.subr.bf16.mxu0 0
      %4346 = vmatpush1.bf16.msra.mxu0 0
      %4347 = vmatprep.subr.bf16.mxu0 0
      %4348 = vmatpush1.bf16.msra.mxu0 0
      %4349 = vmatprep.subr.bf16.mxu0 0
      %4350 = vmatpush1.bf16.msra.mxu0 0
      %4351 = vmatprep.subr.bf16.mxu0 0
      %4352 = vmatpush1.bf16.msra.mxu0 0
      %4353 = vmatprep.subr.bf16.mxu0 0
      %4354 = vmatpush1.bf16.msra.mxu0 0
      %4355 = vmatprep.subr.bf16.mxu0 0
      %4356 = vmatpush1.bf16.msra.mxu0 0
      %4357 = vmatprep.subr.bf16.mxu0 0
      %4358 = vmatpush1.bf16.msra.mxu0 0
      %4359 = vmatprep.subr.bf16.mxu0 0
      %4360 = vmatpush1.bf16.msra.mxu0 0
      %4361 = vmatprep.mubr.bf16.mxu0 0
      %4362 = vmatmul.mubr.bf16.gmra.mrb[0].mxu0 %v4273
      %v4363 = vpop.f32.mrb[0].mxu0
      %v4364 = vadd.f32 0.0, %v4363
      %v4365 = vpop.f32.mrb[0].mxu0
      %v4366 = vpop.f32.mrb[0].mxu0
      %v4367 = vadd.f32 0.0, %v4366
      %v4368 = vpop.f32.mrb[0].mxu0
      %4369 = vmatprep.mubr.bf16.mxu0 0
      %4370 = vmatmul.mubr.bf16.gmra.mrb[0].mxu0 %v4274
      %v4371 = vpop.f32.mrb[0].mxu0
      %v4372 = vadd.f32 0.0, %v4371
      %v4373 = vpop.f32.mrb[0].mxu0
      %v4374 = vpop.f32.mrb[0].mxu0
      %v4375 = vadd.f32 0.0, %v4374
      %v4376 = vpop.f32.mrb[0].mxu0
      %4377 = vmatprep.mubr.bf16.mxu0 0
      %4378 = vmatmul.mubr.bf16.gmra.mrb[0].mxu0 %v4275
      %v4379 = vpop.f32.mrb[0].mxu0
      %v4380 = vadd.f32 0.0, %v4379
      %v4381 = vpop.f32.mrb[0].mxu0
      %v4382 = vpop.f32.mrb[0].mxu0
      %v4383 = vadd.f32 0.0, %v4382
      %v4384 = vpop.f32.mrb[0].mxu0
      %4385 = vmatprep.mubr.bf16.mxu0 0
      %4386 = vmatmul.mubr.bf16.gmra.mrb[0].mxu0 %v4276
      %v4387 = vpop.f32.mrb[0].mxu0
      %v4388 = vadd.f32 0.0, %v4387
      %v4389 = vpop.f32.mrb[0].mxu0
      %v4390 = vpop.f32.mrb[0].mxu0
      %v4391 = vadd.f32 0.0, %v4390
      %v4392 = vpop.f32.mrb[0].mxu0
      %4393 = vdwg.mxu0
      %v4394 = vadd.f32 %v4185, %v4364
      %v4395 = vadd.f32 %v4186, %v4367
      %v4396 = vadd.f32 %v4187, %v4372
      %v4397 = vadd.f32 %v4188, %v4375
      %v4398 = vadd.f32 %v4189, %v4380
      %v4399 = vadd.f32 %v4190, %v4383
      %v4400 = vadd.f32 %v4191, %v4388
      %v4401 = vadd.f32 %v4192, %v4391
      %v4402 = vld [vmem:[%s439] sm:$0xf]
      %v4403 = vld [vmem:[%s439 + $0x8] sm:$0xf]
      %v4404 = vld [vmem:[%s439 + $0x10] sm:$0xf]
      %v4405 = vld [vmem:[%s439 + $0x18] sm:$0xf]
      %v4406 = vld [vmem:[%s439 + $0x20] sm:$0xf]
      %v4407 = vld [vmem:[%s439 + $0x28] sm:$0xf]
      %v4408 = vld [vmem:[%s439 + $0x30] sm:$0xf]
      %v4409 = vld [vmem:[%s439 + $0x38] sm:$0xf]
      %v4410 = vld [vmem:[%s3 + $0x480] sm:$0xf]
      %v4411 = vld [vmem:[%s3 + $0x484] sm:$0xf]
      %v4412 = vld [vmem:[%s3 + $0x488] sm:$0xf]
      %v4413 = vld [vmem:[%s3 + $0x48c] sm:$0xf]
      %v4414 = vld [vmem:[%s3 + $0x490] sm:$0xf]
      %v4415 = vld [vmem:[%s3 + $0x494] sm:$0xf]
      %v4416 = vld [vmem:[%s3 + $0x498] sm:$0xf]
      %v4417 = vld [vmem:[%s3 + $0x49c] sm:$0xf]
      %v4418 = vld [vmem:[%s3 + $0x4a0] sm:$0xf]
      %v4419 = vld [vmem:[%s3 + $0x4a4] sm:$0xf]
      %v4420 = vld [vmem:[%s3 + $0x4a8] sm:$0xf]
      %v4421 = vld [vmem:[%s3 + $0x4ac] sm:$0xf]
      %v4422 = vld [vmem:[%s3 + $0x4b0] sm:$0xf]
      %v4423 = vld [vmem:[%s3 + $0x4b4] sm:$0xf]
      %v4424 = vld [vmem:[%s3 + $0x4b8] sm:$0xf]
      %v4425 = vld [vmem:[%s3 + $0x4bc] sm:$0xf]
      %v4434 = vunpack.c.l.b16 %v4402
      %v4435 = vunpack.c.l.b16 %v4403
      %v4436 = vunpack.c.l.b16 %v4404
      %v4437 = vunpack.c.l.b16 %v4405
      %v4438 = vunpack.c.l.b16 %v4406
      %v4439 = vunpack.c.l.b16 %v4407
      %v4440 = vunpack.c.l.b16 %v4408
      %v4441 = vunpack.c.l.b16 %v4409
      %v4442 = vpack.c.b16 %v4435, %v4434
      %v4443 = vpack.c.b16 %v4437, %v4436
      %v4444 = vpack.c.b16 %v4439, %v4438
      %v4445 = vpack.c.b16 %v4441, %v4440
      %v4466 = vunpack.c.l.b16 %v4410
      %v4467 = vunpack.c.l.b16 %v4411
      %v4468 = vunpack.c.l.b16 %v4412
      %v4469 = vunpack.c.l.b16 %v4413
      %v4470 = vunpack.c.l.b16 %v4414
      %v4471 = vunpack.c.l.b16 %v4415
      %v4472 = vunpack.c.l.b16 %v4416
      %v4473 = vunpack.c.l.b16 %v4417
      %v4474 = vunpack.c.l.b16 %v4418
      %v4475 = vunpack.c.l.b16 %v4419
      %v4476 = vunpack.c.l.b16 %v4420
      %v4477 = vunpack.c.l.b16 %v4421
      %v4478 = vunpack.c.l.b16 %v4422
      %v4479 = vunpack.c.l.b16 %v4423
      %v4480 = vunpack.c.l.b16 %v4424
      %v4481 = vunpack.c.l.b16 %v4425
      %v4482 = vpack.c.b16 %v4467, %v4466
      %v4483 = vpack.c.b16 %v4469, %v4468
      %v4484 = vpack.c.b16 %v4471, %v4470
      %v4485 = vpack.c.b16 %v4473, %v4472
      %v4486 = vpack.c.b16 %v4475, %v4474
      %v4487 = vpack.c.b16 %v4477, %v4476
      %v4488 = vpack.c.b16 %v4479, %v4478
      %v4489 = vpack.c.b16 %v4481, %v4480
      %4498 = vmatprep.subr.bf16.mxu0 0
      %4499 = vmatpush1.bf16.msra.mxu0 %v4482
      %4500 = vmatprep.subr.bf16.mxu0 0
      %4501 = vmatpush1.bf16.msra.mxu0 %v4483
      %4502 = vmatprep.subr.bf16.mxu0 0
      %4503 = vmatpush1.bf16.msra.mxu0 %v4484
      %4504 = vmatprep.subr.bf16.mxu0 0
      %4505 = vmatpush1.bf16.msra.mxu0 %v4485
      %4506 = vmatprep.subr.bf16.mxu0 0
      %4507 = vmatpush1.bf16.msra.mxu0 %v4486
      %4508 = vmatprep.subr.bf16.mxu0 0
      %4509 = vmatpush1.bf16.msra.mxu0 %v4487
      %4510 = vmatprep.subr.bf16.mxu0 0
      %4511 = vmatpush1.bf16.msra.mxu0 %v4488
      %4512 = vmatprep.subr.bf16.mxu0 0
      %4513 = vmatpush1.bf16.msra.mxu0 %v4489
      %4514 = vmatprep.subr.bf16.mxu0 0
      %4515 = vmatpush1.bf16.msra.mxu0 0
      %4516 = vmatprep.subr.bf16.mxu0 0
      %4517 = vmatpush1.bf16.msra.mxu0 0
      %4518 = vmatprep.subr.bf16.mxu0 0
      %4519 = vmatpush1.bf16.msra.mxu0 0
      %4520 = vmatprep.subr.bf16.mxu0 0
      %4521 = vmatpush1.bf16.msra.mxu0 0
      %4522 = vmatprep.subr.bf16.mxu0 0
      %4523 = vmatpush1.bf16.msra.mxu0 0
      %4524 = vmatprep.subr.bf16.mxu0 0
      %4525 = vmatpush1.bf16.msra.mxu0 0
      %4526 = vmatprep.subr.bf16.mxu0 0
      %4527 = vmatpush1.bf16.msra.mxu0 0
      %4528 = vmatprep.subr.bf16.mxu0 0
      %4529 = vmatpush1.bf16.msra.mxu0 0
      %4530 = vmatprep.mubr.bf16.mxu0 0
      %4531 = vmatmul.mubr.bf16.gmra.mrb[0].mxu0 %v4442
      %v4532 = vpop.f32.mrb[0].mxu0
      %v4533 = vadd.f32 0.0, %v4532
      %v4534 = vpop.f32.mrb[0].mxu0
      %v4535 = vpop.f32.mrb[0].mxu0
      %v4536 = vadd.f32 0.0, %v4535
      %v4537 = vpop.f32.mrb[0].mxu0
      %4538 = vmatprep.mubr.bf16.mxu0 0
      %4539 = vmatmul.mubr.bf16.gmra.mrb[0].mxu0 %v4443
      %v4540 = vpop.f32.mrb[0].mxu0
      %v4541 = vadd.f32 0.0, %v4540
      %v4542 = vpop.f32.mrb[0].mxu0
      %v4543 = vpop.f32.mrb[0].mxu0
      %v4544 = vadd.f32 0.0, %v4543
      %v4545 = vpop.f32.mrb[0].mxu0
      %4546 = vmatprep.mubr.bf16.mxu0 0
      %4547 = vmatmul.mubr.bf16.gmra.mrb[0].mxu0 %v4444
      %v4548 = vpop.f32.mrb[0].mxu0
      %v4549 = vadd.f32 0.0, %v4548
      %v4550 = vpop.f32.mrb[0].mxu0
      %v4551 = vpop.f32.mrb[0].mxu0
      %v4552 = vadd.f32 0.0, %v4551
      %v4553 = vpop.f32.mrb[0].mxu0
      %4554 = vmatprep.mubr.bf16.mxu0 0
      %4555 = vmatmul.mubr.bf16.gmra.mrb[0].mxu0 %v4445
      %v4556 = vpop.f32.mrb[0].mxu0
      %v4557 = vadd.f32 0.0, %v4556
      %v4558 = vpop.f32.mrb[0].mxu0
      %v4559 = vpop.f32.mrb[0].mxu0
      %v4560 = vadd.f32 0.0, %v4559
      %v4561 = vpop.f32.mrb[0].mxu0
      %4562 = vdwg.mxu0
      %v4563 = vadd.f32 %v4394, %v4533
      %v4564 = vadd.f32 %v4395, %v4536
      %v4565 = vadd.f32 %v4396, %v4541
      %v4566 = vadd.f32 %v4397, %v4544
      %v4567 = vadd.f32 %v4398, %v4549
      %v4568 = vadd.f32 %v4399, %v4552
      %v4569 = vadd.f32 %v4400, %v4557
      %v4570 = vadd.f32 %v4401, %v4560
      %v4571 = vld [vmem:[%s439] sm:$0xf]
      %v4572 = vld [vmem:[%s439 + $0x4] sm:$0x1]
      %v4573 = vld [vmem:[%s439 + $0x8] sm:$0xf]
      %v4574 = vld [vmem:[%s439 + $0xc] sm:$0x1]
      %v4575 = vld [vmem:[%s439 + $0x10] sm:$0xf]
      %v4576 = vld [vmem:[%s439 + $0x14] sm:$0x1]
      %v4577 = vld [vmem:[%s439 + $0x18] sm:$0xf]
      %v4578 = vld [vmem:[%s439 + $0x1c] sm:$0x1]
      %v4579 = vld [vmem:[%s439 + $0x20] sm:$0xf]
      %v4580 = vld [vmem:[%s439 + $0x24] sm:$0x1]
      %v4581 = vld [vmem:[%s439 + $0x28] sm:$0xf]
      %v4582 = vld [vmem:[%s439 + $0x2c] sm:$0x1]
      %v4583 = vld [vmem:[%s439 + $0x30] sm:$0xf]
      %v4584 = vld [vmem:[%s439 + $0x34] sm:$0x1]
      %v4585 = vld [vmem:[%s439 + $0x38] sm:$0xf]
      %v4586 = vld [vmem:[%s439 + $0x3c] sm:$0x1]
      %v4588 = vshrl.u32 %v4571, 16
      %v4590 = vrot.slane %v4588, 4
      %v4591 = vshll.u32 %v4571, 16
      %v4593 = vrot.slane %v4591, 5
      %v4594 = vor.u32 %v4590, %v4593
      %v4595 = vrot.slane %v4594, 4
      %v4597 = vshll.u32 %v4572, 16
      %v4599 = vrot.slane %v4597, 5
      %v4600 = vsel %vm496, %v4595, %v4599
      %v4602 = vshrl.u32 %v4573, 16
      %v4604 = vrot.slane %v4602, 4
      %v4605 = vshll.u32 %v4573, 16
      %v4607 = vrot.slane %v4605, 5
      %v4608 = vor.u32 %v4604, %v4607
      %v4609 = vrot.slane %v4608, 4
      %v4611 = vshll.u32 %v4574, 16
      %v4613 = vrot.slane %v4611, 5
      %v4614 = vsel %vm496, %v4609, %v4613
      %v4616 = vshrl.u32 %v4575, 16
      %v4618 = vrot.slane %v4616, 4
      %v4619 = vshll.u32 %v4575, 16
      %v4621 = vrot.slane %v4619, 5
      %v4622 = vor.u32 %v4618, %v4621
      %v4623 = vrot.slane %v4622, 4
      %v4625 = vshll.u32 %v4576, 16
      %v4627 = vrot.slane %v4625, 5
      %v4628 = vsel %vm496, %v4623, %v4627
      %v4630 = vshrl.u32 %v4577, 16
      %v4632 = vrot.slane %v4630, 4
      %v4633 = vshll.u32 %v4577, 16
      %v4635 = vrot.slane %v4633, 5
      %v4636 = vor.u32 %v4632, %v4635
      %v4637 = vrot.slane %v4636, 4
      %v4639 = vshll.u32 %v4578, 16
      %v4641 = vrot.slane %v4639, 5
      %v4642 = vsel %vm496, %v4637, %v4641
      %v4644 = vshrl.u32 %v4579, 16
      %v4646 = vrot.slane %v4644, 4
      %v4647 = vshll.u32 %v4579, 16
      %v4649 = vrot.slane %v4647, 5
      %v4650 = vor.u32 %v4646, %v4649
      %v4651 = vrot.slane %v4650, 4
      %v4653 = vshll.u32 %v4580, 16
      %v4655 = vrot.slane %v4653, 5
      %v4656 = vsel %vm496, %v4651, %v4655
      %v4658 = vshrl.u32 %v4581, 16
      %v4660 = vrot.slane %v4658, 4
      %v4661 = vshll.u32 %v4581, 16
      %v4663 = vrot.slane %v4661, 5
      %v4664 = vor.u32 %v4660, %v4663
      %v4665 = vrot.slane %v4664, 4
      %v4667 = vshll.u32 %v4582, 16
      %v4669 = vrot.slane %v4667, 5
      %v4670 = vsel %vm496, %v4665, %v4669
      %v4672 = vshrl.u32 %v4583, 16
      %v4674 = vrot.slane %v4672, 4
      %v4675 = vshll.u32 %v4583, 16
      %v4677 = vrot.slane %v4675, 5
      %v4678 = vor.u32 %v4674, %v4677
      %v4679 = vrot.slane %v4678, 4
      %v4681 = vshll.u32 %v4584, 16
      %v4683 = vrot.slane %v4681, 5
      %v4684 = vsel %vm496, %v4679, %v4683
      %v4686 = vshrl.u32 %v4585, 16
      %v4688 = vrot.slane %v4686, 4
      %v4689 = vshll.u32 %v4585, 16
      %v4691 = vrot.slane %v4689, 5
      %v4692 = vor.u32 %v4688, %v4691
      %v4693 = vrot.slane %v4692, 4
      %v4695 = vshll.u32 %v4586, 16
      %v4697 = vrot.slane %v4695, 5
      %v4698 = vsel %vm496, %v4693, %v4697
      %v4699 = vld [vmem:[%s3 + $0x4c0] sm:$0xf]
      %v4700 = vld [vmem:[%s3 + $0x4c4] sm:$0xf]
      %v4701 = vld [vmem:[%s3 + $0x4c8] sm:$0xf]
      %v4702 = vld [vmem:[%s3 + $0x4cc] sm:$0xf]
      %v4703 = vld [vmem:[%s3 + $0x4d0] sm:$0xf]
      %v4704 = vld [vmem:[%s3 + $0x4d4] sm:$0xf]
      %v4705 = vld [vmem:[%s3 + $0x4d8] sm:$0xf]
      %v4706 = vld [vmem:[%s3 + $0x4dc] sm:$0xf]
      %v4707 = vld [vmem:[%s3 + $0x4e0] sm:$0xf]
      %v4708 = vld [vmem:[%s3 + $0x4e4] sm:$0xf]
      %v4709 = vld [vmem:[%s3 + $0x4e8] sm:$0xf]
      %v4710 = vld [vmem:[%s3 + $0x4ec] sm:$0xf]
      %v4711 = vld [vmem:[%s3 + $0x4f0] sm:$0xf]
      %v4712 = vld [vmem:[%s3 + $0x4f4] sm:$0xf]
      %v4713 = vld [vmem:[%s3 + $0x4f8] sm:$0xf]
      %v4714 = vld [vmem:[%s3 + $0x4fc] sm:$0xf]
      %v4715 = vunpack.c.l.b16 %v4600
      %v4716 = vunpack.c.l.b16 %v4614
      %v4717 = vunpack.c.l.b16 %v4628
      %v4718 = vunpack.c.l.b16 %v4642
      %v4719 = vunpack.c.l.b16 %v4656
      %v4720 = vunpack.c.l.b16 %v4670
      %v4721 = vunpack.c.l.b16 %v4684
      %v4722 = vunpack.c.l.b16 %v4698
      %v4723 = vpack.c.b16 %v4716, %v4715
      %v4724 = vpack.c.b16 %v4718, %v4717
      %v4725 = vpack.c.b16 %v4720, %v4719
      %v4726 = vpack.c.b16 %v4722, %v4721
      %v4747 = vunpack.c.l.b16 %v4699
      %v4748 = vunpack.c.l.b16 %v4700
      %v4749 = vunpack.c.l.b16 %v4701
      %v4750 = vunpack.c.l.b16 %v4702
      %v4751 = vunpack.c.l.b16 %v4703
      %v4752 = vunpack.c.l.b16 %v4704
      %v4753 = vunpack.c.l.b16 %v4705
      %v4754 = vunpack.c.l.b16 %v4706
      %v4755 = vunpack.c.l.b16 %v4707
      %v4756 = vunpack.c.l.b16 %v4708
      %v4757 = vunpack.c.l.b16 %v4709
      %v4758 = vunpack.c.l.b16 %v4710
      %v4759 = vunpack.c.l.b16 %v4711
      %v4760 = vunpack.c.l.b16 %v4712
      %v4761 = vunpack.c.l.b16 %v4713
      %v4762 = vunpack.c.l.b16 %v4714
      %v4763 = vpack.c.b16 %v4748, %v4747
      %v4764 = vpack.c.b16 %v4750, %v4749
      %v4765 = vpack.c.b16 %v4752, %v4751
      %v4766 = vpack.c.b16 %v4754, %v4753
      %v4767 = vpack.c.b16 %v4756, %v4755
      %v4768 = vpack.c.b16 %v4758, %v4757
      %v4769 = vpack.c.b16 %v4760, %v4759
      %v4770 = vpack.c.b16 %v4762, %v4761
      %4779 = vmatprep.subr.bf16.mxu0 0
      %4780 = vmatpush1.bf16.msra.mxu0 %v4763
      %4781 = vmatprep.subr.bf16.mxu0 0
      %4782 = vmatpush1.bf16.msra.mxu0 %v4764
      %4783 = vmatprep.subr.bf16.mxu0 0
      %4784 = vmatpush1.bf16.msra.mxu0 %v4765
      %4785 = vmatprep.subr.bf16.mxu0 0
      %4786 = vmatpush1.bf16.msra.mxu0 %v4766
      %4787 = vmatprep.subr.bf16.mxu0 0
      %4788 = vmatpush1.bf16.msra.mxu0 %v4767
      %4789 = vmatprep.subr.bf16.mxu0 0
      %4790 = vmatpush1.bf16.msra.mxu0 %v4768
      %4791 = vmatprep.subr.bf16.mxu0 0
      %4792 = vmatpush1.bf16.msra.mxu0 %v4769
      %4793 = vmatprep.subr.bf16.mxu0 0
      %4794 = vmatpush1.bf16.msra.mxu0 %v4770
      %4795 = vmatprep.subr.bf16.mxu0 0
      %4796 = vmatpush1.bf16.msra.mxu0 0
      %4797 = vmatprep.subr.bf16.mxu0 0
      %4798 = vmatpush1.bf16.msra.mxu0 0
      %4799 = vmatprep.subr.bf16.mxu0 0
      %4800 = vmatpush1.bf16.msra.mxu0 0
      %4801 = vmatprep.subr.bf16.mxu0 0
      %4802 = vmatpush1.bf16.msra.mxu0 0
      %4803 = vmatprep.subr.bf16.mxu0 0
      %4804 = vmatpush1.bf16.msra.mxu0 0
      %4805 = vmatprep.subr.bf16.mxu0 0
      %4806 = vmatpush1.bf16.msra.mxu0 0
      %4807 = vmatprep.subr.bf16.mxu0 0
      %4808 = vmatpush1.bf16.msra.mxu0 0
      %4809 = vmatprep.subr.bf16.mxu0 0
      %4810 = vmatpush1.bf16.msra.mxu0 0
      %4811 = vmatprep.mubr.bf16.mxu0 0
      %4812 = vmatmul.mubr.bf16.gmra.mrb[0].mxu0 %v4723
      %v4813 = vpop.f32.mrb[0].mxu0
      %v4814 = vadd.f32 0.0, %v4813
      %v4815 = vpop.f32.mrb[0].mxu0
      %v4816 = vpop.f32.mrb[0].mxu0
      %v4817 = vadd.f32 0.0, %v4816
      %v4818 = vpop.f32.mrb[0].mxu0
      %4819 = vmatprep.mubr.bf16.mxu0 0
      %4820 = vmatmul.mubr.bf16.gmra.mrb[0].mxu0 %v4724
      %v4821 = vpop.f32.mrb[0].mxu0
      %v4822 = vadd.f32 0.0, %v4821
      %v4823 = vpop.f32.mrb[0].mxu0
      %v4824 = vpop.f32.mrb[0].mxu0
      %v4825 = vadd.f32 0.0, %v4824
      %v4826 = vpop.f32.mrb[0].mxu0
      %4827 = vmatprep.mubr.bf16.mxu0 0
      %4828 = vmatmul.mubr.bf16.gmra.mrb[0].mxu0 %v4725
      %v4829 = vpop.f32.mrb[0].mxu0
      %v4830 = vadd.f32 0.0, %v4829
      %v4831 = vpop.f32.mrb[0].mxu0
      %v4832 = vpop.f32.mrb[0].mxu0
      %v4833 = vadd.f32 0.0, %v4832
      %v4834 = vpop.f32.mrb[0].mxu0
      %4835 = vmatprep.mubr.bf16.mxu0 0
      %4836 = vmatmul.mubr.bf16.gmra.mrb[0].mxu0 %v4726
      %v4837 = vpop.f32.mrb[0].mxu0
      %v4838 = vadd.f32 0.0, %v4837
      %v4839 = vpop.f32.mrb[0].mxu0
      %v4840 = vpop.f32.mrb[0].mxu0
      %v4841 = vadd.f32 0.0, %v4840
      %v4842 = vpop.f32.mrb[0].mxu0
      %4843 = vdwg.mxu0
      %v4844 = vadd.f32 %v4563, %v4814
      %v4845 = vadd.f32 %v4564, %v4817
      %v4846 = vadd.f32 %v4565, %v4822
      %v4847 = vadd.f32 %v4566, %v4825
      %v4848 = vadd.f32 %v4567, %v4830
      %v4849 = vadd.f32 %v4568, %v4833
      %v4850 = vadd.f32 %v4569, %v4838
      %v4851 = vadd.f32 %v4570, %v4841
      %v4852 = vld [vmem:[%s439] sm:$0xe]
      %v4853 = vld [vmem:[%s439 + $0x8] sm:$0xe]
      %v4854 = vld [vmem:[%s439 + $0x10] sm:$0xe]
      %v4855 = vld [vmem:[%s439 + $0x18] sm:$0xe]
      %v4856 = vld [vmem:[%s439 + $0x20] sm:$0xe]
      %v4857 = vld [vmem:[%s439 + $0x28] sm:$0xe]
      %v4858 = vld [vmem:[%s439 + $0x30] sm:$0xe]
      %v4859 = vld [vmem:[%s439 + $0x38] sm:$0xe]
      %v4876 = vrot.slane %v4852, 5
      %v4877 = vrot.slane %v4876, 4
      %v4878 = vrot.slane %v4572, 5
      %v4879 = vsel %vm917, %v4877, %v4878
      %v4880 = vrot.slane %v4853, 5
      %v4881 = vrot.slane %v4880, 4
      %v4882 = vrot.slane %v4574, 5
      %v4883 = vsel %vm917, %v4881, %v4882
      %v4884 = vrot.slane %v4854, 5
      %v4885 = vrot.slane %v4884, 4
      %v4886 = vrot.slane %v4576, 5
      %v4887 = vsel %vm917, %v4885, %v4886
      %v4888 = vrot.slane %v4855, 5
      %v4889 = vrot.slane %v4888, 4
      %v4890 = vrot.slane %v4578, 5
      %v4891 = vsel %vm917, %v4889, %v4890
      %v4892 = vrot.slane %v4856, 5
      %v4893 = vrot.slane %v4892, 4
      %v4894 = vrot.slane %v4580, 5
      %v4895 = vsel %vm917, %v4893, %v4894
      %v4896 = vrot.slane %v4857, 5
      %v4897 = vrot.slane %v4896, 4
      %v4898 = vrot.slane %v4582, 5
      %v4899 = vsel %vm917, %v4897, %v4898
      %v4900 = vrot.slane %v4858, 5
      %v4901 = vrot.slane %v4900, 4
      %v4902 = vrot.slane %v4584, 5
      %v4903 = vsel %vm917, %v4901, %v4902
      %v4904 = vrot.slane %v4859, 5
      %v4905 = vrot.slane %v4904, 4
      %v4906 = vrot.slane %v4586, 5
      %v4907 = vsel %vm917, %v4905, %v4906
      %v4908 = vld [vmem:[%s3 + $0x500] sm:$0xf]
      %v4909 = vld [vmem:[%s3 + $0x504] sm:$0xf]
      %v4910 = vld [vmem:[%s3 + $0x508] sm:$0xf]
      %v4911 = vld [vmem:[%s3 + $0x50c] sm:$0xf]
      %v4912 = vld [vmem:[%s3 + $0x510] sm:$0xf]
      %v4913 = vld [vmem:[%s3 + $0x514] sm:$0xf]
      %v4914 = vld [vmem:[%s3 + $0x518] sm:$0xf]
      %v4915 = vld [vmem:[%s3 + $0x51c] sm:$0xf]
      %v4916 = vld [vmem:[%s3 + $0x520] sm:$0xf]
      %v4917 = vld [vmem:[%s3 + $0x524] sm:$0xf]
      %v4918 = vld [vmem:[%s3 + $0x528] sm:$0xf]
      %v4919 = vld [vmem:[%s3 + $0x52c] sm:$0xf]
      %v4920 = vld [vmem:[%s3 + $0x530] sm:$0xf]
      %v4921 = vld [vmem:[%s3 + $0x534] sm:$0xf]
      %v4922 = vld [vmem:[%s3 + $0x538] sm:$0xf]
      %v4923 = vld [vmem:[%s3 + $0x53c] sm:$0xf]
      %v4924 = vunpack.c.l.b16 %v4879
      %v4925 = vunpack.c.l.b16 %v4883
      %v4926 = vunpack.c.l.b16 %v4887
      %v4927 = vunpack.c.l.b16 %v4891
      %v4928 = vunpack.c.l.b16 %v4895
      %v4929 = vunpack.c.l.b16 %v4899
      %v4930 = vunpack.c.l.b16 %v4903
      %v4931 = vunpack.c.l.b16 %v4907
      %v4932 = vpack.c.b16 %v4925, %v4924
      %v4933 = vpack.c.b16 %v4927, %v4926
      %v4934 = vpack.c.b16 %v4929, %v4928
      %v4935 = vpack.c.b16 %v4931, %v4930
      %v4956 = vunpack.c.l.b16 %v4908
      %v4957 = vunpack.c.l.b16 %v4909
      %v4958 = vunpack.c.l.b16 %v4910
      %v4959 = vunpack.c.l.b16 %v4911
      %v4960 = vunpack.c.l.b16 %v4912
      %v4961 = vunpack.c.l.b16 %v4913
      %v4962 = vunpack.c.l.b16 %v4914
      %v4963 = vunpack.c.l.b16 %v4915
      %v4964 = vunpack.c.l.b16 %v4916
      %v4965 = vunpack.c.l.b16 %v4917
      %v4966 = vunpack.c.l.b16 %v4918
      %v4967 = vunpack.c.l.b16 %v4919
      %v4968 = vunpack.c.l.b16 %v4920
      %v4969 = vunpack.c.l.b16 %v4921
      %v4970 = vunpack.c.l.b16 %v4922
      %v4971 = vunpack.c.l.b16 %v4923
      %v4972 = vpack.c.b16 %v4957, %v4956
      %v4973 = vpack.c.b16 %v4959, %v4958
      %v4974 = vpack.c.b16 %v4961, %v4960
      %v4975 = vpack.c.b16 %v4963, %v4962
      %v4976 = vpack.c.b16 %v4965, %v4964
      %v4977 = vpack.c.b16 %v4967, %v4966
      %v4978 = vpack.c.b16 %v4969, %v4968
      %v4979 = vpack.c.b16 %v4971, %v4970
      %4988 = vmatprep.subr.bf16.mxu0 0
      %4989 = vmatpush1.bf16.msra.mxu0 %v4972
      %4990 = vmatprep.subr.bf16.mxu0 0
      %4991 = vmatpush1.bf16.msra.mxu0 %v4973
      %4992 = vmatprep.subr.bf16.mxu0 0
      %4993 = vmatpush1.bf16.msra.mxu0 %v4974
      %4994 = vmatprep.subr.bf16.mxu0 0
      %4995 = vmatpush1.bf16.msra.mxu0 %v4975
      %4996 = vmatprep.subr.bf16.mxu0 0
      %4997 = vmatpush1.bf16.msra.mxu0 %v4976
      %4998 = vmatprep.subr.bf16.mxu0 0
      %4999 = vmatpush1.bf16.msra.mxu0 %v4977
      %5000 = vmatprep.subr.bf16.mxu0 0
      %5001 = vmatpush1.bf16.msra.mxu0 %v4978
      %5002 = vmatprep.subr.bf16.mxu0 0
      %5003 = vmatpush1.bf16.msra.mxu0 %v4979
      %5004 = vmatprep.subr.bf16.mxu0 0
      %5005 = vmatpush1.bf16.msra.mxu0 0
      %5006 = vmatprep.subr.bf16.mxu0 0
      %5007 = vmatpush1.bf16.msra.mxu0 0
      %5008 = vmatprep.subr.bf16.mxu0 0
      %5009 = vmatpush1.bf16.msra.mxu0 0
      %5010 = vmatprep.subr.bf16.mxu0 0
      %5011 = vmatpush1.bf16.msra.mxu0 0
      %5012 = vmatprep.subr.bf16.mxu0 0
      %5013 = vmatpush1.bf16.msra.mxu0 0
      %5014 = vmatprep.subr.bf16.mxu0 0
      %5015 = vmatpush1.bf16.msra.mxu0 0
      %5016 = vmatprep.subr.bf16.mxu0 0
      %5017 = vmatpush1.bf16.msra.mxu0 0
      %5018 = vmatprep.subr.bf16.mxu0 0
      %5019 = vmatpush1.bf16.msra.mxu0 0
      %5020 = vmatprep.mubr.bf16.mxu0 0
      %5021 = vmatmul.mubr.bf16.gmra.mrb[0].mxu0 %v4932
      %v5022 = vpop.f32.mrb[0].mxu0
      %v5023 = vadd.f32 0.0, %v5022
      %v5024 = vpop.f32.mrb[0].mxu0
      %v5025 = vpop.f32.mrb[0].mxu0
      %v5026 = vadd.f32 0.0, %v5025
      %v5027 = vpop.f32.mrb[0].mxu0
      %5028 = vmatprep.mubr.bf16.mxu0 0
      %5029 = vmatmul.mubr.bf16.gmra.mrb[0].mxu0 %v4933
      %v5030 = vpop.f32.mrb[0].mxu0
      %v5031 = vadd.f32 0.0, %v5030
      %v5032 = vpop.f32.mrb[0].mxu0
      %v5033 = vpop.f32.mrb[0].mxu0
      %v5034 = vadd.f32 0.0, %v5033
      %v5035 = vpop.f32.mrb[0].mxu0
      %5036 = vmatprep.mubr.bf16.mxu0 0
      %5037 = vmatmul.mubr.bf16.gmra.mrb[0].mxu0 %v4934
      %v5038 = vpop.f32.mrb[0].mxu0
      %v5039 = vadd.f32 0.0, %v5038
      %v5040 = vpop.f32.mrb[0].mxu0
      %v5041 = vpop.f32.mrb[0].mxu0
      %v5042 = vadd.f32 0.0, %v5041
      %v5043 = vpop.f32.mrb[0].mxu0
      %5044 = vmatprep.mubr.bf16.mxu0 0
      %5045 = vmatmul.mubr.bf16.gmra.mrb[0].mxu0 %v4935
      %v5046 = vpop.f32.mrb[0].mxu0
      %v5047 = vadd.f32 0.0, %v5046
      %v5048 = vpop.f32.mrb[0].mxu0
      %v5049 = vpop.f32.mrb[0].mxu0
      %v5050 = vadd.f32 0.0, %v5049
      %v5051 = vpop.f32.mrb[0].mxu0
      %5052 = vdwg.mxu0
      %v5053 = vadd.f32 %v4844, %v5023
      %v5054 = vadd.f32 %v4845, %v5026
      %v5055 = vadd.f32 %v4846, %v5031
      %v5056 = vadd.f32 %v4847, %v5034
      %v5057 = vadd.f32 %v4848, %v5039
      %v5058 = vadd.f32 %v4849, %v5042
      %v5059 = vadd.f32 %v4850, %v5047
      %v5060 = vadd.f32 %v4851, %v5050
      %s5061 = scalar_lea.vmem %s439, 8
      %v5062 = vld [vmem:[%s5061] sm:$0xf]
      %v5063 = vld [vmem:[%s5061 + $0x8] sm:$0xf]
      %v5064 = vld [vmem:[%s5061 + $0x10] sm:$0xf]
      %v5065 = vld [vmem:[%s5061 + $0x18] sm:$0xf]
      %v5066 = vld [vmem:[%s5061 + $0x20] sm:$0xf]
      %v5067 = vld [vmem:[%s5061 + $0x28] sm:$0xf]
      %v5068 = vld [vmem:[%s5061 + $0x30] sm:$0xf]
      %v5069 = vld [vmem:[%s5061 + $0x38] sm:$0xf]
      %v5070 = vld [vmem:[%s3 + $0x540] sm:$0xf]
      %v5071 = vld [vmem:[%s3 + $0x544] sm:$0xf]
      %v5072 = vld [vmem:[%s3 + $0x548] sm:$0xf]
      %v5073 = vld [vmem:[%s3 + $0x54c] sm:$0xf]
      %v5074 = vld [vmem:[%s3 + $0x550] sm:$0xf]
      %v5075 = vld [vmem:[%s3 + $0x554] sm:$0xf]
      %v5076 = vld [vmem:[%s3 + $0x558] sm:$0xf]
      %v5077 = vld [vmem:[%s3 + $0x55c] sm:$0xf]
      %v5078 = vld [vmem:[%s3 + $0x560] sm:$0xf]
      %v5079 = vld [vmem:[%s3 + $0x564] sm:$0xf]
      %v5080 = vld [vmem:[%s3 + $0x568] sm:$0xf]
      %v5081 = vld [vmem:[%s3 + $0x56c] sm:$0xf]
      %v5082 = vld [vmem:[%s3 + $0x570] sm:$0xf]
      %v5083 = vld [vmem:[%s3 + $0x574] sm:$0xf]
      %v5084 = vld [vmem:[%s3 + $0x578] sm:$0xf]
      %v5085 = vld [vmem:[%s3 + $0x57c] sm:$0xf]
      %v5094 = vunpack.c.l.b16 %v5062
      %v5095 = vunpack.c.l.b16 %v5063
      %v5096 = vunpack.c.l.b16 %v5064
      %v5097 = vunpack.c.l.b16 %v5065
      %v5098 = vunpack.c.l.b16 %v5066
      %v5099 = vunpack.c.l.b16 %v5067
      %v5100 = vunpack.c.l.b16 %v5068
      %v5101 = vunpack.c.l.b16 %v5069
      %v5102 = vpack.c.b16 %v5095, %v5094
      %v5103 = vpack.c.b16 %v5097, %v5096
      %v5104 = vpack.c.b16 %v5099, %v5098
      %v5105 = vpack.c.b16 %v5101, %v5100
      %v5126 = vunpack.c.l.b16 %v5070
      %v5127 = vunpack.c.l.b16 %v5071
      %v5128 = vunpack.c.l.b16 %v5072
      %v5129 = vunpack.c.l.b16 %v5073
      %v5130 = vunpack.c.l.b16 %v5074
      %v5131 = vunpack.c.l.b16 %v5075
      %v5132 = vunpack.c.l.b16 %v5076
      %v5133 = vunpack.c.l.b16 %v5077
      %v5134 = vunpack.c.l.b16 %v5078
      %v5135 = vunpack.c.l.b16 %v5079
      %v5136 = vunpack.c.l.b16 %v5080
      %v5137 = vunpack.c.l.b16 %v5081
      %v5138 = vunpack.c.l.b16 %v5082
      %v5139 = vunpack.c.l.b16 %v5083
      %v5140 = vunpack.c.l.b16 %v5084
      %v5141 = vunpack.c.l.b16 %v5085
      %v5142 = vpack.c.b16 %v5127, %v5126
      %v5143 = vpack.c.b16 %v5129, %v5128
      %v5144 = vpack.c.b16 %v5131, %v5130
      %v5145 = vpack.c.b16 %v5133, %v5132
      %v5146 = vpack.c.b16 %v5135, %v5134
      %v5147 = vpack.c.b16 %v5137, %v5136
      %v5148 = vpack.c.b16 %v5139, %v5138
      %v5149 = vpack.c.b16 %v5141, %v5140
      %5158 = vmatprep.subr.bf16.mxu0 0
      %5159 = vmatpush1.bf16.msra.mxu0 %v5142
      %5160 = vmatprep.subr.bf16.mxu0 0
      %5161 = vmatpush1.bf16.msra.mxu0 %v5143
      %5162 = vmatprep.subr.bf16.mxu0 0
      %5163 = vmatpush1.bf16.msra.mxu0 %v5144
      %5164 = vmatprep.subr.bf16.mxu0 0
      %5165 = vmatpush1.bf16.msra.mxu0 %v5145
      %5166 = vmatprep.subr.bf16.mxu0 0
      %5167 = vmatpush1.bf16.msra.mxu0 %v5146
      %5168 = vmatprep.subr.bf16.mxu0 0
      %5169 = vmatpush1.bf16.msra.mxu0 %v5147
      %5170 = vmatprep.subr.bf16.mxu0 0
      %5171 = vmatpush1.bf16.msra.mxu0 %v5148
      %5172 = vmatprep.subr.bf16.mxu0 0
      %5173 = vmatpush1.bf16.msra.mxu0 %v5149
      %5174 = vmatprep.subr.bf16.mxu0 0
      %5175 = vmatpush1.bf16.msra.mxu0 0
      %5176 = vmatprep.subr.bf16.mxu0 0
      %5177 = vmatpush1.bf16.msra.mxu0 0
      %5178 = vmatprep.subr.bf16.mxu0 0
      %5179 = vmatpush1.bf16.msra.mxu0 0
      %5180 = vmatprep.subr.bf16.mxu0 0
      %5181 = vmatpush1.bf16.msra.mxu0 0
      %5182 = vmatprep.subr.bf16.mxu0 0
      %5183 = vmatpush1.bf16.msra.mxu0 0
      %5184 = vmatprep.subr.bf16.mxu0 0
      %5185 = vmatpush1.bf16.msra.mxu0 0
      %5186 = vmatprep.subr.bf16.mxu0 0
      %5187 = vmatpush1.bf16.msra.mxu0 0
      %5188 = vmatprep.subr.bf16.mxu0 0
      %5189 = vmatpush1.bf16.msra.mxu0 0
      %5190 = vmatprep.mubr.bf16.mxu0 0
      %5191 = vmatmul.mubr.bf16.gmra.mrb[0].mxu0 %v5102
      %v5192 = vpop.f32.mrb[0].mxu0
      %v5193 = vadd.f32 0.0, %v5192
      %v5194 = vpop.f32.mrb[0].mxu0
      %v5195 = vpop.f32.mrb[0].mxu0
      %v5196 = vadd.f32 0.0, %v5195
      %v5197 = vpop.f32.mrb[0].mxu0
      %5198 = vmatprep.mubr.bf16.mxu0 0
      %5199 = vmatmul.mubr.bf16.gmra.mrb[0].mxu0 %v5103
      %v5200 = vpop.f32.mrb[0].mxu0
      %v5201 = vadd.f32 0.0, %v5200
      %v5202 = vpop.f32.mrb[0].mxu0
      %v5203 = vpop.f32.mrb[0].mxu0
      %v5204 = vadd.f32 0.0, %v5203
      %v5205 = vpop.f32.mrb[0].mxu0
      %5206 = vmatprep.mubr.bf16.mxu0 0
      %5207 = vmatmul.mubr.bf16.gmra.mrb[0].mxu0 %v5104
      %v5208 = vpop.f32.mrb[0].mxu0
      %v5209 = vadd.f32 0.0, %v5208
      %v5210 = vpop.f32.mrb[0].mxu0
      %v5211 = vpop.f32.mrb[0].mxu0
      %v5212 = vadd.f32 0.0, %v5211
      %v5213 = vpop.f32.mrb[0].mxu0
      %5214 = vmatprep.mubr.bf16.mxu0 0
      %5215 = vmatmul.mubr.bf16.gmra.mrb[0].mxu0 %v5105
      %v5216 = vpop.f32.mrb[0].mxu0
      %v5217 = vadd.f32 0.0, %v5216
      %v5218 = vpop.f32.mrb[0].mxu0
      %v5219 = vpop.f32.mrb[0].mxu0
      %v5220 = vadd.f32 0.0, %v5219
      %v5221 = vpop.f32.mrb[0].mxu0
      %5222 = vdwg.mxu0
      %v5223 = vadd.f32 %v5053, %v5193
      %v5224 = vadd.f32 %v5054, %v5196
      %v5225 = vadd.f32 %v5055, %v5201
      %v5226 = vadd.f32 %v5056, %v5204
      %v5227 = vadd.f32 %v5057, %v5209
      %v5228 = vadd.f32 %v5058, %v5212
      %v5229 = vadd.f32 %v5059, %v5217
      %v5230 = vadd.f32 %v5060, %v5220
      %v5231 = vld [vmem:[%s5061] sm:$0xf]
      %v5232 = vld [vmem:[%s5061 + $0x4] sm:$0x1]
      %v5233 = vld [vmem:[%s5061 + $0x8] sm:$0xf]
      %v5234 = vld [vmem:[%s5061 + $0xc] sm:$0x1]
      %v5235 = vld [vmem:[%s5061 + $0x10] sm:$0xf]
      %v5236 = vld [vmem:[%s5061 + $0x14] sm:$0x1]
      %v5237 = vld [vmem:[%s5061 + $0x18] sm:$0xf]
      %v5238 = vld [vmem:[%s5061 + $0x1c] sm:$0x1]
      %v5239 = vld [vmem:[%s5061 + $0x20] sm:$0xf]
      %v5240 = vld [vmem:[%s5061 + $0x24] sm:$0x1]
      %v5241 = vld [vmem:[%s5061 + $0x28] sm:$0xf]
      %v5242 = vld [vmem:[%s5061 + $0x2c] sm:$0x1]
      %v5243 = vld [vmem:[%s5061 + $0x30] sm:$0xf]
      %v5244 = vld [vmem:[%s5061 + $0x34] sm:$0x1]
      %v5245 = vld [vmem:[%s5061 + $0x38] sm:$0xf]
      %v5246 = vld [vmem:[%s5061 + $0x3c] sm:$0x1]
      %v5248 = vshrl.u32 %v5231, 16
      %v5250 = vrot.slane %v5248, 4
      %v5251 = vshll.u32 %v5231, 16
      %v5253 = vrot.slane %v5251, 5
      %v5254 = vor.u32 %v5250, %v5253
      %v5255 = vrot.slane %v5254, 4
      %v5257 = vshll.u32 %v5232, 16
      %v5259 = vrot.slane %v5257, 5
      %v5260 = vsel %vm496, %v5255, %v5259
      %v5262 = vshrl.u32 %v5233, 16
      %v5264 = vrot.slane %v5262, 4
      %v5265 = vshll.u32 %v5233, 16
      %v5267 = vrot.slane %v5265, 5
      %v5268 = vor.u32 %v5264, %v5267
      %v5269 = vrot.slane %v5268, 4
      %v5271 = vshll.u32 %v5234, 16
      %v5273 = vrot.slane %v5271, 5
      %v5274 = vsel %vm496, %v5269, %v5273
      %v5276 = vshrl.u32 %v5235, 16
      %v5278 = vrot.slane %v5276, 4
      %v5279 = vshll.u32 %v5235, 16
      %v5281 = vrot.slane %v5279, 5
      %v5282 = vor.u32 %v5278, %v5281
      %v5283 = vrot.slane %v5282, 4
      %v5285 = vshll.u32 %v5236, 16
      %v5287 = vrot.slane %v5285, 5
      %v5288 = vsel %vm496, %v5283, %v5287
      %v5290 = vshrl.u32 %v5237, 16
      %v5292 = vrot.slane %v5290, 4
      %v5293 = vshll.u32 %v5237, 16
      %v5295 = vrot.slane %v5293, 5
      %v5296 = vor.u32 %v5292, %v5295
      %v5297 = vrot.slane %v5296, 4
      %v5299 = vshll.u32 %v5238, 16
      %v5301 = vrot.slane %v5299, 5
      %v5302 = vsel %vm496, %v5297, %v5301
      %v5304 = vshrl.u32 %v5239, 16
      %v5306 = vrot.slane %v5304, 4
      %v5307 = vshll.u32 %v5239, 16
      %v5309 = vrot.slane %v5307, 5
      %v5310 = vor.u32 %v5306, %v5309
      %v5311 = vrot.slane %v5310, 4
      %v5313 = vshll.u32 %v5240, 16
      %v5315 = vrot.slane %v5313, 5
      %v5316 = vsel %vm496, %v5311, %v5315
      %v5318 = vshrl.u32 %v5241, 16
      %v5320 = vrot.slane %v5318, 4
      %v5321 = vshll.u32 %v5241, 16
      %v5323 = vrot.slane %v5321, 5
      %v5324 = vor.u32 %v5320, %v5323
      %v5325 = vrot.slane %v5324, 4
      %v5327 = vshll.u32 %v5242, 16
      %v5329 = vrot.slane %v5327, 5
      %v5330 = vsel %vm496, %v5325, %v5329
      %v5332 = vshrl.u32 %v5243, 16
      %v5334 = vrot.slane %v5332, 4
      %v5335 = vshll.u32 %v5243, 16
      %v5337 = vrot.slane %v5335, 5
      %v5338 = vor.u32 %v5334, %v5337
      %v5339 = vrot.slane %v5338, 4
      %v5341 = vshll.u32 %v5244, 16
      %v5343 = vrot.slane %v5341, 5
      %v5344 = vsel %vm496, %v5339, %v5343
      %v5346 = vshrl.u32 %v5245, 16
      %v5348 = vrot.slane %v5346, 4
      %v5349 = vshll.u32 %v5245, 16
      %v5351 = vrot.slane %v5349, 5
      %v5352 = vor.u32 %v5348, %v5351
      %v5353 = vrot.slane %v5352, 4
      %v5355 = vshll.u32 %v5246, 16
      %v5357 = vrot.slane %v5355, 5
      %v5358 = vsel %vm496, %v5353, %v5357
      %v5359 = vld [vmem:[%s3 + $0x580] sm:$0xf]
      %v5360 = vld [vmem:[%s3 + $0x584] sm:$0xf]
      %v5361 = vld [vmem:[%s3 + $0x588] sm:$0xf]
      %v5362 = vld [vmem:[%s3 + $0x58c] sm:$0xf]
      %v5363 = vld [vmem:[%s3 + $0x590] sm:$0xf]
      %v5364 = vld [vmem:[%s3 + $0x594] sm:$0xf]
      %v5365 = vld [vmem:[%s3 + $0x598] sm:$0xf]
      %v5366 = vld [vmem:[%s3 + $0x59c] sm:$0xf]
      %v5367 = vld [vmem:[%s3 + $0x5a0] sm:$0xf]
      %v5368 = vld [vmem:[%s3 + $0x5a4] sm:$0xf]
      %v5369 = vld [vmem:[%s3 + $0x5a8] sm:$0xf]
      %v5370 = vld [vmem:[%s3 + $0x5ac] sm:$0xf]
      %v5371 = vld [vmem:[%s3 + $0x5b0] sm:$0xf]
      %v5372 = vld [vmem:[%s3 + $0x5b4] sm:$0xf]
      %v5373 = vld [vmem:[%s3 + $0x5b8] sm:$0xf]
      %v5374 = vld [vmem:[%s3 + $0x5bc] sm:$0xf]
      %v5375 = vunpack.c.l.b16 %v5260
      %v5376 = vunpack.c.l.b16 %v5274
      %v5377 = vunpack.c.l.b16 %v5288
      %v5378 = vunpack.c.l.b16 %v5302
      %v5379 = vunpack.c.l.b16 %v5316
      %v5380 = vunpack.c.l.b16 %v5330
      %v5381 = vunpack.c.l.b16 %v5344
      %v5382 = vunpack.c.l.b16 %v5358
      %v5383 = vpack.c.b16 %v5376, %v5375
      %v5384 = vpack.c.b16 %v5378, %v5377
      %v5385 = vpack.c.b16 %v5380, %v5379
      %v5386 = vpack.c.b16 %v5382, %v5381
      %v5407 = vunpack.c.l.b16 %v5359
      %v5408 = vunpack.c.l.b16 %v5360
      %v5409 = vunpack.c.l.b16 %v5361
      %v5410 = vunpack.c.l.b16 %v5362
      %v5411 = vunpack.c.l.b16 %v5363
      %v5412 = vunpack.c.l.b16 %v5364
      %v5413 = vunpack.c.l.b16 %v5365
      %v5414 = vunpack.c.l.b16 %v5366
      %v5415 = vunpack.c.l.b16 %v5367
      %v5416 = vunpack.c.l.b16 %v5368
      %v5417 = vunpack.c.l.b16 %v5369
      %v5418 = vunpack.c.l.b16 %v5370
      %v5419 = vunpack.c.l.b16 %v5371
      %v5420 = vunpack.c.l.b16 %v5372
      %v5421 = vunpack.c.l.b16 %v5373
      %v5422 = vunpack.c.l.b16 %v5374
      %v5423 = vpack.c.b16 %v5408, %v5407
      %v5424 = vpack.c.b16 %v5410, %v5409
      %v5425 = vpack.c.b16 %v5412, %v5411
      %v5426 = vpack.c.b16 %v5414, %v5413
      %v5427 = vpack.c.b16 %v5416, %v5415
      %v5428 = vpack.c.b16 %v5418, %v5417
      %v5429 = vpack.c.b16 %v5420, %v5419
      %v5430 = vpack.c.b16 %v5422, %v5421
      %5439 = vmatprep.subr.bf16.mxu0 0
      %5440 = vmatpush1.bf16.msra.mxu0 %v5423
      %5441 = vmatprep.subr.bf16.mxu0 0
      %5442 = vmatpush1.bf16.msra.mxu0 %v5424
      %5443 = vmatprep.subr.bf16.mxu0 0
      %5444 = vmatpush1.bf16.msra.mxu0 %v5425
      %5445 = vmatprep.subr.bf16.mxu0 0
      %5446 = vmatpush1.bf16.msra.mxu0 %v5426
      %5447 = vmatprep.subr.bf16.mxu0 0
      %5448 = vmatpush1.bf16.msra.mxu0 %v5427
      %5449 = vmatprep.subr.bf16.mxu0 0
      %5450 = vmatpush1.bf16.msra.mxu0 %v5428
      %5451 = vmatprep.subr.bf16.mxu0 0
      %5452 = vmatpush1.bf16.msra.mxu0 %v5429
      %5453 = vmatprep.subr.bf16.mxu0 0
      %5454 = vmatpush1.bf16.msra.mxu0 %v5430
      %5455 = vmatprep.subr.bf16.mxu0 0
      %5456 = vmatpush1.bf16.msra.mxu0 0
      %5457 = vmatprep.subr.bf16.mxu0 0
      %5458 = vmatpush1.bf16.msra.mxu0 0
      %5459 = vmatprep.subr.bf16.mxu0 0
      %5460 = vmatpush1.bf16.msra.mxu0 0
      %5461 = vmatprep.subr.bf16.mxu0 0
      %5462 = vmatpush1.bf16.msra.mxu0 0
      %5463 = vmatprep.subr.bf16.mxu0 0
      %5464 = vmatpush1.bf16.msra.mxu0 0
      %5465 = vmatprep.subr.bf16.mxu0 0
      %5466 = vmatpush1.bf16.msra.mxu0 0
      %5467 = vmatprep.subr.bf16.mxu0 0
      %5468 = vmatpush1.bf16.msra.mxu0 0
      %5469 = vmatprep.subr.bf16.mxu0 0
      %5470 = vmatpush1.bf16.msra.mxu0 0
      %5471 = vmatprep.mubr.bf16.mxu0 0
      %5472 = vmatmul.mubr.bf16.gmra.mrb[0].mxu0 %v5383
      %v5473 = vpop.f32.mrb[0].mxu0
      %v5474 = vadd.f32 0.0, %v5473
      %v5475 = vpop.f32.mrb[0].mxu0
      %v5476 = vpop.f32.mrb[0].mxu0
      %v5477 = vadd.f32 0.0, %v5476
      %v5478 = vpop.f32.mrb[0].mxu0
      %5479 = vmatprep.mubr.bf16.mxu0 0
      %5480 = vmatmul.mubr.bf16.gmra.mrb[0].mxu0 %v5384
      %v5481 = vpop.f32.mrb[0].mxu0
      %v5482 = vadd.f32 0.0, %v5481
      %v5483 = vpop.f32.mrb[0].mxu0
      %v5484 = vpop.f32.mrb[0].mxu0
      %v5485 = vadd.f32 0.0, %v5484
      %v5486 = vpop.f32.mrb[0].mxu0
      %5487 = vmatprep.mubr.bf16.mxu0 0
      %5488 = vmatmul.mubr.bf16.gmra.mrb[0].mxu0 %v5385
      %v5489 = vpop.f32.mrb[0].mxu0
      %v5490 = vadd.f32 0.0, %v5489
      %v5491 = vpop.f32.mrb[0].mxu0
      %v5492 = vpop.f32.mrb[0].mxu0
      %v5493 = vadd.f32 0.0, %v5492
      %v5494 = vpop.f32.mrb[0].mxu0
      %5495 = vmatprep.mubr.bf16.mxu0 0
      %5496 = vmatmul.mubr.bf16.gmra.mrb[0].mxu0 %v5386
      %v5497 = vpop.f32.mrb[0].mxu0
      %v5498 = vadd.f32 0.0, %v5497
      %v5499 = vpop.f32.mrb[0].mxu0
      %v5500 = vpop.f32.mrb[0].mxu0
      %v5501 = vadd.f32 0.0, %v5500
      %v5502 = vpop.f32.mrb[0].mxu0
      %5503 = vdwg.mxu0
      %v5504 = vadd.f32 %v5223, %v5474
      %v5505 = vadd.f32 %v5224, %v5477
      %v5506 = vadd.f32 %v5225, %v5482
      %v5507 = vadd.f32 %v5226, %v5485
      %v5508 = vadd.f32 %v5227, %v5490
      %v5509 = vadd.f32 %v5228, %v5493
      %v5510 = vadd.f32 %v5229, %v5498
      %v5511 = vadd.f32 %v5230, %v5501
      %v5512 = vld [vmem:[%s5061] sm:$0xe]
      %v5513 = vld [vmem:[%s5061 + $0x8] sm:$0xe]
      %v5514 = vld [vmem:[%s5061 + $0x10] sm:$0xe]
      %v5515 = vld [vmem:[%s5061 + $0x18] sm:$0xe]
      %v5516 = vld [vmem:[%s5061 + $0x20] sm:$0xe]
      %v5517 = vld [vmem:[%s5061 + $0x28] sm:$0xe]
      %v5518 = vld [vmem:[%s5061 + $0x30] sm:$0xe]
      %v5519 = vld [vmem:[%s5061 + $0x38] sm:$0xe]
      %v5536 = vrot.slane %v5512, 5
      %v5537 = vrot.slane %v5536, 4
      %v5538 = vrot.slane %v5232, 5
      %v5539 = vsel %vm917, %v5537, %v5538
      %v5540 = vrot.slane %v5513, 5
      %v5541 = vrot.slane %v5540, 4
      %v5542 = vrot.slane %v5234, 5
      %v5543 = vsel %vm917, %v5541, %v5542
      %v5544 = vrot.slane %v5514, 5
      %v5545 = vrot.slane %v5544, 4
      %v5546 = vrot.slane %v5236, 5
      %v5547 = vsel %vm917, %v5545, %v5546
      %v5548 = vrot.slane %v5515, 5
      %v5549 = vrot.slane %v5548, 4
      %v5550 = vrot.slane %v5238, 5
      %v5551 = vsel %vm917, %v5549, %v5550
      %v5552 = vrot.slane %v5516, 5
      %v5553 = vrot.slane %v5552, 4
      %v5554 = vrot.slane %v5240, 5
      %v5555 = vsel %vm917, %v5553, %v5554
      %v5556 = vrot.slane %v5517, 5
      %v5557 = vrot.slane %v5556, 4
      %v5558 = vrot.slane %v5242, 5
      %v5559 = vsel %vm917, %v5557, %v5558
      %v5560 = vrot.slane %v5518, 5
      %v5561 = vrot.slane %v5560, 4
      %v5562 = vrot.slane %v5244, 5
      %v5563 = vsel %vm917, %v5561, %v5562
      %v5564 = vrot.slane %v5519, 5
      %v5565 = vrot.slane %v5564, 4
      %v5566 = vrot.slane %v5246, 5
      %v5567 = vsel %vm917, %v5565, %v5566
      %v5568 = vld [vmem:[%s3 + $0x5c0] sm:$0xf]
      %v5569 = vld [vmem:[%s3 + $0x5c4] sm:$0xf]
      %v5570 = vld [vmem:[%s3 + $0x5c8] sm:$0xf]
      %v5571 = vld [vmem:[%s3 + $0x5cc] sm:$0xf]
      %v5572 = vld [vmem:[%s3 + $0x5d0] sm:$0xf]
      %v5573 = vld [vmem:[%s3 + $0x5d4] sm:$0xf]
      %v5574 = vld [vmem:[%s3 + $0x5d8] sm:$0xf]
      %v5575 = vld [vmem:[%s3 + $0x5dc] sm:$0xf]
      %v5576 = vld [vmem:[%s3 + $0x5e0] sm:$0xf]
      %v5577 = vld [vmem:[%s3 + $0x5e4] sm:$0xf]
      %v5578 = vld [vmem:[%s3 + $0x5e8] sm:$0xf]
      %v5579 = vld [vmem:[%s3 + $0x5ec] sm:$0xf]
      %v5580 = vld [vmem:[%s3 + $0x5f0] sm:$0xf]
      %v5581 = vld [vmem:[%s3 + $0x5f4] sm:$0xf]
      %v5582 = vld [vmem:[%s3 + $0x5f8] sm:$0xf]
      %v5583 = vld [vmem:[%s3 + $0x5fc] sm:$0xf]
      %v5584 = vunpack.c.l.b16 %v5539
      %v5585 = vunpack.c.l.b16 %v5543
      %v5586 = vunpack.c.l.b16 %v5547
      %v5587 = vunpack.c.l.b16 %v5551
      %v5588 = vunpack.c.l.b16 %v5555
      %v5589 = vunpack.c.l.b16 %v5559
      %v5590 = vunpack.c.l.b16 %v5563
      %v5591 = vunpack.c.l.b16 %v5567
      %v5592 = vpack.c.b16 %v5585, %v5584
      %v5593 = vpack.c.b16 %v5587, %v5586
      %v5594 = vpack.c.b16 %v5589, %v5588
      %v5595 = vpack.c.b16 %v5591, %v5590
      %v5616 = vunpack.c.l.b16 %v5568
      %v5617 = vunpack.c.l.b16 %v5569
      %v5618 = vunpack.c.l.b16 %v5570
      %v5619 = vunpack.c.l.b16 %v5571
      %v5620 = vunpack.c.l.b16 %v5572
      %v5621 = vunpack.c.l.b16 %v5573
      %v5622 = vunpack.c.l.b16 %v5574
      %v5623 = vunpack.c.l.b16 %v5575
      %v5624 = vunpack.c.l.b16 %v5576
      %v5625 = vunpack.c.l.b16 %v5577
      %v5626 = vunpack.c.l.b16 %v5578
      %v5627 = vunpack.c.l.b16 %v5579
      %v5628 = vunpack.c.l.b16 %v5580
      %v5629 = vunpack.c.l.b16 %v5581
      %v5630 = vunpack.c.l.b16 %v5582
      %v5631 = vunpack.c.l.b16 %v5583
      %v5632 = vpack.c.b16 %v5617, %v5616
      %v5633 = vpack.c.b16 %v5619, %v5618
      %v5634 = vpack.c.b16 %v5621, %v5620
      %v5635 = vpack.c.b16 %v5623, %v5622
      %v5636 = vpack.c.b16 %v5625, %v5624
      %v5637 = vpack.c.b16 %v5627, %v5626
      %v5638 = vpack.c.b16 %v5629, %v5628
      %v5639 = vpack.c.b16 %v5631, %v5630
      %5648 = vmatprep.subr.bf16.mxu0 0
      %5649 = vmatpush1.bf16.msra.mxu0 %v5632
      %5650 = vmatprep.subr.bf16.mxu0 0
      %5651 = vmatpush1.bf16.msra.mxu0 %v5633
      %5652 = vmatprep.subr.bf16.mxu0 0
      %5653 = vmatpush1.bf16.msra.mxu0 %v5634
      %5654 = vmatprep.subr.bf16.mxu0 0
      %5655 = vmatpush1.bf16.msra.mxu0 %v5635
      %5656 = vmatprep.subr.bf16.mxu0 0
      %5657 = vmatpush1.bf16.msra.mxu0 %v5636
      %5658 = vmatprep.subr.bf16.mxu0 0
      %5659 = vmatpush1.bf16.msra.mxu0 %v5637
      %5660 = vmatprep.subr.bf16.mxu0 0
      %5661 = vmatpush1.bf16.msra.mxu0 %v5638
      %5662 = vmatprep.subr.bf16.mxu0 0
      %5663 = vmatpush1.bf16.msra.mxu0 %v5639
      %5664 = vmatprep.subr.bf16.mxu0 0
      %5665 = vmatpush1.bf16.msra.mxu0 0
      %5666 = vmatprep.subr.bf16.mxu0 0
      %5667 = vmatpush1.bf16.msra.mxu0 0
      %5668 = vmatprep.subr.bf16.mxu0 0
      %5669 = vmatpush1.bf16.msra.mxu0 0
      %5670 = vmatprep.subr.bf16.mxu0 0
      %5671 = vmatpush1.bf16.msra.mxu0 0
      %5672 = vmatprep.subr.bf16.mxu0 0
      %5673 = vmatpush1.bf16.msra.mxu0 0
      %5674 = vmatprep.subr.bf16.mxu0 0
      %5675 = vmatpush1.bf16.msra.mxu0 0
      %5676 = vmatprep.subr.bf16.mxu0 0
      %5677 = vmatpush1.bf16.msra.mxu0 0
      %5678 = vmatprep.subr.bf16.mxu0 0
      %5679 = vmatpush1.bf16.msra.mxu0 0
      %5680 = vmatprep.mubr.bf16.mxu0 0
      %5681 = vmatmul.mubr.bf16.gmra.mrb[0].mxu0 %v5592
      %v5682 = vpop.f32.mrb[0].mxu0
      %v5683 = vadd.f32 0.0, %v5682
      %v5684 = vpop.f32.mrb[0].mxu0
      %v5685 = vpop.f32.mrb[0].mxu0
      %v5686 = vadd.f32 0.0, %v5685
      %v5687 = vpop.f32.mrb[0].mxu0
      %5688 = vmatprep.mubr.bf16.mxu0 0
      %5689 = vmatmul.mubr.bf16.gmra.mrb[0].mxu0 %v5593
      %v5690 = vpop.f32.mrb[0].mxu0
      %v5691 = vadd.f32 0.0, %v5690
      %v5692 = vpop.f32.mrb[0].mxu0
      %v5693 = vpop.f32.mrb[0].mxu0
      %v5694 = vadd.f32 0.0, %v5693
      %v5695 = vpop.f32.mrb[0].mxu0
      %5696 = vmatprep.mubr.bf16.mxu0 0
      %5697 = vmatmul.mubr.bf16.gmra.mrb[0].mxu0 %v5594
      %v5698 = vpop.f32.mrb[0].mxu0
      %v5699 = vadd.f32 0.0, %v5698
      %v5700 = vpop.f32.mrb[0].mxu0
      %v5701 = vpop.f32.mrb[0].mxu0
      %v5702 = vadd.f32 0.0, %v5701
      %v5703 = vpop.f32.mrb[0].mxu0
      %5704 = vmatprep.mubr.bf16.mxu0 0
      %5705 = vmatmul.mubr.bf16.gmra.mrb[0].mxu0 %v5595
      %v5706 = vpop.f32.mrb[0].mxu0
      %v5707 = vadd.f32 0.0, %v5706
      %v5708 = vpop.f32.mrb[0].mxu0
      %v5709 = vpop.f32.mrb[0].mxu0
      %v5710 = vadd.f32 0.0, %v5709
      %v5711 = vpop.f32.mrb[0].mxu0
      %5712 = vdwg.mxu0
      %v5713 = vadd.f32 %v5504, %v5683
      %v5714 = vadd.f32 %v5505, %v5686
      %v5715 = vadd.f32 %v5506, %v5691
      %v5716 = vadd.f32 %v5507, %v5694
      %v5717 = vadd.f32 %v5508, %v5699
      %v5718 = vadd.f32 %v5509, %v5702
      %v5719 = vadd.f32 %v5510, %v5707
      %v5720 = vadd.f32 %v5511, %v5710
      %s5721 = scalar_lea.vmem %s439, 16
      %v5722 = vld [vmem:[%s5721] sm:$0xf]
      %v5723 = vld [vmem:[%s5721 + $0x8] sm:$0xf]
      %v5724 = vld [vmem:[%s5721 + $0x10] sm:$0xf]
      %v5725 = vld [vmem:[%s5721 + $0x18] sm:$0xf]
      %v5726 = vld [vmem:[%s5721 + $0x20] sm:$0xf]
      %v5727 = vld [vmem:[%s5721 + $0x28] sm:$0xf]
      %v5728 = vld [vmem:[%s5721 + $0x30] sm:$0xf]
      %v5729 = vld [vmem:[%s5721 + $0x38] sm:$0xf]
      %v5730 = vld [vmem:[%s3 + $0x600] sm:$0xf]
      %v5731 = vld [vmem:[%s3 + $0x604] sm:$0xf]
      %v5732 = vld [vmem:[%s3 + $0x608] sm:$0xf]
      %v5733 = vld [vmem:[%s3 + $0x60c] sm:$0xf]
      %v5734 = vld [vmem:[%s3 + $0x610] sm:$0xf]
      %v5735 = vld [vmem:[%s3 + $0x614] sm:$0xf]
      %v5736 = vld [vmem:[%s3 + $0x618] sm:$0xf]
      %v5737 = vld [vmem:[%s3 + $0x61c] sm:$0xf]
      %v5738 = vld [vmem:[%s3 + $0x620] sm:$0xf]
      %v5739 = vld [vmem:[%s3 + $0x624] sm:$0xf]
      %v5740 = vld [vmem:[%s3 + $0x628] sm:$0xf]
      %v5741 = vld [vmem:[%s3 + $0x62c] sm:$0xf]
      %v5742 = vld [vmem:[%s3 + $0x630] sm:$0xf]
      %v5743 = vld [vmem:[%s3 + $0x634] sm:$0xf]
      %v5744 = vld [vmem:[%s3 + $0x638] sm:$0xf]
      %v5745 = vld [vmem:[%s3 + $0x63c] sm:$0xf]
      %v5754 = vunpack.c.l.b16 %v5722
      %v5755 = vunpack.c.l.b16 %v5723
      %v5756 = vunpack.c.l.b16 %v5724
      %v5757 = vunpack.c.l.b16 %v5725
      %v5758 = vunpack.c.l.b16 %v5726
      %v5759 = vunpack.c.l.b16 %v5727
      %v5760 = vunpack.c.l.b16 %v5728
      %v5761 = vunpack.c.l.b16 %v5729
      %v5762 = vpack.c.b16 %v5755, %v5754
      %v5763 = vpack.c.b16 %v5757, %v5756
      %v5764 = vpack.c.b16 %v5759, %v5758
      %v5765 = vpack.c.b16 %v5761, %v5760
      %v5786 = vunpack.c.l.b16 %v5730
      %v5787 = vunpack.c.l.b16 %v5731
      %v5788 = vunpack.c.l.b16 %v5732
      %v5789 = vunpack.c.l.b16 %v5733
      %v5790 = vunpack.c.l.b16 %v5734
      %v5791 = vunpack.c.l.b16 %v5735
      %v5792 = vunpack.c.l.b16 %v5736
      %v5793 = vunpack.c.l.b16 %v5737
      %v5794 = vunpack.c.l.b16 %v5738
      %v5795 = vunpack.c.l.b16 %v5739
      %v5796 = vunpack.c.l.b16 %v5740
      %v5797 = vunpack.c.l.b16 %v5741
      %v5798 = vunpack.c.l.b16 %v5742
      %v5799 = vunpack.c.l.b16 %v5743
      %v5800 = vunpack.c.l.b16 %v5744
      %v5801 = vunpack.c.l.b16 %v5745
      %v5802 = vpack.c.b16 %v5787, %v5786
      %v5803 = vpack.c.b16 %v5789, %v5788
      %v5804 = vpack.c.b16 %v5791, %v5790
      %v5805 = vpack.c.b16 %v5793, %v5792
      %v5806 = vpack.c.b16 %v5795, %v5794
      %v5807 = vpack.c.b16 %v5797, %v5796
      %v5808 = vpack.c.b16 %v5799, %v5798
      %v5809 = vpack.c.b16 %v5801, %v5800
      %5818 = vmatprep.subr.bf16.mxu0 0
      %5819 = vmatpush1.bf16.msra.mxu0 %v5802
      %5820 = vmatprep.subr.bf16.mxu0 0
      %5821 = vmatpush1.bf16.msra.mxu0 %v5803
      %5822 = vmatprep.subr.bf16.mxu0 0
      %5823 = vmatpush1.bf16.msra.mxu0 %v5804
      %5824 = vmatprep.subr.bf16.mxu0 0
      %5825 = vmatpush1.bf16.msra.mxu0 %v5805
      %5826 = vmatprep.subr.bf16.mxu0 0
      %5827 = vmatpush1.bf16.msra.mxu0 %v5806
      %5828 = vmatprep.subr.bf16.mxu0 0
      %5829 = vmatpush1.bf16.msra.mxu0 %v5807
      %5830 = vmatprep.subr.bf16.mxu0 0
      %5831 = vmatpush1.bf16.msra.mxu0 %v5808
      %5832 = vmatprep.subr.bf16.mxu0 0
      %5833 = vmatpush1.bf16.msra.mxu0 %v5809
      %5834 = vmatprep.subr.bf16.mxu0 0
      %5835 = vmatpush1.bf16.msra.mxu0 0
      %5836 = vmatprep.subr.bf16.mxu0 0
      %5837 = vmatpush1.bf16.msra.mxu0 0
      %5838 = vmatprep.subr.bf16.mxu0 0
      %5839 = vmatpush1.bf16.msra.mxu0 0
      %5840 = vmatprep.subr.bf16.mxu0 0
      %5841 = vmatpush1.bf16.msra.mxu0 0
      %5842 = vmatprep.subr.bf16.mxu0 0
      %5843 = vmatpush1.bf16.msra.mxu0 0
      %5844 = vmatprep.subr.bf16.mxu0 0
      %5845 = vmatpush1.bf16.msra.mxu0 0
      %5846 = vmatprep.subr.bf16.mxu0 0
      %5847 = vmatpush1.bf16.msra.mxu0 0
      %5848 = vmatprep.subr.bf16.mxu0 0
      %5849 = vmatpush1.bf16.msra.mxu0 0
      %5850 = vmatprep.mubr.bf16.mxu0 0
      %5851 = vmatmul.mubr.bf16.gmra.mrb[0].mxu0 %v5762
      %v5852 = vpop.f32.mrb[0].mxu0
      %v5853 = vadd.f32 0.0, %v5852
      %v5854 = vpop.f32.mrb[0].mxu0
      %v5855 = vpop.f32.mrb[0].mxu0
      %v5856 = vadd.f32 0.0, %v5855
      %v5857 = vpop.f32.mrb[0].mxu0
      %5858 = vmatprep.mubr.bf16.mxu0 0
      %5859 = vmatmul.mubr.bf16.gmra.mrb[0].mxu0 %v5763
      %v5860 = vpop.f32.mrb[0].mxu0
      %v5861 = vadd.f32 0.0, %v5860
      %v5862 = vpop.f32.mrb[0].mxu0
      %v5863 = vpop.f32.mrb[0].mxu0
      %v5864 = vadd.f32 0.0, %v5863
      %v5865 = vpop.f32.mrb[0].mxu0
      %5866 = vmatprep.mubr.bf16.mxu0 0
      %5867 = vmatmul.mubr.bf16.gmra.mrb[0].mxu0 %v5764
      %v5868 = vpop.f32.mrb[0].mxu0
      %v5869 = vadd.f32 0.0, %v5868
      %v5870 = vpop.f32.mrb[0].mxu0
      %v5871 = vpop.f32.mrb[0].mxu0
      %v5872 = vadd.f32 0.0, %v5871
      %v5873 = vpop.f32.mrb[0].mxu0
      %5874 = vmatprep.mubr.bf16.mxu0 0
      %5875 = vmatmul.mubr.bf16.gmra.mrb[0].mxu0 %v5765
      %v5876 = vpop.f32.mrb[0].mxu0
      %v5877 = vadd.f32 0.0, %v5876
      %v5878 = vpop.f32.mrb[0].mxu0
      %v5879 = vpop.f32.mrb[0].mxu0
      %v5880 = vadd.f32 0.0, %v5879
      %v5881 = vpop.f32.mrb[0].mxu0
      %5882 = vdwg.mxu0
      %v5883 = vadd.f32 %v5713, %v5853
      %v5884 = vadd.f32 %v5714, %v5856
      %v5885 = vadd.f32 %v5715, %v5861
      %v5886 = vadd.f32 %v5716, %v5864
      %v5887 = vadd.f32 %v5717, %v5869
      %v5888 = vadd.f32 %v5718, %v5872
      %v5889 = vadd.f32 %v5719, %v5877
      %v5890 = vadd.f32 %v5720, %v5880
      %v5891 = vld [vmem:[%s5721] sm:$0xf]
      %v5892 = vld [vmem:[%s5721 + $0x4] sm:$0x1]
      %v5893 = vld [vmem:[%s5721 + $0x8] sm:$0xf]
      %v5894 = vld [vmem:[%s5721 + $0xc] sm:$0x1]
      %v5895 = vld [vmem:[%s5721 + $0x10] sm:$0xf]
      %v5896 = vld [vmem:[%s5721 + $0x14] sm:$0x1]
      %v5897 = vld [vmem:[%s5721 + $0x18] sm:$0xf]
      %v5898 = vld [vmem:[%s5721 + $0x1c] sm:$0x1]
      %v5899 = vld [vmem:[%s5721 + $0x20] sm:$0xf]
      %v5900 = vld [vmem:[%s5721 + $0x24] sm:$0x1]
      %v5901 = vld [vmem:[%s5721 + $0x28] sm:$0xf]
      %v5902 = vld [vmem:[%s5721 + $0x2c] sm:$0x1]
      %v5903 = vld [vmem:[%s5721 + $0x30] sm:$0xf]
      %v5904 = vld [vmem:[%s5721 + $0x34] sm:$0x1]
      %v5905 = vld [vmem:[%s5721 + $0x38] sm:$0xf]
      %v5906 = vld [vmem:[%s5721 + $0x3c] sm:$0x1]
      %v5908 = vshrl.u32 %v5891, 16
      %v5910 = vrot.slane %v5908, 4
      %v5911 = vshll.u32 %v5891, 16
      %v5913 = vrot.slane %v5911, 5
      %v5914 = vor.u32 %v5910, %v5913
      %v5915 = vrot.slane %v5914, 4
      %v5917 = vshll.u32 %v5892, 16
      %v5919 = vrot.slane %v5917, 5
      %v5920 = vsel %vm496, %v5915, %v5919
      %v5922 = vshrl.u32 %v5893, 16
      %v5924 = vrot.slane %v5922, 4
      %v5925 = vshll.u32 %v5893, 16
      %v5927 = vrot.slane %v5925, 5
      %v5928 = vor.u32 %v5924, %v5927
      %v5929 = vrot.slane %v5928, 4
      %v5931 = vshll.u32 %v5894, 16
      %v5933 = vrot.slane %v5931, 5
      %v5934 = vsel %vm496, %v5929, %v5933
      %v5936 = vshrl.u32 %v5895, 16
      %v5938 = vrot.slane %v5936, 4
      %v5939 = vshll.u32 %v5895, 16
      %v5941 = vrot.slane %v5939, 5
      %v5942 = vor.u32 %v5938, %v5941
      %v5943 = vrot.slane %v5942, 4
      %v5945 = vshll.u32 %v5896, 16
      %v5947 = vrot.slane %v5945, 5
      %v5948 = vsel %vm496, %v5943, %v5947
      %v5950 = vshrl.u32 %v5897, 16
      %v5952 = vrot.slane %v5950, 4
      %v5953 = vshll.u32 %v5897, 16
      %v5955 = vrot.slane %v5953, 5
      %v5956 = vor.u32 %v5952, %v5955
      %v5957 = vrot.slane %v5956, 4
      %v5959 = vshll.u32 %v5898, 16
      %v5961 = vrot.slane %v5959, 5
      %v5962 = vsel %vm496, %v5957, %v5961
      %v5964 = vshrl.u32 %v5899, 16
      %v5966 = vrot.slane %v5964, 4
      %v5967 = vshll.u32 %v5899, 16
      %v5969 = vrot.slane %v5967, 5
      %v5970 = vor.u32 %v5966, %v5969
      %v5971 = vrot.slane %v5970, 4
      %v5973 = vshll.u32 %v5900, 16
      %v5975 = vrot.slane %v5973, 5
      %v5976 = vsel %vm496, %v5971, %v5975
      %v5978 = vshrl.u32 %v5901, 16
      %v5980 = vrot.slane %v5978, 4
      %v5981 = vshll.u32 %v5901, 16
      %v5983 = vrot.slane %v5981, 5
      %v5984 = vor.u32 %v5980, %v5983
      %v5985 = vrot.slane %v5984, 4
      %v5987 = vshll.u32 %v5902, 16
      %v5989 = vrot.slane %v5987, 5
      %v5990 = vsel %vm496, %v5985, %v5989
      %v5992 = vshrl.u32 %v5903, 16
      %v5994 = vrot.slane %v5992, 4
      %v5995 = vshll.u32 %v5903, 16
      %v5997 = vrot.slane %v5995, 5
      %v5998 = vor.u32 %v5994, %v5997
      %v5999 = vrot.slane %v5998, 4
      %v6001 = vshll.u32 %v5904, 16
      %v6003 = vrot.slane %v6001, 5
      %v6004 = vsel %vm496, %v5999, %v6003
      %v6006 = vshrl.u32 %v5905, 16
      %v6008 = vrot.slane %v6006, 4
      %v6009 = vshll.u32 %v5905, 16
      %v6011 = vrot.slane %v6009, 5
      %v6012 = vor.u32 %v6008, %v6011
      %v6013 = vrot.slane %v6012, 4
      %v6015 = vshll.u32 %v5906, 16
      %v6017 = vrot.slane %v6015, 5
      %v6018 = vsel %vm496, %v6013, %v6017
      %v6019 = vld [vmem:[%s3 + $0x640] sm:$0xf]
      %v6020 = vld [vmem:[%s3 + $0x644] sm:$0xf]
      %v6021 = vld [vmem:[%s3 + $0x648] sm:$0xf]
      %v6022 = vld [vmem:[%s3 + $0x64c] sm:$0xf]
      %v6023 = vld [vmem:[%s3 + $0x650] sm:$0xf]
      %v6024 = vld [vmem:[%s3 + $0x654] sm:$0xf]
      %v6025 = vld [vmem:[%s3 + $0x658] sm:$0xf]
      %v6026 = vld [vmem:[%s3 + $0x65c] sm:$0xf]
      %v6027 = vld [vmem:[%s3 + $0x660] sm:$0xf]
      %v6028 = vld [vmem:[%s3 + $0x664] sm:$0xf]
      %v6029 = vld [vmem:[%s3 + $0x668] sm:$0xf]
      %v6030 = vld [vmem:[%s3 + $0x66c] sm:$0xf]
      %v6031 = vld [vmem:[%s3 + $0x670] sm:$0xf]
      %v6032 = vld [vmem:[%s3 + $0x674] sm:$0xf]
      %v6033 = vld [vmem:[%s3 + $0x678] sm:$0xf]
      %v6034 = vld [vmem:[%s3 + $0x67c] sm:$0xf]
      %v6035 = vunpack.c.l.b16 %v5920
      %v6036 = vunpack.c.l.b16 %v5934
      %v6037 = vunpack.c.l.b16 %v5948
      %v6038 = vunpack.c.l.b16 %v5962
      %v6039 = vunpack.c.l.b16 %v5976
      %v6040 = vunpack.c.l.b16 %v5990
      %v6041 = vunpack.c.l.b16 %v6004
      %v6042 = vunpack.c.l.b16 %v6018
      %v6043 = vpack.c.b16 %v6036, %v6035
      %v6044 = vpack.c.b16 %v6038, %v6037
      %v6045 = vpack.c.b16 %v6040, %v6039
      %v6046 = vpack.c.b16 %v6042, %v6041
      %v6067 = vunpack.c.l.b16 %v6019
      %v6068 = vunpack.c.l.b16 %v6020
      %v6069 = vunpack.c.l.b16 %v6021
      %v6070 = vunpack.c.l.b16 %v6022
      %v6071 = vunpack.c.l.b16 %v6023
      %v6072 = vunpack.c.l.b16 %v6024
      %v6073 = vunpack.c.l.b16 %v6025
      %v6074 = vunpack.c.l.b16 %v6026
      %v6075 = vunpack.c.l.b16 %v6027
      %v6076 = vunpack.c.l.b16 %v6028
      %v6077 = vunpack.c.l.b16 %v6029
      %v6078 = vunpack.c.l.b16 %v6030
      %v6079 = vunpack.c.l.b16 %v6031
      %v6080 = vunpack.c.l.b16 %v6032
      %v6081 = vunpack.c.l.b16 %v6033
      %v6082 = vunpack.c.l.b16 %v6034
      %v6083 = vpack.c.b16 %v6068, %v6067
      %v6084 = vpack.c.b16 %v6070, %v6069
      %v6085 = vpack.c.b16 %v6072, %v6071
      %v6086 = vpack.c.b16 %v6074, %v6073
      %v6087 = vpack.c.b16 %v6076, %v6075
      %v6088 = vpack.c.b16 %v6078, %v6077
      %v6089 = vpack.c.b16 %v6080, %v6079
      %v6090 = vpack.c.b16 %v6082, %v6081
      %6099 = vmatprep.subr.bf16.mxu0 0
      %6100 = vmatpush1.bf16.msra.mxu0 %v6083
      %6101 = vmatprep.subr.bf16.mxu0 0
      %6102 = vmatpush1.bf16.msra.mxu0 %v6084
      %6103 = vmatprep.subr.bf16.mxu0 0
      %6104 = vmatpush1.bf16.msra.mxu0 %v6085
      %6105 = vmatprep.subr.bf16.mxu0 0
      %6106 = vmatpush1.bf16.msra.mxu0 %v6086
      %6107 = vmatprep.subr.bf16.mxu0 0
      %6108 = vmatpush1.bf16.msra.mxu0 %v6087
      %6109 = vmatprep.subr.bf16.mxu0 0
      %6110 = vmatpush1.bf16.msra.mxu0 %v6088
      %6111 = vmatprep.subr.bf16.mxu0 0
      %6112 = vmatpush1.bf16.msra.mxu0 %v6089
      %6113 = vmatprep.subr.bf16.mxu0 0
      %6114 = vmatpush1.bf16.msra.mxu0 %v6090
      %6115 = vmatprep.subr.bf16.mxu0 0
      %6116 = vmatpush1.bf16.msra.mxu0 0
      %6117 = vmatprep.subr.bf16.mxu0 0
      %6118 = vmatpush1.bf16.msra.mxu0 0
      %6119 = vmatprep.subr.bf16.mxu0 0
      %6120 = vmatpush1.bf16.msra.mxu0 0
      %6121 = vmatprep.subr.bf16.mxu0 0
      %6122 = vmatpush1.bf16.msra.mxu0 0
      %6123 = vmatprep.subr.bf16.mxu0 0
      %6124 = vmatpush1.bf16.msra.mxu0 0
      %6125 = vmatprep.subr.bf16.mxu0 0
      %6126 = vmatpush1.bf16.msra.mxu0 0
      %6127 = vmatprep.subr.bf16.mxu0 0
      %6128 = vmatpush1.bf16.msra.mxu0 0
      %6129 = vmatprep.subr.bf16.mxu0 0
      %6130 = vmatpush1.bf16.msra.mxu0 0
      %6131 = vmatprep.mubr.bf16.mxu0 0
      %6132 = vmatmul.mubr.bf16.gmra.mrb[0].mxu0 %v6043
      %v6133 = vpop.f32.mrb[0].mxu0
      %v6134 = vadd.f32 0.0, %v6133
      %v6135 = vpop.f32.mrb[0].mxu0
      %v6136 = vpop.f32.mrb[0].mxu0
      %v6137 = vadd.f32 0.0, %v6136
      %v6138 = vpop.f32.mrb[0].mxu0
      %6139 = vmatprep.mubr.bf16.mxu0 0
      %6140 = vmatmul.mubr.bf16.gmra.mrb[0].mxu0 %v6044
      %v6141 = vpop.f32.mrb[0].mxu0
      %v6142 = vadd.f32 0.0, %v6141
      %v6143 = vpop.f32.mrb[0].mxu0
      %v6144 = vpop.f32.mrb[0].mxu0
      %v6145 = vadd.f32 0.0, %v6144
      %v6146 = vpop.f32.mrb[0].mxu0
      %6147 = vmatprep.mubr.bf16.mxu0 0
      %6148 = vmatmul.mubr.bf16.gmra.mrb[0].mxu0 %v6045
      %v6149 = vpop.f32.mrb[0].mxu0
      %v6150 = vadd.f32 0.0, %v6149
      %v6151 = vpop.f32.mrb[0].mxu0
      %v6152 = vpop.f32.mrb[0].mxu0
      %v6153 = vadd.f32 0.0, %v6152
      %v6154 = vpop.f32.mrb[0].mxu0
      %6155 = vmatprep.mubr.bf16.mxu0 0
      %6156 = vmatmul.mubr.bf16.gmra.mrb[0].mxu0 %v6046
      %v6157 = vpop.f32.mrb[0].mxu0
      %v6158 = vadd.f32 0.0, %v6157
      %v6159 = vpop.f32.mrb[0].mxu0
      %v6160 = vpop.f32.mrb[0].mxu0
      %v6161 = vadd.f32 0.0, %v6160
      %v6162 = vpop.f32.mrb[0].mxu0
      %6163 = vdwg.mxu0
      %v6164 = vadd.f32 %v5883, %v6134
      %v6165 = vadd.f32 %v5884, %v6137
      %v6166 = vadd.f32 %v5885, %v6142
      %v6167 = vadd.f32 %v5886, %v6145
      %v6168 = vadd.f32 %v5887, %v6150
      %v6169 = vadd.f32 %v5888, %v6153
      %v6170 = vadd.f32 %v5889, %v6158
      %v6171 = vadd.f32 %v5890, %v6161
      %v6172 = vld [vmem:[%s5721] sm:$0xe]
      %v6173 = vld [vmem:[%s5721 + $0x8] sm:$0xe]
      %v6174 = vld [vmem:[%s5721 + $0x10] sm:$0xe]
      %v6175 = vld [vmem:[%s5721 + $0x18] sm:$0xe]
      %v6176 = vld [vmem:[%s5721 + $0x20] sm:$0xe]
      %v6177 = vld [vmem:[%s5721 + $0x28] sm:$0xe]
      %v6178 = vld [vmem:[%s5721 + $0x30] sm:$0xe]
      %v6179 = vld [vmem:[%s5721 + $0x38] sm:$0xe]
      %v6196 = vrot.slane %v6172, 5
      %v6197 = vrot.slane %v6196, 4
      %v6198 = vrot.slane %v5892, 5
      %v6199 = vsel %vm917, %v6197, %v6198
      %v6200 = vrot.slane %v6173, 5
      %v6201 = vrot.slane %v6200, 4
      %v6202 = vrot.slane %v5894, 5
      %v6203 = vsel %vm917, %v6201, %v6202
      %v6204 = vrot.slane %v6174, 5
      %v6205 = vrot.slane %v6204, 4
      %v6206 = vrot.slane %v5896, 5
      %v6207 = vsel %vm917, %v6205, %v6206
      %v6208 = vrot.slane %v6175, 5
      %v6209 = vrot.slane %v6208, 4
      %v6210 = vrot.slane %v5898, 5
      %v6211 = vsel %vm917, %v6209, %v6210
      %v6212 = vrot.slane %v6176, 5
      %v6213 = vrot.slane %v6212, 4
      %v6214 = vrot.slane %v5900, 5
      %v6215 = vsel %vm917, %v6213, %v6214
      %v6216 = vrot.slane %v6177, 5
      %v6217 = vrot.slane %v6216, 4
      %v6218 = vrot.slane %v5902, 5
      %v6219 = vsel %vm917, %v6217, %v6218
      %v6220 = vrot.slane %v6178, 5
      %v6221 = vrot.slane %v6220, 4
      %v6222 = vrot.slane %v5904, 5
      %v6223 = vsel %vm917, %v6221, %v6222
      %v6224 = vrot.slane %v6179, 5
      %v6225 = vrot.slane %v6224, 4
      %v6226 = vrot.slane %v5906, 5
      %v6227 = vsel %vm917, %v6225, %v6226
      %v6228 = vld [vmem:[%s3 + $0x680] sm:$0xf]
      %v6229 = vld [vmem:[%s3 + $0x684] sm:$0xf]
      %v6230 = vld [vmem:[%s3 + $0x688] sm:$0xf]
      %v6231 = vld [vmem:[%s3 + $0x68c] sm:$0xf]
      %v6232 = vld [vmem:[%s3 + $0x690] sm:$0xf]
      %v6233 = vld [vmem:[%s3 + $0x694] sm:$0xf]
      %v6234 = vld [vmem:[%s3 + $0x698] sm:$0xf]
      %v6235 = vld [vmem:[%s3 + $0x69c] sm:$0xf]
      %v6236 = vld [vmem:[%s3 + $0x6a0] sm:$0xf]
      %v6237 = vld [vmem:[%s3 + $0x6a4] sm:$0xf]
      %v6238 = vld [vmem:[%s3 + $0x6a8] sm:$0xf]
      %v6239 = vld [vmem:[%s3 + $0x6ac] sm:$0xf]
      %v6240 = vld [vmem:[%s3 + $0x6b0] sm:$0xf]
      %v6241 = vld [vmem:[%s3 + $0x6b4] sm:$0xf]
      %v6242 = vld [vmem:[%s3 + $0x6b8] sm:$0xf]
      %v6243 = vld [vmem:[%s3 + $0x6bc] sm:$0xf]
      %v6244 = vunpack.c.l.b16 %v6199
      %v6245 = vunpack.c.l.b16 %v6203
      %v6246 = vunpack.c.l.b16 %v6207
      %v6247 = vunpack.c.l.b16 %v6211
      %v6248 = vunpack.c.l.b16 %v6215
      %v6249 = vunpack.c.l.b16 %v6219
      %v6250 = vunpack.c.l.b16 %v6223
      %v6251 = vunpack.c.l.b16 %v6227
      %v6252 = vpack.c.b16 %v6245, %v6244
      %v6253 = vpack.c.b16 %v6247, %v6246
      %v6254 = vpack.c.b16 %v6249, %v6248
      %v6255 = vpack.c.b16 %v6251, %v6250
      %v6276 = vunpack.c.l.b16 %v6228
      %v6277 = vunpack.c.l.b16 %v6229
      %v6278 = vunpack.c.l.b16 %v6230
      %v6279 = vunpack.c.l.b16 %v6231
      %v6280 = vunpack.c.l.b16 %v6232
      %v6281 = vunpack.c.l.b16 %v6233
      %v6282 = vunpack.c.l.b16 %v6234
      %v6283 = vunpack.c.l.b16 %v6235
      %v6284 = vunpack.c.l.b16 %v6236
      %v6285 = vunpack.c.l.b16 %v6237
      %v6286 = vunpack.c.l.b16 %v6238
      %v6287 = vunpack.c.l.b16 %v6239
      %v6288 = vunpack.c.l.b16 %v6240
      %v6289 = vunpack.c.l.b16 %v6241
      %v6290 = vunpack.c.l.b16 %v6242
      %v6291 = vunpack.c.l.b16 %v6243
      %v6292 = vpack.c.b16 %v6277, %v6276
      %v6293 = vpack.c.b16 %v6279, %v6278
      %v6294 = vpack.c.b16 %v6281, %v6280
      %v6295 = vpack.c.b16 %v6283, %v6282
      %v6296 = vpack.c.b16 %v6285, %v6284
      %v6297 = vpack.c.b16 %v6287, %v6286
      %v6298 = vpack.c.b16 %v6289, %v6288
      %v6299 = vpack.c.b16 %v6291, %v6290
      %6308 = vmatprep.subr.bf16.mxu0 0
      %6309 = vmatpush1.bf16.msra.mxu0 %v6292
      %6310 = vmatprep.subr.bf16.mxu0 0
      %6311 = vmatpush1.bf16.msra.mxu0 %v6293
      %6312 = vmatprep.subr.bf16.mxu0 0
      %6313 = vmatpush1.bf16.msra.mxu0 %v6294
      %6314 = vmatprep.subr.bf16.mxu0 0
      %6315 = vmatpush1.bf16.msra.mxu0 %v6295
      %6316 = vmatprep.subr.bf16.mxu0 0
      %6317 = vmatpush1.bf16.msra.mxu0 %v6296
      %6318 = vmatprep.subr.bf16.mxu0 0
      %6319 = vmatpush1.bf16.msra.mxu0 %v6297
      %6320 = vmatprep.subr.bf16.mxu0 0
      %6321 = vmatpush1.bf16.msra.mxu0 %v6298
      %6322 = vmatprep.subr.bf16.mxu0 0
      %6323 = vmatpush1.bf16.msra.mxu0 %v6299
      %6324 = vmatprep.subr.bf16.mxu0 0
      %6325 = vmatpush1.bf16.msra.mxu0 0
      %6326 = vmatprep.subr.bf16.mxu0 0
      %6327 = vmatpush1.bf16.msra.mxu0 0
      %6328 = vmatprep.subr.bf16.mxu0 0
      %6329 = vmatpush1.bf16.msra.mxu0 0
      %6330 = vmatprep.subr.bf16.mxu0 0
      %6331 = vmatpush1.bf16.msra.mxu0 0
      %6332 = vmatprep.subr.bf16.mxu0 0
      %6333 = vmatpush1.bf16.msra.mxu0 0
      %6334 = vmatprep.subr.bf16.mxu0 0
      %6335 = vmatpush1.bf16.msra.mxu0 0
      %6336 = vmatprep.subr.bf16.mxu0 0
      %6337 = vmatpush1.bf16.msra.mxu0 0
      %6338 = vmatprep.subr.bf16.mxu0 0
      %6339 = vmatpush1.bf16.msra.mxu0 0
      %6340 = vmatprep.mubr.bf16.mxu0 0
      %6341 = vmatmul.mubr.bf16.gmra.mrb[0].mxu0 %v6252
      %v6342 = vpop.f32.mrb[0].mxu0
      %v6343 = vadd.f32 0.0, %v6342
      %v6344 = vpop.f32.mrb[0].mxu0
      %v6345 = vpop.f32.mrb[0].mxu0
      %v6346 = vadd.f32 0.0, %v6345
      %v6347 = vpop.f32.mrb[0].mxu0
      %6348 = vmatprep.mubr.bf16.mxu0 0
      %6349 = vmatmul.mubr.bf16.gmra.mrb[0].mxu0 %v6253
      %v6350 = vpop.f32.mrb[0].mxu0
      %v6351 = vadd.f32 0.0, %v6350
      %v6352 = vpop.f32.mrb[0].mxu0
      %v6353 = vpop.f32.mrb[0].mxu0
      %v6354 = vadd.f32 0.0, %v6353
      %v6355 = vpop.f32.mrb[0].mxu0
      %6356 = vmatprep.mubr.bf16.mxu0 0
      %6357 = vmatmul.mubr.bf16.gmra.mrb[0].mxu0 %v6254
      %v6358 = vpop.f32.mrb[0].mxu0
      %v6359 = vadd.f32 0.0, %v6358
      %v6360 = vpop.f32.mrb[0].mxu0
      %v6361 = vpop.f32.mrb[0].mxu0
      %v6362 = vadd.f32 0.0, %v6361
      %v6363 = vpop.f32.mrb[0].mxu0
      %6364 = vmatprep.mubr.bf16.mxu0 0
      %6365 = vmatmul.mubr.bf16.gmra.mrb[0].mxu0 %v6255
      %v6366 = vpop.f32.mrb[0].mxu0
      %v6367 = vadd.f32 0.0, %v6366
      %v6368 = vpop.f32.mrb[0].mxu0
      %v6369 = vpop.f32.mrb[0].mxu0
      %v6370 = vadd.f32 0.0, %v6369
      %v6371 = vpop.f32.mrb[0].mxu0
      %6372 = vdwg.mxu0
      %v6373 = vadd.f32 %v6164, %v6343
      %v6374 = vadd.f32 %v6165, %v6346
      %v6375 = vadd.f32 %v6166, %v6351
      %v6376 = vadd.f32 %v6167, %v6354
      %v6377 = vadd.f32 %v6168, %v6359
      %v6378 = vadd.f32 %v6169, %v6362
      %v6379 = vadd.f32 %v6170, %v6367
      %v6380 = vadd.f32 %v6171, %v6370
      %v6381 = vld [vmem:[%s4] sm:$0x1]
      %v6383 = vlaneseq
      %v6384 = vshrl.u32 %v6383, 7
      %v6385 = vsub.s32 0, %v6384
      %v6386 = vrot.slane %v6381, %v6385
      %v6388 = vadd.f32 %v6373, %v6386
      %v6389 = vadd.f32 %v6374, %v6386
      %v6390 = vadd.f32 %v6375, %v6386
      %v6391 = vadd.f32 %v6376, %v6386
      %v6392 = vadd.f32 %v6377, %v6386
      %v6393 = vadd.f32 %v6378, %v6386
      %v6394 = vadd.f32 %v6379, %v6386
      %v6395 = vadd.f32 %v6380, %v6386
      %v6396 = vmax.f32 %v6388, 0.0
      %v6397 = vmax.f32 %v6389, 0.0
      %v6398 = vmax.f32 %v6390, 0.0
      %v6399 = vmax.f32 %v6391, 0.0
      %v6400 = vmax.f32 %v6392, 0.0
      %v6401 = vmax.f32 %v6393, 0.0
      %v6402 = vmax.f32 %v6394, 0.0
      %v6403 = vmax.f32 %v6395, 0.0
      %v6404 = vpack.c.bf16 %v6397, %v6396
      %v6405 = vpack.c.bf16 %v6399, %v6398
      %v6406 = vpack.c.bf16 %v6401, %v6400
      %v6407 = vpack.c.bf16 %v6403, %v6402
      %v6408 = vld [vmem:[%s5] sm:$0xf]
      %v6409 = vld [vmem:[%s5 + $0x4] sm:$0xf]
      %v6410 = vld [vmem:[%s5 + $0x8] sm:$0xf]
      %v6411 = vld [vmem:[%s5 + $0xc] sm:$0xf]
      %v6412 = vld [vmem:[%s5 + $0x10] sm:$0xf]
      %v6413 = vld [vmem:[%s5 + $0x14] sm:$0xf]
      %v6414 = vld [vmem:[%s5 + $0x18] sm:$0xf]
      %v6415 = vld [vmem:[%s5 + $0x1c] sm:$0xf]
      %v6416 = vld [vmem:[%s5 + $0x20] sm:$0xf]
      %v6417 = vld [vmem:[%s5 + $0x24] sm:$0xf]
      %v6418 = vld [vmem:[%s5 + $0x28] sm:$0xf]
      %v6419 = vld [vmem:[%s5 + $0x2c] sm:$0xf]
      %v6420 = vld [vmem:[%s5 + $0x30] sm:$0xf]
      %v6421 = vld [vmem:[%s5 + $0x34] sm:$0xf]
      %v6422 = vld [vmem:[%s5 + $0x38] sm:$0xf]
      %v6423 = vld [vmem:[%s5 + $0x3c] sm:$0xf]
      %v6424 = vld [vmem:[%s6] sm:$0x1]
      %v6426 = vlaneseq
      %v6427 = vshrl.u32 %v6426, 7
      %v6428 = vsub.s32 0, %v6427
      %v6429 = vrot.slane %v6424, %v6428
      %v6447 = vunpack.c.l.b16 %v6408
      %v6448 = vunpack.c.l.b16 %v6409
      %v6449 = vunpack.c.l.b16 %v6410
      %v6450 = vunpack.c.l.b16 %v6411
      %v6451 = vunpack.c.l.b16 %v6412
      %v6452 = vunpack.c.l.b16 %v6413
      %v6453 = vunpack.c.l.b16 %v6414
      %v6454 = vunpack.c.l.b16 %v6415
      %v6455 = vunpack.c.l.b16 %v6416
      %v6456 = vunpack.c.l.b16 %v6417
      %v6457 = vunpack.c.l.b16 %v6418
      %v6458 = vunpack.c.l.b16 %v6419
      %v6459 = vunpack.c.l.b16 %v6420
      %v6460 = vunpack.c.l.b16 %v6421
      %v6461 = vunpack.c.l.b16 %v6422
      %v6462 = vunpack.c.l.b16 %v6423
      %v6463 = vpack.c.b16 %v6448, %v6447
      %v6464 = vpack.c.b16 %v6450, %v6449
      %v6465 = vpack.c.b16 %v6452, %v6451
      %v6466 = vpack.c.b16 %v6454, %v6453
      %v6467 = vpack.c.b16 %v6456, %v6455
      %v6468 = vpack.c.b16 %v6458, %v6457
      %v6469 = vpack.c.b16 %v6460, %v6459
      %v6470 = vpack.c.b16 %v6462, %v6461
      %6479 = vmatprep.subr.bf16.mxu0 0
      %6480 = vmatpush1.bf16.msra.mxu0 %v6463
      %6481 = vmatprep.subr.bf16.mxu0 0
      %6482 = vmatpush1.bf16.msra.mxu0 %v6464
      %6483 = vmatprep.subr.bf16.mxu0 0
      %6484 = vmatpush1.bf16.msra.mxu0 %v6465
      %6485 = vmatprep.subr.bf16.mxu0 0
      %6486 = vmatpush1.bf16.msra.mxu0 %v6466
      %6487 = vmatprep.subr.bf16.mxu0 0
      %6488 = vmatpush1.bf16.msra.mxu0 %v6467
      %6489 = vmatprep.subr.bf16.mxu0 0
      %6490 = vmatpush1.bf16.msra.mxu0 %v6468
      %6491 = vmatprep.subr.bf16.mxu0 0
      %6492 = vmatpush1.bf16.msra.mxu0 %v6469
      %6493 = vmatprep.subr.bf16.mxu0 0
      %6494 = vmatpush1.bf16.msra.mxu0 %v6470
      %6495 = vmatprep.subr.bf16.mxu0 0
      %6496 = vmatpush1.bf16.msra.mxu0 0
      %6497 = vmatprep.subr.bf16.mxu0 0
      %6498 = vmatpush1.bf16.msra.mxu0 0
      %6499 = vmatprep.subr.bf16.mxu0 0
      %6500 = vmatpush1.bf16.msra.mxu0 0
      %6501 = vmatprep.subr.bf16.mxu0 0
      %6502 = vmatpush1.bf16.msra.mxu0 0
      %6503 = vmatprep.subr.bf16.mxu0 0
      %6504 = vmatpush1.bf16.msra.mxu0 0
      %6505 = vmatprep.subr.bf16.mxu0 0
      %6506 = vmatpush1.bf16.msra.mxu0 0
      %6507 = vmatprep.subr.bf16.mxu0 0
      %6508 = vmatpush1.bf16.msra.mxu0 0
      %6509 = vmatprep.subr.bf16.mxu0 0
      %6510 = vmatpush1.bf16.msra.mxu0 0
      %6511 = vmatprep.mubr.bf16.mxu0 0
      %6512 = vmatmul.mubr.bf16.gmra.mrb[0].mxu0 %v6404
      %v6513 = vpop.f32.mrb[0].mxu0
      %v6514 = vadd.f32 %v6429, %v6513
      %v6515 = vpop.f32.mrb[0].mxu0
      %v6516 = vpop.f32.mrb[0].mxu0
      %v6517 = vadd.f32 %v6429, %v6516
      %v6518 = vpop.f32.mrb[0].mxu0
      %6519 = vmatprep.mubr.bf16.mxu0 0
      %6520 = vmatmul.mubr.bf16.gmra.mrb[0].mxu0 %v6405
      %v6521 = vpop.f32.mrb[0].mxu0
      %v6522 = vadd.f32 %v6429, %v6521
      %v6523 = vpop.f32.mrb[0].mxu0
      %v6524 = vpop.f32.mrb[0].mxu0
      %v6525 = vadd.f32 %v6429, %v6524
      %v6526 = vpop.f32.mrb[0].mxu0
      %6527 = vmatprep.mubr.bf16.mxu0 0
      %6528 = vmatmul.mubr.bf16.gmra.mrb[0].mxu0 %v6406
      %v6529 = vpop.f32.mrb[0].mxu0
      %v6530 = vadd.f32 %v6429, %v6529
      %v6531 = vpop.f32.mrb[0].mxu0
      %v6532 = vpop.f32.mrb[0].mxu0
      %v6533 = vadd.f32 %v6429, %v6532
      %v6534 = vpop.f32.mrb[0].mxu0
      %6535 = vmatprep.mubr.bf16.mxu0 0
      %6536 = vmatmul.mubr.bf16.gmra.mrb[0].mxu0 %v6407
      %v6537 = vpop.f32.mrb[0].mxu0
      %v6538 = vadd.f32 %v6429, %v6537
      %v6539 = vpop.f32.mrb[0].mxu0
      %v6540 = vpop.f32.mrb[0].mxu0
      %v6541 = vadd.f32 %v6429, %v6540
      %v6542 = vpop.f32.mrb[0].mxu0
      %6543 = vdwg.mxu0
      %v6544 = vld [vmem:[%s447] sm:$0xff]
      %v6545 = vld [vmem:[%s447 + $0x8] sm:$0xff]
      %v6546 = vld [vmem:[%s447 + $0x10] sm:$0xff]
      %v6547 = vld [vmem:[%s447 + $0x18] sm:$0xff]
      %v6548 = vld [vmem:[%s447 + $0x20] sm:$0xff]
      %v6549 = vld [vmem:[%s447 + $0x28] sm:$0xff]
      %v6550 = vld [vmem:[%s447 + $0x30] sm:$0xff]
      %v6551 = vld [vmem:[%s447 + $0x38] sm:$0xff]
      %v6552 = vadd.f32 %v6514, %v6544
      %v6553 = vadd.f32 %v6517, %v6545
      %v6554 = vadd.f32 %v6522, %v6546
      %v6555 = vadd.f32 %v6525, %v6547
      %v6556 = vadd.f32 %v6530, %v6548
      %v6557 = vadd.f32 %v6533, %v6549
      %v6558 = vadd.f32 %v6538, %v6550
      %v6559 = vadd.f32 %v6541, %v6551
      %v6560 = vmax.f32 %v6552, 0.0
      %v6561 = vmax.f32 %v6553, 0.0
      %v6562 = vmax.f32 %v6554, 0.0
      %v6563 = vmax.f32 %v6555, 0.0
      %v6564 = vmax.f32 %v6556, 0.0
      %v6565 = vmax.f32 %v6557, 0.0
      %v6566 = vmax.f32 %v6558, 0.0
      %v6567 = vmax.f32 %v6559, 0.0
      %6568 = vst [vmem:[%s457] sm:$0xff] %v6560
      %6569 = vst [vmem:[%s457 + $0x8] sm:$0xff] %v6561
      %6570 = vst [vmem:[%s457 + $0x10] sm:$0xff] %v6562
      %6571 = vst [vmem:[%s457 + $0x18] sm:$0xff] %v6563
      %6572 = vst [vmem:[%s457 + $0x20] sm:$0xff] %v6564
      %6573 = vst [vmem:[%s457 + $0x28] sm:$0xff] %v6565
      %6574 = vst [vmem:[%s457 + $0x30] sm:$0xff] %v6566
      %6575 = vst [vmem:[%s457 + $0x38] sm:$0xff] %v6567
      %s6576 = smul.u32 %s23, 8
      %s6577 = sadd.s32 %s6576, %s24
      %s6578 = smul.u32 8, %s6577
      %p6579 = scmp.lt.s32.totalorder %s6578, 127
      %s6580 = scalar_select %p6579, %s6578, 127
      %s6581 = smul.addr %s6580, 8
      %s6582 = scalar_lea.vmem %s8, %s6581
      // Predicated region
      $region53: #{bottleneck_forward.3} parent=51 // pred_check
        %p6583 = pneg %p255
      $region54: #{bottleneck_forward.3} parent=51 // pred_check_branch
        %6585 = sbr.rel (%p6583) target = $region56
      $region55: #{bottleneck_forward.3} parent=51 // pred_region
        %s6586 = smul.u32 %s23, 8
        %s6587 = sadd.s32 %s6586, %s24
        %s6588 = smul.u32 8, %s6587
      $region56: #{bottleneck_forward.3} parent=51 // pred_fallthru
        _
    $region52: #{bottleneck_forward.3} parent=5 // pred_fallthru
      _
    %p6589 = scmp.le.s32.totalorder 2, %s14
    // Predicated region
    $region57: #{bottleneck_forward.3} parent=5 // pred_check
      %p6590 = pneg %p6589
    $region58: #{bottleneck_forward.3} parent=5 // pred_check_branch
      %6592 = sbr.rel (%p6590) target = $region60
    $region59: #{bottleneck_forward.3} parent=5 // pred_region
      %s6593 = ssub.s32 %s14, 2
      // Predicated region
      $region61: #{bottleneck_forward.3} parent=59 // pred_check
        %p6594 = pneg %p261
      $region62: #{bottleneck_forward.3} parent=59 // pred_check_branch
        %6596 = sbr.rel (%p6594) target = $region64
      $region63: #{bottleneck_forward.3} parent=59 // pred_region
        %s6597 = smul.u32 %s25, 8
        %s6598 = sadd.s32 %s6597, %s26
        %s6599 = smul.u32 8, %s6598
        %p6600 = scmp.lt.s32.totalorder %s6599, 127
        %s6601 = scalar_select %p6600, %s6599, 127
        %s6602 = smul.addr %s6601, 8
        %s6603 = scalar_lea.vmem %s8, %s6602
      $region64: #{bottleneck_forward.3} parent=59 // pred_fallthru
        _
    $region60: #{bottleneck_forward.3} parent=5 // pred_fallthru
      _
  $region6: #{bottleneck_forward.3} parent=0 // loop_footer
    %s18 = sadd.s32 1, %s14
  $region7: #{bottleneck_forward.3} parent=0 // loop_footer_branch
    %13 = sbr.rel target = $region3
  $region8: #{bottleneck_forward.3} parent=0 // loop_exit
    _

</llo_original>
